<compile_context>
chip_gen: v5e
topology: v5e:2x2
jax: 0.10.0
libtpu: 0.0.40
codegen_flags: <defaults>
</compile_context>

<pallas_src>
import functools
import jax
import jax.numpy as jnp
from jax.experimental import pallas as pl

LN_EPS = 1e-5
WEIGHT_DTYPE = jnp.bfloat16   # MXU operand dtype (f32 accumulate)


# ---------------------------------------------------------------------------
# helpers used inside the kernel body (pure value functions)
# ---------------------------------------------------------------------------
def _mm(x, w):
    """Matmul with LHS cast to the weight dtype, f32 accumulation on the MXU."""
    return jnp.dot(x.astype(w.dtype), w, preferred_element_type=jnp.float32)


def _ln(y, g, b):
    """LayerNorm over the last axis (f32) with affine params g/b of shape (1, D)."""
    mean = jnp.mean(y, axis=-1, keepdims=True)
    var = jnp.mean(jnp.square(y - mean), axis=-1, keepdims=True)
    return (y - mean) * jax.lax.rsqrt(var + LN_EPS) * g + b


# ---------------------------------------------------------------------------
# The fully fused forward kernel (grid=(), everything resident in VMEM)
# ---------------------------------------------------------------------------
def _proteus_kernel(x_expr_ref, xy_ref,
                    sw1_ref, s_vecs_ref, sw2_ref,
                    qw1a_ref, qw1b_ref, qw2_ref, q_vecs_ref,
                    me_ref, kv_w1_ref, kv_vecs1_ref, kv_w2_ref, kv_vecs2_ref,
                    et_ref,
                    l_wqkvo_ref, l_attn_vecs_ref,
                    l_fw1_ref, l_fb1_ref, l_fw2_ref, l_f_vecs_ref,
                    pc_vecs_ref, cw1_ref, cw2_ref, cb2_ref,
                    logits_ref, attw_ref,
                    *, num_layers, num_heads):
    bs = x_expr_ref.shape[0]
    P = me_ref.shape[0]
    d = et_ref.shape[1]
    H = num_heads
    dh = d // H
    scale = 1.0 / float(dh) ** 0.5

    # ---- spatial MLP: Linear(2->C) as two VPU FMAs, then Linear(C->C), ReLUs
    xy = xy_ref[...]                                  # (bs, 2) f32
    sw1 = sw1_ref[...]                                # (2, C)  f32 (VPU path)
    sv = s_vecs_ref[...]                              # (2, C)  [sb1; sb2]
    h0 = jnp.maximum(xy[:, 0:1] * sw1[0:1, :] + xy[:, 1:2] * sw1[1:2, :]
                     + sv[0:1, :], 0.0)
    e_xy = jnp.maximum(_mm(h0, sw2_ref[...]) + sv[1:2, :], 0.0)

    # ---- query projection; concat([x_expr, e_xy]) @ W1 folded into two matmuls
    qv = q_vecs_ref[...]                              # (6, d) [b1,g1,bt1,b2,g2,bt2]
    y1 = _mm(x_expr_ref[...], qw1a_ref[...]) + _mm(e_xy, qw1b_ref[...]) + qv[0:1, :]
    h1 = jnp.maximum(_ln(y1, qv[1:2, :], qv[2:3, :]), 0.0)
    y2 = _mm(h1, qw2_ref[...]) + qv[3:4, :]
    q = jnp.maximum(_ln(y2, qv[4:5, :], qv[5:6, :]), 0.0)          # (bs, d)

    # ---- key / value projections, ONCE on the (P, M) marker table
    me = me_ref[...]
    kv1 = kv_vecs1_ref[...]                           # (2, 3, hkv) [b1, g1, bt1]
    kv2 = kv_vecs2_ref[...]                           # (2, 3, d)   [b2, g2, bt2]
    hk = jnp.maximum(_ln(_mm(me, kv_w1_ref[0]) + kv1[0, 0:1, :],
                         kv1[0, 1:2, :], kv1[0, 2:3, :]), 0.0)
    k = jnp.maximum(_ln(_mm(hk, kv_w2_ref[0]) + kv2[0, 0:1, :],
                        kv2[0, 1:2, :], kv2[0, 2:3, :]), 0.0)      # (P, d)
    hv = jnp.maximum(_ln(_mm(me, kv_w1_ref[1]) + kv1[1, 0:1, :],
                         kv1[1, 1:2, :], kv1[1, 2:3, :]), 0.0)
    v = jnp.maximum(_ln(_mm(hv, kv_w2_ref[1]) + kv2[1, 0:1, :],
                        kv2[1, 1:2, :], kv2[1, 2:3, :]), 0.0)      # (P, d)

    ET = et_ref[...]                                  # (H, d) head indicator (0/1)

    # ---- EMInteractorBlocks, unrolled; q stays in vregs/VMEM between layers
    for li in range(num_layers):
        is_last = li == num_layers - 1
        av = l_attn_vecs_ref[li]                      # (6, d) [bq,bk,bv,bo,ag,abt]
        wq = l_wqkvo_ref[4 * li + 0]
        wk = l_wqkvo_ref[4 * li + 1]
        wv = l_wqkvo_ref[4 * li + 2]
        wo = l_wqkvo_ref[4 * li + 3]

        qp = _mm(q, wq) + av[0:1, :]                  # (bs, d)
        kp = _mm(k, wk) + av[1:2, :]                  # (P, d)
        vp = _mm(v, wv) + av[2:3, :]                  # (P, d)

        # per-head scores via ET mask (keeps a full K=128 MXU contraction)
        qh = (qp[:, None, :] * ET[None, :, :]).reshape(bs * H, d)
        s = jax.lax.dot_general(qh.astype(WEIGHT_DTYPE), kp.astype(WEIGHT_DTYPE),
                                (((1,), (1,)), ((), ())),
                                preferred_element_type=jnp.float32)  # (bs*H, P)
        s = (s * scale).reshape(bs, H, P)

        # softmax over keys (f32)
        s = s - jnp.max(s, axis=-1, keepdims=True)
        e = jnp.exp(s)
        denom = jnp.sum(e, axis=-1, keepdims=True)
        if is_last:
            w = e / denom                             # exact: attw must sum to 1
        else:
            w = e * pl.reciprocal(denom, approx=True)  # EUP slot, otherwise idle

        # context: ctx[b, j] = sum_p w[b, head(j), p] * vp[p, j]
        ctx_h = jnp.dot(w.reshape(bs * H, P).astype(WEIGHT_DTYPE),
                        vp.astype(WEIGHT_DTYPE),
                        preferred_element_type=jnp.float32).reshape(bs, H, d)
        ctx = jnp.sum(ctx_h * ET[None, :, :], axis=1)  # (bs, d)

        attn_out = _mm(ctx, wo) + av[3:4, :]

        # residual + LN, feed-forward, residual + LN (dropout = identity)
        q1 = _ln(q + attn_out, av[4:5, :], av[5:6, :])
        fv = l_f_vecs_ref[li]                         # (3, d) [fb2, fg, fbt]
        ff1 = jnp.maximum(_mm(q1, l_fw1_ref[li]) + l_fb1_ref[li], 0.0)
        ff2 = _mm(ff1, l_fw2_ref[li]) + fv[0:1, :]
        q = _ln(q1 + ff2, fv[1:2, :], fv[2:3, :])

        if is_last:
            # PyTorch MultiheadAttention default: average attn weights over heads
            attw_ref[...] = jnp.mean(w, axis=1)       # (bs, P)

    # ---- post-LN + classifier (Linear->ReLU->Linear)
    pc = pc_vecs_ref[...]                             # (3, d) [post_g, post_b, cb1]
    qn = _ln(q, pc[0:1, :], pc[1:2, :])
    hc = jnp.maximum(_mm(qn, cw1_ref[...]) + pc[2:3, :], 0.0)
    logits_ref[...] = _mm(hc, cw2_ref[...]) + cb2_ref[...]


# ---------------------------------------------------------------------------
# Parameter init (deterministic, synthetic).  Matmul weights stored bf16,
# VPU-path weight (sw1), biases, LayerNorm params and marker embeds in f32.
# ---------------------------------------------------------------------------
def init_params(key, P, M, d_model, coord_dim, hidden_kv, ff_hidden,
                num_classes, num_layers):
    keys = iter(jax.random.split(key, 512))

    def w(shape, scale=0.05, dtype=WEIGHT_DTYPE):
        return (scale * jax.random.normal(next(keys), shape,
                                          dtype=jnp.float32)).astype(dtype)

    def lin(din, dout, dtype=WEIGHT_DTYPE):
        return {"w": w((din, dout), dtype=dtype),
                "b": w((1, dout), 0.01, jnp.float32)}

    def ln(dim):
        return {"g": jnp.ones((1, dim), jnp.float32),
                "b": jnp.zeros((1, dim), jnp.float32)}

    params = {
        # first spatial linear stays f32 (it is computed on the VPU, not MXU)
        "spatial": {"l1": lin(2, coord_dim, jnp.float32),
                    "l2": lin(coord_dim, coord_dim)},
        "marker_embeds": w((P, M), 0.1, jnp.float32),   # == initial_marker_embeds
        "query": {"l1": lin(P + coord_dim, d_model), "ln1": ln(d_model),
                  "l2": lin(d_model, d_model), "ln2": ln(d_model)},
        "key": {"l1": lin(M, hidden_kv), "ln1": ln(hidden_kv),
                "l2": lin(hidden_kv, d_model), "ln2": ln(d_model)},
        "value": {"l1": lin(M, hidden_kv), "ln1": ln(hidden_kv),
                  "l2": lin(hidden_kv, d_model), "ln2": ln(d_model)},
        "layers": [],
        "post_ln": ln(d_model),
        "classifier": {"l1": lin(d_model, d_model),
                       "l2": lin(d_model, num_classes)},
    }
    for _ in range(num_layers):
        params["layers"].append({
            "attn": {"wq": w((d_model, d_model)), "wk": w((d_model, d_model)),
                     "wv": w((d_model, d_model)), "wo": w((d_model, d_model)),
                     "bq": w((1, d_model), 0.01, jnp.float32),
                     "bk": w((1, d_model), 0.01, jnp.float32),
                     "bv": w((1, d_model), 0.01, jnp.float32),
                     "bo": w((1, d_model), 0.01, jnp.float32)},
            "attn_ln": ln(d_model),
            "ff": {"l1": lin(d_model, ff_hidden), "l2": lin(ff_hidden, d_model)},
            "ff_ln": ln(d_model),
        })
    return params


# ---------------------------------------------------------------------------
# One-time packing of the nested params into the flat slabs the kernel wants
# (done OUTSIDE jit, so no per-call concat work).
# ---------------------------------------------------------------------------
def pack_params(params, num_heads):
    P, M = params["marker_embeds"].shape
    d = params["post_ln"]["g"].shape[-1]
    assert d % num_heads == 0, "d_model must be divisible by num_heads"
    dh = d // num_heads

    sp, qp_, kp_, vp_ = (params["spatial"], params["query"],
                         params["key"], params["value"])

    # split query first-layer weight: concat([x_expr, e_xy]) @ W1 = x@W1a + e@W1b
    qw1 = qp_["l1"]["w"]
    qw1a, qw1b = qw1[:P], qw1[P:]

    # head-indicator matrix ET[h, j] = [j // dh == h]
    h_idx = jax.lax.broadcasted_iota(jnp.int32, (num_heads, d), 0)
    j_head = jax.lax.broadcasted_iota(jnp.int32, (num_heads, d), 1) // dh
    et = (h_idx == j_head).astype(jnp.float32)

    layers = params["layers"]
    cat = functools.partial(jnp.concatenate, axis=0)

    packed = {
        "x_dummy": None,  # placeholder, inputs come at call time
        "sw1": sp["l1"]["w"],
        "s_vecs": cat([sp["l1"]["b"], sp["l2"]["b"]]),                    # (2, C)
        "sw2": sp["l2"]["w"],
        "qw1a": qw1a, "qw1b": qw1b, "qw2": qp_["l2"]["w"],
        "q_vecs": cat([qp_["l1"]["b"], qp_["ln1"]["g"], qp_["ln1"]["b"],
                       qp_["l2"]["b"], qp_["ln2"]["g"], qp_["ln2"]["b"]]),  # (6, d)
        "me": params["marker_embeds"],
        "kv_w1": jnp.stack([kp_["l1"]["w"], vp_["l1"]["w"]]),            # (2, M, hkv)
        "kv_vecs1": jnp.stack([cat([kp_["l1"]["b"], kp_["ln1"]["g"], kp_["ln1"]["b"]]),
                               cat([vp_["l1"]["b"], vp_["ln1"]["g"], vp_["ln1"]["b"]])]),
        "kv_w2": jnp.stack([kp_["l2"]["w"], vp_["l2"]["w"]]),            # (2, hkv, d)
        "kv_vecs2": jnp.stack([cat([kp_["l2"]["b"], kp_["ln2"]["g"], kp_["ln2"]["b"]]),
                               cat([vp_["l2"]["b"], vp_["ln2"]["g"], vp_["ln2"]["b"]])]),
        "et": et,
        "l_wqkvo": jnp.stack([lp["attn"][k] for lp in layers
                              for k in ("wq", "wk", "wv", "wo")]),        # (4L, d, d)
        "l_attn_vecs": jnp.stack([cat([lp["attn"]["bq"], lp["attn"]["bk"],
                                       lp["attn"]["bv"], lp["attn"]["bo"],
                                       lp["attn_ln"]["g"], lp["attn_ln"]["b"]])
                                  for lp in layers]),                     # (L, 6, d)
        "l_fw1": jnp.stack([lp["ff"]["l1"]["w"] for lp in layers]),       # (L, d, ffh)
        "l_fb1": jnp.stack([lp["ff"]["l1"]["b"] for lp in layers]),       # (L, 1, ffh)
        "l_fw2": jnp.stack([lp["ff"]["l2"]["w"] for lp in layers]),       # (L, ffh, d)
        "l_f_vecs": jnp.stack([cat([lp["ff"]["l2"]["b"], lp["ff_ln"]["g"],
                                    lp["ff_ln"]["b"]]) for lp in layers]),  # (L, 3, d)
        "pc_vecs": cat([params["post_ln"]["g"], params["post_ln"]["b"],
                        params["classifier"]["l1"]["b"]]),                # (3, d)
        "cw1": params["classifier"]["l1"]["w"],
        "cw2": params["classifier"]["l2"]["w"],
        "cb2": params["classifier"]["l2"]["b"],
    }
    del packed["x_dummy"]
    packed["_num_layers"] = len(layers)
    packed["_P"] = P
    packed["_d"] = d
    return packed


# ---------------------------------------------------------------------------
# Forward pass: ONE pallas_call for the whole network.
# ---------------------------------------------------------------------------
def proteus_forward(x_expr, xy, packed, num_heads):
    bs = x_expr.shape[0]
    P = packed["_P"]
    d = packed["_d"]
    num_layers = packed["_num_layers"]
    num_classes = packed["cw2"].shape[-1]

    kernel = functools.partial(_proteus_kernel,
                               num_layers=num_layers, num_heads=num_heads)

    # NOTE: for large bs, add a batch-tiled "parallel" grid axis here (two TCs
    # on v7x), halve the tile for v7x's 64 MiB VMEM, and emit a lane-dense
    # (128-wide) classifier slab; at bs=8 a single grid step is optimal.
    logits, attw = pl.pallas_call(
        kernel,
        out_shape=(jax.ShapeDtypeStruct((bs, num_classes), jnp.float32),
                   jax.ShapeDtypeStruct((bs, P), jnp.float32)),
    )(x_expr, xy,
      packed["sw1"], packed["s_vecs"], packed["sw2"],
      packed["qw1a"], packed["qw1b"], packed["qw2"], packed["q_vecs"],
      packed["me"], packed["kv_w1"], packed["kv_vecs1"],
      packed["kv_w2"], packed["kv_vecs2"],
      packed["et"],
      packed["l_wqkvo"], packed["l_attn_vecs"],
      packed["l_fw1"], packed["l_fb1"], packed["l_fw2"], packed["l_f_vecs"],
      packed["pc_vecs"], packed["cw1"], packed["cw2"], packed["cb2"])

    return logits, attw.reshape(bs, 1, P)   # (bs, C), (bs, 1 query, P keys)


# ---------------------------------------------------------------------------
if __name__ == "__main__":
    # small, module-consistent config (module defaults: 6 layers, 8 heads)
    bs = 8
    P = 32                  # number of markers / genes
    marker_embed_dim = 64
    d_model = 128
    num_heads = 8
    num_layers = 6
    num_classes = 18
    coord_embed_dim = 128
    hidden_kv = 256
    ff_hidden = 4 * d_model

    root = jax.random.PRNGKey(0)
    kp, kx, ky = jax.random.split(root, 3)
    params = init_params(kp, P, marker_embed_dim, d_model, coord_embed_dim,
                         hidden_kv, ff_hidden, num_classes, num_layers)
    packed = pack_params(params, num_heads)

    x_expr = jax.random.normal(kx, (bs, P), dtype=jnp.float32)
    xy = jax.random.uniform(ky, (bs, 2), dtype=jnp.float32)

    fwd = jax.jit(lambda xe, c: proteus_forward(xe, c, packed, num_heads))
    logits, attn_weights = fwd(x_expr, xy)
    jax.block_until_ready((logits, attn_weights))

    assert logits.shape == (bs, num_classes), logits.shape
    assert attn_weights.shape == (bs, 1, P), attn_weights.shape
    assert bool(jnp.all(jnp.isfinite(logits)))
    # attention rows are head-averaged softmaxes -> sum to 1 (exact division
    # is used on the emitted last-layer weights)
    assert bool(jnp.allclose(jnp.sum(attn_weights, axis=-1), 1.0, atol=1e-4))
    print("KERNEL_OK")
</pallas_src>

<mosaic_0001>
module attributes {stable_mosaic.version = 11 : i64} {
  func.func @_proteus_kernel(%arg0: memref<8x32xf32, #tpu.memory_space<vmem>>, %arg1: memref<8x2xf32, #tpu.memory_space<vmem>>, %arg2: memref<2x128xf32, #tpu.memory_space<vmem>>, %arg3: memref<2x128xf32, #tpu.memory_space<vmem>>, %arg4: memref<128x128xbf16, #tpu.memory_space<vmem>>, %arg5: memref<32x128xbf16, #tpu.memory_space<vmem>>, %arg6: memref<128x128xbf16, #tpu.memory_space<vmem>>, %arg7: memref<128x128xbf16, #tpu.memory_space<vmem>>, %arg8: memref<6x128xf32, #tpu.memory_space<vmem>>, %arg9: memref<32x64xf32, #tpu.memory_space<vmem>>, %arg10: memref<2x64x256xbf16, #tpu.memory_space<vmem>>, %arg11: memref<2x3x256xf32, #tpu.memory_space<vmem>>, %arg12: memref<2x256x128xbf16, #tpu.memory_space<vmem>>, %arg13: memref<2x3x128xf32, #tpu.memory_space<vmem>>, %arg14: memref<8x128xf32, #tpu.memory_space<vmem>>, %arg15: memref<24x128x128xbf16, #tpu.memory_space<vmem>>, %arg16: memref<6x6x128xf32, #tpu.memory_space<vmem>>, %arg17: memref<6x128x512xbf16, #tpu.memory_space<vmem>>, %arg18: memref<6x1x512xf32, #tpu.memory_space<vmem>>, %arg19: memref<6x512x128xbf16, #tpu.memory_space<vmem>>, %arg20: memref<6x3x128xf32, #tpu.memory_space<vmem>>, %arg21: memref<3x128xf32, #tpu.memory_space<vmem>>, %arg22: memref<128x128xbf16, #tpu.memory_space<vmem>>, %arg23: memref<128x18xbf16, #tpu.memory_space<vmem>>, %arg24: memref<1x18xf32, #tpu.memory_space<vmem>>, %arg25: memref<8x18xf32, #tpu.memory_space<vmem>>, %arg26: memref<8x32xf32, #tpu.memory_space<vmem>>) attributes {dimension_semantics = [], scalar_prefetch = 0 : i64, scratch_operands = 0 : i64, tpu.core_type = #tpu.core_type<tc>} {
    %c0 = arith.constant 0 : index
    %c0_0 = arith.constant 0 : index
    %0 = vector.load %arg1[%c0, %c0_0] : memref<8x2xf32, #tpu.memory_space<vmem>>, vector<8x2xf32>
    %c0_1 = arith.constant 0 : index
    %c0_2 = arith.constant 0 : index
    %1 = vector.load %arg2[%c0_1, %c0_2] : memref<2x128xf32, #tpu.memory_space<vmem>>, vector<2x128xf32>
    %c0_3 = arith.constant 0 : index
    %c0_4 = arith.constant 0 : index
    %2 = vector.load %arg3[%c0_3, %c0_4] : memref<2x128xf32, #tpu.memory_space<vmem>>, vector<2x128xf32>
    %3 = vector.extract_strided_slice %0 {offsets = [0, 0], sizes = [8, 1], strides = [1, 1]} : vector<8x2xf32> to vector<8x1xf32>
    %4 = vector.extract_strided_slice %1 {offsets = [0, 0], sizes = [1, 128], strides = [1, 1]} : vector<2x128xf32> to vector<1x128xf32>
    %5 = vector.broadcast %3 : vector<8x1xf32> to vector<8x128xf32>
    %6 = vector.broadcast %4 : vector<1x128xf32> to vector<8x128xf32>
    %7 = arith.mulf %5, %6 : vector<8x128xf32>
    %8 = vector.extract_strided_slice %0 {offsets = [0, 1], sizes = [8, 1], strides = [1, 1]} : vector<8x2xf32> to vector<8x1xf32>
    %9 = vector.extract_strided_slice %1 {offsets = [1, 0], sizes = [1, 128], strides = [1, 1]} : vector<2x128xf32> to vector<1x128xf32>
    %10 = vector.broadcast %8 : vector<8x1xf32> to vector<8x128xf32>
    %11 = vector.broadcast %9 : vector<1x128xf32> to vector<8x128xf32>
    %12 = arith.mulf %10, %11 : vector<8x128xf32>
    %13 = arith.addf %7, %12 : vector<8x128xf32>
    %14 = vector.extract_strided_slice %2 {offsets = [0, 0], sizes = [1, 128], strides = [1, 1]} : vector<2x128xf32> to vector<1x128xf32>
    %15 = vector.broadcast %14 : vector<1x128xf32> to vector<8x128xf32>
    %16 = arith.addf %13, %15 : vector<8x128xf32>
    %cst = arith.constant 0.000000e+00 : f32
    %17 = vector.broadcast %cst : f32 to vector<8x128xf32>
    %18 = arith.maximumf %16, %17 : vector<8x128xf32>
    %c0_5 = arith.constant 0 : index
    %c0_6 = arith.constant 0 : index
    %19 = vector.load %arg4[%c0_5, %c0_6] : memref<128x128xbf16, #tpu.memory_space<vmem>>, vector<128x128xbf16>
    %20 = arith.truncf %18 : vector<8x128xf32> to vector<8x128xbf16>
    %cst_7 = arith.constant dense<0.000000e+00> : vector<8x128xf32>
    %21 = tpu.matmul %20, %19, %cst_7 {dimension_numbers = #tpu.dot_dimension_numbers<[1], [0], [0], [1], [0, 0, 1, 1], [], []>} : vector<8x128xbf16>, vector<128x128xbf16>, vector<8x128xf32> -> vector<8x128xf32>
    %22 = vector.extract_strided_slice %2 {offsets = [1, 0], sizes = [1, 128], strides = [1, 1]} : vector<2x128xf32> to vector<1x128xf32>
    %23 = vector.broadcast %22 : vector<1x128xf32> to vector<8x128xf32>
    %24 = arith.addf %21, %23 : vector<8x128xf32>
    %cst_8 = arith.constant 0.000000e+00 : f32
    %25 = vector.broadcast %cst_8 : f32 to vector<8x128xf32>
    %26 = arith.maximumf %24, %25 : vector<8x128xf32>
    %c0_9 = arith.constant 0 : index
    %c0_10 = arith.constant 0 : index
    %27 = vector.load %arg8[%c0_9, %c0_10] : memref<6x128xf32, #tpu.memory_space<vmem>>, vector<6x128xf32>
    %c0_11 = arith.constant 0 : index
    %c0_12 = arith.constant 0 : index
    %28 = vector.load %arg0[%c0_11, %c0_12] : memref<8x32xf32, #tpu.memory_space<vmem>>, vector<8x32xf32>
    %c0_13 = arith.constant 0 : index
    %c0_14 = arith.constant 0 : index
    %29 = vector.load %arg5[%c0_13, %c0_14] : memref<32x128xbf16, #tpu.memory_space<vmem>>, vector<32x128xbf16>
    %30 = arith.truncf %28 : vector<8x32xf32> to vector<8x32xbf16>
    %cst_15 = arith.constant dense<0.000000e+00> : vector<8x128xf32>
    %31 = tpu.matmul %30, %29, %cst_15 {dimension_numbers = #tpu.dot_dimension_numbers<[1], [0], [0], [1], [0, 0, 1, 1], [], []>} : vector<8x32xbf16>, vector<32x128xbf16>, vector<8x128xf32> -> vector<8x128xf32>
    %c0_16 = arith.constant 0 : index
    %c0_17 = arith.constant 0 : index
    %32 = vector.load %arg6[%c0_16, %c0_17] : memref<128x128xbf16, #tpu.memory_space<vmem>>, vector<128x128xbf16>
    %33 = arith.truncf %26 : vector<8x128xf32> to vector<8x128xbf16>
    %cst_18 = arith.constant dense<0.000000e+00> : vector<8x128xf32>
    %34 = tpu.matmul %33, %32, %cst_18 {dimension_numbers = #tpu.dot_dimension_numbers<[1], [0], [0], [1], [0, 0, 1, 1], [], []>} : vector<8x128xbf16>, vector<128x128xbf16>, vector<8x128xf32> -> vector<8x128xf32>
    %35 = arith.addf %31, %34 : vector<8x128xf32>
    %36 = vector.extract_strided_slice %27 {offsets = [0, 0], sizes = [1, 128], strides = [1, 1]} : vector<6x128xf32> to vector<1x128xf32>
    %37 = vector.broadcast %36 : vector<1x128xf32> to vector<8x128xf32>
    %38 = arith.addf %35, %37 : vector<8x128xf32>
    %39 = vector.extract_strided_slice %27 {offsets = [1, 0], sizes = [1, 128], strides = [1, 1]} : vector<6x128xf32> to vector<1x128xf32>
    %40 = vector.extract_strided_slice %27 {offsets = [2, 0], sizes = [1, 128], strides = [1, 1]} : vector<6x128xf32> to vector<1x128xf32>
    %cst_19 = arith.constant dense<0.000000e+00> : vector<8xf32>
    %41 = vector.multi_reduction <add>, %38, %cst_19 [1] : vector<8x128xf32> to vector<8xf32>
    %42 = vector.shape_cast %41 : vector<8xf32> to vector<8x1xf32>
    %cst_20 = arith.constant 1.280000e+02 : f32
    %43 = vector.broadcast %cst_20 : f32 to vector<8x1xf32>
    %44 = arith.divf %42, %43 : vector<8x1xf32>
    %45 = vector.broadcast %44 : vector<8x1xf32> to vector<8x128xf32>
    %46 = arith.subf %38, %45 : vector<8x128xf32>
    %47 = arith.mulf %46, %46 : vector<8x128xf32>
    %cst_21 = arith.constant dense<0.000000e+00> : vector<8xf32>
    %48 = vector.multi_reduction <add>, %47, %cst_21 [1] : vector<8x128xf32> to vector<8xf32>
    %49 = vector.shape_cast %48 : vector<8xf32> to vector<8x1xf32>
    %cst_22 = arith.constant 1.280000e+02 : f32
    %50 = vector.broadcast %cst_22 : f32 to vector<8x1xf32>
    %51 = arith.divf %49, %50 : vector<8x1xf32>
    %52 = vector.broadcast %44 : vector<8x1xf32> to vector<8x128xf32>
    %53 = arith.subf %38, %52 : vector<8x128xf32>
    %cst_23 = arith.constant 9.99999974E-6 : f32
    %54 = vector.broadcast %cst_23 : f32 to vector<8x1xf32>
    %55 = arith.addf %51, %54 : vector<8x1xf32>
    %56 = math.rsqrt %55 : vector<8x1xf32>
    %57 = vector.broadcast %56 : vector<8x1xf32> to vector<8x128xf32>
    %58 = arith.mulf %53, %57 : vector<8x128xf32>
    %59 = vector.broadcast %39 : vector<1x128xf32> to vector<8x128xf32>
    %60 = arith.mulf %58, %59 : vector<8x128xf32>
    %61 = vector.broadcast %40 : vector<1x128xf32> to vector<8x128xf32>
    %62 = arith.addf %60, %61 : vector<8x128xf32>
    %cst_24 = arith.constant 0.000000e+00 : f32
    %63 = vector.broadcast %cst_24 : f32 to vector<8x128xf32>
    %64 = arith.maximumf %62, %63 : vector<8x128xf32>
    %c0_25 = arith.constant 0 : index
    %c0_26 = arith.constant 0 : index
    %65 = vector.load %arg7[%c0_25, %c0_26] : memref<128x128xbf16, #tpu.memory_space<vmem>>, vector<128x128xbf16>
    %66 = arith.truncf %64 : vector<8x128xf32> to vector<8x128xbf16>
    %cst_27 = arith.constant dense<0.000000e+00> : vector<8x128xf32>
    %67 = tpu.matmul %66, %65, %cst_27 {dimension_numbers = #tpu.dot_dimension_numbers<[1], [0], [0], [1], [0, 0, 1, 1], [], []>} : vector<8x128xbf16>, vector<128x128xbf16>, vector<8x128xf32> -> vector<8x128xf32>
    %68 = vector.extract_strided_slice %27 {offsets = [3, 0], sizes = [1, 128], strides = [1, 1]} : vector<6x128xf32> to vector<1x128xf32>
    %69 = vector.broadcast %68 : vector<1x128xf32> to vector<8x128xf32>
    %70 = arith.addf %67, %69 : vector<8x128xf32>
    %71 = vector.extract_strided_slice %27 {offsets = [4, 0], sizes = [1, 128], strides = [1, 1]} : vector<6x128xf32> to vector<1x128xf32>
    %72 = vector.extract_strided_slice %27 {offsets = [5, 0], sizes = [1, 128], strides = [1, 1]} : vector<6x128xf32> to vector<1x128xf32>
    %cst_28 = arith.constant dense<0.000000e+00> : vector<8xf32>
    %73 = vector.multi_reduction <add>, %70, %cst_28 [1] : vector<8x128xf32> to vector<8xf32>
    %74 = vector.shape_cast %73 : vector<8xf32> to vector<8x1xf32>
    %cst_29 = arith.constant 1.280000e+02 : f32
    %75 = vector.broadcast %cst_29 : f32 to vector<8x1xf32>
    %76 = arith.divf %74, %75 : vector<8x1xf32>
    %77 = vector.broadcast %76 : vector<8x1xf32> to vector<8x128xf32>
    %78 = arith.subf %70, %77 : vector<8x128xf32>
    %79 = arith.mulf %78, %78 : vector<8x128xf32>
    %cst_30 = arith.constant dense<0.000000e+00> : vector<8xf32>
    %80 = vector.multi_reduction <add>, %79, %cst_30 [1] : vector<8x128xf32> to vector<8xf32>
    %81 = vector.shape_cast %80 : vector<8xf32> to vector<8x1xf32>
    %cst_31 = arith.constant 1.280000e+02 : f32
    %82 = vector.broadcast %cst_31 : f32 to vector<8x1xf32>
    %83 = arith.divf %81, %82 : vector<8x1xf32>
    %84 = vector.broadcast %76 : vector<8x1xf32> to vector<8x128xf32>
    %85 = arith.subf %70, %84 : vector<8x128xf32>
    %cst_32 = arith.constant 9.99999974E-6 : f32
    %86 = vector.broadcast %cst_32 : f32 to vector<8x1xf32>
    %87 = arith.addf %83, %86 : vector<8x1xf32>
    %88 = math.rsqrt %87 : vector<8x1xf32>
    %89 = vector.broadcast %88 : vector<8x1xf32> to vector<8x128xf32>
    %90 = arith.mulf %85, %89 : vector<8x128xf32>
    %91 = vector.broadcast %71 : vector<1x128xf32> to vector<8x128xf32>
    %92 = arith.mulf %90, %91 : vector<8x128xf32>
    %93 = vector.broadcast %72 : vector<1x128xf32> to vector<8x128xf32>
    %94 = arith.addf %92, %93 : vector<8x128xf32>
    %cst_33 = arith.constant 0.000000e+00 : f32
    %95 = vector.broadcast %cst_33 : f32 to vector<8x128xf32>
    %96 = arith.maximumf %94, %95 : vector<8x128xf32>
    %c0_34 = arith.constant 0 : index
    %c0_35 = arith.constant 0 : index
    %97 = vector.load %arg9[%c0_34, %c0_35] : memref<32x64xf32, #tpu.memory_space<vmem>>, vector<32x64xf32>
    %c0_36 = arith.constant 0 : index
    %c0_37 = arith.constant 0 : index
    %c0_38 = arith.constant 0 : index
    %98 = vector.load %arg11[%c0_36, %c0_37, %c0_38] : memref<2x3x256xf32, #tpu.memory_space<vmem>>, vector<2x3x256xf32>
    %c0_39 = arith.constant 0 : index
    %c0_40 = arith.constant 0 : index
    %c0_41 = arith.constant 0 : index
    %99 = vector.load %arg13[%c0_39, %c0_40, %c0_41] : memref<2x3x128xf32, #tpu.memory_space<vmem>>, vector<2x3x128xf32>
    %c0_42 = arith.constant 0 : index
    %c0_43 = arith.constant 0 : index
    %c0_44 = arith.constant 0 : index
    %100 = vector.load %arg10[%c0_42, %c0_43, %c0_44] : memref<2x64x256xbf16, #tpu.memory_space<vmem>>, vector<1x64x256xbf16>
    %101 = vector.shape_cast %100 : vector<1x64x256xbf16> to vector<64x256xbf16>
    %102 = arith.truncf %97 : vector<32x64xf32> to vector<32x64xbf16>
    %cst_45 = arith.constant dense<0.000000e+00> : vector<32x256xf32>
    %103 = tpu.matmul %102, %101, %cst_45 {dimension_numbers = #tpu.dot_dimension_numbers<[1], [0], [0], [1], [0, 0, 1, 1], [], []>} : vector<32x64xbf16>, vector<64x256xbf16>, vector<32x256xf32> -> vector<32x256xf32>
    %104 = vector.extract_strided_slice %98 {offsets = [0, 0, 0], sizes = [1, 1, 256], strides = [1, 1, 1]} : vector<2x3x256xf32> to vector<1x1x256xf32>
    %105 = vector.shape_cast %104 : vector<1x1x256xf32> to vector<1x256xf32>
    %106 = vector.broadcast %105 : vector<1x256xf32> to vector<32x256xf32>
    %107 = arith.addf %103, %106 : vector<32x256xf32>
    %108 = vector.extract_strided_slice %98 {offsets = [0, 1, 0], sizes = [1, 1, 256], strides = [1, 1, 1]} : vector<2x3x256xf32> to vector<1x1x256xf32>
    %109 = vector.shape_cast %108 : vector<1x1x256xf32> to vector<1x256xf32>
    %110 = vector.extract_strided_slice %98 {offsets = [0, 2, 0], sizes = [1, 1, 256], strides = [1, 1, 1]} : vector<2x3x256xf32> to vector<1x1x256xf32>
    %111 = vector.shape_cast %110 : vector<1x1x256xf32> to vector<1x256xf32>
    %cst_46 = arith.constant dense<0.000000e+00> : vector<32xf32>
    %112 = vector.multi_reduction <add>, %107, %cst_46 [1] : vector<32x256xf32> to vector<32xf32>
    %113 = vector.shape_cast %112 : vector<32xf32> to vector<32x1xf32>
    %cst_47 = arith.constant 2.560000e+02 : f32
    %114 = vector.broadcast %cst_47 : f32 to vector<32x1xf32>
    %115 = arith.divf %113, %114 : vector<32x1xf32>
    %116 = vector.broadcast %115 : vector<32x1xf32> to vector<32x256xf32>
    %117 = arith.subf %107, %116 : vector<32x256xf32>
    %118 = arith.mulf %117, %117 : vector<32x256xf32>
    %cst_48 = arith.constant dense<0.000000e+00> : vector<32xf32>
    %119 = vector.multi_reduction <add>, %118, %cst_48 [1] : vector<32x256xf32> to vector<32xf32>
    %120 = vector.shape_cast %119 : vector<32xf32> to vector<32x1xf32>
    %cst_49 = arith.constant 2.560000e+02 : f32
    %121 = vector.broadcast %cst_49 : f32 to vector<32x1xf32>
    %122 = arith.divf %120, %121 : vector<32x1xf32>
    %123 = vector.broadcast %115 : vector<32x1xf32> to vector<32x256xf32>
    %124 = arith.subf %107, %123 : vector<32x256xf32>
    %cst_50 = arith.constant 9.99999974E-6 : f32
    %125 = vector.broadcast %cst_50 : f32 to vector<32x1xf32>
    %126 = arith.addf %122, %125 : vector<32x1xf32>
    %127 = math.rsqrt %126 : vector<32x1xf32>
    %128 = vector.broadcast %127 : vector<32x1xf32> to vector<32x256xf32>
    %129 = arith.mulf %124, %128 : vector<32x256xf32>
    %130 = vector.broadcast %109 : vector<1x256xf32> to vector<32x256xf32>
    %131 = arith.mulf %129, %130 : vector<32x256xf32>
    %132 = vector.broadcast %111 : vector<1x256xf32> to vector<32x256xf32>
    %133 = arith.addf %131, %132 : vector<32x256xf32>
    %cst_51 = arith.constant 0.000000e+00 : f32
    %134 = vector.broadcast %cst_51 : f32 to vector<32x256xf32>
    %135 = arith.maximumf %133, %134 : vector<32x256xf32>
    %c0_52 = arith.constant 0 : index
    %c0_53 = arith.constant 0 : index
    %c0_54 = arith.constant 0 : index
    %136 = vector.load %arg12[%c0_52, %c0_53, %c0_54] : memref<2x256x128xbf16, #tpu.memory_space<vmem>>, vector<1x256x128xbf16>
    %137 = vector.shape_cast %136 : vector<1x256x128xbf16> to vector<256x128xbf16>
    %138 = arith.truncf %135 : vector<32x256xf32> to vector<32x256xbf16>
    %cst_55 = arith.constant dense<0.000000e+00> : vector<32x128xf32>
    %139 = tpu.matmul %138, %137, %cst_55 {dimension_numbers = #tpu.dot_dimension_numbers<[1], [0], [0], [1], [0, 0, 1, 1], [], []>} : vector<32x256xbf16>, vector<256x128xbf16>, vector<32x128xf32> -> vector<32x128xf32>
    %140 = vector.extract_strided_slice %99 {offsets = [0, 0, 0], sizes = [1, 1, 128], strides = [1, 1, 1]} : vector<2x3x128xf32> to vector<1x1x128xf32>
    %141 = vector.shape_cast %140 : vector<1x1x128xf32> to vector<1x128xf32>
    %142 = vector.broadcast %141 : vector<1x128xf32> to vector<32x128xf32>
    %143 = arith.addf %139, %142 : vector<32x128xf32>
    %144 = vector.extract_strided_slice %99 {offsets = [0, 1, 0], sizes = [1, 1, 128], strides = [1, 1, 1]} : vector<2x3x128xf32> to vector<1x1x128xf32>
    %145 = vector.shape_cast %144 : vector<1x1x128xf32> to vector<1x128xf32>
    %146 = vector.extract_strided_slice %99 {offsets = [0, 2, 0], sizes = [1, 1, 128], strides = [1, 1, 1]} : vector<2x3x128xf32> to vector<1x1x128xf32>
    %147 = vector.shape_cast %146 : vector<1x1x128xf32> to vector<1x128xf32>
    %cst_56 = arith.constant dense<0.000000e+00> : vector<32xf32>
    %148 = vector.multi_reduction <add>, %143, %cst_56 [1] : vector<32x128xf32> to vector<32xf32>
    %149 = vector.shape_cast %148 : vector<32xf32> to vector<32x1xf32>
    %cst_57 = arith.constant 1.280000e+02 : f32
    %150 = vector.broadcast %cst_57 : f32 to vector<32x1xf32>
    %151 = arith.divf %149, %150 : vector<32x1xf32>
    %152 = vector.broadcast %151 : vector<32x1xf32> to vector<32x128xf32>
    %153 = arith.subf %143, %152 : vector<32x128xf32>
    %154 = arith.mulf %153, %153 : vector<32x128xf32>
    %cst_58 = arith.constant dense<0.000000e+00> : vector<32xf32>
    %155 = vector.multi_reduction <add>, %154, %cst_58 [1] : vector<32x128xf32> to vector<32xf32>
    %156 = vector.shape_cast %155 : vector<32xf32> to vector<32x1xf32>
    %cst_59 = arith.constant 1.280000e+02 : f32
    %157 = vector.broadcast %cst_59 : f32 to vector<32x1xf32>
    %158 = arith.divf %156, %157 : vector<32x1xf32>
    %159 = vector.broadcast %151 : vector<32x1xf32> to vector<32x128xf32>
    %160 = arith.subf %143, %159 : vector<32x128xf32>
    %cst_60 = arith.constant 9.99999974E-6 : f32
    %161 = vector.broadcast %cst_60 : f32 to vector<32x1xf32>
    %162 = arith.addf %158, %161 : vector<32x1xf32>
    %163 = math.rsqrt %162 : vector<32x1xf32>
    %164 = vector.broadcast %163 : vector<32x1xf32> to vector<32x128xf32>
    %165 = arith.mulf %160, %164 : vector<32x128xf32>
    %166 = vector.broadcast %145 : vector<1x128xf32> to vector<32x128xf32>
    %167 = arith.mulf %165, %166 : vector<32x128xf32>
    %168 = vector.broadcast %147 : vector<1x128xf32> to vector<32x128xf32>
    %169 = arith.addf %167, %168 : vector<32x128xf32>
    %cst_61 = arith.constant 0.000000e+00 : f32
    %170 = vector.broadcast %cst_61 : f32 to vector<32x128xf32>
    %171 = arith.maximumf %169, %170 : vector<32x128xf32>
    %c1 = arith.constant 1 : index
    %c0_62 = arith.constant 0 : index
    %c0_63 = arith.constant 0 : index
    %172 = vector.load %arg10[%c1, %c0_62, %c0_63] : memref<2x64x256xbf16, #tpu.memory_space<vmem>>, vector<1x64x256xbf16>
    %173 = vector.shape_cast %172 : vector<1x64x256xbf16> to vector<64x256xbf16>
    %174 = arith.truncf %97 : vector<32x64xf32> to vector<32x64xbf16>
    %cst_64 = arith.constant dense<0.000000e+00> : vector<32x256xf32>
    %175 = tpu.matmul %174, %173, %cst_64 {dimension_numbers = #tpu.dot_dimension_numbers<[1], [0], [0], [1], [0, 0, 1, 1], [], []>} : vector<32x64xbf16>, vector<64x256xbf16>, vector<32x256xf32> -> vector<32x256xf32>
    %176 = vector.extract_strided_slice %98 {offsets = [1, 0, 0], sizes = [1, 1, 256], strides = [1, 1, 1]} : vector<2x3x256xf32> to vector<1x1x256xf32>
    %177 = vector.shape_cast %176 : vector<1x1x256xf32> to vector<1x256xf32>
    %178 = vector.broadcast %177 : vector<1x256xf32> to vector<32x256xf32>
    %179 = arith.addf %175, %178 : vector<32x256xf32>
    %180 = vector.extract_strided_slice %98 {offsets = [1, 1, 0], sizes = [1, 1, 256], strides = [1, 1, 1]} : vector<2x3x256xf32> to vector<1x1x256xf32>
    %181 = vector.shape_cast %180 : vector<1x1x256xf32> to vector<1x256xf32>
    %182 = vector.extract_strided_slice %98 {offsets = [1, 2, 0], sizes = [1, 1, 256], strides = [1, 1, 1]} : vector<2x3x256xf32> to vector<1x1x256xf32>
    %183 = vector.shape_cast %182 : vector<1x1x256xf32> to vector<1x256xf32>
    %cst_65 = arith.constant dense<0.000000e+00> : vector<32xf32>
    %184 = vector.multi_reduction <add>, %179, %cst_65 [1] : vector<32x256xf32> to vector<32xf32>
    %185 = vector.shape_cast %184 : vector<32xf32> to vector<32x1xf32>
    %cst_66 = arith.constant 2.560000e+02 : f32
    %186 = vector.broadcast %cst_66 : f32 to vector<32x1xf32>
    %187 = arith.divf %185, %186 : vector<32x1xf32>
    %188 = vector.broadcast %187 : vector<32x1xf32> to vector<32x256xf32>
    %189 = arith.subf %179, %188 : vector<32x256xf32>
    %190 = arith.mulf %189, %189 : vector<32x256xf32>
    %cst_67 = arith.constant dense<0.000000e+00> : vector<32xf32>
    %191 = vector.multi_reduction <add>, %190, %cst_67 [1] : vector<32x256xf32> to vector<32xf32>
    %192 = vector.shape_cast %191 : vector<32xf32> to vector<32x1xf32>
    %cst_68 = arith.constant 2.560000e+02 : f32
    %193 = vector.broadcast %cst_68 : f32 to vector<32x1xf32>
    %194 = arith.divf %192, %193 : vector<32x1xf32>
    %195 = vector.broadcast %187 : vector<32x1xf32> to vector<32x256xf32>
    %196 = arith.subf %179, %195 : vector<32x256xf32>
    %cst_69 = arith.constant 9.99999974E-6 : f32
    %197 = vector.broadcast %cst_69 : f32 to vector<32x1xf32>
    %198 = arith.addf %194, %197 : vector<32x1xf32>
    %199 = math.rsqrt %198 : vector<32x1xf32>
    %200 = vector.broadcast %199 : vector<32x1xf32> to vector<32x256xf32>
    %201 = arith.mulf %196, %200 : vector<32x256xf32>
    %202 = vector.broadcast %181 : vector<1x256xf32> to vector<32x256xf32>
    %203 = arith.mulf %201, %202 : vector<32x256xf32>
    %204 = vector.broadcast %183 : vector<1x256xf32> to vector<32x256xf32>
    %205 = arith.addf %203, %204 : vector<32x256xf32>
    %cst_70 = arith.constant 0.000000e+00 : f32
    %206 = vector.broadcast %cst_70 : f32 to vector<32x256xf32>
    %207 = arith.maximumf %205, %206 : vector<32x256xf32>
    %c1_71 = arith.constant 1 : index
    %c0_72 = arith.constant 0 : index
    %c0_73 = arith.constant 0 : index
    %208 = vector.load %arg12[%c1_71, %c0_72, %c0_73] : memref<2x256x128xbf16, #tpu.memory_space<vmem>>, vector<1x256x128xbf16>
    %209 = vector.shape_cast %208 : vector<1x256x128xbf16> to vector<256x128xbf16>
    %210 = arith.truncf %207 : vector<32x256xf32> to vector<32x256xbf16>
    %cst_74 = arith.constant dense<0.000000e+00> : vector<32x128xf32>
    %211 = tpu.matmul %210, %209, %cst_74 {dimension_numbers = #tpu.dot_dimension_numbers<[1], [0], [0], [1], [0, 0, 1, 1], [], []>} : vector<32x256xbf16>, vector<256x128xbf16>, vector<32x128xf32> -> vector<32x128xf32>
    %212 = vector.extract_strided_slice %99 {offsets = [1, 0, 0], sizes = [1, 1, 128], strides = [1, 1, 1]} : vector<2x3x128xf32> to vector<1x1x128xf32>
    %213 = vector.shape_cast %212 : vector<1x1x128xf32> to vector<1x128xf32>
    %214 = vector.broadcast %213 : vector<1x128xf32> to vector<32x128xf32>
    %215 = arith.addf %211, %214 : vector<32x128xf32>
    %216 = vector.extract_strided_slice %99 {offsets = [1, 1, 0], sizes = [1, 1, 128], strides = [1, 1, 1]} : vector<2x3x128xf32> to vector<1x1x128xf32>
    %217 = vector.shape_cast %216 : vector<1x1x128xf32> to vector<1x128xf32>
    %218 = vector.extract_strided_slice %99 {offsets = [1, 2, 0], sizes = [1, 1, 128], strides = [1, 1, 1]} : vector<2x3x128xf32> to vector<1x1x128xf32>
    %219 = vector.shape_cast %218 : vector<1x1x128xf32> to vector<1x128xf32>
    %cst_75 = arith.constant dense<0.000000e+00> : vector<32xf32>
    %220 = vector.multi_reduction <add>, %215, %cst_75 [1] : vector<32x128xf32> to vector<32xf32>
    %221 = vector.shape_cast %220 : vector<32xf32> to vector<32x1xf32>
    %cst_76 = arith.constant 1.280000e+02 : f32
    %222 = vector.broadcast %cst_76 : f32 to vector<32x1xf32>
    %223 = arith.divf %221, %222 : vector<32x1xf32>
    %224 = vector.broadcast %223 : vector<32x1xf32> to vector<32x128xf32>
    %225 = arith.subf %215, %224 : vector<32x128xf32>
    %226 = arith.mulf %225, %225 : vector<32x128xf32>
    %cst_77 = arith.constant dense<0.000000e+00> : vector<32xf32>
    %227 = vector.multi_reduction <add>, %226, %cst_77 [1] : vector<32x128xf32> to vector<32xf32>
    %228 = vector.shape_cast %227 : vector<32xf32> to vector<32x1xf32>
    %cst_78 = arith.constant 1.280000e+02 : f32
    %229 = vector.broadcast %cst_78 : f32 to vector<32x1xf32>
    %230 = arith.divf %228, %229 : vector<32x1xf32>
    %231 = vector.broadcast %223 : vector<32x1xf32> to vector<32x128xf32>
    %232 = arith.subf %215, %231 : vector<32x128xf32>
    %cst_79 = arith.constant 9.99999974E-6 : f32
    %233 = vector.broadcast %cst_79 : f32 to vector<32x1xf32>
    %234 = arith.addf %230, %233 : vector<32x1xf32>
    %235 = math.rsqrt %234 : vector<32x1xf32>
    %236 = vector.broadcast %235 : vector<32x1xf32> to vector<32x128xf32>
    %237 = arith.mulf %232, %236 : vector<32x128xf32>
    %238 = vector.broadcast %217 : vector<1x128xf32> to vector<32x128xf32>
    %239 = arith.mulf %237, %238 : vector<32x128xf32>
    %240 = vector.broadcast %219 : vector<1x128xf32> to vector<32x128xf32>
    %241 = arith.addf %239, %240 : vector<32x128xf32>
    %cst_80 = arith.constant 0.000000e+00 : f32
    %242 = vector.broadcast %cst_80 : f32 to vector<32x128xf32>
    %243 = arith.maximumf %241, %242 : vector<32x128xf32>
    %c0_81 = arith.constant 0 : index
    %c0_82 = arith.constant 0 : index
    %244 = vector.load %arg14[%c0_81, %c0_82] : memref<8x128xf32, #tpu.memory_space<vmem>>, vector<8x128xf32>
    %c0_83 = arith.constant 0 : index
    %c0_84 = arith.constant 0 : index
    %c0_85 = arith.constant 0 : index
    %245 = vector.load %arg16[%c0_83, %c0_84, %c0_85] : memref<6x6x128xf32, #tpu.memory_space<vmem>>, vector<1x6x128xf32>
    %246 = vector.shape_cast %245 : vector<1x6x128xf32> to vector<6x128xf32>
    %c0_86 = arith.constant 0 : index
    %c0_87 = arith.constant 0 : index
    %c0_88 = arith.constant 0 : index
    %247 = vector.load %arg15[%c0_86, %c0_87, %c0_88] : memref<24x128x128xbf16, #tpu.memory_space<vmem>>, vector<1x128x128xbf16>
    %248 = vector.shape_cast %247 : vector<1x128x128xbf16> to vector<128x128xbf16>
    %c1_89 = arith.constant 1 : index
    %c0_90 = arith.constant 0 : index
    %c0_91 = arith.constant 0 : index
    %249 = vector.load %arg15[%c1_89, %c0_90, %c0_91] : memref<24x128x128xbf16, #tpu.memory_space<vmem>>, vector<1x128x128xbf16>
    %250 = vector.shape_cast %249 : vector<1x128x128xbf16> to vector<128x128xbf16>
    %c2 = arith.constant 2 : index
    %c0_92 = arith.constant 0 : index
    %c0_93 = arith.constant 0 : index
    %251 = vector.load %arg15[%c2, %c0_92, %c0_93] : memref<24x128x128xbf16, #tpu.memory_space<vmem>>, vector<1x128x128xbf16>
    %252 = vector.shape_cast %251 : vector<1x128x128xbf16> to vector<128x128xbf16>
    %c3 = arith.constant 3 : index
    %c0_94 = arith.constant 0 : index
    %c0_95 = arith.constant 0 : index
    %253 = vector.load %arg15[%c3, %c0_94, %c0_95] : memref<24x128x128xbf16, #tpu.memory_space<vmem>>, vector<1x128x128xbf16>
    %254 = vector.shape_cast %253 : vector<1x128x128xbf16> to vector<128x128xbf16>
    %255 = arith.truncf %96 : vector<8x128xf32> to vector<8x128xbf16>
    %cst_96 = arith.constant dense<0.000000e+00> : vector<8x128xf32>
    %256 = tpu.matmul %255, %248, %cst_96 {dimension_numbers = #tpu.dot_dimension_numbers<[1], [0], [0], [1], [0, 0, 1, 1], [], []>} : vector<8x128xbf16>, vector<128x128xbf16>, vector<8x128xf32> -> vector<8x128xf32>
    %257 = vector.extract_strided_slice %246 {offsets = [0, 0], sizes = [1, 128], strides = [1, 1]} : vector<6x128xf32> to vector<1x128xf32>
    %258 = vector.broadcast %257 : vector<1x128xf32> to vector<8x128xf32>
    %259 = arith.addf %256, %258 : vector<8x128xf32>
    %260 = arith.truncf %171 : vector<32x128xf32> to vector<32x128xbf16>
    %cst_97 = arith.constant dense<0.000000e+00> : vector<32x128xf32>
    %261 = tpu.matmul %260, %250, %cst_97 {dimension_numbers = #tpu.dot_dimension_numbers<[1], [0], [0], [1], [0, 0, 1, 1], [], []>} : vector<32x128xbf16>, vector<128x128xbf16>, vector<32x128xf32> -> vector<32x128xf32>
    %262 = vector.extract_strided_slice %246 {offsets = [1, 0], sizes = [1, 128], strides = [1, 1]} : vector<6x128xf32> to vector<1x128xf32>
    %263 = vector.broadcast %262 : vector<1x128xf32> to vector<32x128xf32>
    %264 = arith.addf %261, %263 : vector<32x128xf32>
    %265 = arith.truncf %243 : vector<32x128xf32> to vector<32x128xbf16>
    %cst_98 = arith.constant dense<0.000000e+00> : vector<32x128xf32>
    %266 = tpu.matmul %265, %252, %cst_98 {dimension_numbers = #tpu.dot_dimension_numbers<[1], [0], [0], [1], [0, 0, 1, 1], [], []>} : vector<32x128xbf16>, vector<128x128xbf16>, vector<32x128xf32> -> vector<32x128xf32>
    %267 = vector.extract_strided_slice %246 {offsets = [2, 0], sizes = [1, 128], strides = [1, 1]} : vector<6x128xf32> to vector<1x128xf32>
    %268 = vector.broadcast %267 : vector<1x128xf32> to vector<32x128xf32>
    %269 = arith.addf %266, %268 : vector<32x128xf32>
    %270 = vector.shape_cast %259 : vector<8x128xf32> to vector<8x1x128xf32>
    %271 = vector.shape_cast %244 : vector<8x128xf32> to vector<1x8x128xf32>
    %272 = vector.broadcast %270 : vector<8x1x128xf32> to vector<8x8x128xf32>
    %273 = vector.broadcast %271 : vector<1x8x128xf32> to vector<8x8x128xf32>
    %274 = arith.mulf %272, %273 : vector<8x8x128xf32>
    %275 = vector.shape_cast %274 : vector<8x8x128xf32> to vector<64x128xf32>
    %276 = arith.truncf %275 : vector<64x128xf32> to vector<64x128xbf16>
    %277 = arith.truncf %264 : vector<32x128xf32> to vector<32x128xbf16>
    %cst_99 = arith.constant dense<0.000000e+00> : vector<64x32xf32>
    %278 = tpu.matmul %276, %277, %cst_99 {dimension_numbers = #tpu.dot_dimension_numbers<[1], [1], [0], [0], [0, 0, 1, 0], [], []>} : vector<64x128xbf16>, vector<32x128xbf16>, vector<64x32xf32> -> vector<64x32xf32>
    %cst_100 = arith.constant 2.500000e-01 : f32
    %279 = vector.broadcast %cst_100 : f32 to vector<64x32xf32>
    %280 = arith.mulf %278, %279 : vector<64x32xf32>
    %281 = vector.shape_cast %280 : vector<64x32xf32> to vector<8x8x32xf32>
    %cst_101 = arith.constant dense<0xFF800000> : vector<8x8xf32>
    %282 = vector.multi_reduction <maximumf>, %281, %cst_101 [2] : vector<8x8x32xf32> to vector<8x8xf32>
    %283 = vector.shape_cast %282 : vector<8x8xf32> to vector<8x8x1xf32>
    %284 = vector.broadcast %283 : vector<8x8x1xf32> to vector<8x8x32xf32>
    %285 = arith.subf %281, %284 : vector<8x8x32xf32>
    %286 = math.exp %285 : vector<8x8x32xf32>
    %cst_102 = arith.constant dense<0.000000e+00> : vector<8x8xf32>
    %287 = vector.multi_reduction <add>, %286, %cst_102 [2] : vector<8x8x32xf32> to vector<8x8xf32>
    %288 = vector.shape_cast %287 : vector<8x8xf32> to vector<8x8x1xf32>
    %289 = tpu.reciprocal %288 {approx = true} : vector<8x8x1xf32> -> vector<8x8x1xf32>
    %290 = vector.broadcast %289 : vector<8x8x1xf32> to vector<8x8x32xf32>
    %291 = arith.mulf %286, %290 : vector<8x8x32xf32>
    %292 = vector.shape_cast %291 : vector<8x8x32xf32> to vector<64x32xf32>
    %293 = arith.truncf %292 : vector<64x32xf32> to vector<64x32xbf16>
    %294 = arith.truncf %269 : vector<32x128xf32> to vector<32x128xbf16>
    %cst_103 = arith.constant dense<0.000000e+00> : vector<64x128xf32>
    %295 = tpu.matmul %293, %294, %cst_103 {dimension_numbers = #tpu.dot_dimension_numbers<[1], [0], [0], [1], [0, 0, 1, 1], [], []>} : vector<64x32xbf16>, vector<32x128xbf16>, vector<64x128xf32> -> vector<64x128xf32>
    %296 = vector.shape_cast %295 : vector<64x128xf32> to vector<8x8x128xf32>
    %297 = vector.shape_cast %244 : vector<8x128xf32> to vector<1x8x128xf32>
    %298 = vector.broadcast %297 : vector<1x8x128xf32> to vector<8x8x128xf32>
    %299 = arith.mulf %296, %298 : vector<8x8x128xf32>
    %cst_104 = arith.constant dense<0.000000e+00> : vector<8x128xf32>
    %300 = vector.multi_reduction <add>, %299, %cst_104 [1] : vector<8x8x128xf32> to vector<8x128xf32>
    %301 = arith.truncf %300 : vector<8x128xf32> to vector<8x128xbf16>
    %cst_105 = arith.constant dense<0.000000e+00> : vector<8x128xf32>
    %302 = tpu.matmul %301, %254, %cst_105 {dimension_numbers = #tpu.dot_dimension_numbers<[1], [0], [0], [1], [0, 0, 1, 1], [], []>} : vector<8x128xbf16>, vector<128x128xbf16>, vector<8x128xf32> -> vector<8x128xf32>
    %303 = vector.extract_strided_slice %246 {offsets = [3, 0], sizes = [1, 128], strides = [1, 1]} : vector<6x128xf32> to vector<1x128xf32>
    %304 = vector.broadcast %303 : vector<1x128xf32> to vector<8x128xf32>
    %305 = arith.addf %302, %304 : vector<8x128xf32>
    %306 = arith.addf %96, %305 : vector<8x128xf32>
    %307 = vector.extract_strided_slice %246 {offsets = [4, 0], sizes = [1, 128], strides = [1, 1]} : vector<6x128xf32> to vector<1x128xf32>
    %308 = vector.extract_strided_slice %246 {offsets = [5, 0], sizes = [1, 128], strides = [1, 1]} : vector<6x128xf32> to vector<1x128xf32>
    %cst_106 = arith.constant dense<0.000000e+00> : vector<8xf32>
    %309 = vector.multi_reduction <add>, %306, %cst_106 [1] : vector<8x128xf32> to vector<8xf32>
    %310 = vector.shape_cast %309 : vector<8xf32> to vector<8x1xf32>
    %cst_107 = arith.constant 1.280000e+02 : f32
    %311 = vector.broadcast %cst_107 : f32 to vector<8x1xf32>
    %312 = arith.divf %310, %311 : vector<8x1xf32>
    %313 = vector.broadcast %312 : vector<8x1xf32> to vector<8x128xf32>
    %314 = arith.subf %306, %313 : vector<8x128xf32>
    %315 = arith.mulf %314, %314 : vector<8x128xf32>
    %cst_108 = arith.constant dense<0.000000e+00> : vector<8xf32>
    %316 = vector.multi_reduction <add>, %315, %cst_108 [1] : vector<8x128xf32> to vector<8xf32>
    %317 = vector.shape_cast %316 : vector<8xf32> to vector<8x1xf32>
    %cst_109 = arith.constant 1.280000e+02 : f32
    %318 = vector.broadcast %cst_109 : f32 to vector<8x1xf32>
    %319 = arith.divf %317, %318 : vector<8x1xf32>
    %320 = vector.broadcast %312 : vector<8x1xf32> to vector<8x128xf32>
    %321 = arith.subf %306, %320 : vector<8x128xf32>
    %cst_110 = arith.constant 9.99999974E-6 : f32
    %322 = vector.broadcast %cst_110 : f32 to vector<8x1xf32>
    %323 = arith.addf %319, %322 : vector<8x1xf32>
    %324 = math.rsqrt %323 : vector<8x1xf32>
    %325 = vector.broadcast %324 : vector<8x1xf32> to vector<8x128xf32>
    %326 = arith.mulf %321, %325 : vector<8x128xf32>
    %327 = vector.broadcast %307 : vector<1x128xf32> to vector<8x128xf32>
    %328 = arith.mulf %326, %327 : vector<8x128xf32>
    %329 = vector.broadcast %308 : vector<1x128xf32> to vector<8x128xf32>
    %330 = arith.addf %328, %329 : vector<8x128xf32>
    %c0_111 = arith.constant 0 : index
    %c0_112 = arith.constant 0 : index
    %c0_113 = arith.constant 0 : index
    %331 = vector.load %arg20[%c0_111, %c0_112, %c0_113] : memref<6x3x128xf32, #tpu.memory_space<vmem>>, vector<1x3x128xf32>
    %332 = vector.shape_cast %331 : vector<1x3x128xf32> to vector<3x128xf32>
    %c0_114 = arith.constant 0 : index
    %c0_115 = arith.constant 0 : index
    %c0_116 = arith.constant 0 : index
    %333 = vector.load %arg17[%c0_114, %c0_115, %c0_116] : memref<6x128x512xbf16, #tpu.memory_space<vmem>>, vector<1x128x512xbf16>
    %334 = vector.shape_cast %333 : vector<1x128x512xbf16> to vector<128x512xbf16>
    %335 = arith.truncf %330 : vector<8x128xf32> to vector<8x128xbf16>
    %cst_117 = arith.constant dense<0.000000e+00> : vector<8x512xf32>
    %336 = tpu.matmul %335, %334, %cst_117 {dimension_numbers = #tpu.dot_dimension_numbers<[1], [0], [0], [1], [0, 0, 1, 1], [], []>} : vector<8x128xbf16>, vector<128x512xbf16>, vector<8x512xf32> -> vector<8x512xf32>
    %c0_118 = arith.constant 0 : index
    %c0_119 = arith.constant 0 : index
    %c0_120 = arith.constant 0 : index
    %337 = vector.load %arg18[%c0_118, %c0_119, %c0_120] : memref<6x1x512xf32, #tpu.memory_space<vmem>>, vector<1x1x512xf32>
    %338 = vector.shape_cast %337 : vector<1x1x512xf32> to vector<1x512xf32>
    %339 = vector.broadcast %338 : vector<1x512xf32> to vector<8x512xf32>
    %340 = arith.addf %336, %339 : vector<8x512xf32>
    %cst_121 = arith.constant 0.000000e+00 : f32
    %341 = vector.broadcast %cst_121 : f32 to vector<8x512xf32>
    %342 = arith.maximumf %340, %341 : vector<8x512xf32>
    %c0_122 = arith.constant 0 : index
    %c0_123 = arith.constant 0 : index
    %c0_124 = arith.constant 0 : index
    %343 = vector.load %arg19[%c0_122, %c0_123, %c0_124] : memref<6x512x128xbf16, #tpu.memory_space<vmem>>, vector<1x512x128xbf16>
    %344 = vector.shape_cast %343 : vector<1x512x128xbf16> to vector<512x128xbf16>
    %345 = arith.truncf %342 : vector<8x512xf32> to vector<8x512xbf16>
    %cst_125 = arith.constant dense<0.000000e+00> : vector<8x128xf32>
    %346 = tpu.matmul %345, %344, %cst_125 {dimension_numbers = #tpu.dot_dimension_numbers<[1], [0], [0], [1], [0, 0, 1, 1], [], []>} : vector<8x512xbf16>, vector<512x128xbf16>, vector<8x128xf32> -> vector<8x128xf32>
    %347 = vector.extract_strided_slice %332 {offsets = [0, 0], sizes = [1, 128], strides = [1, 1]} : vector<3x128xf32> to vector<1x128xf32>
    %348 = vector.broadcast %347 : vector<1x128xf32> to vector<8x128xf32>
    %349 = arith.addf %346, %348 : vector<8x128xf32>
    %350 = arith.addf %330, %349 : vector<8x128xf32>
    %351 = vector.extract_strided_slice %332 {offsets = [1, 0], sizes = [1, 128], strides = [1, 1]} : vector<3x128xf32> to vector<1x128xf32>
    %352 = vector.extract_strided_slice %332 {offsets = [2, 0], sizes = [1, 128], strides = [1, 1]} : vector<3x128xf32> to vector<1x128xf32>
    %cst_126 = arith.constant dense<0.000000e+00> : vector<8xf32>
    %353 = vector.multi_reduction <add>, %350, %cst_126 [1] : vector<8x128xf32> to vector<8xf32>
    %354 = vector.shape_cast %353 : vector<8xf32> to vector<8x1xf32>
    %cst_127 = arith.constant 1.280000e+02 : f32
    %355 = vector.broadcast %cst_127 : f32 to vector<8x1xf32>
    %356 = arith.divf %354, %355 : vector<8x1xf32>
    %357 = vector.broadcast %356 : vector<8x1xf32> to vector<8x128xf32>
    %358 = arith.subf %350, %357 : vector<8x128xf32>
    %359 = arith.mulf %358, %358 : vector<8x128xf32>
    %cst_128 = arith.constant dense<0.000000e+00> : vector<8xf32>
    %360 = vector.multi_reduction <add>, %359, %cst_128 [1] : vector<8x128xf32> to vector<8xf32>
    %361 = vector.shape_cast %360 : vector<8xf32> to vector<8x1xf32>
    %cst_129 = arith.constant 1.280000e+02 : f32
    %362 = vector.broadcast %cst_129 : f32 to vector<8x1xf32>
    %363 = arith.divf %361, %362 : vector<8x1xf32>
    %364 = vector.broadcast %356 : vector<8x1xf32> to vector<8x128xf32>
    %365 = arith.subf %350, %364 : vector<8x128xf32>
    %cst_130 = arith.constant 9.99999974E-6 : f32
    %366 = vector.broadcast %cst_130 : f32 to vector<8x1xf32>
    %367 = arith.addf %363, %366 : vector<8x1xf32>
    %368 = math.rsqrt %367 : vector<8x1xf32>
    %369 = vector.broadcast %368 : vector<8x1xf32> to vector<8x128xf32>
    %370 = arith.mulf %365, %369 : vector<8x128xf32>
    %371 = vector.broadcast %351 : vector<1x128xf32> to vector<8x128xf32>
    %372 = arith.mulf %370, %371 : vector<8x128xf32>
    %373 = vector.broadcast %352 : vector<1x128xf32> to vector<8x128xf32>
    %374 = arith.addf %372, %373 : vector<8x128xf32>
    %c1_131 = arith.constant 1 : index
    %c0_132 = arith.constant 0 : index
    %c0_133 = arith.constant 0 : index
    %375 = vector.load %arg16[%c1_131, %c0_132, %c0_133] : memref<6x6x128xf32, #tpu.memory_space<vmem>>, vector<1x6x128xf32>
    %376 = vector.shape_cast %375 : vector<1x6x128xf32> to vector<6x128xf32>
    %c4 = arith.constant 4 : index
    %c0_134 = arith.constant 0 : index
    %c0_135 = arith.constant 0 : index
    %377 = vector.load %arg15[%c4, %c0_134, %c0_135] : memref<24x128x128xbf16, #tpu.memory_space<vmem>>, vector<1x128x128xbf16>
    %378 = vector.shape_cast %377 : vector<1x128x128xbf16> to vector<128x128xbf16>
    %c5 = arith.constant 5 : index
    %c0_136 = arith.constant 0 : index
    %c0_137 = arith.constant 0 : index
    %379 = vector.load %arg15[%c5, %c0_136, %c0_137] : memref<24x128x128xbf16, #tpu.memory_space<vmem>>, vector<1x128x128xbf16>
    %380 = vector.shape_cast %379 : vector<1x128x128xbf16> to vector<128x128xbf16>
    %c6 = arith.constant 6 : index
    %c0_138 = arith.constant 0 : index
    %c0_139 = arith.constant 0 : index
    %381 = vector.load %arg15[%c6, %c0_138, %c0_139] : memref<24x128x128xbf16, #tpu.memory_space<vmem>>, vector<1x128x128xbf16>
    %382 = vector.shape_cast %381 : vector<1x128x128xbf16> to vector<128x128xbf16>
    %c7 = arith.constant 7 : index
    %c0_140 = arith.constant 0 : index
    %c0_141 = arith.constant 0 : index
    %383 = vector.load %arg15[%c7, %c0_140, %c0_141] : memref<24x128x128xbf16, #tpu.memory_space<vmem>>, vector<1x128x128xbf16>
    %384 = vector.shape_cast %383 : vector<1x128x128xbf16> to vector<128x128xbf16>
    %385 = arith.truncf %374 : vector<8x128xf32> to vector<8x128xbf16>
    %cst_142 = arith.constant dense<0.000000e+00> : vector<8x128xf32>
    %386 = tpu.matmul %385, %378, %cst_142 {dimension_numbers = #tpu.dot_dimension_numbers<[1], [0], [0], [1], [0, 0, 1, 1], [], []>} : vector<8x128xbf16>, vector<128x128xbf16>, vector<8x128xf32> -> vector<8x128xf32>
    %387 = vector.extract_strided_slice %376 {offsets = [0, 0], sizes = [1, 128], strides = [1, 1]} : vector<6x128xf32> to vector<1x128xf32>
    %388 = vector.broadcast %387 : vector<1x128xf32> to vector<8x128xf32>
    %389 = arith.addf %386, %388 : vector<8x128xf32>
    %390 = arith.truncf %171 : vector<32x128xf32> to vector<32x128xbf16>
    %cst_143 = arith.constant dense<0.000000e+00> : vector<32x128xf32>
    %391 = tpu.matmul %390, %380, %cst_143 {dimension_numbers = #tpu.dot_dimension_numbers<[1], [0], [0], [1], [0, 0, 1, 1], [], []>} : vector<32x128xbf16>, vector<128x128xbf16>, vector<32x128xf32> -> vector<32x128xf32>
    %392 = vector.extract_strided_slice %376 {offsets = [1, 0], sizes = [1, 128], strides = [1, 1]} : vector<6x128xf32> to vector<1x128xf32>
    %393 = vector.broadcast %392 : vector<1x128xf32> to vector<32x128xf32>
    %394 = arith.addf %391, %393 : vector<32x128xf32>
    %395 = arith.truncf %243 : vector<32x128xf32> to vector<32x128xbf16>
    %cst_144 = arith.constant dense<0.000000e+00> : vector<32x128xf32>
    %396 = tpu.matmul %395, %382, %cst_144 {dimension_numbers = #tpu.dot_dimension_numbers<[1], [0], [0], [1], [0, 0, 1, 1], [], []>} : vector<32x128xbf16>, vector<128x128xbf16>, vector<32x128xf32> -> vector<32x128xf32>
    %397 = vector.extract_strided_slice %376 {offsets = [2, 0], sizes = [1, 128], strides = [1, 1]} : vector<6x128xf32> to vector<1x128xf32>
    %398 = vector.broadcast %397 : vector<1x128xf32> to vector<32x128xf32>
    %399 = arith.addf %396, %398 : vector<32x128xf32>
    %400 = vector.shape_cast %389 : vector<8x128xf32> to vector<8x1x128xf32>
    %401 = vector.shape_cast %244 : vector<8x128xf32> to vector<1x8x128xf32>
    %402 = vector.broadcast %400 : vector<8x1x128xf32> to vector<8x8x128xf32>
    %403 = vector.broadcast %401 : vector<1x8x128xf32> to vector<8x8x128xf32>
    %404 = arith.mulf %402, %403 : vector<8x8x128xf32>
    %405 = vector.shape_cast %404 : vector<8x8x128xf32> to vector<64x128xf32>
    %406 = arith.truncf %405 : vector<64x128xf32> to vector<64x128xbf16>
    %407 = arith.truncf %394 : vector<32x128xf32> to vector<32x128xbf16>
    %cst_145 = arith.constant dense<0.000000e+00> : vector<64x32xf32>
    %408 = tpu.matmul %406, %407, %cst_145 {dimension_numbers = #tpu.dot_dimension_numbers<[1], [1], [0], [0], [0, 0, 1, 0], [], []>} : vector<64x128xbf16>, vector<32x128xbf16>, vector<64x32xf32> -> vector<64x32xf32>
    %cst_146 = arith.constant 2.500000e-01 : f32
    %409 = vector.broadcast %cst_146 : f32 to vector<64x32xf32>
    %410 = arith.mulf %408, %409 : vector<64x32xf32>
    %411 = vector.shape_cast %410 : vector<64x32xf32> to vector<8x8x32xf32>
    %cst_147 = arith.constant dense<0xFF800000> : vector<8x8xf32>
    %412 = vector.multi_reduction <maximumf>, %411, %cst_147 [2] : vector<8x8x32xf32> to vector<8x8xf32>
    %413 = vector.shape_cast %412 : vector<8x8xf32> to vector<8x8x1xf32>
    %414 = vector.broadcast %413 : vector<8x8x1xf32> to vector<8x8x32xf32>
    %415 = arith.subf %411, %414 : vector<8x8x32xf32>
    %416 = math.exp %415 : vector<8x8x32xf32>
    %cst_148 = arith.constant dense<0.000000e+00> : vector<8x8xf32>
    %417 = vector.multi_reduction <add>, %416, %cst_148 [2] : vector<8x8x32xf32> to vector<8x8xf32>
    %418 = vector.shape_cast %417 : vector<8x8xf32> to vector<8x8x1xf32>
    %419 = tpu.reciprocal %418 {approx = true} : vector<8x8x1xf32> -> vector<8x8x1xf32>
    %420 = vector.broadcast %419 : vector<8x8x1xf32> to vector<8x8x32xf32>
    %421 = arith.mulf %416, %420 : vector<8x8x32xf32>
    %422 = vector.shape_cast %421 : vector<8x8x32xf32> to vector<64x32xf32>
    %423 = arith.truncf %422 : vector<64x32xf32> to vector<64x32xbf16>
    %424 = arith.truncf %399 : vector<32x128xf32> to vector<32x128xbf16>
    %cst_149 = arith.constant dense<0.000000e+00> : vector<64x128xf32>
    %425 = tpu.matmul %423, %424, %cst_149 {dimension_numbers = #tpu.dot_dimension_numbers<[1], [0], [0], [1], [0, 0, 1, 1], [], []>} : vector<64x32xbf16>, vector<32x128xbf16>, vector<64x128xf32> -> vector<64x128xf32>
    %426 = vector.shape_cast %425 : vector<64x128xf32> to vector<8x8x128xf32>
    %427 = vector.shape_cast %244 : vector<8x128xf32> to vector<1x8x128xf32>
    %428 = vector.broadcast %427 : vector<1x8x128xf32> to vector<8x8x128xf32>
    %429 = arith.mulf %426, %428 : vector<8x8x128xf32>
    %cst_150 = arith.constant dense<0.000000e+00> : vector<8x128xf32>
    %430 = vector.multi_reduction <add>, %429, %cst_150 [1] : vector<8x8x128xf32> to vector<8x128xf32>
    %431 = arith.truncf %430 : vector<8x128xf32> to vector<8x128xbf16>
    %cst_151 = arith.constant dense<0.000000e+00> : vector<8x128xf32>
    %432 = tpu.matmul %431, %384, %cst_151 {dimension_numbers = #tpu.dot_dimension_numbers<[1], [0], [0], [1], [0, 0, 1, 1], [], []>} : vector<8x128xbf16>, vector<128x128xbf16>, vector<8x128xf32> -> vector<8x128xf32>
    %433 = vector.extract_strided_slice %376 {offsets = [3, 0], sizes = [1, 128], strides = [1, 1]} : vector<6x128xf32> to vector<1x128xf32>
    %434 = vector.broadcast %433 : vector<1x128xf32> to vector<8x128xf32>
    %435 = arith.addf %432, %434 : vector<8x128xf32>
    %436 = arith.addf %374, %435 : vector<8x128xf32>
    %437 = vector.extract_strided_slice %376 {offsets = [4, 0], sizes = [1, 128], strides = [1, 1]} : vector<6x128xf32> to vector<1x128xf32>
    %438 = vector.extract_strided_slice %376 {offsets = [5, 0], sizes = [1, 128], strides = [1, 1]} : vector<6x128xf32> to vector<1x128xf32>
    %cst_152 = arith.constant dense<0.000000e+00> : vector<8xf32>
    %439 = vector.multi_reduction <add>, %436, %cst_152 [1] : vector<8x128xf32> to vector<8xf32>
    %440 = vector.shape_cast %439 : vector<8xf32> to vector<8x1xf32>
    %cst_153 = arith.constant 1.280000e+02 : f32
    %441 = vector.broadcast %cst_153 : f32 to vector<8x1xf32>
    %442 = arith.divf %440, %441 : vector<8x1xf32>
    %443 = vector.broadcast %442 : vector<8x1xf32> to vector<8x128xf32>
    %444 = arith.subf %436, %443 : vector<8x128xf32>
    %445 = arith.mulf %444, %444 : vector<8x128xf32>
    %cst_154 = arith.constant dense<0.000000e+00> : vector<8xf32>
    %446 = vector.multi_reduction <add>, %445, %cst_154 [1] : vector<8x128xf32> to vector<8xf32>
    %447 = vector.shape_cast %446 : vector<8xf32> to vector<8x1xf32>
    %cst_155 = arith.constant 1.280000e+02 : f32
    %448 = vector.broadcast %cst_155 : f32 to vector<8x1xf32>
    %449 = arith.divf %447, %448 : vector<8x1xf32>
    %450 = vector.broadcast %442 : vector<8x1xf32> to vector<8x128xf32>
    %451 = arith.subf %436, %450 : vector<8x128xf32>
    %cst_156 = arith.constant 9.99999974E-6 : f32
    %452 = vector.broadcast %cst_156 : f32 to vector<8x1xf32>
    %453 = arith.addf %449, %452 : vector<8x1xf32>
    %454 = math.rsqrt %453 : vector<8x1xf32>
    %455 = vector.broadcast %454 : vector<8x1xf32> to vector<8x128xf32>
    %456 = arith.mulf %451, %455 : vector<8x128xf32>
    %457 = vector.broadcast %437 : vector<1x128xf32> to vector<8x128xf32>
    %458 = arith.mulf %456, %457 : vector<8x128xf32>
    %459 = vector.broadcast %438 : vector<1x128xf32> to vector<8x128xf32>
    %460 = arith.addf %458, %459 : vector<8x128xf32>
    %c1_157 = arith.constant 1 : index
    %c0_158 = arith.constant 0 : index
    %c0_159 = arith.constant 0 : index
    %461 = vector.load %arg20[%c1_157, %c0_158, %c0_159] : memref<6x3x128xf32, #tpu.memory_space<vmem>>, vector<1x3x128xf32>
    %462 = vector.shape_cast %461 : vector<1x3x128xf32> to vector<3x128xf32>
    %c1_160 = arith.constant 1 : index
    %c0_161 = arith.constant 0 : index
    %c0_162 = arith.constant 0 : index
    %463 = vector.load %arg17[%c1_160, %c0_161, %c0_162] : memref<6x128x512xbf16, #tpu.memory_space<vmem>>, vector<1x128x512xbf16>
    %464 = vector.shape_cast %463 : vector<1x128x512xbf16> to vector<128x512xbf16>
    %465 = arith.truncf %460 : vector<8x128xf32> to vector<8x128xbf16>
    %cst_163 = arith.constant dense<0.000000e+00> : vector<8x512xf32>
    %466 = tpu.matmul %465, %464, %cst_163 {dimension_numbers = #tpu.dot_dimension_numbers<[1], [0], [0], [1], [0, 0, 1, 1], [], []>} : vector<8x128xbf16>, vector<128x512xbf16>, vector<8x512xf32> -> vector<8x512xf32>
    %c1_164 = arith.constant 1 : index
    %c0_165 = arith.constant 0 : index
    %c0_166 = arith.constant 0 : index
    %467 = vector.load %arg18[%c1_164, %c0_165, %c0_166] : memref<6x1x512xf32, #tpu.memory_space<vmem>>, vector<1x1x512xf32>
    %468 = vector.shape_cast %467 : vector<1x1x512xf32> to vector<1x512xf32>
    %469 = vector.broadcast %468 : vector<1x512xf32> to vector<8x512xf32>
    %470 = arith.addf %466, %469 : vector<8x512xf32>
    %cst_167 = arith.constant 0.000000e+00 : f32
    %471 = vector.broadcast %cst_167 : f32 to vector<8x512xf32>
    %472 = arith.maximumf %470, %471 : vector<8x512xf32>
    %c1_168 = arith.constant 1 : index
    %c0_169 = arith.constant 0 : index
    %c0_170 = arith.constant 0 : index
    %473 = vector.load %arg19[%c1_168, %c0_169, %c0_170] : memref<6x512x128xbf16, #tpu.memory_space<vmem>>, vector<1x512x128xbf16>
    %474 = vector.shape_cast %473 : vector<1x512x128xbf16> to vector<512x128xbf16>
    %475 = arith.truncf %472 : vector<8x512xf32> to vector<8x512xbf16>
    %cst_171 = arith.constant dense<0.000000e+00> : vector<8x128xf32>
    %476 = tpu.matmul %475, %474, %cst_171 {dimension_numbers = #tpu.dot_dimension_numbers<[1], [0], [0], [1], [0, 0, 1, 1], [], []>} : vector<8x512xbf16>, vector<512x128xbf16>, vector<8x128xf32> -> vector<8x128xf32>
    %477 = vector.extract_strided_slice %462 {offsets = [0, 0], sizes = [1, 128], strides = [1, 1]} : vector<3x128xf32> to vector<1x128xf32>
    %478 = vector.broadcast %477 : vector<1x128xf32> to vector<8x128xf32>
    %479 = arith.addf %476, %478 : vector<8x128xf32>
    %480 = arith.addf %460, %479 : vector<8x128xf32>
    %481 = vector.extract_strided_slice %462 {offsets = [1, 0], sizes = [1, 128], strides = [1, 1]} : vector<3x128xf32> to vector<1x128xf32>
    %482 = vector.extract_strided_slice %462 {offsets = [2, 0], sizes = [1, 128], strides = [1, 1]} : vector<3x128xf32> to vector<1x128xf32>
    %cst_172 = arith.constant dense<0.000000e+00> : vector<8xf32>
    %483 = vector.multi_reduction <add>, %480, %cst_172 [1] : vector<8x128xf32> to vector<8xf32>
    %484 = vector.shape_cast %483 : vector<8xf32> to vector<8x1xf32>
    %cst_173 = arith.constant 1.280000e+02 : f32
    %485 = vector.broadcast %cst_173 : f32 to vector<8x1xf32>
    %486 = arith.divf %484, %485 : vector<8x1xf32>
    %487 = vector.broadcast %486 : vector<8x1xf32> to vector<8x128xf32>
    %488 = arith.subf %480, %487 : vector<8x128xf32>
    %489 = arith.mulf %488, %488 : vector<8x128xf32>
    %cst_174 = arith.constant dense<0.000000e+00> : vector<8xf32>
    %490 = vector.multi_reduction <add>, %489, %cst_174 [1] : vector<8x128xf32> to vector<8xf32>
    %491 = vector.shape_cast %490 : vector<8xf32> to vector<8x1xf32>
    %cst_175 = arith.constant 1.280000e+02 : f32
    %492 = vector.broadcast %cst_175 : f32 to vector<8x1xf32>
    %493 = arith.divf %491, %492 : vector<8x1xf32>
    %494 = vector.broadcast %486 : vector<8x1xf32> to vector<8x128xf32>
    %495 = arith.subf %480, %494 : vector<8x128xf32>
    %cst_176 = arith.constant 9.99999974E-6 : f32
    %496 = vector.broadcast %cst_176 : f32 to vector<8x1xf32>
    %497 = arith.addf %493, %496 : vector<8x1xf32>
    %498 = math.rsqrt %497 : vector<8x1xf32>
    %499 = vector.broadcast %498 : vector<8x1xf32> to vector<8x128xf32>
    %500 = arith.mulf %495, %499 : vector<8x128xf32>
    %501 = vector.broadcast %481 : vector<1x128xf32> to vector<8x128xf32>
    %502 = arith.mulf %500, %501 : vector<8x128xf32>
    %503 = vector.broadcast %482 : vector<1x128xf32> to vector<8x128xf32>
    %504 = arith.addf %502, %503 : vector<8x128xf32>
    %c2_177 = arith.constant 2 : index
    %c0_178 = arith.constant 0 : index
    %c0_179 = arith.constant 0 : index
    %505 = vector.load %arg16[%c2_177, %c0_178, %c0_179] : memref<6x6x128xf32, #tpu.memory_space<vmem>>, vector<1x6x128xf32>
    %506 = vector.shape_cast %505 : vector<1x6x128xf32> to vector<6x128xf32>
    %c8 = arith.constant 8 : index
    %c0_180 = arith.constant 0 : index
    %c0_181 = arith.constant 0 : index
    %507 = vector.load %arg15[%c8, %c0_180, %c0_181] : memref<24x128x128xbf16, #tpu.memory_space<vmem>>, vector<1x128x128xbf16>
    %508 = vector.shape_cast %507 : vector<1x128x128xbf16> to vector<128x128xbf16>
    %c9 = arith.constant 9 : index
    %c0_182 = arith.constant 0 : index
    %c0_183 = arith.constant 0 : index
    %509 = vector.load %arg15[%c9, %c0_182, %c0_183] : memref<24x128x128xbf16, #tpu.memory_space<vmem>>, vector<1x128x128xbf16>
    %510 = vector.shape_cast %509 : vector<1x128x128xbf16> to vector<128x128xbf16>
    %c10 = arith.constant 10 : index
    %c0_184 = arith.constant 0 : index
    %c0_185 = arith.constant 0 : index
    %511 = vector.load %arg15[%c10, %c0_184, %c0_185] : memref<24x128x128xbf16, #tpu.memory_space<vmem>>, vector<1x128x128xbf16>
    %512 = vector.shape_cast %511 : vector<1x128x128xbf16> to vector<128x128xbf16>
    %c11 = arith.constant 11 : index
    %c0_186 = arith.constant 0 : index
    %c0_187 = arith.constant 0 : index
    %513 = vector.load %arg15[%c11, %c0_186, %c0_187] : memref<24x128x128xbf16, #tpu.memory_space<vmem>>, vector<1x128x128xbf16>
    %514 = vector.shape_cast %513 : vector<1x128x128xbf16> to vector<128x128xbf16>
    %515 = arith.truncf %504 : vector<8x128xf32> to vector<8x128xbf16>
    %cst_188 = arith.constant dense<0.000000e+00> : vector<8x128xf32>
    %516 = tpu.matmul %515, %508, %cst_188 {dimension_numbers = #tpu.dot_dimension_numbers<[1], [0], [0], [1], [0, 0, 1, 1], [], []>} : vector<8x128xbf16>, vector<128x128xbf16>, vector<8x128xf32> -> vector<8x128xf32>
    %517 = vector.extract_strided_slice %506 {offsets = [0, 0], sizes = [1, 128], strides = [1, 1]} : vector<6x128xf32> to vector<1x128xf32>
    %518 = vector.broadcast %517 : vector<1x128xf32> to vector<8x128xf32>
    %519 = arith.addf %516, %518 : vector<8x128xf32>
    %520 = arith.truncf %171 : vector<32x128xf32> to vector<32x128xbf16>
    %cst_189 = arith.constant dense<0.000000e+00> : vector<32x128xf32>
    %521 = tpu.matmul %520, %510, %cst_189 {dimension_numbers = #tpu.dot_dimension_numbers<[1], [0], [0], [1], [0, 0, 1, 1], [], []>} : vector<32x128xbf16>, vector<128x128xbf16>, vector<32x128xf32> -> vector<32x128xf32>
    %522 = vector.extract_strided_slice %506 {offsets = [1, 0], sizes = [1, 128], strides = [1, 1]} : vector<6x128xf32> to vector<1x128xf32>
    %523 = vector.broadcast %522 : vector<1x128xf32> to vector<32x128xf32>
    %524 = arith.addf %521, %523 : vector<32x128xf32>
    %525 = arith.truncf %243 : vector<32x128xf32> to vector<32x128xbf16>
    %cst_190 = arith.constant dense<0.000000e+00> : vector<32x128xf32>
    %526 = tpu.matmul %525, %512, %cst_190 {dimension_numbers = #tpu.dot_dimension_numbers<[1], [0], [0], [1], [0, 0, 1, 1], [], []>} : vector<32x128xbf16>, vector<128x128xbf16>, vector<32x128xf32> -> vector<32x128xf32>
    %527 = vector.extract_strided_slice %506 {offsets = [2, 0], sizes = [1, 128], strides = [1, 1]} : vector<6x128xf32> to vector<1x128xf32>
    %528 = vector.broadcast %527 : vector<1x128xf32> to vector<32x128xf32>
    %529 = arith.addf %526, %528 : vector<32x128xf32>
    %530 = vector.shape_cast %519 : vector<8x128xf32> to vector<8x1x128xf32>
    %531 = vector.shape_cast %244 : vector<8x128xf32> to vector<1x8x128xf32>
    %532 = vector.broadcast %530 : vector<8x1x128xf32> to vector<8x8x128xf32>
    %533 = vector.broadcast %531 : vector<1x8x128xf32> to vector<8x8x128xf32>
    %534 = arith.mulf %532, %533 : vector<8x8x128xf32>
    %535 = vector.shape_cast %534 : vector<8x8x128xf32> to vector<64x128xf32>
    %536 = arith.truncf %535 : vector<64x128xf32> to vector<64x128xbf16>
    %537 = arith.truncf %524 : vector<32x128xf32> to vector<32x128xbf16>
    %cst_191 = arith.constant dense<0.000000e+00> : vector<64x32xf32>
    %538 = tpu.matmul %536, %537, %cst_191 {dimension_numbers = #tpu.dot_dimension_numbers<[1], [1], [0], [0], [0, 0, 1, 0], [], []>} : vector<64x128xbf16>, vector<32x128xbf16>, vector<64x32xf32> -> vector<64x32xf32>
    %cst_192 = arith.constant 2.500000e-01 : f32
    %539 = vector.broadcast %cst_192 : f32 to vector<64x32xf32>
    %540 = arith.mulf %538, %539 : vector<64x32xf32>
    %541 = vector.shape_cast %540 : vector<64x32xf32> to vector<8x8x32xf32>
    %cst_193 = arith.constant dense<0xFF800000> : vector<8x8xf32>
    %542 = vector.multi_reduction <maximumf>, %541, %cst_193 [2] : vector<8x8x32xf32> to vector<8x8xf32>
    %543 = vector.shape_cast %542 : vector<8x8xf32> to vector<8x8x1xf32>
    %544 = vector.broadcast %543 : vector<8x8x1xf32> to vector<8x8x32xf32>
    %545 = arith.subf %541, %544 : vector<8x8x32xf32>
    %546 = math.exp %545 : vector<8x8x32xf32>
    %cst_194 = arith.constant dense<0.000000e+00> : vector<8x8xf32>
    %547 = vector.multi_reduction <add>, %546, %cst_194 [2] : vector<8x8x32xf32> to vector<8x8xf32>
    %548 = vector.shape_cast %547 : vector<8x8xf32> to vector<8x8x1xf32>
    %549 = tpu.reciprocal %548 {approx = true} : vector<8x8x1xf32> -> vector<8x8x1xf32>
    %550 = vector.broadcast %549 : vector<8x8x1xf32> to vector<8x8x32xf32>
    %551 = arith.mulf %546, %550 : vector<8x8x32xf32>
    %552 = vector.shape_cast %551 : vector<8x8x32xf32> to vector<64x32xf32>
    %553 = arith.truncf %552 : vector<64x32xf32> to vector<64x32xbf16>
    %554 = arith.truncf %529 : vector<32x128xf32> to vector<32x128xbf16>
    %cst_195 = arith.constant dense<0.000000e+00> : vector<64x128xf32>
    %555 = tpu.matmul %553, %554, %cst_195 {dimension_numbers = #tpu.dot_dimension_numbers<[1], [0], [0], [1], [0, 0, 1, 1], [], []>} : vector<64x32xbf16>, vector<32x128xbf16>, vector<64x128xf32> -> vector<64x128xf32>
    %556 = vector.shape_cast %555 : vector<64x128xf32> to vector<8x8x128xf32>
    %557 = vector.shape_cast %244 : vector<8x128xf32> to vector<1x8x128xf32>
    %558 = vector.broadcast %557 : vector<1x8x128xf32> to vector<8x8x128xf32>
    %559 = arith.mulf %556, %558 : vector<8x8x128xf32>
    %cst_196 = arith.constant dense<0.000000e+00> : vector<8x128xf32>
    %560 = vector.multi_reduction <add>, %559, %cst_196 [1] : vector<8x8x128xf32> to vector<8x128xf32>
    %561 = arith.truncf %560 : vector<8x128xf32> to vector<8x128xbf16>
    %cst_197 = arith.constant dense<0.000000e+00> : vector<8x128xf32>
    %562 = tpu.matmul %561, %514, %cst_197 {dimension_numbers = #tpu.dot_dimension_numbers<[1], [0], [0], [1], [0, 0, 1, 1], [], []>} : vector<8x128xbf16>, vector<128x128xbf16>, vector<8x128xf32> -> vector<8x128xf32>
    %563 = vector.extract_strided_slice %506 {offsets = [3, 0], sizes = [1, 128], strides = [1, 1]} : vector<6x128xf32> to vector<1x128xf32>
    %564 = vector.broadcast %563 : vector<1x128xf32> to vector<8x128xf32>
    %565 = arith.addf %562, %564 : vector<8x128xf32>
    %566 = arith.addf %504, %565 : vector<8x128xf32>
    %567 = vector.extract_strided_slice %506 {offsets = [4, 0], sizes = [1, 128], strides = [1, 1]} : vector<6x128xf32> to vector<1x128xf32>
    %568 = vector.extract_strided_slice %506 {offsets = [5, 0], sizes = [1, 128], strides = [1, 1]} : vector<6x128xf32> to vector<1x128xf32>
    %cst_198 = arith.constant dense<0.000000e+00> : vector<8xf32>
    %569 = vector.multi_reduction <add>, %566, %cst_198 [1] : vector<8x128xf32> to vector<8xf32>
    %570 = vector.shape_cast %569 : vector<8xf32> to vector<8x1xf32>
    %cst_199 = arith.constant 1.280000e+02 : f32
    %571 = vector.broadcast %cst_199 : f32 to vector<8x1xf32>
    %572 = arith.divf %570, %571 : vector<8x1xf32>
    %573 = vector.broadcast %572 : vector<8x1xf32> to vector<8x128xf32>
    %574 = arith.subf %566, %573 : vector<8x128xf32>
    %575 = arith.mulf %574, %574 : vector<8x128xf32>
    %cst_200 = arith.constant dense<0.000000e+00> : vector<8xf32>
    %576 = vector.multi_reduction <add>, %575, %cst_200 [1] : vector<8x128xf32> to vector<8xf32>
    %577 = vector.shape_cast %576 : vector<8xf32> to vector<8x1xf32>
    %cst_201 = arith.constant 1.280000e+02 : f32
    %578 = vector.broadcast %cst_201 : f32 to vector<8x1xf32>
    %579 = arith.divf %577, %578 : vector<8x1xf32>
    %580 = vector.broadcast %572 : vector<8x1xf32> to vector<8x128xf32>
    %581 = arith.subf %566, %580 : vector<8x128xf32>
    %cst_202 = arith.constant 9.99999974E-6 : f32
    %582 = vector.broadcast %cst_202 : f32 to vector<8x1xf32>
    %583 = arith.addf %579, %582 : vector<8x1xf32>
    %584 = math.rsqrt %583 : vector<8x1xf32>
    %585 = vector.broadcast %584 : vector<8x1xf32> to vector<8x128xf32>
    %586 = arith.mulf %581, %585 : vector<8x128xf32>
    %587 = vector.broadcast %567 : vector<1x128xf32> to vector<8x128xf32>
    %588 = arith.mulf %586, %587 : vector<8x128xf32>
    %589 = vector.broadcast %568 : vector<1x128xf32> to vector<8x128xf32>
    %590 = arith.addf %588, %589 : vector<8x128xf32>
    %c2_203 = arith.constant 2 : index
    %c0_204 = arith.constant 0 : index
    %c0_205 = arith.constant 0 : index
    %591 = vector.load %arg20[%c2_203, %c0_204, %c0_205] : memref<6x3x128xf32, #tpu.memory_space<vmem>>, vector<1x3x128xf32>
    %592 = vector.shape_cast %591 : vector<1x3x128xf32> to vector<3x128xf32>
    %c2_206 = arith.constant 2 : index
    %c0_207 = arith.constant 0 : index
    %c0_208 = arith.constant 0 : index
    %593 = vector.load %arg17[%c2_206, %c0_207, %c0_208] : memref<6x128x512xbf16, #tpu.memory_space<vmem>>, vector<1x128x512xbf16>
    %594 = vector.shape_cast %593 : vector<1x128x512xbf16> to vector<128x512xbf16>
    %595 = arith.truncf %590 : vector<8x128xf32> to vector<8x128xbf16>
    %cst_209 = arith.constant dense<0.000000e+00> : vector<8x512xf32>
    %596 = tpu.matmul %595, %594, %cst_209 {dimension_numbers = #tpu.dot_dimension_numbers<[1], [0], [0], [1], [0, 0, 1, 1], [], []>} : vector<8x128xbf16>, vector<128x512xbf16>, vector<8x512xf32> -> vector<8x512xf32>
    %c2_210 = arith.constant 2 : index
    %c0_211 = arith.constant 0 : index
    %c0_212 = arith.constant 0 : index
    %597 = vector.load %arg18[%c2_210, %c0_211, %c0_212] : memref<6x1x512xf32, #tpu.memory_space<vmem>>, vector<1x1x512xf32>
    %598 = vector.shape_cast %597 : vector<1x1x512xf32> to vector<1x512xf32>
    %599 = vector.broadcast %598 : vector<1x512xf32> to vector<8x512xf32>
    %600 = arith.addf %596, %599 : vector<8x512xf32>
    %cst_213 = arith.constant 0.000000e+00 : f32
    %601 = vector.broadcast %cst_213 : f32 to vector<8x512xf32>
    %602 = arith.maximumf %600, %601 : vector<8x512xf32>
    %c2_214 = arith.constant 2 : index
    %c0_215 = arith.constant 0 : index
    %c0_216 = arith.constant 0 : index
    %603 = vector.load %arg19[%c2_214, %c0_215, %c0_216] : memref<6x512x128xbf16, #tpu.memory_space<vmem>>, vector<1x512x128xbf16>
    %604 = vector.shape_cast %603 : vector<1x512x128xbf16> to vector<512x128xbf16>
    %605 = arith.truncf %602 : vector<8x512xf32> to vector<8x512xbf16>
    %cst_217 = arith.constant dense<0.000000e+00> : vector<8x128xf32>
    %606 = tpu.matmul %605, %604, %cst_217 {dimension_numbers = #tpu.dot_dimension_numbers<[1], [0], [0], [1], [0, 0, 1, 1], [], []>} : vector<8x512xbf16>, vector<512x128xbf16>, vector<8x128xf32> -> vector<8x128xf32>
    %607 = vector.extract_strided_slice %592 {offsets = [0, 0], sizes = [1, 128], strides = [1, 1]} : vector<3x128xf32> to vector<1x128xf32>
    %608 = vector.broadcast %607 : vector<1x128xf32> to vector<8x128xf32>
    %609 = arith.addf %606, %608 : vector<8x128xf32>
    %610 = arith.addf %590, %609 : vector<8x128xf32>
    %611 = vector.extract_strided_slice %592 {offsets = [1, 0], sizes = [1, 128], strides = [1, 1]} : vector<3x128xf32> to vector<1x128xf32>
    %612 = vector.extract_strided_slice %592 {offsets = [2, 0], sizes = [1, 128], strides = [1, 1]} : vector<3x128xf32> to vector<1x128xf32>
    %cst_218 = arith.constant dense<0.000000e+00> : vector<8xf32>
    %613 = vector.multi_reduction <add>, %610, %cst_218 [1] : vector<8x128xf32> to vector<8xf32>
    %614 = vector.shape_cast %613 : vector<8xf32> to vector<8x1xf32>
    %cst_219 = arith.constant 1.280000e+02 : f32
    %615 = vector.broadcast %cst_219 : f32 to vector<8x1xf32>
    %616 = arith.divf %614, %615 : vector<8x1xf32>
    %617 = vector.broadcast %616 : vector<8x1xf32> to vector<8x128xf32>
    %618 = arith.subf %610, %617 : vector<8x128xf32>
    %619 = arith.mulf %618, %618 : vector<8x128xf32>
    %cst_220 = arith.constant dense<0.000000e+00> : vector<8xf32>
    %620 = vector.multi_reduction <add>, %619, %cst_220 [1] : vector<8x128xf32> to vector<8xf32>
    %621 = vector.shape_cast %620 : vector<8xf32> to vector<8x1xf32>
    %cst_221 = arith.constant 1.280000e+02 : f32
    %622 = vector.broadcast %cst_221 : f32 to vector<8x1xf32>
    %623 = arith.divf %621, %622 : vector<8x1xf32>
    %624 = vector.broadcast %616 : vector<8x1xf32> to vector<8x128xf32>
    %625 = arith.subf %610, %624 : vector<8x128xf32>
    %cst_222 = arith.constant 9.99999974E-6 : f32
    %626 = vector.broadcast %cst_222 : f32 to vector<8x1xf32>
    %627 = arith.addf %623, %626 : vector<8x1xf32>
    %628 = math.rsqrt %627 : vector<8x1xf32>
    %629 = vector.broadcast %628 : vector<8x1xf32> to vector<8x128xf32>
    %630 = arith.mulf %625, %629 : vector<8x128xf32>
    %631 = vector.broadcast %611 : vector<1x128xf32> to vector<8x128xf32>
    %632 = arith.mulf %630, %631 : vector<8x128xf32>
    %633 = vector.broadcast %612 : vector<1x128xf32> to vector<8x128xf32>
    %634 = arith.addf %632, %633 : vector<8x128xf32>
    %c3_223 = arith.constant 3 : index
    %c0_224 = arith.constant 0 : index
    %c0_225 = arith.constant 0 : index
    %635 = vector.load %arg16[%c3_223, %c0_224, %c0_225] : memref<6x6x128xf32, #tpu.memory_space<vmem>>, vector<1x6x128xf32>
    %636 = vector.shape_cast %635 : vector<1x6x128xf32> to vector<6x128xf32>
    %c12 = arith.constant 12 : index
    %c0_226 = arith.constant 0 : index
    %c0_227 = arith.constant 0 : index
    %637 = vector.load %arg15[%c12, %c0_226, %c0_227] : memref<24x128x128xbf16, #tpu.memory_space<vmem>>, vector<1x128x128xbf16>
    %638 = vector.shape_cast %637 : vector<1x128x128xbf16> to vector<128x128xbf16>
    %c13 = arith.constant 13 : index
    %c0_228 = arith.constant 0 : index
    %c0_229 = arith.constant 0 : index
    %639 = vector.load %arg15[%c13, %c0_228, %c0_229] : memref<24x128x128xbf16, #tpu.memory_space<vmem>>, vector<1x128x128xbf16>
    %640 = vector.shape_cast %639 : vector<1x128x128xbf16> to vector<128x128xbf16>
    %c14 = arith.constant 14 : index
    %c0_230 = arith.constant 0 : index
    %c0_231 = arith.constant 0 : index
    %641 = vector.load %arg15[%c14, %c0_230, %c0_231] : memref<24x128x128xbf16, #tpu.memory_space<vmem>>, vector<1x128x128xbf16>
    %642 = vector.shape_cast %641 : vector<1x128x128xbf16> to vector<128x128xbf16>
    %c15 = arith.constant 15 : index
    %c0_232 = arith.constant 0 : index
    %c0_233 = arith.constant 0 : index
    %643 = vector.load %arg15[%c15, %c0_232, %c0_233] : memref<24x128x128xbf16, #tpu.memory_space<vmem>>, vector<1x128x128xbf16>
    %644 = vector.shape_cast %643 : vector<1x128x128xbf16> to vector<128x128xbf16>
    %645 = arith.truncf %634 : vector<8x128xf32> to vector<8x128xbf16>
    %cst_234 = arith.constant dense<0.000000e+00> : vector<8x128xf32>
    %646 = tpu.matmul %645, %638, %cst_234 {dimension_numbers = #tpu.dot_dimension_numbers<[1], [0], [0], [1], [0, 0, 1, 1], [], []>} : vector<8x128xbf16>, vector<128x128xbf16>, vector<8x128xf32> -> vector<8x128xf32>
    %647 = vector.extract_strided_slice %636 {offsets = [0, 0], sizes = [1, 128], strides = [1, 1]} : vector<6x128xf32> to vector<1x128xf32>
    %648 = vector.broadcast %647 : vector<1x128xf32> to vector<8x128xf32>
    %649 = arith.addf %646, %648 : vector<8x128xf32>
    %650 = arith.truncf %171 : vector<32x128xf32> to vector<32x128xbf16>
    %cst_235 = arith.constant dense<0.000000e+00> : vector<32x128xf32>
    %651 = tpu.matmul %650, %640, %cst_235 {dimension_numbers = #tpu.dot_dimension_numbers<[1], [0], [0], [1], [0, 0, 1, 1], [], []>} : vector<32x128xbf16>, vector<128x128xbf16>, vector<32x128xf32> -> vector<32x128xf32>
    %652 = vector.extract_strided_slice %636 {offsets = [1, 0], sizes = [1, 128], strides = [1, 1]} : vector<6x128xf32> to vector<1x128xf32>
    %653 = vector.broadcast %652 : vector<1x128xf32> to vector<32x128xf32>
    %654 = arith.addf %651, %653 : vector<32x128xf32>
    %655 = arith.truncf %243 : vector<32x128xf32> to vector<32x128xbf16>
    %cst_236 = arith.constant dense<0.000000e+00> : vector<32x128xf32>
    %656 = tpu.matmul %655, %642, %cst_236 {dimension_numbers = #tpu.dot_dimension_numbers<[1], [0], [0], [1], [0, 0, 1, 1], [], []>} : vector<32x128xbf16>, vector<128x128xbf16>, vector<32x128xf32> -> vector<32x128xf32>
    %657 = vector.extract_strided_slice %636 {offsets = [2, 0], sizes = [1, 128], strides = [1, 1]} : vector<6x128xf32> to vector<1x128xf32>
    %658 = vector.broadcast %657 : vector<1x128xf32> to vector<32x128xf32>
    %659 = arith.addf %656, %658 : vector<32x128xf32>
    %660 = vector.shape_cast %649 : vector<8x128xf32> to vector<8x1x128xf32>
    %661 = vector.shape_cast %244 : vector<8x128xf32> to vector<1x8x128xf32>
    %662 = vector.broadcast %660 : vector<8x1x128xf32> to vector<8x8x128xf32>
    %663 = vector.broadcast %661 : vector<1x8x128xf32> to vector<8x8x128xf32>
    %664 = arith.mulf %662, %663 : vector<8x8x128xf32>
    %665 = vector.shape_cast %664 : vector<8x8x128xf32> to vector<64x128xf32>
    %666 = arith.truncf %665 : vector<64x128xf32> to vector<64x128xbf16>
    %667 = arith.truncf %654 : vector<32x128xf32> to vector<32x128xbf16>
    %cst_237 = arith.constant dense<0.000000e+00> : vector<64x32xf32>
    %668 = tpu.matmul %666, %667, %cst_237 {dimension_numbers = #tpu.dot_dimension_numbers<[1], [1], [0], [0], [0, 0, 1, 0], [], []>} : vector<64x128xbf16>, vector<32x128xbf16>, vector<64x32xf32> -> vector<64x32xf32>
    %cst_238 = arith.constant 2.500000e-01 : f32
    %669 = vector.broadcast %cst_238 : f32 to vector<64x32xf32>
    %670 = arith.mulf %668, %669 : vector<64x32xf32>
    %671 = vector.shape_cast %670 : vector<64x32xf32> to vector<8x8x32xf32>
    %cst_239 = arith.constant dense<0xFF800000> : vector<8x8xf32>
    %672 = vector.multi_reduction <maximumf>, %671, %cst_239 [2] : vector<8x8x32xf32> to vector<8x8xf32>
    %673 = vector.shape_cast %672 : vector<8x8xf32> to vector<8x8x1xf32>
    %674 = vector.broadcast %673 : vector<8x8x1xf32> to vector<8x8x32xf32>
    %675 = arith.subf %671, %674 : vector<8x8x32xf32>
    %676 = math.exp %675 : vector<8x8x32xf32>
    %cst_240 = arith.constant dense<0.000000e+00> : vector<8x8xf32>
    %677 = vector.multi_reduction <add>, %676, %cst_240 [2] : vector<8x8x32xf32> to vector<8x8xf32>
    %678 = vector.shape_cast %677 : vector<8x8xf32> to vector<8x8x1xf32>
    %679 = tpu.reciprocal %678 {approx = true} : vector<8x8x1xf32> -> vector<8x8x1xf32>
    %680 = vector.broadcast %679 : vector<8x8x1xf32> to vector<8x8x32xf32>
    %681 = arith.mulf %676, %680 : vector<8x8x32xf32>
    %682 = vector.shape_cast %681 : vector<8x8x32xf32> to vector<64x32xf32>
    %683 = arith.truncf %682 : vector<64x32xf32> to vector<64x32xbf16>
    %684 = arith.truncf %659 : vector<32x128xf32> to vector<32x128xbf16>
    %cst_241 = arith.constant dense<0.000000e+00> : vector<64x128xf32>
    %685 = tpu.matmul %683, %684, %cst_241 {dimension_numbers = #tpu.dot_dimension_numbers<[1], [0], [0], [1], [0, 0, 1, 1], [], []>} : vector<64x32xbf16>, vector<32x128xbf16>, vector<64x128xf32> -> vector<64x128xf32>
    %686 = vector.shape_cast %685 : vector<64x128xf32> to vector<8x8x128xf32>
    %687 = vector.shape_cast %244 : vector<8x128xf32> to vector<1x8x128xf32>
    %688 = vector.broadcast %687 : vector<1x8x128xf32> to vector<8x8x128xf32>
    %689 = arith.mulf %686, %688 : vector<8x8x128xf32>
    %cst_242 = arith.constant dense<0.000000e+00> : vector<8x128xf32>
    %690 = vector.multi_reduction <add>, %689, %cst_242 [1] : vector<8x8x128xf32> to vector<8x128xf32>
    %691 = arith.truncf %690 : vector<8x128xf32> to vector<8x128xbf16>
    %cst_243 = arith.constant dense<0.000000e+00> : vector<8x128xf32>
    %692 = tpu.matmul %691, %644, %cst_243 {dimension_numbers = #tpu.dot_dimension_numbers<[1], [0], [0], [1], [0, 0, 1, 1], [], []>} : vector<8x128xbf16>, vector<128x128xbf16>, vector<8x128xf32> -> vector<8x128xf32>
    %693 = vector.extract_strided_slice %636 {offsets = [3, 0], sizes = [1, 128], strides = [1, 1]} : vector<6x128xf32> to vector<1x128xf32>
    %694 = vector.broadcast %693 : vector<1x128xf32> to vector<8x128xf32>
    %695 = arith.addf %692, %694 : vector<8x128xf32>
    %696 = arith.addf %634, %695 : vector<8x128xf32>
    %697 = vector.extract_strided_slice %636 {offsets = [4, 0], sizes = [1, 128], strides = [1, 1]} : vector<6x128xf32> to vector<1x128xf32>
    %698 = vector.extract_strided_slice %636 {offsets = [5, 0], sizes = [1, 128], strides = [1, 1]} : vector<6x128xf32> to vector<1x128xf32>
    %cst_244 = arith.constant dense<0.000000e+00> : vector<8xf32>
    %699 = vector.multi_reduction <add>, %696, %cst_244 [1] : vector<8x128xf32> to vector<8xf32>
    %700 = vector.shape_cast %699 : vector<8xf32> to vector<8x1xf32>
    %cst_245 = arith.constant 1.280000e+02 : f32
    %701 = vector.broadcast %cst_245 : f32 to vector<8x1xf32>
    %702 = arith.divf %700, %701 : vector<8x1xf32>
    %703 = vector.broadcast %702 : vector<8x1xf32> to vector<8x128xf32>
    %704 = arith.subf %696, %703 : vector<8x128xf32>
    %705 = arith.mulf %704, %704 : vector<8x128xf32>
    %cst_246 = arith.constant dense<0.000000e+00> : vector<8xf32>
    %706 = vector.multi_reduction <add>, %705, %cst_246 [1] : vector<8x128xf32> to vector<8xf32>
    %707 = vector.shape_cast %706 : vector<8xf32> to vector<8x1xf32>
    %cst_247 = arith.constant 1.280000e+02 : f32
    %708 = vector.broadcast %cst_247 : f32 to vector<8x1xf32>
    %709 = arith.divf %707, %708 : vector<8x1xf32>
    %710 = vector.broadcast %702 : vector<8x1xf32> to vector<8x128xf32>
    %711 = arith.subf %696, %710 : vector<8x128xf32>
    %cst_248 = arith.constant 9.99999974E-6 : f32
    %712 = vector.broadcast %cst_248 : f32 to vector<8x1xf32>
    %713 = arith.addf %709, %712 : vector<8x1xf32>
    %714 = math.rsqrt %713 : vector<8x1xf32>
    %715 = vector.broadcast %714 : vector<8x1xf32> to vector<8x128xf32>
    %716 = arith.mulf %711, %715 : vector<8x128xf32>
    %717 = vector.broadcast %697 : vector<1x128xf32> to vector<8x128xf32>
    %718 = arith.mulf %716, %717 : vector<8x128xf32>
    %719 = vector.broadcast %698 : vector<1x128xf32> to vector<8x128xf32>
    %720 = arith.addf %718, %719 : vector<8x128xf32>
    %c3_249 = arith.constant 3 : index
    %c0_250 = arith.constant 0 : index
    %c0_251 = arith.constant 0 : index
    %721 = vector.load %arg20[%c3_249, %c0_250, %c0_251] : memref<6x3x128xf32, #tpu.memory_space<vmem>>, vector<1x3x128xf32>
    %722 = vector.shape_cast %721 : vector<1x3x128xf32> to vector<3x128xf32>
    %c3_252 = arith.constant 3 : index
    %c0_253 = arith.constant 0 : index
    %c0_254 = arith.constant 0 : index
    %723 = vector.load %arg17[%c3_252, %c0_253, %c0_254] : memref<6x128x512xbf16, #tpu.memory_space<vmem>>, vector<1x128x512xbf16>
    %724 = vector.shape_cast %723 : vector<1x128x512xbf16> to vector<128x512xbf16>
    %725 = arith.truncf %720 : vector<8x128xf32> to vector<8x128xbf16>
    %cst_255 = arith.constant dense<0.000000e+00> : vector<8x512xf32>
    %726 = tpu.matmul %725, %724, %cst_255 {dimension_numbers = #tpu.dot_dimension_numbers<[1], [0], [0], [1], [0, 0, 1, 1], [], []>} : vector<8x128xbf16>, vector<128x512xbf16>, vector<8x512xf32> -> vector<8x512xf32>
    %c3_256 = arith.constant 3 : index
    %c0_257 = arith.constant 0 : index
    %c0_258 = arith.constant 0 : index
    %727 = vector.load %arg18[%c3_256, %c0_257, %c0_258] : memref<6x1x512xf32, #tpu.memory_space<vmem>>, vector<1x1x512xf32>
    %728 = vector.shape_cast %727 : vector<1x1x512xf32> to vector<1x512xf32>
    %729 = vector.broadcast %728 : vector<1x512xf32> to vector<8x512xf32>
    %730 = arith.addf %726, %729 : vector<8x512xf32>
    %cst_259 = arith.constant 0.000000e+00 : f32
    %731 = vector.broadcast %cst_259 : f32 to vector<8x512xf32>
    %732 = arith.maximumf %730, %731 : vector<8x512xf32>
    %c3_260 = arith.constant 3 : index
    %c0_261 = arith.constant 0 : index
    %c0_262 = arith.constant 0 : index
    %733 = vector.load %arg19[%c3_260, %c0_261, %c0_262] : memref<6x512x128xbf16, #tpu.memory_space<vmem>>, vector<1x512x128xbf16>
    %734 = vector.shape_cast %733 : vector<1x512x128xbf16> to vector<512x128xbf16>
    %735 = arith.truncf %732 : vector<8x512xf32> to vector<8x512xbf16>
    %cst_263 = arith.constant dense<0.000000e+00> : vector<8x128xf32>
    %736 = tpu.matmul %735, %734, %cst_263 {dimension_numbers = #tpu.dot_dimension_numbers<[1], [0], [0], [1], [0, 0, 1, 1], [], []>} : vector<8x512xbf16>, vector<512x128xbf16>, vector<8x128xf32> -> vector<8x128xf32>
    %737 = vector.extract_strided_slice %722 {offsets = [0, 0], sizes = [1, 128], strides = [1, 1]} : vector<3x128xf32> to vector<1x128xf32>
    %738 = vector.broadcast %737 : vector<1x128xf32> to vector<8x128xf32>
    %739 = arith.addf %736, %738 : vector<8x128xf32>
    %740 = arith.addf %720, %739 : vector<8x128xf32>
    %741 = vector.extract_strided_slice %722 {offsets = [1, 0], sizes = [1, 128], strides = [1, 1]} : vector<3x128xf32> to vector<1x128xf32>
    %742 = vector.extract_strided_slice %722 {offsets = [2, 0], sizes = [1, 128], strides = [1, 1]} : vector<3x128xf32> to vector<1x128xf32>
    %cst_264 = arith.constant dense<0.000000e+00> : vector<8xf32>
    %743 = vector.multi_reduction <add>, %740, %cst_264 [1] : vector<8x128xf32> to vector<8xf32>
    %744 = vector.shape_cast %743 : vector<8xf32> to vector<8x1xf32>
    %cst_265 = arith.constant 1.280000e+02 : f32
    %745 = vector.broadcast %cst_265 : f32 to vector<8x1xf32>
    %746 = arith.divf %744, %745 : vector<8x1xf32>
    %747 = vector.broadcast %746 : vector<8x1xf32> to vector<8x128xf32>
    %748 = arith.subf %740, %747 : vector<8x128xf32>
    %749 = arith.mulf %748, %748 : vector<8x128xf32>
    %cst_266 = arith.constant dense<0.000000e+00> : vector<8xf32>
    %750 = vector.multi_reduction <add>, %749, %cst_266 [1] : vector<8x128xf32> to vector<8xf32>
    %751 = vector.shape_cast %750 : vector<8xf32> to vector<8x1xf32>
    %cst_267 = arith.constant 1.280000e+02 : f32
    %752 = vector.broadcast %cst_267 : f32 to vector<8x1xf32>
    %753 = arith.divf %751, %752 : vector<8x1xf32>
    %754 = vector.broadcast %746 : vector<8x1xf32> to vector<8x128xf32>
    %755 = arith.subf %740, %754 : vector<8x128xf32>
    %cst_268 = arith.constant 9.99999974E-6 : f32
    %756 = vector.broadcast %cst_268 : f32 to vector<8x1xf32>
    %757 = arith.addf %753, %756 : vector<8x1xf32>
    %758 = math.rsqrt %757 : vector<8x1xf32>
    %759 = vector.broadcast %758 : vector<8x1xf32> to vector<8x128xf32>
    %760 = arith.mulf %755, %759 : vector<8x128xf32>
    %761 = vector.broadcast %741 : vector<1x128xf32> to vector<8x128xf32>
    %762 = arith.mulf %760, %761 : vector<8x128xf32>
    %763 = vector.broadcast %742 : vector<1x128xf32> to vector<8x128xf32>
    %764 = arith.addf %762, %763 : vector<8x128xf32>
    %c4_269 = arith.constant 4 : index
    %c0_270 = arith.constant 0 : index
    %c0_271 = arith.constant 0 : index
    %765 = vector.load %arg16[%c4_269, %c0_270, %c0_271] : memref<6x6x128xf32, #tpu.memory_space<vmem>>, vector<1x6x128xf32>
    %766 = vector.shape_cast %765 : vector<1x6x128xf32> to vector<6x128xf32>
    %c16 = arith.constant 16 : index
    %c0_272 = arith.constant 0 : index
    %c0_273 = arith.constant 0 : index
    %767 = vector.load %arg15[%c16, %c0_272, %c0_273] : memref<24x128x128xbf16, #tpu.memory_space<vmem>>, vector<1x128x128xbf16>
    %768 = vector.shape_cast %767 : vector<1x128x128xbf16> to vector<128x128xbf16>
    %c17 = arith.constant 17 : index
    %c0_274 = arith.constant 0 : index
    %c0_275 = arith.constant 0 : index
    %769 = vector.load %arg15[%c17, %c0_274, %c0_275] : memref<24x128x128xbf16, #tpu.memory_space<vmem>>, vector<1x128x128xbf16>
    %770 = vector.shape_cast %769 : vector<1x128x128xbf16> to vector<128x128xbf16>
    %c18 = arith.constant 18 : index
    %c0_276 = arith.constant 0 : index
    %c0_277 = arith.constant 0 : index
    %771 = vector.load %arg15[%c18, %c0_276, %c0_277] : memref<24x128x128xbf16, #tpu.memory_space<vmem>>, vector<1x128x128xbf16>
    %772 = vector.shape_cast %771 : vector<1x128x128xbf16> to vector<128x128xbf16>
    %c19 = arith.constant 19 : index
    %c0_278 = arith.constant 0 : index
    %c0_279 = arith.constant 0 : index
    %773 = vector.load %arg15[%c19, %c0_278, %c0_279] : memref<24x128x128xbf16, #tpu.memory_space<vmem>>, vector<1x128x128xbf16>
    %774 = vector.shape_cast %773 : vector<1x128x128xbf16> to vector<128x128xbf16>
    %775 = arith.truncf %764 : vector<8x128xf32> to vector<8x128xbf16>
    %cst_280 = arith.constant dense<0.000000e+00> : vector<8x128xf32>
    %776 = tpu.matmul %775, %768, %cst_280 {dimension_numbers = #tpu.dot_dimension_numbers<[1], [0], [0], [1], [0, 0, 1, 1], [], []>} : vector<8x128xbf16>, vector<128x128xbf16>, vector<8x128xf32> -> vector<8x128xf32>
    %777 = vector.extract_strided_slice %766 {offsets = [0, 0], sizes = [1, 128], strides = [1, 1]} : vector<6x128xf32> to vector<1x128xf32>
    %778 = vector.broadcast %777 : vector<1x128xf32> to vector<8x128xf32>
    %779 = arith.addf %776, %778 : vector<8x128xf32>
    %780 = arith.truncf %171 : vector<32x128xf32> to vector<32x128xbf16>
    %cst_281 = arith.constant dense<0.000000e+00> : vector<32x128xf32>
    %781 = tpu.matmul %780, %770, %cst_281 {dimension_numbers = #tpu.dot_dimension_numbers<[1], [0], [0], [1], [0, 0, 1, 1], [], []>} : vector<32x128xbf16>, vector<128x128xbf16>, vector<32x128xf32> -> vector<32x128xf32>
    %782 = vector.extract_strided_slice %766 {offsets = [1, 0], sizes = [1, 128], strides = [1, 1]} : vector<6x128xf32> to vector<1x128xf32>
    %783 = vector.broadcast %782 : vector<1x128xf32> to vector<32x128xf32>
    %784 = arith.addf %781, %783 : vector<32x128xf32>
    %785 = arith.truncf %243 : vector<32x128xf32> to vector<32x128xbf16>
    %cst_282 = arith.constant dense<0.000000e+00> : vector<32x128xf32>
    %786 = tpu.matmul %785, %772, %cst_282 {dimension_numbers = #tpu.dot_dimension_numbers<[1], [0], [0], [1], [0, 0, 1, 1], [], []>} : vector<32x128xbf16>, vector<128x128xbf16>, vector<32x128xf32> -> vector<32x128xf32>
    %787 = vector.extract_strided_slice %766 {offsets = [2, 0], sizes = [1, 128], strides = [1, 1]} : vector<6x128xf32> to vector<1x128xf32>
    %788 = vector.broadcast %787 : vector<1x128xf32> to vector<32x128xf32>
    %789 = arith.addf %786, %788 : vector<32x128xf32>
    %790 = vector.shape_cast %779 : vector<8x128xf32> to vector<8x1x128xf32>
    %791 = vector.shape_cast %244 : vector<8x128xf32> to vector<1x8x128xf32>
    %792 = vector.broadcast %790 : vector<8x1x128xf32> to vector<8x8x128xf32>
    %793 = vector.broadcast %791 : vector<1x8x128xf32> to vector<8x8x128xf32>
    %794 = arith.mulf %792, %793 : vector<8x8x128xf32>
    %795 = vector.shape_cast %794 : vector<8x8x128xf32> to vector<64x128xf32>
    %796 = arith.truncf %795 : vector<64x128xf32> to vector<64x128xbf16>
    %797 = arith.truncf %784 : vector<32x128xf32> to vector<32x128xbf16>
    %cst_283 = arith.constant dense<0.000000e+00> : vector<64x32xf32>
    %798 = tpu.matmul %796, %797, %cst_283 {dimension_numbers = #tpu.dot_dimension_numbers<[1], [1], [0], [0], [0, 0, 1, 0], [], []>} : vector<64x128xbf16>, vector<32x128xbf16>, vector<64x32xf32> -> vector<64x32xf32>
    %cst_284 = arith.constant 2.500000e-01 : f32
    %799 = vector.broadcast %cst_284 : f32 to vector<64x32xf32>
    %800 = arith.mulf %798, %799 : vector<64x32xf32>
    %801 = vector.shape_cast %800 : vector<64x32xf32> to vector<8x8x32xf32>
    %cst_285 = arith.constant dense<0xFF800000> : vector<8x8xf32>
    %802 = vector.multi_reduction <maximumf>, %801, %cst_285 [2] : vector<8x8x32xf32> to vector<8x8xf32>
    %803 = vector.shape_cast %802 : vector<8x8xf32> to vector<8x8x1xf32>
    %804 = vector.broadcast %803 : vector<8x8x1xf32> to vector<8x8x32xf32>
    %805 = arith.subf %801, %804 : vector<8x8x32xf32>
    %806 = math.exp %805 : vector<8x8x32xf32>
    %cst_286 = arith.constant dense<0.000000e+00> : vector<8x8xf32>
    %807 = vector.multi_reduction <add>, %806, %cst_286 [2] : vector<8x8x32xf32> to vector<8x8xf32>
    %808 = vector.shape_cast %807 : vector<8x8xf32> to vector<8x8x1xf32>
    %809 = tpu.reciprocal %808 {approx = true} : vector<8x8x1xf32> -> vector<8x8x1xf32>
    %810 = vector.broadcast %809 : vector<8x8x1xf32> to vector<8x8x32xf32>
    %811 = arith.mulf %806, %810 : vector<8x8x32xf32>
    %812 = vector.shape_cast %811 : vector<8x8x32xf32> to vector<64x32xf32>
    %813 = arith.truncf %812 : vector<64x32xf32> to vector<64x32xbf16>
    %814 = arith.truncf %789 : vector<32x128xf32> to vector<32x128xbf16>
    %cst_287 = arith.constant dense<0.000000e+00> : vector<64x128xf32>
    %815 = tpu.matmul %813, %814, %cst_287 {dimension_numbers = #tpu.dot_dimension_numbers<[1], [0], [0], [1], [0, 0, 1, 1], [], []>} : vector<64x32xbf16>, vector<32x128xbf16>, vector<64x128xf32> -> vector<64x128xf32>
    %816 = vector.shape_cast %815 : vector<64x128xf32> to vector<8x8x128xf32>
    %817 = vector.shape_cast %244 : vector<8x128xf32> to vector<1x8x128xf32>
    %818 = vector.broadcast %817 : vector<1x8x128xf32> to vector<8x8x128xf32>
    %819 = arith.mulf %816, %818 : vector<8x8x128xf32>
    %cst_288 = arith.constant dense<0.000000e+00> : vector<8x128xf32>
    %820 = vector.multi_reduction <add>, %819, %cst_288 [1] : vector<8x8x128xf32> to vector<8x128xf32>
    %821 = arith.truncf %820 : vector<8x128xf32> to vector<8x128xbf16>
    %cst_289 = arith.constant dense<0.000000e+00> : vector<8x128xf32>
    %822 = tpu.matmul %821, %774, %cst_289 {dimension_numbers = #tpu.dot_dimension_numbers<[1], [0], [0], [1], [0, 0, 1, 1], [], []>} : vector<8x128xbf16>, vector<128x128xbf16>, vector<8x128xf32> -> vector<8x128xf32>
    %823 = vector.extract_strided_slice %766 {offsets = [3, 0], sizes = [1, 128], strides = [1, 1]} : vector<6x128xf32> to vector<1x128xf32>
    %824 = vector.broadcast %823 : vector<1x128xf32> to vector<8x128xf32>
    %825 = arith.addf %822, %824 : vector<8x128xf32>
    %826 = arith.addf %764, %825 : vector<8x128xf32>
    %827 = vector.extract_strided_slice %766 {offsets = [4, 0], sizes = [1, 128], strides = [1, 1]} : vector<6x128xf32> to vector<1x128xf32>
    %828 = vector.extract_strided_slice %766 {offsets = [5, 0], sizes = [1, 128], strides = [1, 1]} : vector<6x128xf32> to vector<1x128xf32>
    %cst_290 = arith.constant dense<0.000000e+00> : vector<8xf32>
    %829 = vector.multi_reduction <add>, %826, %cst_290 [1] : vector<8x128xf32> to vector<8xf32>
    %830 = vector.shape_cast %829 : vector<8xf32> to vector<8x1xf32>
    %cst_291 = arith.constant 1.280000e+02 : f32
    %831 = vector.broadcast %cst_291 : f32 to vector<8x1xf32>
    %832 = arith.divf %830, %831 : vector<8x1xf32>
    %833 = vector.broadcast %832 : vector<8x1xf32> to vector<8x128xf32>
    %834 = arith.subf %826, %833 : vector<8x128xf32>
    %835 = arith.mulf %834, %834 : vector<8x128xf32>
    %cst_292 = arith.constant dense<0.000000e+00> : vector<8xf32>
    %836 = vector.multi_reduction <add>, %835, %cst_292 [1] : vector<8x128xf32> to vector<8xf32>
    %837 = vector.shape_cast %836 : vector<8xf32> to vector<8x1xf32>
    %cst_293 = arith.constant 1.280000e+02 : f32
    %838 = vector.broadcast %cst_293 : f32 to vector<8x1xf32>
    %839 = arith.divf %837, %838 : vector<8x1xf32>
    %840 = vector.broadcast %832 : vector<8x1xf32> to vector<8x128xf32>
    %841 = arith.subf %826, %840 : vector<8x128xf32>
    %cst_294 = arith.constant 9.99999974E-6 : f32
    %842 = vector.broadcast %cst_294 : f32 to vector<8x1xf32>
    %843 = arith.addf %839, %842 : vector<8x1xf32>
    %844 = math.rsqrt %843 : vector<8x1xf32>
    %845 = vector.broadcast %844 : vector<8x1xf32> to vector<8x128xf32>
    %846 = arith.mulf %841, %845 : vector<8x128xf32>
    %847 = vector.broadcast %827 : vector<1x128xf32> to vector<8x128xf32>
    %848 = arith.mulf %846, %847 : vector<8x128xf32>
    %849 = vector.broadcast %828 : vector<1x128xf32> to vector<8x128xf32>
    %850 = arith.addf %848, %849 : vector<8x128xf32>
    %c4_295 = arith.constant 4 : index
    %c0_296 = arith.constant 0 : index
    %c0_297 = arith.constant 0 : index
    %851 = vector.load %arg20[%c4_295, %c0_296, %c0_297] : memref<6x3x128xf32, #tpu.memory_space<vmem>>, vector<1x3x128xf32>
    %852 = vector.shape_cast %851 : vector<1x3x128xf32> to vector<3x128xf32>
    %c4_298 = arith.constant 4 : index
    %c0_299 = arith.constant 0 : index
    %c0_300 = arith.constant 0 : index
    %853 = vector.load %arg17[%c4_298, %c0_299, %c0_300] : memref<6x128x512xbf16, #tpu.memory_space<vmem>>, vector<1x128x512xbf16>
    %854 = vector.shape_cast %853 : vector<1x128x512xbf16> to vector<128x512xbf16>
    %855 = arith.truncf %850 : vector<8x128xf32> to vector<8x128xbf16>
    %cst_301 = arith.constant dense<0.000000e+00> : vector<8x512xf32>
    %856 = tpu.matmul %855, %854, %cst_301 {dimension_numbers = #tpu.dot_dimension_numbers<[1], [0], [0], [1], [0, 0, 1, 1], [], []>} : vector<8x128xbf16>, vector<128x512xbf16>, vector<8x512xf32> -> vector<8x512xf32>
    %c4_302 = arith.constant 4 : index
    %c0_303 = arith.constant 0 : index
    %c0_304 = arith.constant 0 : index
    %857 = vector.load %arg18[%c4_302, %c0_303, %c0_304] : memref<6x1x512xf32, #tpu.memory_space<vmem>>, vector<1x1x512xf32>
    %858 = vector.shape_cast %857 : vector<1x1x512xf32> to vector<1x512xf32>
    %859 = vector.broadcast %858 : vector<1x512xf32> to vector<8x512xf32>
    %860 = arith.addf %856, %859 : vector<8x512xf32>
    %cst_305 = arith.constant 0.000000e+00 : f32
    %861 = vector.broadcast %cst_305 : f32 to vector<8x512xf32>
    %862 = arith.maximumf %860, %861 : vector<8x512xf32>
    %c4_306 = arith.constant 4 : index
    %c0_307 = arith.constant 0 : index
    %c0_308 = arith.constant 0 : index
    %863 = vector.load %arg19[%c4_306, %c0_307, %c0_308] : memref<6x512x128xbf16, #tpu.memory_space<vmem>>, vector<1x512x128xbf16>
    %864 = vector.shape_cast %863 : vector<1x512x128xbf16> to vector<512x128xbf16>
    %865 = arith.truncf %862 : vector<8x512xf32> to vector<8x512xbf16>
    %cst_309 = arith.constant dense<0.000000e+00> : vector<8x128xf32>
    %866 = tpu.matmul %865, %864, %cst_309 {dimension_numbers = #tpu.dot_dimension_numbers<[1], [0], [0], [1], [0, 0, 1, 1], [], []>} : vector<8x512xbf16>, vector<512x128xbf16>, vector<8x128xf32> -> vector<8x128xf32>
    %867 = vector.extract_strided_slice %852 {offsets = [0, 0], sizes = [1, 128], strides = [1, 1]} : vector<3x128xf32> to vector<1x128xf32>
    %868 = vector.broadcast %867 : vector<1x128xf32> to vector<8x128xf32>
    %869 = arith.addf %866, %868 : vector<8x128xf32>
    %870 = arith.addf %850, %869 : vector<8x128xf32>
    %871 = vector.extract_strided_slice %852 {offsets = [1, 0], sizes = [1, 128], strides = [1, 1]} : vector<3x128xf32> to vector<1x128xf32>
    %872 = vector.extract_strided_slice %852 {offsets = [2, 0], sizes = [1, 128], strides = [1, 1]} : vector<3x128xf32> to vector<1x128xf32>
    %cst_310 = arith.constant dense<0.000000e+00> : vector<8xf32>
    %873 = vector.multi_reduction <add>, %870, %cst_310 [1] : vector<8x128xf32> to vector<8xf32>
    %874 = vector.shape_cast %873 : vector<8xf32> to vector<8x1xf32>
    %cst_311 = arith.constant 1.280000e+02 : f32
    %875 = vector.broadcast %cst_311 : f32 to vector<8x1xf32>
    %876 = arith.divf %874, %875 : vector<8x1xf32>
    %877 = vector.broadcast %876 : vector<8x1xf32> to vector<8x128xf32>
    %878 = arith.subf %870, %877 : vector<8x128xf32>
    %879 = arith.mulf %878, %878 : vector<8x128xf32>
    %cst_312 = arith.constant dense<0.000000e+00> : vector<8xf32>
    %880 = vector.multi_reduction <add>, %879, %cst_312 [1] : vector<8x128xf32> to vector<8xf32>
    %881 = vector.shape_cast %880 : vector<8xf32> to vector<8x1xf32>
    %cst_313 = arith.constant 1.280000e+02 : f32
    %882 = vector.broadcast %cst_313 : f32 to vector<8x1xf32>
    %883 = arith.divf %881, %882 : vector<8x1xf32>
    %884 = vector.broadcast %876 : vector<8x1xf32> to vector<8x128xf32>
    %885 = arith.subf %870, %884 : vector<8x128xf32>
    %cst_314 = arith.constant 9.99999974E-6 : f32
    %886 = vector.broadcast %cst_314 : f32 to vector<8x1xf32>
    %887 = arith.addf %883, %886 : vector<8x1xf32>
    %888 = math.rsqrt %887 : vector<8x1xf32>
    %889 = vector.broadcast %888 : vector<8x1xf32> to vector<8x128xf32>
    %890 = arith.mulf %885, %889 : vector<8x128xf32>
    %891 = vector.broadcast %871 : vector<1x128xf32> to vector<8x128xf32>
    %892 = arith.mulf %890, %891 : vector<8x128xf32>
    %893 = vector.broadcast %872 : vector<1x128xf32> to vector<8x128xf32>
    %894 = arith.addf %892, %893 : vector<8x128xf32>
    %c5_315 = arith.constant 5 : index
    %c0_316 = arith.constant 0 : index
    %c0_317 = arith.constant 0 : index
    %895 = vector.load %arg16[%c5_315, %c0_316, %c0_317] : memref<6x6x128xf32, #tpu.memory_space<vmem>>, vector<1x6x128xf32>
    %896 = vector.shape_cast %895 : vector<1x6x128xf32> to vector<6x128xf32>
    %c20 = arith.constant 20 : index
    %c0_318 = arith.constant 0 : index
    %c0_319 = arith.constant 0 : index
    %897 = vector.load %arg15[%c20, %c0_318, %c0_319] : memref<24x128x128xbf16, #tpu.memory_space<vmem>>, vector<1x128x128xbf16>
    %898 = vector.shape_cast %897 : vector<1x128x128xbf16> to vector<128x128xbf16>
    %c21 = arith.constant 21 : index
    %c0_320 = arith.constant 0 : index
    %c0_321 = arith.constant 0 : index
    %899 = vector.load %arg15[%c21, %c0_320, %c0_321] : memref<24x128x128xbf16, #tpu.memory_space<vmem>>, vector<1x128x128xbf16>
    %900 = vector.shape_cast %899 : vector<1x128x128xbf16> to vector<128x128xbf16>
    %c22 = arith.constant 22 : index
    %c0_322 = arith.constant 0 : index
    %c0_323 = arith.constant 0 : index
    %901 = vector.load %arg15[%c22, %c0_322, %c0_323] : memref<24x128x128xbf16, #tpu.memory_space<vmem>>, vector<1x128x128xbf16>
    %902 = vector.shape_cast %901 : vector<1x128x128xbf16> to vector<128x128xbf16>
    %c23 = arith.constant 23 : index
    %c0_324 = arith.constant 0 : index
    %c0_325 = arith.constant 0 : index
    %903 = vector.load %arg15[%c23, %c0_324, %c0_325] : memref<24x128x128xbf16, #tpu.memory_space<vmem>>, vector<1x128x128xbf16>
    %904 = vector.shape_cast %903 : vector<1x128x128xbf16> to vector<128x128xbf16>
    %905 = arith.truncf %894 : vector<8x128xf32> to vector<8x128xbf16>
    %cst_326 = arith.constant dense<0.000000e+00> : vector<8x128xf32>
    %906 = tpu.matmul %905, %898, %cst_326 {dimension_numbers = #tpu.dot_dimension_numbers<[1], [0], [0], [1], [0, 0, 1, 1], [], []>} : vector<8x128xbf16>, vector<128x128xbf16>, vector<8x128xf32> -> vector<8x128xf32>
    %907 = vector.extract_strided_slice %896 {offsets = [0, 0], sizes = [1, 128], strides = [1, 1]} : vector<6x128xf32> to vector<1x128xf32>
    %908 = vector.broadcast %907 : vector<1x128xf32> to vector<8x128xf32>
    %909 = arith.addf %906, %908 : vector<8x128xf32>
    %910 = arith.truncf %171 : vector<32x128xf32> to vector<32x128xbf16>
    %cst_327 = arith.constant dense<0.000000e+00> : vector<32x128xf32>
    %911 = tpu.matmul %910, %900, %cst_327 {dimension_numbers = #tpu.dot_dimension_numbers<[1], [0], [0], [1], [0, 0, 1, 1], [], []>} : vector<32x128xbf16>, vector<128x128xbf16>, vector<32x128xf32> -> vector<32x128xf32>
    %912 = vector.extract_strided_slice %896 {offsets = [1, 0], sizes = [1, 128], strides = [1, 1]} : vector<6x128xf32> to vector<1x128xf32>
    %913 = vector.broadcast %912 : vector<1x128xf32> to vector<32x128xf32>
    %914 = arith.addf %911, %913 : vector<32x128xf32>
    %915 = arith.truncf %243 : vector<32x128xf32> to vector<32x128xbf16>
    %cst_328 = arith.constant dense<0.000000e+00> : vector<32x128xf32>
    %916 = tpu.matmul %915, %902, %cst_328 {dimension_numbers = #tpu.dot_dimension_numbers<[1], [0], [0], [1], [0, 0, 1, 1], [], []>} : vector<32x128xbf16>, vector<128x128xbf16>, vector<32x128xf32> -> vector<32x128xf32>
    %917 = vector.extract_strided_slice %896 {offsets = [2, 0], sizes = [1, 128], strides = [1, 1]} : vector<6x128xf32> to vector<1x128xf32>
    %918 = vector.broadcast %917 : vector<1x128xf32> to vector<32x128xf32>
    %919 = arith.addf %916, %918 : vector<32x128xf32>
    %920 = vector.shape_cast %909 : vector<8x128xf32> to vector<8x1x128xf32>
    %921 = vector.shape_cast %244 : vector<8x128xf32> to vector<1x8x128xf32>
    %922 = vector.broadcast %920 : vector<8x1x128xf32> to vector<8x8x128xf32>
    %923 = vector.broadcast %921 : vector<1x8x128xf32> to vector<8x8x128xf32>
    %924 = arith.mulf %922, %923 : vector<8x8x128xf32>
    %925 = vector.shape_cast %924 : vector<8x8x128xf32> to vector<64x128xf32>
    %926 = arith.truncf %925 : vector<64x128xf32> to vector<64x128xbf16>
    %927 = arith.truncf %914 : vector<32x128xf32> to vector<32x128xbf16>
    %cst_329 = arith.constant dense<0.000000e+00> : vector<64x32xf32>
    %928 = tpu.matmul %926, %927, %cst_329 {dimension_numbers = #tpu.dot_dimension_numbers<[1], [1], [0], [0], [0, 0, 1, 0], [], []>} : vector<64x128xbf16>, vector<32x128xbf16>, vector<64x32xf32> -> vector<64x32xf32>
    %cst_330 = arith.constant 2.500000e-01 : f32
    %929 = vector.broadcast %cst_330 : f32 to vector<64x32xf32>
    %930 = arith.mulf %928, %929 : vector<64x32xf32>
    %931 = vector.shape_cast %930 : vector<64x32xf32> to vector<8x8x32xf32>
    %cst_331 = arith.constant dense<0xFF800000> : vector<8x8xf32>
    %932 = vector.multi_reduction <maximumf>, %931, %cst_331 [2] : vector<8x8x32xf32> to vector<8x8xf32>
    %933 = vector.shape_cast %932 : vector<8x8xf32> to vector<8x8x1xf32>
    %934 = vector.broadcast %933 : vector<8x8x1xf32> to vector<8x8x32xf32>
    %935 = arith.subf %931, %934 : vector<8x8x32xf32>
    %936 = math.exp %935 : vector<8x8x32xf32>
    %cst_332 = arith.constant dense<0.000000e+00> : vector<8x8xf32>
    %937 = vector.multi_reduction <add>, %936, %cst_332 [2] : vector<8x8x32xf32> to vector<8x8xf32>
    %938 = vector.shape_cast %937 : vector<8x8xf32> to vector<8x8x1xf32>
    %939 = vector.broadcast %938 : vector<8x8x1xf32> to vector<8x8x32xf32>
    %940 = arith.divf %936, %939 : vector<8x8x32xf32>
    %941 = vector.shape_cast %940 : vector<8x8x32xf32> to vector<64x32xf32>
    %942 = arith.truncf %941 : vector<64x32xf32> to vector<64x32xbf16>
    %943 = arith.truncf %919 : vector<32x128xf32> to vector<32x128xbf16>
    %cst_333 = arith.constant dense<0.000000e+00> : vector<64x128xf32>
    %944 = tpu.matmul %942, %943, %cst_333 {dimension_numbers = #tpu.dot_dimension_numbers<[1], [0], [0], [1], [0, 0, 1, 1], [], []>} : vector<64x32xbf16>, vector<32x128xbf16>, vector<64x128xf32> -> vector<64x128xf32>
    %945 = vector.shape_cast %944 : vector<64x128xf32> to vector<8x8x128xf32>
    %946 = vector.shape_cast %244 : vector<8x128xf32> to vector<1x8x128xf32>
    %947 = vector.broadcast %946 : vector<1x8x128xf32> to vector<8x8x128xf32>
    %948 = arith.mulf %945, %947 : vector<8x8x128xf32>
    %cst_334 = arith.constant dense<0.000000e+00> : vector<8x128xf32>
    %949 = vector.multi_reduction <add>, %948, %cst_334 [1] : vector<8x8x128xf32> to vector<8x128xf32>
    %950 = arith.truncf %949 : vector<8x128xf32> to vector<8x128xbf16>
    %cst_335 = arith.constant dense<0.000000e+00> : vector<8x128xf32>
    %951 = tpu.matmul %950, %904, %cst_335 {dimension_numbers = #tpu.dot_dimension_numbers<[1], [0], [0], [1], [0, 0, 1, 1], [], []>} : vector<8x128xbf16>, vector<128x128xbf16>, vector<8x128xf32> -> vector<8x128xf32>
    %952 = vector.extract_strided_slice %896 {offsets = [3, 0], sizes = [1, 128], strides = [1, 1]} : vector<6x128xf32> to vector<1x128xf32>
    %953 = vector.broadcast %952 : vector<1x128xf32> to vector<8x128xf32>
    %954 = arith.addf %951, %953 : vector<8x128xf32>
    %955 = arith.addf %894, %954 : vector<8x128xf32>
    %956 = vector.extract_strided_slice %896 {offsets = [4, 0], sizes = [1, 128], strides = [1, 1]} : vector<6x128xf32> to vector<1x128xf32>
    %957 = vector.extract_strided_slice %896 {offsets = [5, 0], sizes = [1, 128], strides = [1, 1]} : vector<6x128xf32> to vector<1x128xf32>
    %cst_336 = arith.constant dense<0.000000e+00> : vector<8xf32>
    %958 = vector.multi_reduction <add>, %955, %cst_336 [1] : vector<8x128xf32> to vector<8xf32>
    %959 = vector.shape_cast %958 : vector<8xf32> to vector<8x1xf32>
    %cst_337 = arith.constant 1.280000e+02 : f32
    %960 = vector.broadcast %cst_337 : f32 to vector<8x1xf32>
    %961 = arith.divf %959, %960 : vector<8x1xf32>
    %962 = vector.broadcast %961 : vector<8x1xf32> to vector<8x128xf32>
    %963 = arith.subf %955, %962 : vector<8x128xf32>
    %964 = arith.mulf %963, %963 : vector<8x128xf32>
    %cst_338 = arith.constant dense<0.000000e+00> : vector<8xf32>
    %965 = vector.multi_reduction <add>, %964, %cst_338 [1] : vector<8x128xf32> to vector<8xf32>
    %966 = vector.shape_cast %965 : vector<8xf32> to vector<8x1xf32>
    %cst_339 = arith.constant 1.280000e+02 : f32
    %967 = vector.broadcast %cst_339 : f32 to vector<8x1xf32>
    %968 = arith.divf %966, %967 : vector<8x1xf32>
    %969 = vector.broadcast %961 : vector<8x1xf32> to vector<8x128xf32>
    %970 = arith.subf %955, %969 : vector<8x128xf32>
    %cst_340 = arith.constant 9.99999974E-6 : f32
    %971 = vector.broadcast %cst_340 : f32 to vector<8x1xf32>
    %972 = arith.addf %968, %971 : vector<8x1xf32>
    %973 = math.rsqrt %972 : vector<8x1xf32>
    %974 = vector.broadcast %973 : vector<8x1xf32> to vector<8x128xf32>
    %975 = arith.mulf %970, %974 : vector<8x128xf32>
    %976 = vector.broadcast %956 : vector<1x128xf32> to vector<8x128xf32>
    %977 = arith.mulf %975, %976 : vector<8x128xf32>
    %978 = vector.broadcast %957 : vector<1x128xf32> to vector<8x128xf32>
    %979 = arith.addf %977, %978 : vector<8x128xf32>
    %c5_341 = arith.constant 5 : index
    %c0_342 = arith.constant 0 : index
    %c0_343 = arith.constant 0 : index
    %980 = vector.load %arg20[%c5_341, %c0_342, %c0_343] : memref<6x3x128xf32, #tpu.memory_space<vmem>>, vector<1x3x128xf32>
    %981 = vector.shape_cast %980 : vector<1x3x128xf32> to vector<3x128xf32>
    %c5_344 = arith.constant 5 : index
    %c0_345 = arith.constant 0 : index
    %c0_346 = arith.constant 0 : index
    %982 = vector.load %arg17[%c5_344, %c0_345, %c0_346] : memref<6x128x512xbf16, #tpu.memory_space<vmem>>, vector<1x128x512xbf16>
    %983 = vector.shape_cast %982 : vector<1x128x512xbf16> to vector<128x512xbf16>
    %984 = arith.truncf %979 : vector<8x128xf32> to vector<8x128xbf16>
    %cst_347 = arith.constant dense<0.000000e+00> : vector<8x512xf32>
    %985 = tpu.matmul %984, %983, %cst_347 {dimension_numbers = #tpu.dot_dimension_numbers<[1], [0], [0], [1], [0, 0, 1, 1], [], []>} : vector<8x128xbf16>, vector<128x512xbf16>, vector<8x512xf32> -> vector<8x512xf32>
    %c5_348 = arith.constant 5 : index
    %c0_349 = arith.constant 0 : index
    %c0_350 = arith.constant 0 : index
    %986 = vector.load %arg18[%c5_348, %c0_349, %c0_350] : memref<6x1x512xf32, #tpu.memory_space<vmem>>, vector<1x1x512xf32>
    %987 = vector.shape_cast %986 : vector<1x1x512xf32> to vector<1x512xf32>
    %988 = vector.broadcast %987 : vector<1x512xf32> to vector<8x512xf32>
    %989 = arith.addf %985, %988 : vector<8x512xf32>
    %cst_351 = arith.constant 0.000000e+00 : f32
    %990 = vector.broadcast %cst_351 : f32 to vector<8x512xf32>
    %991 = arith.maximumf %989, %990 : vector<8x512xf32>
    %c5_352 = arith.constant 5 : index
    %c0_353 = arith.constant 0 : index
    %c0_354 = arith.constant 0 : index
    %992 = vector.load %arg19[%c5_352, %c0_353, %c0_354] : memref<6x512x128xbf16, #tpu.memory_space<vmem>>, vector<1x512x128xbf16>
    %993 = vector.shape_cast %992 : vector<1x512x128xbf16> to vector<512x128xbf16>
    %994 = arith.truncf %991 : vector<8x512xf32> to vector<8x512xbf16>
    %cst_355 = arith.constant dense<0.000000e+00> : vector<8x128xf32>
    %995 = tpu.matmul %994, %993, %cst_355 {dimension_numbers = #tpu.dot_dimension_numbers<[1], [0], [0], [1], [0, 0, 1, 1], [], []>} : vector<8x512xbf16>, vector<512x128xbf16>, vector<8x128xf32> -> vector<8x128xf32>
    %996 = vector.extract_strided_slice %981 {offsets = [0, 0], sizes = [1, 128], strides = [1, 1]} : vector<3x128xf32> to vector<1x128xf32>
    %997 = vector.broadcast %996 : vector<1x128xf32> to vector<8x128xf32>
    %998 = arith.addf %995, %997 : vector<8x128xf32>
    %999 = arith.addf %979, %998 : vector<8x128xf32>
    %1000 = vector.extract_strided_slice %981 {offsets = [1, 0], sizes = [1, 128], strides = [1, 1]} : vector<3x128xf32> to vector<1x128xf32>
    %1001 = vector.extract_strided_slice %981 {offsets = [2, 0], sizes = [1, 128], strides = [1, 1]} : vector<3x128xf32> to vector<1x128xf32>
    %cst_356 = arith.constant dense<0.000000e+00> : vector<8xf32>
    %1002 = vector.multi_reduction <add>, %999, %cst_356 [1] : vector<8x128xf32> to vector<8xf32>
    %1003 = vector.shape_cast %1002 : vector<8xf32> to vector<8x1xf32>
    %cst_357 = arith.constant 1.280000e+02 : f32
    %1004 = vector.broadcast %cst_357 : f32 to vector<8x1xf32>
    %1005 = arith.divf %1003, %1004 : vector<8x1xf32>
    %1006 = vector.broadcast %1005 : vector<8x1xf32> to vector<8x128xf32>
    %1007 = arith.subf %999, %1006 : vector<8x128xf32>
    %1008 = arith.mulf %1007, %1007 : vector<8x128xf32>
    %cst_358 = arith.constant dense<0.000000e+00> : vector<8xf32>
    %1009 = vector.multi_reduction <add>, %1008, %cst_358 [1] : vector<8x128xf32> to vector<8xf32>
    %1010 = vector.shape_cast %1009 : vector<8xf32> to vector<8x1xf32>
    %cst_359 = arith.constant 1.280000e+02 : f32
    %1011 = vector.broadcast %cst_359 : f32 to vector<8x1xf32>
    %1012 = arith.divf %1010, %1011 : vector<8x1xf32>
    %1013 = vector.broadcast %1005 : vector<8x1xf32> to vector<8x128xf32>
    %1014 = arith.subf %999, %1013 : vector<8x128xf32>
    %cst_360 = arith.constant 9.99999974E-6 : f32
    %1015 = vector.broadcast %cst_360 : f32 to vector<8x1xf32>
    %1016 = arith.addf %1012, %1015 : vector<8x1xf32>
    %1017 = math.rsqrt %1016 : vector<8x1xf32>
    %1018 = vector.broadcast %1017 : vector<8x1xf32> to vector<8x128xf32>
    %1019 = arith.mulf %1014, %1018 : vector<8x128xf32>
    %1020 = vector.broadcast %1000 : vector<1x128xf32> to vector<8x128xf32>
    %1021 = arith.mulf %1019, %1020 : vector<8x128xf32>
    %1022 = vector.broadcast %1001 : vector<1x128xf32> to vector<8x128xf32>
    %1023 = arith.addf %1021, %1022 : vector<8x128xf32>
    %cst_361 = arith.constant dense<0.000000e+00> : vector<8x32xf32>
    %1024 = vector.multi_reduction <add>, %940, %cst_361 [1] : vector<8x8x32xf32> to vector<8x32xf32>
    %cst_362 = arith.constant 8.000000e+00 : f32
    %1025 = vector.broadcast %cst_362 : f32 to vector<8x32xf32>
    %1026 = arith.divf %1024, %1025 : vector<8x32xf32>
    %c0_363 = arith.constant 0 : index
    %c0_364 = arith.constant 0 : index
    %1027 = vector.load %arg26[%c0_363, %c0_364] : memref<8x32xf32, #tpu.memory_space<vmem>>, vector<8x32xf32>
    tpu.vector_store %arg26[%c0_363, %c0_364], %1026 {strides = array<i32>} : memref<8x32xf32, #tpu.memory_space<vmem>>, vector<8x32xf32>,
    %c0_365 = arith.constant 0 : index
    %c0_366 = arith.constant 0 : index
    %1028 = vector.load %arg21[%c0_365, %c0_366] : memref<3x128xf32, #tpu.memory_space<vmem>>, vector<3x128xf32>
    %1029 = vector.extract_strided_slice %1028 {offsets = [0, 0], sizes = [1, 128], strides = [1, 1]} : vector<3x128xf32> to vector<1x128xf32>
    %1030 = vector.extract_strided_slice %1028 {offsets = [1, 0], sizes = [1, 128], strides = [1, 1]} : vector<3x128xf32> to vector<1x128xf32>
    %cst_367 = arith.constant dense<0.000000e+00> : vector<8xf32>
    %1031 = vector.multi_reduction <add>, %1023, %cst_367 [1] : vector<8x128xf32> to vector<8xf32>
    %1032 = vector.shape_cast %1031 : vector<8xf32> to vector<8x1xf32>
    %cst_368 = arith.constant 1.280000e+02 : f32
    %1033 = vector.broadcast %cst_368 : f32 to vector<8x1xf32>
    %1034 = arith.divf %1032, %1033 : vector<8x1xf32>
    %1035 = vector.broadcast %1034 : vector<8x1xf32> to vector<8x128xf32>
    %1036 = arith.subf %1023, %1035 : vector<8x128xf32>
    %1037 = arith.mulf %1036, %1036 : vector<8x128xf32>
    %cst_369 = arith.constant dense<0.000000e+00> : vector<8xf32>
    %1038 = vector.multi_reduction <add>, %1037, %cst_369 [1] : vector<8x128xf32> to vector<8xf32>
    %1039 = vector.shape_cast %1038 : vector<8xf32> to vector<8x1xf32>
    %cst_370 = arith.constant 1.280000e+02 : f32
    %1040 = vector.broadcast %cst_370 : f32 to vector<8x1xf32>
    %1041 = arith.divf %1039, %1040 : vector<8x1xf32>
    %1042 = vector.broadcast %1034 : vector<8x1xf32> to vector<8x128xf32>
    %1043 = arith.subf %1023, %1042 : vector<8x128xf32>
    %cst_371 = arith.constant 9.99999974E-6 : f32
    %1044 = vector.broadcast %cst_371 : f32 to vector<8x1xf32>
    %1045 = arith.addf %1041, %1044 : vector<8x1xf32>
    %1046 = math.rsqrt %1045 : vector<8x1xf32>
    %1047 = vector.broadcast %1046 : vector<8x1xf32> to vector<8x128xf32>
    %1048 = arith.mulf %1043, %1047 : vector<8x128xf32>
    %1049 = vector.broadcast %1029 : vector<1x128xf32> to vector<8x128xf32>
    %1050 = arith.mulf %1048, %1049 : vector<8x128xf32>
    %1051 = vector.broadcast %1030 : vector<1x128xf32> to vector<8x128xf32>
    %1052 = arith.addf %1050, %1051 : vector<8x128xf32>
    %c0_372 = arith.constant 0 : index
    %c0_373 = arith.constant 0 : index
    %1053 = vector.load %arg22[%c0_372, %c0_373] : memref<128x128xbf16, #tpu.memory_space<vmem>>, vector<128x128xbf16>
    %1054 = arith.truncf %1052 : vector<8x128xf32> to vector<8x128xbf16>
    %cst_374 = arith.constant dense<0.000000e+00> : vector<8x128xf32>
    %1055 = tpu.matmul %1054, %1053, %cst_374 {dimension_numbers = #tpu.dot_dimension_numbers<[1], [0], [0], [1], [0, 0, 1, 1], [], []>} : vector<8x128xbf16>, vector<128x128xbf16>, vector<8x128xf32> -> vector<8x128xf32>
    %1056 = vector.extract_strided_slice %1028 {offsets = [2, 0], sizes = [1, 128], strides = [1, 1]} : vector<3x128xf32> to vector<1x128xf32>
    %1057 = vector.broadcast %1056 : vector<1x128xf32> to vector<8x128xf32>
    %1058 = arith.addf %1055, %1057 : vector<8x128xf32>
    %cst_375 = arith.constant 0.000000e+00 : f32
    %1059 = vector.broadcast %cst_375 : f32 to vector<8x128xf32>
    %1060 = arith.maximumf %1058, %1059 : vector<8x128xf32>
    %c0_376 = arith.constant 0 : index
    %c0_377 = arith.constant 0 : index
    %1061 = vector.load %arg23[%c0_376, %c0_377] : memref<128x18xbf16, #tpu.memory_space<vmem>>, vector<128x18xbf16>
    %1062 = arith.truncf %1060 : vector<8x128xf32> to vector<8x128xbf16>
    %cst_378 = arith.constant dense<0.000000e+00> : vector<8x18xf32>
    %1063 = tpu.matmul %1062, %1061, %cst_378 {dimension_numbers = #tpu.dot_dimension_numbers<[1], [0], [0], [1], [0, 0, 1, 1], [], []>} : vector<8x128xbf16>, vector<128x18xbf16>, vector<8x18xf32> -> vector<8x18xf32>
    %c0_379 = arith.constant 0 : index
    %c0_380 = arith.constant 0 : index
    %1064 = vector.load %arg24[%c0_379, %c0_380] : memref<1x18xf32, #tpu.memory_space<vmem>>, vector<1x18xf32>
    %1065 = vector.broadcast %1064 : vector<1x18xf32> to vector<8x18xf32>
    %1066 = arith.addf %1063, %1065 : vector<8x18xf32>
    %c0_381 = arith.constant 0 : index
    %c0_382 = arith.constant 0 : index
    %1067 = vector.load %arg25[%c0_381, %c0_382] : memref<8x18xf32, #tpu.memory_space<vmem>>, vector<8x18xf32>
    tpu.vector_store %arg25[%c0_381, %c0_382], %1066 {strides = array<i32>} : memref<8x18xf32, #tpu.memory_space<vmem>>, vector<8x18xf32>,
    return
  }
}

</mosaic_0001>

<llo_original>
// kernel: _lambda_.1
$region0: #{_lambda_.1}
  #allocation0 [shape = 'u32[]', space=smem, size = 0x4, offset = 0x4, fixed_abs, tag = 'smem constant byte address 0x4 - core index']
  #allocation1 [shape = 'u32[72,128]{1,0:T(1,128)}', space=vmem, size = 0x9000, scoped, tag = 'internal scratch']
  %s0 = inlined_call_operand.hbm [shape: f32[8,32], index: 0, kind: input, shape index: {}]
  %s1 = inlined_call_operand.vmem [shape: f32[8,2], index: 1, kind: input, shape index: {}]
  %s2 = inlined_call_operand.hbm [shape: f32[2,128], index: 2, kind: input, shape index: {}]
  %s3 = inlined_call_operand.hbm [shape: f32[2,128], index: 3, kind: input, shape index: {}]
  %s4 = inlined_call_operand.hbm [shape: bf16[128,128], index: 4, kind: input, shape index: {}]
  %s5 = inlined_call_operand.hbm [shape: bf16[32,128], index: 5, kind: input, shape index: {}]
  %s6 = inlined_call_operand.hbm [shape: bf16[128,128], index: 6, kind: input, shape index: {}]
  %s7 = inlined_call_operand.hbm [shape: bf16[128,128], index: 7, kind: input, shape index: {}]
  %s8 = inlined_call_operand.hbm [shape: f32[6,128], index: 8, kind: input, shape index: {}]
  %s9 = inlined_call_operand.hbm [shape: f32[32,64], index: 9, kind: input, shape index: {}]
  %s10 = inlined_call_operand.hbm [shape: bf16[2,64,256], index: 10, kind: input, shape index: {}]
  %s11 = inlined_call_operand.hbm [shape: f32[2,3,256], index: 11, kind: input, shape index: {}]
  %s12 = inlined_call_operand.hbm [shape: bf16[2,256,128], index: 12, kind: input, shape index: {}]
  %s13 = inlined_call_operand.hbm [shape: f32[2,3,128], index: 13, kind: input, shape index: {}]
  %s14 = inlined_call_operand.hbm [shape: f32[8,128], index: 14, kind: input, shape index: {}]
  %s15 = inlined_call_operand.hbm [shape: bf16[24,128,128], index: 15, kind: input, shape index: {}]
  %s16 = inlined_call_operand.hbm [shape: f32[6,6,128], index: 16, kind: input, shape index: {}]
  %s17 = inlined_call_operand.hbm [shape: bf16[6,128,512], index: 17, kind: input, shape index: {}]
  %s18 = inlined_call_operand.hbm [shape: f32[6,1,512], index: 18, kind: input, shape index: {}]
  %s19 = inlined_call_operand.hbm [shape: bf16[6,512,128], index: 19, kind: input, shape index: {}]
  %s20 = inlined_call_operand.vmem [shape: f32[6,3,128], index: 20, kind: input, shape index: {}]
  %s21 = inlined_call_operand.vmem [shape: f32[3,128], index: 21, kind: input, shape index: {}]
  %s22 = inlined_call_operand.hbm [shape: bf16[128,128], index: 22, kind: input, shape index: {}]
  %s23 = inlined_call_operand.hbm [shape: bf16[128,18], index: 23, kind: input, shape index: {}]
  %s24 = inlined_call_operand.vmem [shape: f32[1,18], index: 24, kind: input, shape index: {}]
  %s25 = inlined_call_operand.hbm [shape: f32[8,18], index: 25, kind: output, shape index: {0}]
  %s26 = inlined_call_operand.hbm [shape: f32[8,32], index: 26, kind: output, shape index: {1}]
  %27 = xla_tuple %s25, %s26
  %s28 = sld [smem:[#allocation0]]
  $region202: #{_lambda_.1} parent=0
    _
  %s30 = ssub.s32 1, %s28
  %s31 = scalar_select 0, %s30, %s28
  $region1: #{_lambda_.1} parent=0
    #allocation2 [shape = 'u8[4096]{0}', space=vmem, size = 0x1000, scoped, tag = 'input window, operand 0, single buffered']
    #allocation3 [shape = 's32[1]{0}', space=sflag, size = 0x4, scoped, tag = 'scoped memory for _lambda_.1']
    #allocation4 [shape = 's32[1]{0}', space=sflag, size = 0x4, scoped, tag = 'scoped memory for _lambda_.1']
    #allocation5 [shape = 'u8[1024]{0}', space=vmem, size = 0x400, scoped, tag = 'input window, operand 2, single buffered']
    #allocation6 [shape = 's32[1]{0}', space=sflag, size = 0x4, scoped, tag = 'scoped memory for _lambda_.1']
    #allocation7 [shape = 'u8[1024]{0}', space=vmem, size = 0x400, scoped, tag = 'input window, operand 3, single buffered']
    #allocation8 [shape = 'u8[32768]{0}', space=vmem, size = 0x8000, scoped, tag = 'input window, operand 4, single buffered']
    #allocation9 [shape = 's32[1]{0}', space=sflag, size = 0x4, scoped, tag = 'scoped memory for _lambda_.1']
    #allocation10 [shape = 'u8[8192]{0}', space=vmem, size = 0x2000, scoped, tag = 'input window, operand 5, single buffered']
    #allocation11 [shape = 'u8[32768]{0}', space=vmem, size = 0x8000, scoped, tag = 'input window, operand 6, single buffered']
    #allocation12 [shape = 's32[1]{0}', space=sflag, size = 0x4, scoped, tag = 'scoped memory for _lambda_.1']
    #allocation13 [shape = 'u8[32768]{0}', space=vmem, size = 0x8000, scoped, tag = 'input window, operand 7, single buffered']
    #allocation14 [shape = 'u8[4096]{0}', space=vmem, size = 0x1000, scoped, tag = 'input window, operand 8, single buffered']
    #allocation15 [shape = 's32[1]{0}', space=sflag, size = 0x4, scoped, tag = 'scoped memory for _lambda_.1']
    #allocation16 [shape = 'u8[16384]{0}', space=vmem, size = 0x4000, scoped, tag = 'input window, operand 9, single buffered']
    #allocation17 [shape = 'u8[65536]{0}', space=vmem, size = 0x10000, scoped, tag = 'input window, operand 10, single buffered']
    #allocation18 [shape = 's32[1]{0}', space=sflag, size = 0x4, scoped, tag = 'scoped memory for _lambda_.1']
    #allocation19 [shape = 'u8[8192]{0}', space=vmem, size = 0x2000, scoped, tag = 'input window, operand 11, single buffered']
    #allocation20 [shape = 'u8[131072]{0}', space=vmem, size = 0x20000, scoped, tag = 'input window, operand 12, single buffered']
    #allocation21 [shape = 's32[1]{0}', space=sflag, size = 0x4, scoped, tag = 'scoped memory for _lambda_.1']
    #allocation22 [shape = 'u8[4096]{0}', space=vmem, size = 0x1000, scoped, tag = 'input window, operand 13, single buffered']
    #allocation23 [shape = 'u8[4096]{0}', space=vmem, size = 0x1000, scoped, tag = 'input window, operand 14, single buffered']
    #allocation24 [shape = 's32[1]{0}', space=sflag, size = 0x4, scoped, tag = 'scoped memory for _lambda_.1']
    #allocation25 [shape = 'u8[786432]{0}', space=vmem, size = 0xc0000, scoped, tag = 'input window, operand 15, single buffered']
    #allocation26 [shape = 'u8[24576]{0}', space=vmem, size = 0x6000, scoped, tag = 'input window, operand 16, single buffered']
    #allocation27 [shape = 's32[1]{0}', space=sflag, size = 0x4, scoped, tag = 'scoped memory for _lambda_.1']
    #allocation28 [shape = 'u8[786432]{0}', space=vmem, size = 0xc0000, scoped, tag = 'input window, operand 17, single buffered']
    #allocation29 [shape = 'u8[12288]{0}', space=vmem, size = 0x3000, scoped, tag = 'input window, operand 18, single buffered']
    #allocation30 [shape = 's32[1]{0}', space=sflag, size = 0x4, scoped, tag = 'scoped memory for _lambda_.1']
    #allocation31 [shape = 'u8[786432]{0}', space=vmem, size = 0xc0000, scoped, tag = 'input window, operand 19, single buffered']
    #allocation32 [shape = 'u8[32768]{0}', space=vmem, size = 0x8000, scoped, tag = 'input window, operand 22, single buffered']
    #allocation33 [shape = 's32[1]{0}', space=sflag, size = 0x4, scoped, tag = 'scoped memory for _lambda_.1']
    #allocation34 [shape = 'u8[32768]{0}', space=vmem, size = 0x8000, scoped, tag = 'input window, operand 23, single buffered']
    #allocation35 [shape = 'u8[4096]{0}', space=vmem, size = 0x1000, scoped, tag = 'output window, operand 0, single buffered']
    #allocation36 [shape = 'u8[4096]{0}', space=vmem, size = 0x1000, scoped, tag = 'output window, operand 1, single buffered']
    #allocation37 [shape = 's32[1]{0}', space=sflag, size = 0x4, scoped, tag = 'scoped memory for _lambda_.1']
    %32 = vsyncpa [#allocation3], 0
    %33 = vsyncpa [#allocation6], 0
    %34 = vsyncpa [#allocation9], 0
    %35 = vsyncpa [#allocation12], 0
    %36 = vsyncpa [#allocation15], 0
    %37 = vsyncpa [#allocation18], 0
    %38 = vsyncpa [#allocation21], 0
    %39 = vsyncpa [#allocation24], 0
    %40 = vsyncpa [#allocation27], 0
    %41 = vsyncpa [#allocation30], 0
    %42 = vsyncpa [#allocation33], 0
    %43 = vsyncpa [#allocation4], 0
    %44 = vsyncpa [#allocation37], 0
    // Predicated region
    $region2: #{_lambda_.1} parent=1 // pred_check
      _
    $region3: #{_lambda_.1} parent=1 // pred_check_branch
      %46 = sbr.rel (0) target = $region5
    $region4: #{_lambda_.1} parent=1 // pred_region
      %48 = vsyncadd [#allocation3], 0
      %s50 = sshll.u32 %s0, 4
      %s51 = int_to_ptr.hbm [resolvable:$true] %s50
      %s52 = sshll.u32 [#allocation2], 4
      %s53 = int_to_ptr.vmem [resolvable:$true] %s52
      %55 = dma.hbm_to_vmem [thread:$0]  %s51, 128, %s53, [#allocation3]
    $region5: #{_lambda_.1} parent=1 // pred_fallthru
      _
    // Predicated region
    $region6: #{_lambda_.1} parent=1 // pred_check
      _
    $region7: #{_lambda_.1} parent=1 // pred_check_branch
      %57 = sbr.rel (0) target = $region9
    $region8: #{_lambda_.1} parent=1 // pred_region
      _
    $region9: #{_lambda_.1} parent=1 // pred_fallthru
      _
    // Predicated region
    $region10: #{_lambda_.1} parent=1 // pred_check
      _
    $region11: #{_lambda_.1} parent=1 // pred_check_branch
      %59 = sbr.rel (0) target = $region13
    $region12: #{_lambda_.1} parent=1 // pred_region
      %61 = vsyncadd [#allocation6], 0
      %s63 = sshll.u32 %s2, 4
      %s64 = int_to_ptr.hbm [resolvable:$true] %s63
      %s65 = sshll.u32 [#allocation5], 4
      %s66 = int_to_ptr.vmem [resolvable:$true] %s65
      %68 = dma.hbm_to_vmem [thread:$0]  %s64, 32, %s66, [#allocation6]
    $region13: #{_lambda_.1} parent=1 // pred_fallthru
      _
    // Predicated region
    $region14: #{_lambda_.1} parent=1 // pred_check
      _
    $region15: #{_lambda_.1} parent=1 // pred_check_branch
      %70 = sbr.rel (0) target = $region17
    $region16: #{_lambda_.1} parent=1 // pred_region
      %72 = vsyncadd [#allocation6], 0
      %s74 = sshll.u32 %s3, 4
      %s75 = int_to_ptr.hbm [resolvable:$true] %s74
      %s76 = sshll.u32 [#allocation7], 4
      %s77 = int_to_ptr.vmem [resolvable:$true] %s76
      %79 = dma.hbm_to_vmem [thread:$0]  %s75, 32, %s77, [#allocation6]
    $region17: #{_lambda_.1} parent=1 // pred_fallthru
      _
    // Predicated region
    $region18: #{_lambda_.1} parent=1 // pred_check
      _
    $region19: #{_lambda_.1} parent=1 // pred_check_branch
      %81 = sbr.rel (0) target = $region21
    $region20: #{_lambda_.1} parent=1 // pred_region
      %83 = vsyncadd [#allocation9], 0
      %s84 = sshll.u32 %s4, 4
      %s85 = int_to_ptr.hbm [resolvable:$true] %s84
      %s86 = sshll.u32 [#allocation8], 4
      %s87 = int_to_ptr.vmem [resolvable:$true] %s86
      %92 = dma.hbm_to_vmem [thread:$0]  %s85, 1024, %s87, [#allocation9], 64, 64, 4
    $region21: #{_lambda_.1} parent=1 // pred_fallthru
      _
    // Predicated region
    $region22: #{_lambda_.1} parent=1 // pred_check
      _
    $region23: #{_lambda_.1} parent=1 // pred_check_branch
      %94 = sbr.rel (0) target = $region25
    $region24: #{_lambda_.1} parent=1 // pred_region
      %96 = vsyncadd [#allocation9], 0
      %s97 = sshll.u32 %s5, 4
      %s98 = int_to_ptr.hbm [resolvable:$true] %s97
      %s99 = sshll.u32 [#allocation10], 4
      %s100 = int_to_ptr.vmem [resolvable:$true] %s99
      %105 = dma.hbm_to_vmem [thread:$0]  %s98, 256, %s100, [#allocation9], 64, 64, 4
    $region25: #{_lambda_.1} parent=1 // pred_fallthru
      _
    // Predicated region
    $region26: #{_lambda_.1} parent=1 // pred_check
      _
    $region27: #{_lambda_.1} parent=1 // pred_check_branch
      %107 = sbr.rel (0) target = $region29
    $region28: #{_lambda_.1} parent=1 // pred_region
      %109 = vsyncadd [#allocation12], 0
      %s110 = sshll.u32 %s6, 4
      %s111 = int_to_ptr.hbm [resolvable:$true] %s110
      %s112 = sshll.u32 [#allocation11], 4
      %s113 = int_to_ptr.vmem [resolvable:$true] %s112
      %118 = dma.hbm_to_vmem [thread:$0]  %s111, 1024, %s113, [#allocation12], 64, 64, 4
    $region29: #{_lambda_.1} parent=1 // pred_fallthru
      _
    // Predicated region
    $region30: #{_lambda_.1} parent=1 // pred_check
      _
    $region31: #{_lambda_.1} parent=1 // pred_check_branch
      %120 = sbr.rel (0) target = $region33
    $region32: #{_lambda_.1} parent=1 // pred_region
      %122 = vsyncadd [#allocation12], 0
      %s123 = sshll.u32 %s7, 4
      %s124 = int_to_ptr.hbm [resolvable:$true] %s123
      %s125 = sshll.u32 [#allocation13], 4
      %s126 = int_to_ptr.vmem [resolvable:$true] %s125
      %131 = dma.hbm_to_vmem [thread:$0]  %s124, 1024, %s126, [#allocation12], 64, 64, 4
    $region33: #{_lambda_.1} parent=1 // pred_fallthru
      _
    // Predicated region
    $region34: #{_lambda_.1} parent=1 // pred_check
      _
    $region35: #{_lambda_.1} parent=1 // pred_check_branch
      %133 = sbr.rel (0) target = $region37
    $region36: #{_lambda_.1} parent=1 // pred_region
      %135 = vsyncadd [#allocation15], 0
      %s137 = sshll.u32 %s8, 4
      %s138 = int_to_ptr.hbm [resolvable:$true] %s137
      %s139 = sshll.u32 [#allocation14], 4
      %s140 = int_to_ptr.vmem [resolvable:$true] %s139
      %142 = dma.hbm_to_vmem [thread:$0]  %s138, 128, %s140, [#allocation15]
    $region37: #{_lambda_.1} parent=1 // pred_fallthru
      _
    // Predicated region
    $region38: #{_lambda_.1} parent=1 // pred_check
      _
    $region39: #{_lambda_.1} parent=1 // pred_check_branch
      %144 = sbr.rel (0) target = $region41
    $region40: #{_lambda_.1} parent=1 // pred_region
      %146 = vsyncadd [#allocation15], 0
      %s147 = sshll.u32 %s9, 4
      %s148 = int_to_ptr.hbm [resolvable:$true] %s147
      %s149 = sshll.u32 [#allocation16], 4
      %s150 = int_to_ptr.vmem [resolvable:$true] %s149
      %155 = dma.hbm_to_vmem [thread:$0]  %s148, 512, %s150, [#allocation15], 128, 128, 8
    $region41: #{_lambda_.1} parent=1 // pred_fallthru
      _
    // Predicated region
    $region42: #{_lambda_.1} parent=1 // pred_check
      _
    $region43: #{_lambda_.1} parent=1 // pred_check_branch
      %157 = sbr.rel (0) target = $region45
    $region44: #{_lambda_.1} parent=1 // pred_region
      %159 = vsyncadd [#allocation18], 0
      %s160 = sshll.u32 %s10, 4
      %s161 = int_to_ptr.hbm [resolvable:$true] %s160
      %s162 = sshll.u32 [#allocation17], 4
      %s163 = int_to_ptr.vmem [resolvable:$true] %s162
      %168 = dma.hbm_to_vmem [thread:$0]  %s161, 2048, %s163, [#allocation18], 128, 128, 8
    $region45: #{_lambda_.1} parent=1 // pred_fallthru
      _
    // Predicated region
    $region46: #{_lambda_.1} parent=1 // pred_check
      _
    $region47: #{_lambda_.1} parent=1 // pred_check_branch
      %170 = sbr.rel (0) target = $region49
    $region48: #{_lambda_.1} parent=1 // pred_region
      %172 = vsyncadd [#allocation18], 0
      %s173 = sshll.u32 %s11, 4
      %s174 = int_to_ptr.hbm [resolvable:$true] %s173
      %s175 = sshll.u32 [#allocation19], 4
      %s176 = int_to_ptr.vmem [resolvable:$true] %s175
      %181 = dma.hbm_to_vmem [thread:$0]  %s174, 256, %s176, [#allocation18], 128, 128, 8
    $region49: #{_lambda_.1} parent=1 // pred_fallthru
      _
    // Predicated region
    $region50: #{_lambda_.1} parent=1 // pred_check
      _
    $region51: #{_lambda_.1} parent=1 // pred_check_branch
      %183 = sbr.rel (0) target = $region53
    $region52: #{_lambda_.1} parent=1 // pred_region
      %185 = vsyncadd [#allocation21], 0
      %s186 = sshll.u32 %s12, 4
      %s187 = int_to_ptr.hbm [resolvable:$true] %s186
      %s188 = sshll.u32 [#allocation20], 4
      %s189 = int_to_ptr.vmem [resolvable:$true] %s188
      %194 = dma.hbm_to_vmem [thread:$0]  %s187, 4096, %s189, [#allocation21], 64, 64, 4
    $region53: #{_lambda_.1} parent=1 // pred_fallthru
      _
    // Predicated region
    $region54: #{_lambda_.1} parent=1 // pred_check
      _
    $region55: #{_lambda_.1} parent=1 // pred_check_branch
      %196 = sbr.rel (0) target = $region57
    $region56: #{_lambda_.1} parent=1 // pred_region
      %198 = vsyncadd [#allocation21], 0
      %s199 = sshll.u32 %s13, 4
      %s200 = int_to_ptr.hbm [resolvable:$true] %s199
      %s201 = sshll.u32 [#allocation22], 4
      %s202 = int_to_ptr.vmem [resolvable:$true] %s201
      %207 = dma.hbm_to_vmem [thread:$0]  %s200, 128, %s202, [#allocation21], 64, 64, 4
    $region57: #{_lambda_.1} parent=1 // pred_fallthru
      _
    // Predicated region
    $region58: #{_lambda_.1} parent=1 // pred_check
      _
    $region59: #{_lambda_.1} parent=1 // pred_check_branch
      %209 = sbr.rel (0) target = $region61
    $region60: #{_lambda_.1} parent=1 // pred_region
      %211 = vsyncadd [#allocation24], 0
      %s213 = sshll.u32 %s14, 4
      %s214 = int_to_ptr.hbm [resolvable:$true] %s213
      %s215 = sshll.u32 [#allocation23], 4
      %s216 = int_to_ptr.vmem [resolvable:$true] %s215
      %218 = dma.hbm_to_vmem [thread:$0]  %s214, 128, %s216, [#allocation24]
    $region61: #{_lambda_.1} parent=1 // pred_fallthru
      _
    // Predicated region
    $region62: #{_lambda_.1} parent=1 // pred_check
      _
    $region63: #{_lambda_.1} parent=1 // pred_check_branch
      %220 = sbr.rel (0) target = $region65
    $region64: #{_lambda_.1} parent=1 // pred_region
      %222 = vsyncadd [#allocation24], 0
      %s223 = sshll.u32 %s15, 4
      %s224 = int_to_ptr.hbm [resolvable:$true] %s223
      %s225 = sshll.u32 [#allocation25], 4
      %s226 = int_to_ptr.vmem [resolvable:$true] %s225
      %231 = dma.hbm_to_vmem [thread:$0]  %s224, 24576, %s226, [#allocation24], 64, 64, 4
    $region65: #{_lambda_.1} parent=1 // pred_fallthru
      _
    // Predicated region
    $region66: #{_lambda_.1} parent=1 // pred_check
      _
    $region67: #{_lambda_.1} parent=1 // pred_check_branch
      %233 = sbr.rel (0) target = $region69
    $region68: #{_lambda_.1} parent=1 // pred_region
      %235 = vsyncadd [#allocation27], 0
      %s236 = sshll.u32 %s16, 4
      %s237 = int_to_ptr.hbm [resolvable:$true] %s236
      %s238 = sshll.u32 [#allocation26], 4
      %s239 = int_to_ptr.vmem [resolvable:$true] %s238
      %244 = dma.hbm_to_vmem [thread:$0]  %s237, 768, %s239, [#allocation27], 128, 128, 8
    $region69: #{_lambda_.1} parent=1 // pred_fallthru
      _
    // Predicated region
    $region70: #{_lambda_.1} parent=1 // pred_check
      _
    $region71: #{_lambda_.1} parent=1 // pred_check_branch
      %246 = sbr.rel (0) target = $region73
    $region72: #{_lambda_.1} parent=1 // pred_region
      %248 = vsyncadd [#allocation27], 0
      %s249 = sshll.u32 %s17, 4
      %s250 = int_to_ptr.hbm [resolvable:$true] %s249
      %s251 = sshll.u32 [#allocation28], 4
      %s252 = int_to_ptr.vmem [resolvable:$true] %s251
      %257 = dma.hbm_to_vmem [thread:$0]  %s250, 24576, %s252, [#allocation27], 256, 256, 16
    $region73: #{_lambda_.1} parent=1 // pred_fallthru
      _
    // Predicated region
    $region74: #{_lambda_.1} parent=1 // pred_check
      _
    $region75: #{_lambda_.1} parent=1 // pred_check_branch
      %259 = sbr.rel (0) target = $region77
    $region76: #{_lambda_.1} parent=1 // pred_region
      %261 = vsyncadd [#allocation30], 0
      %s262 = sshll.u32 %s18, 4
      %s263 = int_to_ptr.hbm [resolvable:$true] %s262
      %s264 = sshll.u32 [#allocation29], 4
      %s265 = int_to_ptr.vmem [resolvable:$true] %s264
      %270 = dma.hbm_to_vmem [thread:$0]  %s263, 384, %s265, [#allocation30], 64, 64, 4
    $region77: #{_lambda_.1} parent=1 // pred_fallthru
      _
    // Predicated region
    $region78: #{_lambda_.1} parent=1 // pred_check
      _
    $region79: #{_lambda_.1} parent=1 // pred_check_branch
      %272 = sbr.rel (0) target = $region81
    $region80: #{_lambda_.1} parent=1 // pred_region
      %274 = vsyncadd [#allocation30], 0
      %s275 = sshll.u32 %s19, 4
      %s276 = int_to_ptr.hbm [resolvable:$true] %s275
      %s277 = sshll.u32 [#allocation31], 4
      %s278 = int_to_ptr.vmem [resolvable:$true] %s277
      %283 = dma.hbm_to_vmem [thread:$0]  %s276, 24576, %s278, [#allocation30], 64, 64, 4
    $region81: #{_lambda_.1} parent=1 // pred_fallthru
      _
    // Predicated region
    $region82: #{_lambda_.1} parent=1 // pred_check
      _
    $region83: #{_lambda_.1} parent=1 // pred_check_branch
      %285 = sbr.rel (0) target = $region85
    $region84: #{_lambda_.1} parent=1 // pred_region
      _
    $region85: #{_lambda_.1} parent=1 // pred_fallthru
      _
    // Predicated region
    $region86: #{_lambda_.1} parent=1 // pred_check
      _
    $region87: #{_lambda_.1} parent=1 // pred_check_branch
      %287 = sbr.rel (0) target = $region89
    $region88: #{_lambda_.1} parent=1 // pred_region
      _
    $region89: #{_lambda_.1} parent=1 // pred_fallthru
      _
    // Predicated region
    $region90: #{_lambda_.1} parent=1 // pred_check
      _
    $region91: #{_lambda_.1} parent=1 // pred_check_branch
      %289 = sbr.rel (0) target = $region93
    $region92: #{_lambda_.1} parent=1 // pred_region
      %291 = vsyncadd [#allocation33], 0
      %s292 = sshll.u32 %s22, 4
      %s293 = int_to_ptr.hbm [resolvable:$true] %s292
      %s294 = sshll.u32 [#allocation32], 4
      %s295 = int_to_ptr.vmem [resolvable:$true] %s294
      %300 = dma.hbm_to_vmem [thread:$0]  %s293, 1024, %s295, [#allocation33], 64, 64, 4
    $region93: #{_lambda_.1} parent=1 // pred_fallthru
      _
    // Predicated region
    $region94: #{_lambda_.1} parent=1 // pred_check
      _
    $region95: #{_lambda_.1} parent=1 // pred_check_branch
      %302 = sbr.rel (0) target = $region97
    $region96: #{_lambda_.1} parent=1 // pred_region
      %304 = vsyncadd [#allocation33], 0
      %s305 = sshll.u32 %s23, 4
      %s306 = int_to_ptr.hbm [resolvable:$true] %s305
      %s307 = sshll.u32 [#allocation34], 4
      %s308 = int_to_ptr.vmem [resolvable:$true] %s307
      %313 = dma.hbm_to_vmem [thread:$0]  %s306, 1024, %s308, [#allocation33], 64, 64, 4
    $region97: #{_lambda_.1} parent=1 // pred_fallthru
      _
    // Predicated region
    $region98: #{_lambda_.1} parent=1 // pred_check
      _
    $region99: #{_lambda_.1} parent=1 // pred_check_branch
      %315 = sbr.rel (0) target = $region101
    $region100: #{_lambda_.1} parent=1 // pred_region
      _
    $region101: #{_lambda_.1} parent=1 // pred_fallthru
      _
    // Predicated region
    $region102: #{_lambda_.1} parent=1 // pred_check
      _
    $region103: #{_lambda_.1} parent=1 // pred_check_branch
      %317 = sbr.rel (0) target = $region105
    $region104: #{_lambda_.1} parent=1 // pred_region
      %319 = dma.done [#allocation3], 128
    $region105: #{_lambda_.1} parent=1 // pred_fallthru
      _
    // Predicated region
    $region106: #{_lambda_.1} parent=1 // pred_check
      _
    $region107: #{_lambda_.1} parent=1 // pred_check_branch
      %321 = sbr.rel (0) target = $region109
    $region108: #{_lambda_.1} parent=1 // pred_region
      %323 = dma.done [#allocation6], 32
    $region109: #{_lambda_.1} parent=1 // pred_fallthru
      _
    // Predicated region
    $region110: #{_lambda_.1} parent=1 // pred_check
      _
    $region111: #{_lambda_.1} parent=1 // pred_check_branch
      %325 = sbr.rel (0) target = $region113
    $region112: #{_lambda_.1} parent=1 // pred_region
      %327 = dma.done [#allocation6], 32
    $region113: #{_lambda_.1} parent=1 // pred_fallthru
      _
    // Predicated region
    $region114: #{_lambda_.1} parent=1 // pred_check
      _
    $region115: #{_lambda_.1} parent=1 // pred_check_branch
      %329 = sbr.rel (0) target = $region117
    $region116: #{_lambda_.1} parent=1 // pred_region
      %331 = dma.done [#allocation9], 1024
    $region117: #{_lambda_.1} parent=1 // pred_fallthru
      _
    // Predicated region
    $region118: #{_lambda_.1} parent=1 // pred_check
      _
    $region119: #{_lambda_.1} parent=1 // pred_check_branch
      %333 = sbr.rel (0) target = $region121
    $region120: #{_lambda_.1} parent=1 // pred_region
      %335 = dma.done [#allocation9], 256
    $region121: #{_lambda_.1} parent=1 // pred_fallthru
      _
    // Predicated region
    $region122: #{_lambda_.1} parent=1 // pred_check
      _
    $region123: #{_lambda_.1} parent=1 // pred_check_branch
      %337 = sbr.rel (0) target = $region125
    $region124: #{_lambda_.1} parent=1 // pred_region
      %339 = dma.done [#allocation12], 1024
    $region125: #{_lambda_.1} parent=1 // pred_fallthru
      _
    // Predicated region
    $region126: #{_lambda_.1} parent=1 // pred_check
      _
    $region127: #{_lambda_.1} parent=1 // pred_check_branch
      %341 = sbr.rel (0) target = $region129
    $region128: #{_lambda_.1} parent=1 // pred_region
      %343 = dma.done [#allocation12], 1024
    $region129: #{_lambda_.1} parent=1 // pred_fallthru
      _
    // Predicated region
    $region130: #{_lambda_.1} parent=1 // pred_check
      _
    $region131: #{_lambda_.1} parent=1 // pred_check_branch
      %345 = sbr.rel (0) target = $region133
    $region132: #{_lambda_.1} parent=1 // pred_region
      %347 = dma.done [#allocation15], 128
    $region133: #{_lambda_.1} parent=1 // pred_fallthru
      _
    // Predicated region
    $region134: #{_lambda_.1} parent=1 // pred_check
      _
    $region135: #{_lambda_.1} parent=1 // pred_check_branch
      %349 = sbr.rel (0) target = $region137
    $region136: #{_lambda_.1} parent=1 // pred_region
      %351 = dma.done [#allocation15], 512
    $region137: #{_lambda_.1} parent=1 // pred_fallthru
      _
    // Predicated region
    $region138: #{_lambda_.1} parent=1 // pred_check
      _
    $region139: #{_lambda_.1} parent=1 // pred_check_branch
      %353 = sbr.rel (0) target = $region141
    $region140: #{_lambda_.1} parent=1 // pred_region
      %355 = dma.done [#allocation18], 2048
    $region141: #{_lambda_.1} parent=1 // pred_fallthru
      _
    // Predicated region
    $region142: #{_lambda_.1} parent=1 // pred_check
      _
    $region143: #{_lambda_.1} parent=1 // pred_check_branch
      %357 = sbr.rel (0) target = $region145
    $region144: #{_lambda_.1} parent=1 // pred_region
      %359 = dma.done [#allocation18], 256
    $region145: #{_lambda_.1} parent=1 // pred_fallthru
      _
    // Predicated region
    $region146: #{_lambda_.1} parent=1 // pred_check
      _
    $region147: #{_lambda_.1} parent=1 // pred_check_branch
      %361 = sbr.rel (0) target = $region149
    $region148: #{_lambda_.1} parent=1 // pred_region
      %363 = dma.done [#allocation21], 4096
    $region149: #{_lambda_.1} parent=1 // pred_fallthru
      _
    // Predicated region
    $region150: #{_lambda_.1} parent=1 // pred_check
      _
    $region151: #{_lambda_.1} parent=1 // pred_check_branch
      %365 = sbr.rel (0) target = $region153
    $region152: #{_lambda_.1} parent=1 // pred_region
      %367 = dma.done [#allocation21], 128
    $region153: #{_lambda_.1} parent=1 // pred_fallthru
      _
    // Predicated region
    $region154: #{_lambda_.1} parent=1 // pred_check
      _
    $region155: #{_lambda_.1} parent=1 // pred_check_branch
      %369 = sbr.rel (0) target = $region157
    $region156: #{_lambda_.1} parent=1 // pred_region
      %371 = dma.done [#allocation24], 128
    $region157: #{_lambda_.1} parent=1 // pred_fallthru
      _
    // Predicated region
    $region158: #{_lambda_.1} parent=1 // pred_check
      _
    $region159: #{_lambda_.1} parent=1 // pred_check_branch
      %373 = sbr.rel (0) target = $region161
    $region160: #{_lambda_.1} parent=1 // pred_region
      %375 = dma.done [#allocation24], 24576
    $region161: #{_lambda_.1} parent=1 // pred_fallthru
      _
    // Predicated region
    $region162: #{_lambda_.1} parent=1 // pred_check
      _
    $region163: #{_lambda_.1} parent=1 // pred_check_branch
      %377 = sbr.rel (0) target = $region165
    $region164: #{_lambda_.1} parent=1 // pred_region
      %379 = dma.done [#allocation27], 768
    $region165: #{_lambda_.1} parent=1 // pred_fallthru
      _
    // Predicated region
    $region166: #{_lambda_.1} parent=1 // pred_check
      _
    $region167: #{_lambda_.1} parent=1 // pred_check_branch
      %381 = sbr.rel (0) target = $region169
    $region168: #{_lambda_.1} parent=1 // pred_region
      %383 = dma.done [#allocation27], 24576
    $region169: #{_lambda_.1} parent=1 // pred_fallthru
      _
    // Predicated region
    $region170: #{_lambda_.1} parent=1 // pred_check
      _
    $region171: #{_lambda_.1} parent=1 // pred_check_branch
      %385 = sbr.rel (0) target = $region173
    $region172: #{_lambda_.1} parent=1 // pred_region
      %387 = dma.done [#allocation30], 384
    $region173: #{_lambda_.1} parent=1 // pred_fallthru
      _
    // Predicated region
    $region174: #{_lambda_.1} parent=1 // pred_check
      _
    $region175: #{_lambda_.1} parent=1 // pred_check_branch
      %389 = sbr.rel (0) target = $region177
    $region176: #{_lambda_.1} parent=1 // pred_region
      %391 = dma.done [#allocation30], 24576
    $region177: #{_lambda_.1} parent=1 // pred_fallthru
      _
    // Predicated region
    $region178: #{_lambda_.1} parent=1 // pred_check
      _
    $region179: #{_lambda_.1} parent=1 // pred_check_branch
      %393 = sbr.rel (0) target = $region181
    $region180: #{_lambda_.1} parent=1 // pred_region
      %395 = dma.done [#allocation33], 1024
    $region181: #{_lambda_.1} parent=1 // pred_fallthru
      _
    // Predicated region
    $region182: #{_lambda_.1} parent=1 // pred_check
      _
    $region183: #{_lambda_.1} parent=1 // pred_check_branch
      %397 = sbr.rel (0) target = $region185
    $region184: #{_lambda_.1} parent=1 // pred_region
      %399 = dma.done [#allocation33], 1024
    $region185: #{_lambda_.1} parent=1 // pred_fallthru
      _
    %v401 = vld [vmem:[%s1] sm:$0xff]
    %v402 = vld [vmem:[#allocation5] sm:$0x3]
    %v403 = vld [vmem:[#allocation7] sm:$0x3]
    %405 = vset.pattern.permute.xlu0 0
    %406 = vperm.xlu0 %405, %v401
    %v407 = vpop.permute.xlu0 %406
    %v409 = vperm.slane %v402, 0
    %v410 = vmul.f32 %v407, %v409
    %411 = vset.pattern.permute.xlu0 1
    %412 = vperm.xlu0 %411, %v401
    %v413 = vpop.permute.xlu0 %412
    %v415 = vperm.slane %v402, 1
    %v416 = vmul.f32 %v413, %v415
    %v417 = vadd.f32 %v410, %v416
    %v418 = vperm.slane %v403, 0
    %v419 = vadd.f32 %v417, %v418
    %v420 = vmax.f32 %v419, 0.0
    %v421 = vld [vmem:[#allocation8] sm:$0xf]
    %v422 = vld [vmem:[#allocation8 + $0x4] sm:$0xf]
    %v423 = vld [vmem:[#allocation8 + $0x8] sm:$0xf]
    %v424 = vld [vmem:[#allocation8 + $0xc] sm:$0xf]
    %v425 = vld [vmem:[#allocation8 + $0x10] sm:$0xf]
    %v426 = vld [vmem:[#allocation8 + $0x14] sm:$0xf]
    %v427 = vld [vmem:[#allocation8 + $0x18] sm:$0xf]
    %v428 = vld [vmem:[#allocation8 + $0x1c] sm:$0xf]
    %v429 = vld [vmem:[#allocation8 + $0x20] sm:$0xf]
    %v430 = vld [vmem:[#allocation8 + $0x24] sm:$0xf]
    %v431 = vld [vmem:[#allocation8 + $0x28] sm:$0xf]
    %v432 = vld [vmem:[#allocation8 + $0x2c] sm:$0xf]
    %v433 = vld [vmem:[#allocation8 + $0x30] sm:$0xf]
    %v434 = vld [vmem:[#allocation8 + $0x34] sm:$0xf]
    %v435 = vld [vmem:[#allocation8 + $0x38] sm:$0xf]
    %v436 = vld [vmem:[#allocation8 + $0x3c] sm:$0xf]
    %v437 = vpack.c.bf16 %v420, %v420
    %v438 = vperm.slane %v403, 1
    %v455 = vunpack.c.l.b16 %v421
    %v456 = vunpack.c.l.b16 %v422
    %v457 = vunpack.c.l.b16 %v423
    %v458 = vunpack.c.l.b16 %v424
    %v459 = vunpack.c.l.b16 %v425
    %v460 = vunpack.c.l.b16 %v426
    %v461 = vunpack.c.l.b16 %v427
    %v462 = vunpack.c.l.b16 %v428
    %v463 = vunpack.c.l.b16 %v429
    %v464 = vunpack.c.l.b16 %v430
    %v465 = vunpack.c.l.b16 %v431
    %v466 = vunpack.c.l.b16 %v432
    %v467 = vunpack.c.l.b16 %v433
    %v468 = vunpack.c.l.b16 %v434
    %v469 = vunpack.c.l.b16 %v435
    %v470 = vunpack.c.l.b16 %v436
    %v471 = vpack.c.b16 %v456, %v455
    %v472 = vpack.c.b16 %v458, %v457
    %v473 = vpack.c.b16 %v460, %v459
    %v474 = vpack.c.b16 %v462, %v461
    %v475 = vpack.c.b16 %v464, %v463
    %v476 = vpack.c.b16 %v466, %v465
    %v477 = vpack.c.b16 %v468, %v467
    %v478 = vpack.c.b16 %v470, %v469
    %487 = vmatpush.bf16.msra.mxu0 %v478
    %488 = vmatpush.bf16.msra.mxu0 %v477
    %489 = vmatpush.bf16.msra.mxu0 %v476
    %490 = vmatpush.bf16.msra.mxu0 %v475
    %491 = vmatpush.bf16.msra.mxu0 %v474
    %492 = vmatpush.bf16.msra.mxu0 %v473
    %493 = vmatpush.bf16.msra.mxu0 %v472
    %494 = vmatpush.bf16.msra.mxu0 %v471
    %495 = vmatmul.bf16.gmra.mxu0 %v437
    %v496 = vpop.f32.mrf.mxu0
    %v497 = vadd.f32 %v438, %v496
    %v498 = vpop.f32.mrf.mxu0
    %499 = vdwg.mxu0
    %v500 = vmax.f32 %v497, 0.0
    %v501 = vld [vmem:[#allocation14] sm:$0x3f]
    %v502 = vld [vmem:[#allocation2] sm:$0xff]
    %v503 = vld [vmem:[#allocation10] sm:$0xf]
    %v504 = vld [vmem:[#allocation10 + $0x4] sm:$0xf]
    %v505 = vld [vmem:[#allocation10 + $0x8] sm:$0xf]
    %v506 = vld [vmem:[#allocation10 + $0xc] sm:$0xf]
    %v507 = vpack.c.bf16 %v502, %v502
    %v508 = vld [vmem:[#allocation11] sm:$0xf]
    %v509 = vld [vmem:[#allocation11 + $0x4] sm:$0xf]
    %v510 = vld [vmem:[#allocation11 + $0x8] sm:$0xf]
    %v511 = vld [vmem:[#allocation11 + $0xc] sm:$0xf]
    %v512 = vld [vmem:[#allocation11 + $0x10] sm:$0xf]
    %v513 = vld [vmem:[#allocation11 + $0x14] sm:$0xf]
    %v514 = vld [vmem:[#allocation11 + $0x18] sm:$0xf]
    %v515 = vld [vmem:[#allocation11 + $0x1c] sm:$0xf]
    %v516 = vld [vmem:[#allocation11 + $0x20] sm:$0xf]
    %v517 = vld [vmem:[#allocation11 + $0x24] sm:$0xf]
    %v518 = vld [vmem:[#allocation11 + $0x28] sm:$0xf]
    %v519 = vld [vmem:[#allocation11 + $0x2c] sm:$0xf]
    %v520 = vld [vmem:[#allocation11 + $0x30] sm:$0xf]
    %v521 = vld [vmem:[#allocation11 + $0x34] sm:$0xf]
    %v522 = vld [vmem:[#allocation11 + $0x38] sm:$0xf]
    %v523 = vld [vmem:[#allocation11 + $0x3c] sm:$0xf]
    %v524 = vpack.c.bf16 %v500, %v500
    %v541 = vunpack.c.l.b16 %v508
    %v542 = vunpack.c.l.b16 %v509
    %v543 = vunpack.c.l.b16 %v510
    %v544 = vunpack.c.l.b16 %v511
    %v545 = vunpack.c.l.b16 %v512
    %v546 = vunpack.c.l.b16 %v513
    %v547 = vunpack.c.l.b16 %v514
    %v548 = vunpack.c.l.b16 %v515
    %v549 = vunpack.c.l.b16 %v516
    %v550 = vunpack.c.l.b16 %v517
    %v551 = vunpack.c.l.b16 %v518
    %v552 = vunpack.c.l.b16 %v519
    %v553 = vunpack.c.l.b16 %v520
    %v554 = vunpack.c.l.b16 %v521
    %v555 = vunpack.c.l.b16 %v522
    %v556 = vunpack.c.l.b16 %v523
    %v557 = vpack.c.b16 %v542, %v541
    %v558 = vpack.c.b16 %v544, %v543
    %v559 = vpack.c.b16 %v546, %v545
    %v560 = vpack.c.b16 %v548, %v547
    %v561 = vpack.c.b16 %v550, %v549
    %v562 = vpack.c.b16 %v552, %v551
    %v563 = vpack.c.b16 %v554, %v553
    %v564 = vpack.c.b16 %v556, %v555
    %573 = vmatpush.bf16.msra.mxu0 %v564
    %574 = vmatpush.bf16.msra.mxu0 %v563
    %575 = vmatpush.bf16.msra.mxu0 %v562
    %576 = vmatpush.bf16.msra.mxu0 %v561
    %577 = vmatpush.bf16.msra.mxu0 %v560
    %578 = vmatpush.bf16.msra.mxu0 %v559
    %579 = vmatpush.bf16.msra.mxu0 %v558
    %580 = vmatpush.bf16.msra.mxu0 %v557
    %581 = vmatmul.bf16.gmra.mxu0 %v524
    %v582 = vpop.f32.mrf.mxu0
    %v583 = vadd.f32 0.0, %v582
    %v584 = vpop.f32.mrf.mxu0
    %585 = vdwg.mxu0
    %v590 = vunpack.c.l.b16 %v503
    %v591 = vunpack.c.l.b16 %v504
    %v592 = vunpack.c.l.b16 %v505
    %v593 = vunpack.c.l.b16 %v506
    %v594 = vpack.c.b16 %v591, %v590
    %v595 = vpack.c.b16 %v593, %v592
    %vm598 = vcmask 261120
    %v600 = vsel %vm598, %v507, 0
    %602 = vmatpush.bf16.msra.mxu0 0
    %603 = vmatpush.bf16.msra.mxu0 0
    %604 = vmatpush.bf16.msra.mxu0 0
    %605 = vmatpush.bf16.msra.mxu0 0
    %606 = vmatpush.bf16.msra.mxu0 0
    %607 = vmatpush.bf16.msra.mxu0 0
    %608 = vmatpush.bf16.msra.mxu0 %v595
    %609 = vmatpush.bf16.msra.mxu0 %v594
    %610 = vmatmul.bf16.gmra.mxu0 %v600
    %v611 = vpop.f32.mrf.mxu0
    %v612 = vadd.f32 %v583, %v611
    %v613 = vpop.f32.mrf.mxu0
    %614 = vdwg.mxu0
    %v615 = vperm.slane %v501, 0
    %v616 = vadd.f32 %v612, %v615
    %617 = vadd.xlane.f32.xlu0 %v616
    %v618 = vpop.xlane.xlu0 %617
    %v619 = vrcp.pop 128.0
    %v620 = vmul.f32 128.0, %v619
    %v621 = vsub.f32 1.0, %v620
    %v622 = vmul.f32 %v619, %v621
    %v623 = vadd.f32 %v619, %v622
    %vm624 = vweird.f32 %v619
    %v625 = vsel %vm624, %v619, %v623
    %v626 = vmul.f32 %v618, %v625
    %v627 = vsub.f32 %v616, %v626
    %v628 = vmul.f32 %v627, %v627
    %629 = vadd.xlane.f32.xlu0 %v628
    %v630 = vpop.xlane.xlu0 %629
    %v631 = vmul.f32 %v630, %v625
    %v632 = vadd.f32 %v631, 1e-05
    %v633 = vrsqrt.pop %v632
    %v634 = vmul.f32 %v633, %v632
    %v635 = vmul.f32 %v634, %v633
    %v636 = vmul.f32 0.5, %v635
    %v637 = vsub.f32 1.5, %v636
    %v638 = vmul.f32 %v633, %v637
    %vm639 = vweird.f32 %v632
    %vm640 = vweird.f32 %v633
    %vm641 = vmor %vm639, %vm640
    %v642 = vsel %vm641, %v633, %v638
    %v643 = vmul.f32 %v627, %v642
    %v644 = vperm.slane %v501, 1
    %v645 = vmul.f32 %v643, %v644
    %v646 = vperm.slane %v501, 2
    %v647 = vadd.f32 %v645, %v646
    %v648 = vmax.f32 %v647, 0.0
    %v649 = vld [vmem:[#allocation13] sm:$0xf]
    %v650 = vld [vmem:[#allocation13 + $0x4] sm:$0xf]
    %v651 = vld [vmem:[#allocation13 + $0x8] sm:$0xf]
    %v652 = vld [vmem:[#allocation13 + $0xc] sm:$0xf]
    %v653 = vld [vmem:[#allocation13 + $0x10] sm:$0xf]
    %v654 = vld [vmem:[#allocation13 + $0x14] sm:$0xf]
    %v655 = vld [vmem:[#allocation13 + $0x18] sm:$0xf]
    %v656 = vld [vmem:[#allocation13 + $0x1c] sm:$0xf]
    %v657 = vld [vmem:[#allocation13 + $0x20] sm:$0xf]
    %v658 = vld [vmem:[#allocation13 + $0x24] sm:$0xf]
    %v659 = vld [vmem:[#allocation13 + $0x28] sm:$0xf]
    %v660 = vld [vmem:[#allocation13 + $0x2c] sm:$0xf]
    %v661 = vld [vmem:[#allocation13 + $0x30] sm:$0xf]
    %v662 = vld [vmem:[#allocation13 + $0x34] sm:$0xf]
    %v663 = vld [vmem:[#allocation13 + $0x38] sm:$0xf]
    %v664 = vld [vmem:[#allocation13 + $0x3c] sm:$0xf]
    %v665 = vpack.c.bf16 %v648, %v648
    %v666 = vperm.slane %v501, 3
    %v683 = vunpack.c.l.b16 %v649
    %v684 = vunpack.c.l.b16 %v650
    %v685 = vunpack.c.l.b16 %v651
    %v686 = vunpack.c.l.b16 %v652
    %v687 = vunpack.c.l.b16 %v653
    %v688 = vunpack.c.l.b16 %v654
    %v689 = vunpack.c.l.b16 %v655
    %v690 = vunpack.c.l.b16 %v656
    %v691 = vunpack.c.l.b16 %v657
    %v692 = vunpack.c.l.b16 %v658
    %v693 = vunpack.c.l.b16 %v659
    %v694 = vunpack.c.l.b16 %v660
    %v695 = vunpack.c.l.b16 %v661
    %v696 = vunpack.c.l.b16 %v662
    %v697 = vunpack.c.l.b16 %v663
    %v698 = vunpack.c.l.b16 %v664
    %v699 = vpack.c.b16 %v684, %v683
    %v700 = vpack.c.b16 %v686, %v685
    %v701 = vpack.c.b16 %v688, %v687
    %v702 = vpack.c.b16 %v690, %v689
    %v703 = vpack.c.b16 %v692, %v691
    %v704 = vpack.c.b16 %v694, %v693
    %v705 = vpack.c.b16 %v696, %v695
    %v706 = vpack.c.b16 %v698, %v697
    %715 = vmatpush.bf16.msra.mxu0 %v706
    %716 = vmatpush.bf16.msra.mxu0 %v705
    %717 = vmatpush.bf16.msra.mxu0 %v704
    %718 = vmatpush.bf16.msra.mxu0 %v703
    %719 = vmatpush.bf16.msra.mxu0 %v702
    %720 = vmatpush.bf16.msra.mxu0 %v701
    %721 = vmatpush.bf16.msra.mxu0 %v700
    %722 = vmatpush.bf16.msra.mxu0 %v699
    %723 = vmatmul.bf16.gmra.mxu0 %v665
    %v724 = vpop.f32.mrf.mxu0
    %v725 = vadd.f32 %v666, %v724
    %v726 = vpop.f32.mrf.mxu0
    %727 = vdwg.mxu0
    %728 = vadd.xlane.f32.xlu0 %v725
    %v729 = vpop.xlane.xlu0 %728
    %v730 = vmul.f32 %v729, %v625
    %v731 = vsub.f32 %v725, %v730
    %v732 = vmul.f32 %v731, %v731
    %733 = vadd.xlane.f32.xlu0 %v732
    %v734 = vpop.xlane.xlu0 %733
    %v735 = vmul.f32 %v734, %v625
    %v736 = vadd.f32 %v735, 1e-05
    %v737 = vrsqrt.pop %v736
    %v738 = vmul.f32 %v737, %v736
    %v739 = vmul.f32 %v738, %v737
    %v740 = vmul.f32 0.5, %v739
    %v741 = vsub.f32 1.5, %v740
    %v742 = vmul.f32 %v737, %v741
    %vm743 = vweird.f32 %v736
    %vm744 = vweird.f32 %v737
    %vm745 = vmor %vm743, %vm744
    %v746 = vsel %vm745, %v737, %v742
    %v747 = vmul.f32 %v731, %v746
    %v748 = vperm.slane %v501, 4
    %v749 = vmul.f32 %v747, %v748
    %v750 = vperm.slane %v501, 5
    %v751 = vadd.f32 %v749, %v750
    %v752 = vmax.f32 %v751, 0.0
    %v753 = vld [vmem:[#allocation16] sm:$0xff]
    %v754 = vld [vmem:[#allocation16 + $0x8] sm:$0xff]
    %v755 = vld [vmem:[#allocation16 + $0x10] sm:$0xff]
    %v756 = vld [vmem:[#allocation16 + $0x18] sm:$0xff]
    %v757 = vld [vmem:[#allocation19] sm:$0x77]
    %v758 = vld [vmem:[#allocation19 + $0x8] sm:$0x77]
    %v759 = vld [vmem:[#allocation22] sm:$0x7]
    %v760 = vld [vmem:[#allocation22 + $0x4] sm:$0x7]
    %v761 = vld [vmem:[#allocation17] sm:$0xff]
    %v762 = vld [vmem:[#allocation17 + $0x8] sm:$0xff]
    %v763 = vld [vmem:[#allocation17 + $0x10] sm:$0xff]
    %v764 = vld [vmem:[#allocation17 + $0x18] sm:$0xff]
    %v765 = vld [vmem:[#allocation17 + $0x20] sm:$0xff]
    %v766 = vld [vmem:[#allocation17 + $0x28] sm:$0xff]
    %v767 = vld [vmem:[#allocation17 + $0x30] sm:$0xff]
    %v768 = vld [vmem:[#allocation17 + $0x38] sm:$0xff]
    %v769 = vpack.c.bf16 %v754, %v753
    %v770 = vpack.c.bf16 %v756, %v755
    %v772 = vperm.slane %v757, 0
    %v773 = vperm.slane %v757, 4
    %v776 = vperm.slane %v772, 0
    %v777 = vperm.slane %v773, 0
    %v786 = vunpack.c.l.b16 %v761
    %v787 = vunpack.c.h.b16 %v761
    %v788 = vunpack.c.l.b16 %v762
    %v789 = vunpack.c.h.b16 %v762
    %v790 = vunpack.c.l.b16 %v763
    %v791 = vunpack.c.h.b16 %v763
    %v792 = vunpack.c.l.b16 %v764
    %v793 = vunpack.c.h.b16 %v764
    %v794 = vunpack.c.l.b16 %v765
    %v795 = vunpack.c.h.b16 %v765
    %v796 = vunpack.c.l.b16 %v766
    %v797 = vunpack.c.h.b16 %v766
    %v798 = vunpack.c.l.b16 %v767
    %v799 = vunpack.c.h.b16 %v767
    %v800 = vunpack.c.l.b16 %v768
    %v801 = vunpack.c.h.b16 %v768
    %v802 = vpack.c.b16 %v788, %v786
    %v803 = vpack.c.b16 %v789, %v787
    %v804 = vpack.c.b16 %v792, %v790
    %v805 = vpack.c.b16 %v793, %v791
    %v806 = vpack.c.b16 %v796, %v794
    %v807 = vpack.c.b16 %v797, %v795
    %v808 = vpack.c.b16 %v800, %v798
    %v809 = vpack.c.b16 %v801, %v799
    %vm818 = vcmask 523264
    %v820 = vsel %vm818, %v769, 0
    %v823 = vsel %vm818, %v770, 0
    %825 = vmatpush.bf16.msra.mxu0 0
    %826 = vmatpush.bf16.msra.mxu0 0
    %827 = vmatpush.bf16.msra.mxu0 0
    %828 = vmatpush.bf16.msra.mxu0 0
    %829 = vmatpush.bf16.msra.mxu0 %v808
    %830 = vmatpush.bf16.msra.mxu0 %v806
    %831 = vmatpush.bf16.msra.mxu0 %v804
    %832 = vmatpush.bf16.msra.mxu0 %v802
    %833 = vmatmul.bf16.gmra.mxu0 %v820
    %v834 = vpop.f32.mrf.mxu0
    %v835 = vadd.f32 %v776, %v834
    %v836 = vpop.f32.mrf.mxu0
    %v837 = vadd.f32 %v776, %v836
    %838 = vmatmul.bf16.gmra.mxu0 %v823
    %v839 = vpop.f32.mrf.mxu0
    %v840 = vadd.f32 %v776, %v839
    %v841 = vpop.f32.mrf.mxu0
    %v842 = vadd.f32 %v776, %v841
    %843 = vdwg.mxu0
    %844 = vmatpush.bf16.msra.mxu0 0
    %845 = vmatpush.bf16.msra.mxu0 0
    %846 = vmatpush.bf16.msra.mxu0 0
    %847 = vmatpush.bf16.msra.mxu0 0
    %848 = vmatpush.bf16.msra.mxu0 %v809
    %849 = vmatpush.bf16.msra.mxu0 %v807
    %850 = vmatpush.bf16.msra.mxu0 %v805
    %851 = vmatpush.bf16.msra.mxu0 %v803
    %852 = vmatmul.bf16.gmra.mxu0 %v820
    %v853 = vpop.f32.mrf.mxu0
    %v854 = vadd.f32 %v777, %v853
    %v855 = vpop.f32.mrf.mxu0
    %v856 = vadd.f32 %v777, %v855
    %857 = vmatmul.bf16.gmra.mxu0 %v823
    %v858 = vpop.f32.mrf.mxu0
    %v859 = vadd.f32 %v777, %v858
    %v860 = vpop.f32.mrf.mxu0
    %v861 = vadd.f32 %v777, %v860
    %862 = vdwg.mxu0
    %v863 = vadd.f32 %v835, %v854
    %864 = vadd.xlane.f32.xlu0 %v863
    %v865 = vpop.xlane.xlu0 %864
    %v866 = vadd.f32 %v837, %v856
    %867 = vadd.xlane.f32.xlu0 %v866
    %v868 = vpop.xlane.xlu0 %867
    %v869 = vadd.f32 %v840, %v859
    %870 = vadd.xlane.f32.xlu0 %v869
    %v871 = vpop.xlane.xlu0 %870
    %v872 = vadd.f32 %v842, %v861
    %873 = vadd.xlane.f32.xlu0 %v872
    %v874 = vpop.xlane.xlu0 %873
    %v875 = vrcp.pop 256.0
    %v876 = vmul.f32 256.0, %v875
    %v877 = vsub.f32 1.0, %v876
    %v878 = vmul.f32 %v875, %v877
    %v879 = vadd.f32 %v875, %v878
    %vm880 = vweird.f32 %v875
    %v881 = vsel %vm880, %v875, %v879
    %v882 = vmul.f32 %v865, %v881
    %v883 = vmul.f32 %v868, %v881
    %v884 = vmul.f32 %v871, %v881
    %v885 = vmul.f32 %v874, %v881
    %v886 = vsub.f32 %v835, %v882
    %v887 = vsub.f32 %v854, %v882
    %v888 = vsub.f32 %v837, %v883
    %v889 = vsub.f32 %v856, %v883
    %v890 = vsub.f32 %v840, %v884
    %v891 = vsub.f32 %v859, %v884
    %v892 = vsub.f32 %v842, %v885
    %v893 = vsub.f32 %v861, %v885
    %v894 = vmul.f32 %v886, %v886
    %v895 = vmul.f32 %v887, %v887
    %v896 = vmul.f32 %v888, %v888
    %v897 = vmul.f32 %v889, %v889
    %v898 = vmul.f32 %v890, %v890
    %v899 = vmul.f32 %v891, %v891
    %v900 = vmul.f32 %v892, %v892
    %v901 = vmul.f32 %v893, %v893
    %v902 = vadd.f32 %v894, %v895
    %903 = vadd.xlane.f32.xlu0 %v902
    %v904 = vpop.xlane.xlu0 %903
    %v905 = vadd.f32 %v896, %v897
    %906 = vadd.xlane.f32.xlu0 %v905
    %v907 = vpop.xlane.xlu0 %906
    %v908 = vadd.f32 %v898, %v899
    %909 = vadd.xlane.f32.xlu0 %v908
    %v910 = vpop.xlane.xlu0 %909
    %v911 = vadd.f32 %v900, %v901
    %912 = vadd.xlane.f32.xlu0 %v911
    %v913 = vpop.xlane.xlu0 %912
    %v914 = vmul.f32 %v904, %v881
    %v915 = vmul.f32 %v907, %v881
    %v916 = vmul.f32 %v910, %v881
    %v917 = vmul.f32 %v913, %v881
    %v918 = vadd.f32 %v914, 1e-05
    %v919 = vadd.f32 %v915, 1e-05
    %v920 = vadd.f32 %v916, 1e-05
    %v921 = vadd.f32 %v917, 1e-05
    %v922 = vrsqrt.pop %v918
    %v923 = vmul.f32 %v922, %v918
    %v924 = vmul.f32 %v923, %v922
    %v925 = vmul.f32 0.5, %v924
    %v926 = vsub.f32 1.5, %v925
    %v927 = vmul.f32 %v922, %v926
    %vm928 = vweird.f32 %v918
    %vm929 = vweird.f32 %v922
    %vm930 = vmor %vm928, %vm929
    %v931 = vsel %vm930, %v922, %v927
    %v932 = vrsqrt.pop %v919
    %v933 = vmul.f32 %v932, %v919
    %v934 = vmul.f32 %v933, %v932
    %v935 = vmul.f32 0.5, %v934
    %v936 = vsub.f32 1.5, %v935
    %v937 = vmul.f32 %v932, %v936
    %vm938 = vweird.f32 %v919
    %vm939 = vweird.f32 %v932
    %vm940 = vmor %vm938, %vm939
    %v941 = vsel %vm940, %v932, %v937
    %v942 = vrsqrt.pop %v920
    %v943 = vmul.f32 %v942, %v920
    %v944 = vmul.f32 %v943, %v942
    %v945 = vmul.f32 0.5, %v944
    %v946 = vsub.f32 1.5, %v945
    %v947 = vmul.f32 %v942, %v946
    %vm948 = vweird.f32 %v920
    %vm949 = vweird.f32 %v942
    %vm950 = vmor %vm948, %vm949
    %v951 = vsel %vm950, %v942, %v947
    %v952 = vrsqrt.pop %v921
    %v953 = vmul.f32 %v952, %v921
    %v954 = vmul.f32 %v953, %v952
    %v955 = vmul.f32 0.5, %v954
    %v956 = vsub.f32 1.5, %v955
    %v957 = vmul.f32 %v952, %v956
    %vm958 = vweird.f32 %v921
    %vm959 = vweird.f32 %v952
    %vm960 = vmor %vm958, %vm959
    %v961 = vsel %vm960, %v952, %v957
    %v962 = vmul.f32 %v886, %v931
    %v963 = vmul.f32 %v887, %v931
    %v964 = vmul.f32 %v888, %v941
    %v965 = vmul.f32 %v889, %v941
    %v966 = vmul.f32 %v890, %v951
    %v967 = vmul.f32 %v891, %v951
    %v968 = vmul.f32 %v892, %v961
    %v969 = vmul.f32 %v893, %v961
    %v970 = vperm.slane %v757, 1
    %v971 = vperm.slane %v757, 5
    %v974 = vperm.slane %v970, 1
    %v975 = vperm.slane %v971, 1
    %v976 = vmul.f32 %v962, %v974
    %v977 = vmul.f32 %v963, %v975
    %v978 = vmul.f32 %v964, %v974
    %v979 = vmul.f32 %v965, %v975
    %v980 = vmul.f32 %v966, %v974
    %v981 = vmul.f32 %v967, %v975
    %v982 = vmul.f32 %v968, %v974
    %v983 = vmul.f32 %v969, %v975
    %v984 = vperm.slane %v757, 2
    %v985 = vperm.slane %v757, 6
    %v988 = vperm.slane %v984, 2
    %v989 = vperm.slane %v985, 2
    %v990 = vadd.f32 %v976, %v988
    %v991 = vadd.f32 %v977, %v989
    %v992 = vadd.f32 %v978, %v988
    %v993 = vadd.f32 %v979, %v989
    %v994 = vadd.f32 %v980, %v988
    %v995 = vadd.f32 %v981, %v989
    %v996 = vadd.f32 %v982, %v988
    %v997 = vadd.f32 %v983, %v989
    %v998 = vmax.f32 %v990, 0.0
    %v999 = vmax.f32 %v991, 0.0
    %v1000 = vmax.f32 %v992, 0.0
    %v1001 = vmax.f32 %v993, 0.0
    %v1002 = vmax.f32 %v994, 0.0
    %v1003 = vmax.f32 %v995, 0.0
    %v1004 = vmax.f32 %v996, 0.0
    %v1005 = vmax.f32 %v997, 0.0
    %v1006 = vld [vmem:[#allocation20] sm:$0xf]
    %v1007 = vld [vmem:[#allocation20 + $0x4] sm:$0xf]
    %v1008 = vld [vmem:[#allocation20 + $0x8] sm:$0xf]
    %v1009 = vld [vmem:[#allocation20 + $0xc] sm:$0xf]
    %v1010 = vld [vmem:[#allocation20 + $0x10] sm:$0xf]
    %v1011 = vld [vmem:[#allocation20 + $0x14] sm:$0xf]
    %v1012 = vld [vmem:[#allocation20 + $0x18] sm:$0xf]
    %v1013 = vld [vmem:[#allocation20 + $0x1c] sm:$0xf]
    %v1014 = vld [vmem:[#allocation20 + $0x20] sm:$0xf]
    %v1015 = vld [vmem:[#allocation20 + $0x24] sm:$0xf]
    %v1016 = vld [vmem:[#allocation20 + $0x28] sm:$0xf]
    %v1017 = vld [vmem:[#allocation20 + $0x2c] sm:$0xf]
    %v1018 = vld [vmem:[#allocation20 + $0x30] sm:$0xf]
    %v1019 = vld [vmem:[#allocation20 + $0x34] sm:$0xf]
    %v1020 = vld [vmem:[#allocation20 + $0x38] sm:$0xf]
    %v1021 = vld [vmem:[#allocation20 + $0x3c] sm:$0xf]
    %v1022 = vld [vmem:[#allocation20 + $0x40] sm:$0xf]
    %v1023 = vld [vmem:[#allocation20 + $0x44] sm:$0xf]
    %v1024 = vld [vmem:[#allocation20 + $0x48] sm:$0xf]
    %v1025 = vld [vmem:[#allocation20 + $0x4c] sm:$0xf]
    %v1026 = vld [vmem:[#allocation20 + $0x50] sm:$0xf]
    %v1027 = vld [vmem:[#allocation20 + $0x54] sm:$0xf]
    %v1028 = vld [vmem:[#allocation20 + $0x58] sm:$0xf]
    %v1029 = vld [vmem:[#allocation20 + $0x5c] sm:$0xf]
    %v1030 = vld [vmem:[#allocation20 + $0x60] sm:$0xf]
    %v1031 = vld [vmem:[#allocation20 + $0x64] sm:$0xf]
    %v1032 = vld [vmem:[#allocation20 + $0x68] sm:$0xf]
    %v1033 = vld [vmem:[#allocation20 + $0x6c] sm:$0xf]
    %v1034 = vld [vmem:[#allocation20 + $0x70] sm:$0xf]
    %v1035 = vld [vmem:[#allocation20 + $0x74] sm:$0xf]
    %v1036 = vld [vmem:[#allocation20 + $0x78] sm:$0xf]
    %v1037 = vld [vmem:[#allocation20 + $0x7c] sm:$0xf]
    %v1038 = vpack.c.bf16 %v1000, %v998
    %v1039 = vpack.c.bf16 %v1001, %v999
    %v1040 = vpack.c.bf16 %v1004, %v1002
    %v1041 = vpack.c.bf16 %v1005, %v1003
    %v1042 = vperm.slane %v759, 0
    %v1075 = vunpack.c.l.b16 %v1006
    %v1076 = vunpack.c.l.b16 %v1007
    %v1077 = vunpack.c.l.b16 %v1008
    %v1078 = vunpack.c.l.b16 %v1009
    %v1079 = vunpack.c.l.b16 %v1010
    %v1080 = vunpack.c.l.b16 %v1011
    %v1081 = vunpack.c.l.b16 %v1012
    %v1082 = vunpack.c.l.b16 %v1013
    %v1083 = vunpack.c.l.b16 %v1014
    %v1084 = vunpack.c.l.b16 %v1015
    %v1085 = vunpack.c.l.b16 %v1016
    %v1086 = vunpack.c.l.b16 %v1017
    %v1087 = vunpack.c.l.b16 %v1018
    %v1088 = vunpack.c.l.b16 %v1019
    %v1089 = vunpack.c.l.b16 %v1020
    %v1090 = vunpack.c.l.b16 %v1021
    %v1091 = vunpack.c.l.b16 %v1022
    %v1092 = vunpack.c.l.b16 %v1023
    %v1093 = vunpack.c.l.b16 %v1024
    %v1094 = vunpack.c.l.b16 %v1025
    %v1095 = vunpack.c.l.b16 %v1026
    %v1096 = vunpack.c.l.b16 %v1027
    %v1097 = vunpack.c.l.b16 %v1028
    %v1098 = vunpack.c.l.b16 %v1029
    %v1099 = vunpack.c.l.b16 %v1030
    %v1100 = vunpack.c.l.b16 %v1031
    %v1101 = vunpack.c.l.b16 %v1032
    %v1102 = vunpack.c.l.b16 %v1033
    %v1103 = vunpack.c.l.b16 %v1034
    %v1104 = vunpack.c.l.b16 %v1035
    %v1105 = vunpack.c.l.b16 %v1036
    %v1106 = vunpack.c.l.b16 %v1037
    %v1107 = vpack.c.b16 %v1076, %v1075
    %v1108 = vpack.c.b16 %v1078, %v1077
    %v1109 = vpack.c.b16 %v1080, %v1079
    %v1110 = vpack.c.b16 %v1082, %v1081
    %v1111 = vpack.c.b16 %v1084, %v1083
    %v1112 = vpack.c.b16 %v1086, %v1085
    %v1113 = vpack.c.b16 %v1088, %v1087
    %v1114 = vpack.c.b16 %v1090, %v1089
    %v1115 = vpack.c.b16 %v1092, %v1091
    %v1116 = vpack.c.b16 %v1094, %v1093
    %v1117 = vpack.c.b16 %v1096, %v1095
    %v1118 = vpack.c.b16 %v1098, %v1097
    %v1119 = vpack.c.b16 %v1100, %v1099
    %v1120 = vpack.c.b16 %v1102, %v1101
    %v1121 = vpack.c.b16 %v1104, %v1103
    %v1122 = vpack.c.b16 %v1106, %v1105
    %1139 = vmatpush.bf16.msra.mxu0 %v1114
    %1140 = vmatpush.bf16.msra.mxu0 %v1113
    %1141 = vmatpush.bf16.msra.mxu0 %v1112
    %1142 = vmatpush.bf16.msra.mxu0 %v1111
    %1143 = vmatpush.bf16.msra.mxu0 %v1110
    %1144 = vmatpush.bf16.msra.mxu0 %v1109
    %1145 = vmatpush.bf16.msra.mxu0 %v1108
    %1146 = vmatpush.bf16.msra.mxu0 %v1107
    %1147 = vmatmul.bf16.gmra.mxu0 %v1038
    %v1148 = vpop.f32.mrf.mxu0
    %v1149 = vadd.f32 %v1042, %v1148
    %v1150 = vpop.f32.mrf.mxu0
    %v1151 = vadd.f32 %v1042, %v1150
    %1152 = vmatmul.bf16.gmra.mxu0 %v1040
    %v1153 = vpop.f32.mrf.mxu0
    %v1154 = vadd.f32 %v1042, %v1153
    %v1155 = vpop.f32.mrf.mxu0
    %v1156 = vadd.f32 %v1042, %v1155
    %1157 = vdwg.mxu0
    %1158 = vmatpush.bf16.msra.mxu0 %v1122
    %1159 = vmatpush.bf16.msra.mxu0 %v1121
    %1160 = vmatpush.bf16.msra.mxu0 %v1120
    %1161 = vmatpush.bf16.msra.mxu0 %v1119
    %1162 = vmatpush.bf16.msra.mxu0 %v1118
    %1163 = vmatpush.bf16.msra.mxu0 %v1117
    %1164 = vmatpush.bf16.msra.mxu0 %v1116
    %1165 = vmatpush.bf16.msra.mxu0 %v1115
    %1166 = vmatmul.bf16.gmra.mxu0 %v1039
    %v1167 = vpop.f32.mrf.mxu0
    %v1168 = vadd.f32 %v1149, %v1167
    %v1169 = vpop.f32.mrf.mxu0
    %v1170 = vadd.f32 %v1151, %v1169
    %1171 = vmatmul.bf16.gmra.mxu0 %v1041
    %v1172 = vpop.f32.mrf.mxu0
    %v1173 = vadd.f32 %v1154, %v1172
    %v1174 = vpop.f32.mrf.mxu0
    %v1175 = vadd.f32 %v1156, %v1174
    %1176 = vdwg.mxu0
    %1177 = vadd.xlane.f32.xlu0 %v1168
    %v1178 = vpop.xlane.xlu0 %1177
    %1179 = vadd.xlane.f32.xlu0 %v1170
    %v1180 = vpop.xlane.xlu0 %1179
    %1181 = vadd.xlane.f32.xlu0 %v1173
    %v1182 = vpop.xlane.xlu0 %1181
    %1183 = vadd.xlane.f32.xlu0 %v1175
    %v1184 = vpop.xlane.xlu0 %1183
    %v1185 = vmul.f32 %v1178, %v625
    %v1186 = vmul.f32 %v1180, %v625
    %v1187 = vmul.f32 %v1182, %v625
    %v1188 = vmul.f32 %v1184, %v625
    %v1189 = vsub.f32 %v1168, %v1185
    %v1190 = vsub.f32 %v1170, %v1186
    %v1191 = vsub.f32 %v1173, %v1187
    %v1192 = vsub.f32 %v1175, %v1188
    %v1193 = vmul.f32 %v1189, %v1189
    %v1194 = vmul.f32 %v1190, %v1190
    %v1195 = vmul.f32 %v1191, %v1191
    %v1196 = vmul.f32 %v1192, %v1192
    %1197 = vadd.xlane.f32.xlu0 %v1193
    %v1198 = vpop.xlane.xlu0 %1197
    %1199 = vadd.xlane.f32.xlu0 %v1194
    %v1200 = vpop.xlane.xlu0 %1199
    %1201 = vadd.xlane.f32.xlu0 %v1195
    %v1202 = vpop.xlane.xlu0 %1201
    %1203 = vadd.xlane.f32.xlu0 %v1196
    %v1204 = vpop.xlane.xlu0 %1203
    %v1205 = vmul.f32 %v1198, %v625
    %v1206 = vmul.f32 %v1200, %v625
    %v1207 = vmul.f32 %v1202, %v625
    %v1208 = vmul.f32 %v1204, %v625
    %v1209 = vadd.f32 %v1205, 1e-05
    %v1210 = vadd.f32 %v1206, 1e-05
    %v1211 = vadd.f32 %v1207, 1e-05
    %v1212 = vadd.f32 %v1208, 1e-05
    %v1213 = vrsqrt.pop %v1209
    %v1214 = vmul.f32 %v1213, %v1209
    %v1215 = vmul.f32 %v1214, %v1213
    %v1216 = vmul.f32 0.5, %v1215
    %v1217 = vsub.f32 1.5, %v1216
    %v1218 = vmul.f32 %v1213, %v1217
    %vm1219 = vweird.f32 %v1209
    %vm1220 = vweird.f32 %v1213
    %vm1221 = vmor %vm1219, %vm1220
    %v1222 = vsel %vm1221, %v1213, %v1218
    %v1223 = vrsqrt.pop %v1210
    %v1224 = vmul.f32 %v1223, %v1210
    %v1225 = vmul.f32 %v1224, %v1223
    %v1226 = vmul.f32 0.5, %v1225
    %v1227 = vsub.f32 1.5, %v1226
    %v1228 = vmul.f32 %v1223, %v1227
    %vm1229 = vweird.f32 %v1210
    %vm1230 = vweird.f32 %v1223
    %vm1231 = vmor %vm1229, %vm1230
    %v1232 = vsel %vm1231, %v1223, %v1228
    %v1233 = vrsqrt.pop %v1211
    %v1234 = vmul.f32 %v1233, %v1211
    %v1235 = vmul.f32 %v1234, %v1233
    %v1236 = vmul.f32 0.5, %v1235
    %v1237 = vsub.f32 1.5, %v1236
    %v1238 = vmul.f32 %v1233, %v1237
    %vm1239 = vweird.f32 %v1211
    %vm1240 = vweird.f32 %v1233
    %vm1241 = vmor %vm1239, %vm1240
    %v1242 = vsel %vm1241, %v1233, %v1238
    %v1243 = vrsqrt.pop %v1212
    %v1244 = vmul.f32 %v1243, %v1212
    %v1245 = vmul.f32 %v1244, %v1243
    %v1246 = vmul.f32 0.5, %v1245
    %v1247 = vsub.f32 1.5, %v1246
    %v1248 = vmul.f32 %v1243, %v1247
    %vm1249 = vweird.f32 %v1212
    %vm1250 = vweird.f32 %v1243
    %vm1251 = vmor %vm1249, %vm1250
    %v1252 = vsel %vm1251, %v1243, %v1248
    %v1253 = vmul.f32 %v1189, %v1222
    %v1254 = vmul.f32 %v1190, %v1232
    %v1255 = vmul.f32 %v1191, %v1242
    %v1256 = vmul.f32 %v1192, %v1252
    %v1257 = vperm.slane %v759, 1
    %v1258 = vmul.f32 %v1253, %v1257
    %v1259 = vmul.f32 %v1254, %v1257
    %v1260 = vmul.f32 %v1255, %v1257
    %v1261 = vmul.f32 %v1256, %v1257
    %v1262 = vperm.slane %v759, 2
    %v1263 = vadd.f32 %v1258, %v1262
    %v1264 = vadd.f32 %v1259, %v1262
    %v1265 = vadd.f32 %v1260, %v1262
    %v1266 = vadd.f32 %v1261, %v1262
    %v1267 = vmax.f32 %v1263, 0.0
    %v1268 = vmax.f32 %v1264, 0.0
    %v1269 = vmax.f32 %v1265, 0.0
    %v1270 = vmax.f32 %v1266, 0.0
    %s1271 = scalar_lea.vmem [#allocation17], 64
    %v1272 = vld [vmem:[%s1271] sm:$0xff]
    %v1273 = vld [vmem:[%s1271 + $0x8] sm:$0xff]
    %v1274 = vld [vmem:[%s1271 + $0x10] sm:$0xff]
    %v1275 = vld [vmem:[%s1271 + $0x18] sm:$0xff]
    %v1276 = vld [vmem:[%s1271 + $0x20] sm:$0xff]
    %v1277 = vld [vmem:[%s1271 + $0x28] sm:$0xff]
    %v1278 = vld [vmem:[%s1271 + $0x30] sm:$0xff]
    %v1279 = vld [vmem:[%s1271 + $0x38] sm:$0xff]
    %v1281 = vperm.slane %v758, 0
    %v1282 = vperm.slane %v758, 4
    %v1285 = vperm.slane %v1281, 0
    %v1286 = vperm.slane %v1282, 0
    %v1295 = vunpack.c.l.b16 %v1272
    %v1296 = vunpack.c.h.b16 %v1272
    %v1297 = vunpack.c.l.b16 %v1273
    %v1298 = vunpack.c.h.b16 %v1273
    %v1299 = vunpack.c.l.b16 %v1274
    %v1300 = vunpack.c.h.b16 %v1274
    %v1301 = vunpack.c.l.b16 %v1275
    %v1302 = vunpack.c.h.b16 %v1275
    %v1303 = vunpack.c.l.b16 %v1276
    %v1304 = vunpack.c.h.b16 %v1276
    %v1305 = vunpack.c.l.b16 %v1277
    %v1306 = vunpack.c.h.b16 %v1277
    %v1307 = vunpack.c.l.b16 %v1278
    %v1308 = vunpack.c.h.b16 %v1278
    %v1309 = vunpack.c.l.b16 %v1279
    %v1310 = vunpack.c.h.b16 %v1279
    %v1311 = vpack.c.b16 %v1297, %v1295
    %v1312 = vpack.c.b16 %v1298, %v1296
    %v1313 = vpack.c.b16 %v1301, %v1299
    %v1314 = vpack.c.b16 %v1302, %v1300
    %v1315 = vpack.c.b16 %v1305, %v1303
    %v1316 = vpack.c.b16 %v1306, %v1304
    %v1317 = vpack.c.b16 %v1309, %v1307
    %v1318 = vpack.c.b16 %v1310, %v1308
    %1327 = vmatpush.bf16.msra.mxu0 0
    %1328 = vmatpush.bf16.msra.mxu0 0
    %1329 = vmatpush.bf16.msra.mxu0 0
    %1330 = vmatpush.bf16.msra.mxu0 0
    %1331 = vmatpush.bf16.msra.mxu0 %v1317
    %1332 = vmatpush.bf16.msra.mxu0 %v1315
    %1333 = vmatpush.bf16.msra.mxu0 %v1313
    %1334 = vmatpush.bf16.msra.mxu0 %v1311
    %1335 = vmatmul.bf16.gmra.mxu0 %v820
    %v1336 = vpop.f32.mrf.mxu0
    %v1337 = vadd.f32 %v1285, %v1336
    %v1338 = vpop.f32.mrf.mxu0
    %v1339 = vadd.f32 %v1285, %v1338
    %1340 = vmatmul.bf16.gmra.mxu0 %v823
    %v1341 = vpop.f32.mrf.mxu0
    %v1342 = vadd.f32 %v1285, %v1341
    %v1343 = vpop.f32.mrf.mxu0
    %v1344 = vadd.f32 %v1285, %v1343
    %1345 = vdwg.mxu0
    %1346 = vmatpush.bf16.msra.mxu0 0
    %1347 = vmatpush.bf16.msra.mxu0 0
    %1348 = vmatpush.bf16.msra.mxu0 0
    %1349 = vmatpush.bf16.msra.mxu0 0
    %1350 = vmatpush.bf16.msra.mxu0 %v1318
    %1351 = vmatpush.bf16.msra.mxu0 %v1316
    %1352 = vmatpush.bf16.msra.mxu0 %v1314
    %1353 = vmatpush.bf16.msra.mxu0 %v1312
    %1354 = vmatmul.bf16.gmra.mxu0 %v820
    %v1355 = vpop.f32.mrf.mxu0
    %v1356 = vadd.f32 %v1286, %v1355
    %v1357 = vpop.f32.mrf.mxu0
    %v1358 = vadd.f32 %v1286, %v1357
    %1359 = vmatmul.bf16.gmra.mxu0 %v823
    %v1360 = vpop.f32.mrf.mxu0
    %v1361 = vadd.f32 %v1286, %v1360
    %v1362 = vpop.f32.mrf.mxu0
    %v1363 = vadd.f32 %v1286, %v1362
    %1364 = vdwg.mxu0
    %v1365 = vadd.f32 %v1337, %v1356
    %1366 = vadd.xlane.f32.xlu0 %v1365
    %v1367 = vpop.xlane.xlu0 %1366
    %v1368 = vadd.f32 %v1339, %v1358
    %1369 = vadd.xlane.f32.xlu0 %v1368
    %v1370 = vpop.xlane.xlu0 %1369
    %v1371 = vadd.f32 %v1342, %v1361
    %1372 = vadd.xlane.f32.xlu0 %v1371
    %v1373 = vpop.xlane.xlu0 %1372
    %v1374 = vadd.f32 %v1344, %v1363
    %1375 = vadd.xlane.f32.xlu0 %v1374
    %v1376 = vpop.xlane.xlu0 %1375
    %v1377 = vmul.f32 %v1367, %v881
    %v1378 = vmul.f32 %v1370, %v881
    %v1379 = vmul.f32 %v1373, %v881
    %v1380 = vmul.f32 %v1376, %v881
    %v1381 = vsub.f32 %v1337, %v1377
    %v1382 = vsub.f32 %v1356, %v1377
    %v1383 = vsub.f32 %v1339, %v1378
    %v1384 = vsub.f32 %v1358, %v1378
    %v1385 = vsub.f32 %v1342, %v1379
    %v1386 = vsub.f32 %v1361, %v1379
    %v1387 = vsub.f32 %v1344, %v1380
    %v1388 = vsub.f32 %v1363, %v1380
    %v1389 = vmul.f32 %v1381, %v1381
    %v1390 = vmul.f32 %v1382, %v1382
    %v1391 = vmul.f32 %v1383, %v1383
    %v1392 = vmul.f32 %v1384, %v1384
    %v1393 = vmul.f32 %v1385, %v1385
    %v1394 = vmul.f32 %v1386, %v1386
    %v1395 = vmul.f32 %v1387, %v1387
    %v1396 = vmul.f32 %v1388, %v1388
    %v1397 = vadd.f32 %v1389, %v1390
    %1398 = vadd.xlane.f32.xlu0 %v1397
    %v1399 = vpop.xlane.xlu0 %1398
    %v1400 = vadd.f32 %v1391, %v1392
    %1401 = vadd.xlane.f32.xlu0 %v1400
    %v1402 = vpop.xlane.xlu0 %1401
    %v1403 = vadd.f32 %v1393, %v1394
    %1404 = vadd.xlane.f32.xlu0 %v1403
    %v1405 = vpop.xlane.xlu0 %1404
    %v1406 = vadd.f32 %v1395, %v1396
    %1407 = vadd.xlane.f32.xlu0 %v1406
    %v1408 = vpop.xlane.xlu0 %1407
    %v1409 = vmul.f32 %v1399, %v881
    %v1410 = vmul.f32 %v1402, %v881
    %v1411 = vmul.f32 %v1405, %v881
    %v1412 = vmul.f32 %v1408, %v881
    %v1413 = vadd.f32 %v1409, 1e-05
    %v1414 = vadd.f32 %v1410, 1e-05
    %v1415 = vadd.f32 %v1411, 1e-05
    %v1416 = vadd.f32 %v1412, 1e-05
    %v1417 = vrsqrt.pop %v1413
    %v1418 = vmul.f32 %v1417, %v1413
    %v1419 = vmul.f32 %v1418, %v1417
    %v1420 = vmul.f32 0.5, %v1419
    %v1421 = vsub.f32 1.5, %v1420
    %v1422 = vmul.f32 %v1417, %v1421
    %vm1423 = vweird.f32 %v1413
    %vm1424 = vweird.f32 %v1417
    %vm1425 = vmor %vm1423, %vm1424
    %v1426 = vsel %vm1425, %v1417, %v1422
    %v1427 = vrsqrt.pop %v1414
    %v1428 = vmul.f32 %v1427, %v1414
    %v1429 = vmul.f32 %v1428, %v1427
    %v1430 = vmul.f32 0.5, %v1429
    %v1431 = vsub.f32 1.5, %v1430
    %v1432 = vmul.f32 %v1427, %v1431
    %vm1433 = vweird.f32 %v1414
    %vm1434 = vweird.f32 %v1427
    %vm1435 = vmor %vm1433, %vm1434
    %v1436 = vsel %vm1435, %v1427, %v1432
    %v1437 = vrsqrt.pop %v1415
    %v1438 = vmul.f32 %v1437, %v1415
    %v1439 = vmul.f32 %v1438, %v1437
    %v1440 = vmul.f32 0.5, %v1439
    %v1441 = vsub.f32 1.5, %v1440
    %v1442 = vmul.f32 %v1437, %v1441
    %vm1443 = vweird.f32 %v1415
    %vm1444 = vweird.f32 %v1437
    %vm1445 = vmor %vm1443, %vm1444
    %v1446 = vsel %vm1445, %v1437, %v1442
    %v1447 = vrsqrt.pop %v1416
    %v1448 = vmul.f32 %v1447, %v1416
    %v1449 = vmul.f32 %v1448, %v1447
    %v1450 = vmul.f32 0.5, %v1449
    %v1451 = vsub.f32 1.5, %v1450
    %v1452 = vmul.f32 %v1447, %v1451
    %vm1453 = vweird.f32 %v1416
    %vm1454 = vweird.f32 %v1447
    %vm1455 = vmor %vm1453, %vm1454
    %v1456 = vsel %vm1455, %v1447, %v1452
    %v1457 = vmul.f32 %v1381, %v1426
    %v1458 = vmul.f32 %v1382, %v1426
    %v1459 = vmul.f32 %v1383, %v1436
    %v1460 = vmul.f32 %v1384, %v1436
    %v1461 = vmul.f32 %v1385, %v1446
    %v1462 = vmul.f32 %v1386, %v1446
    %v1463 = vmul.f32 %v1387, %v1456
    %v1464 = vmul.f32 %v1388, %v1456
    %v1465 = vperm.slane %v758, 1
    %v1466 = vperm.slane %v758, 5
    %v1469 = vperm.slane %v1465, 1
    %v1470 = vperm.slane %v1466, 1
    %v1471 = vmul.f32 %v1457, %v1469
    %v1472 = vmul.f32 %v1458, %v1470
    %v1473 = vmul.f32 %v1459, %v1469
    %v1474 = vmul.f32 %v1460, %v1470
    %v1475 = vmul.f32 %v1461, %v1469
    %v1476 = vmul.f32 %v1462, %v1470
    %v1477 = vmul.f32 %v1463, %v1469
    %v1478 = vmul.f32 %v1464, %v1470
    %v1479 = vperm.slane %v758, 2
    %v1480 = vperm.slane %v758, 6
    %v1483 = vperm.slane %v1479, 2
    %v1484 = vperm.slane %v1480, 2
    %v1485 = vadd.f32 %v1471, %v1483
    %v1486 = vadd.f32 %v1472, %v1484
    %v1487 = vadd.f32 %v1473, %v1483
    %v1488 = vadd.f32 %v1474, %v1484
    %v1489 = vadd.f32 %v1475, %v1483
    %v1490 = vadd.f32 %v1476, %v1484
    %v1491 = vadd.f32 %v1477, %v1483
    %v1492 = vadd.f32 %v1478, %v1484
    %v1493 = vmax.f32 %v1485, 0.0
    %v1494 = vmax.f32 %v1486, 0.0
    %v1495 = vmax.f32 %v1487, 0.0
    %v1496 = vmax.f32 %v1488, 0.0
    %v1497 = vmax.f32 %v1489, 0.0
    %v1498 = vmax.f32 %v1490, 0.0
    %v1499 = vmax.f32 %v1491, 0.0
    %v1500 = vmax.f32 %v1492, 0.0
    %s1501 = scalar_lea.vmem [#allocation20], 128
    %v1502 = vld [vmem:[%s1501] sm:$0xf]
    %v1503 = vld [vmem:[%s1501 + $0x4] sm:$0xf]
    %v1504 = vld [vmem:[%s1501 + $0x8] sm:$0xf]
    %v1505 = vld [vmem:[%s1501 + $0xc] sm:$0xf]
    %v1506 = vld [vmem:[%s1501 + $0x10] sm:$0xf]
    %v1507 = vld [vmem:[%s1501 + $0x14] sm:$0xf]
    %v1508 = vld [vmem:[%s1501 + $0x18] sm:$0xf]
    %v1509 = vld [vmem:[%s1501 + $0x1c] sm:$0xf]
    %v1510 = vld [vmem:[%s1501 + $0x20] sm:$0xf]
    %v1511 = vld [vmem:[%s1501 + $0x24] sm:$0xf]
    %v1512 = vld [vmem:[%s1501 + $0x28] sm:$0xf]
    %v1513 = vld [vmem:[%s1501 + $0x2c] sm:$0xf]
    %v1514 = vld [vmem:[%s1501 + $0x30] sm:$0xf]
    %v1515 = vld [vmem:[%s1501 + $0x34] sm:$0xf]
    %v1516 = vld [vmem:[%s1501 + $0x38] sm:$0xf]
    %v1517 = vld [vmem:[%s1501 + $0x3c] sm:$0xf]
    %v1518 = vld [vmem:[%s1501 + $0x40] sm:$0xf]
    %v1519 = vld [vmem:[%s1501 + $0x44] sm:$0xf]
    %v1520 = vld [vmem:[%s1501 + $0x48] sm:$0xf]
    %v1521 = vld [vmem:[%s1501 + $0x4c] sm:$0xf]
    %v1522 = vld [vmem:[%s1501 + $0x50] sm:$0xf]
    %v1523 = vld [vmem:[%s1501 + $0x54] sm:$0xf]
    %v1524 = vld [vmem:[%s1501 + $0x58] sm:$0xf]
    %v1525 = vld [vmem:[%s1501 + $0x5c] sm:$0xf]
    %v1526 = vld [vmem:[%s1501 + $0x60] sm:$0xf]
    %v1527 = vld [vmem:[%s1501 + $0x64] sm:$0xf]
    %v1528 = vld [vmem:[%s1501 + $0x68] sm:$0xf]
    %v1529 = vld [vmem:[%s1501 + $0x6c] sm:$0xf]
    %v1530 = vld [vmem:[%s1501 + $0x70] sm:$0xf]
    %v1531 = vld [vmem:[%s1501 + $0x74] sm:$0xf]
    %v1532 = vld [vmem:[%s1501 + $0x78] sm:$0xf]
    %v1533 = vld [vmem:[%s1501 + $0x7c] sm:$0xf]
    %v1534 = vpack.c.bf16 %v1495, %v1493
    %v1535 = vpack.c.bf16 %v1496, %v1494
    %v1536 = vpack.c.bf16 %v1499, %v1497
    %v1537 = vpack.c.bf16 %v1500, %v1498
    %v1538 = vperm.slane %v760, 0
    %v1571 = vunpack.c.l.b16 %v1502
    %v1572 = vunpack.c.l.b16 %v1503
    %v1573 = vunpack.c.l.b16 %v1504
    %v1574 = vunpack.c.l.b16 %v1505
    %v1575 = vunpack.c.l.b16 %v1506
    %v1576 = vunpack.c.l.b16 %v1507
    %v1577 = vunpack.c.l.b16 %v1508
    %v1578 = vunpack.c.l.b16 %v1509
    %v1579 = vunpack.c.l.b16 %v1510
    %v1580 = vunpack.c.l.b16 %v1511
    %v1581 = vunpack.c.l.b16 %v1512
    %v1582 = vunpack.c.l.b16 %v1513
    %v1583 = vunpack.c.l.b16 %v1514
    %v1584 = vunpack.c.l.b16 %v1515
    %v1585 = vunpack.c.l.b16 %v1516
    %v1586 = vunpack.c.l.b16 %v1517
    %v1587 = vunpack.c.l.b16 %v1518
    %v1588 = vunpack.c.l.b16 %v1519
    %v1589 = vunpack.c.l.b16 %v1520
    %v1590 = vunpack.c.l.b16 %v1521
    %v1591 = vunpack.c.l.b16 %v1522
    %v1592 = vunpack.c.l.b16 %v1523
    %v1593 = vunpack.c.l.b16 %v1524
    %v1594 = vunpack.c.l.b16 %v1525
    %v1595 = vunpack.c.l.b16 %v1526
    %v1596 = vunpack.c.l.b16 %v1527
    %v1597 = vunpack.c.l.b16 %v1528
    %v1598 = vunpack.c.l.b16 %v1529
    %v1599 = vunpack.c.l.b16 %v1530
    %v1600 = vunpack.c.l.b16 %v1531
    %v1601 = vunpack.c.l.b16 %v1532
    %v1602 = vunpack.c.l.b16 %v1533
    %v1603 = vpack.c.b16 %v1572, %v1571
    %v1604 = vpack.c.b16 %v1574, %v1573
    %v1605 = vpack.c.b16 %v1576, %v1575
    %v1606 = vpack.c.b16 %v1578, %v1577
    %v1607 = vpack.c.b16 %v1580, %v1579
    %v1608 = vpack.c.b16 %v1582, %v1581
    %v1609 = vpack.c.b16 %v1584, %v1583
    %v1610 = vpack.c.b16 %v1586, %v1585
    %v1611 = vpack.c.b16 %v1588, %v1587
    %v1612 = vpack.c.b16 %v1590, %v1589
    %v1613 = vpack.c.b16 %v1592, %v1591
    %v1614 = vpack.c.b16 %v1594, %v1593
    %v1615 = vpack.c.b16 %v1596, %v1595
    %v1616 = vpack.c.b16 %v1598, %v1597
    %v1617 = vpack.c.b16 %v1600, %v1599
    %v1618 = vpack.c.b16 %v1602, %v1601
    %1635 = vmatpush.bf16.msra.mxu0 %v1610
    %1636 = vmatpush.bf16.msra.mxu0 %v1609
    %1637 = vmatpush.bf16.msra.mxu0 %v1608
    %1638 = vmatpush.bf16.msra.mxu0 %v1607
    %1639 = vmatpush.bf16.msra.mxu0 %v1606
    %1640 = vmatpush.bf16.msra.mxu0 %v1605
    %1641 = vmatpush.bf16.msra.mxu0 %v1604
    %1642 = vmatpush.bf16.msra.mxu0 %v1603
    %1643 = vmatmul.bf16.gmra.mxu0 %v1534
    %v1644 = vpop.f32.mrf.mxu0
    %v1645 = vadd.f32 %v1538, %v1644
    %v1646 = vpop.f32.mrf.mxu0
    %v1647 = vadd.f32 %v1538, %v1646
    %1648 = vmatmul.bf16.gmra.mxu0 %v1536
    %v1649 = vpop.f32.mrf.mxu0
    %v1650 = vadd.f32 %v1538, %v1649
    %v1651 = vpop.f32.mrf.mxu0
    %v1652 = vadd.f32 %v1538, %v1651
    %1653 = vdwg.mxu0
    %1654 = vmatpush.bf16.msra.mxu0 %v1618
    %1655 = vmatpush.bf16.msra.mxu0 %v1617
    %1656 = vmatpush.bf16.msra.mxu0 %v1616
    %1657 = vmatpush.bf16.msra.mxu0 %v1615
    %1658 = vmatpush.bf16.msra.mxu0 %v1614
    %1659 = vmatpush.bf16.msra.mxu0 %v1613
    %1660 = vmatpush.bf16.msra.mxu0 %v1612
    %1661 = vmatpush.bf16.msra.mxu0 %v1611
    %1662 = vmatmul.bf16.gmra.mxu0 %v1535
    %v1663 = vpop.f32.mrf.mxu0
    %v1664 = vadd.f32 %v1645, %v1663
    %v1665 = vpop.f32.mrf.mxu0
    %v1666 = vadd.f32 %v1647, %v1665
    %1667 = vmatmul.bf16.gmra.mxu0 %v1537
    %v1668 = vpop.f32.mrf.mxu0
    %v1669 = vadd.f32 %v1650, %v1668
    %v1670 = vpop.f32.mrf.mxu0
    %v1671 = vadd.f32 %v1652, %v1670
    %1672 = vdwg.mxu0
    %1673 = vadd.xlane.f32.xlu0 %v1664
    %v1674 = vpop.xlane.xlu0 %1673
    %1675 = vadd.xlane.f32.xlu0 %v1666
    %v1676 = vpop.xlane.xlu0 %1675
    %1677 = vadd.xlane.f32.xlu0 %v1669
    %v1678 = vpop.xlane.xlu0 %1677
    %1679 = vadd.xlane.f32.xlu0 %v1671
    %v1680 = vpop.xlane.xlu0 %1679
    %v1681 = vmul.f32 %v1674, %v625
    %v1682 = vmul.f32 %v1676, %v625
    %v1683 = vmul.f32 %v1678, %v625
    %v1684 = vmul.f32 %v1680, %v625
    %v1685 = vsub.f32 %v1664, %v1681
    %v1686 = vsub.f32 %v1666, %v1682
    %v1687 = vsub.f32 %v1669, %v1683
    %v1688 = vsub.f32 %v1671, %v1684
    %v1689 = vmul.f32 %v1685, %v1685
    %v1690 = vmul.f32 %v1686, %v1686
    %v1691 = vmul.f32 %v1687, %v1687
    %v1692 = vmul.f32 %v1688, %v1688
    %1693 = vadd.xlane.f32.xlu0 %v1689
    %v1694 = vpop.xlane.xlu0 %1693
    %1695 = vadd.xlane.f32.xlu0 %v1690
    %v1696 = vpop.xlane.xlu0 %1695
    %1697 = vadd.xlane.f32.xlu0 %v1691
    %v1698 = vpop.xlane.xlu0 %1697
    %1699 = vadd.xlane.f32.xlu0 %v1692
    %v1700 = vpop.xlane.xlu0 %1699
    %v1701 = vmul.f32 %v1694, %v625
    %v1702 = vmul.f32 %v1696, %v625
    %v1703 = vmul.f32 %v1698, %v625
    %v1704 = vmul.f32 %v1700, %v625
    %v1705 = vadd.f32 %v1701, 1e-05
    %v1706 = vadd.f32 %v1702, 1e-05
    %v1707 = vadd.f32 %v1703, 1e-05
    %v1708 = vadd.f32 %v1704, 1e-05
    %v1709 = vrsqrt.pop %v1705
    %v1710 = vmul.f32 %v1709, %v1705
    %v1711 = vmul.f32 %v1710, %v1709
    %v1712 = vmul.f32 0.5, %v1711
    %v1713 = vsub.f32 1.5, %v1712
    %v1714 = vmul.f32 %v1709, %v1713
    %vm1715 = vweird.f32 %v1705
    %vm1716 = vweird.f32 %v1709
    %vm1717 = vmor %vm1715, %vm1716
    %v1718 = vsel %vm1717, %v1709, %v1714
    %v1719 = vrsqrt.pop %v1706
    %v1720 = vmul.f32 %v1719, %v1706
    %v1721 = vmul.f32 %v1720, %v1719
    %v1722 = vmul.f32 0.5, %v1721
    %v1723 = vsub.f32 1.5, %v1722
    %v1724 = vmul.f32 %v1719, %v1723
    %vm1725 = vweird.f32 %v1706
    %vm1726 = vweird.f32 %v1719
    %vm1727 = vmor %vm1725, %vm1726
    %v1728 = vsel %vm1727, %v1719, %v1724
    %v1729 = vrsqrt.pop %v1707
    %v1730 = vmul.f32 %v1729, %v1707
    %v1731 = vmul.f32 %v1730, %v1729
    %v1732 = vmul.f32 0.5, %v1731
    %v1733 = vsub.f32 1.5, %v1732
    %v1734 = vmul.f32 %v1729, %v1733
    %vm1735 = vweird.f32 %v1707
    %vm1736 = vweird.f32 %v1729
    %vm1737 = vmor %vm1735, %vm1736
    %v1738 = vsel %vm1737, %v1729, %v1734
    %v1739 = vrsqrt.pop %v1708
    %v1740 = vmul.f32 %v1739, %v1708
    %v1741 = vmul.f32 %v1740, %v1739
    %v1742 = vmul.f32 0.5, %v1741
    %v1743 = vsub.f32 1.5, %v1742
    %v1744 = vmul.f32 %v1739, %v1743
    %vm1745 = vweird.f32 %v1708
    %vm1746 = vweird.f32 %v1739
    %vm1747 = vmor %vm1745, %vm1746
    %v1748 = vsel %vm1747, %v1739, %v1744
    %v1749 = vmul.f32 %v1685, %v1718
    %v1750 = vmul.f32 %v1686, %v1728
    %v1751 = vmul.f32 %v1687, %v1738
    %v1752 = vmul.f32 %v1688, %v1748
    %v1753 = vperm.slane %v760, 1
    %v1754 = vmul.f32 %v1749, %v1753
    %v1755 = vmul.f32 %v1750, %v1753
    %v1756 = vmul.f32 %v1751, %v1753
    %v1757 = vmul.f32 %v1752, %v1753
    %v1758 = vperm.slane %v760, 2
    %v1759 = vadd.f32 %v1754, %v1758
    %v1760 = vadd.f32 %v1755, %v1758
    %v1761 = vadd.f32 %v1756, %v1758
    %v1762 = vadd.f32 %v1757, %v1758
    %v1763 = vmax.f32 %v1759, 0.0
    %v1764 = vmax.f32 %v1760, 0.0
    %v1765 = vmax.f32 %v1761, 0.0
    %v1766 = vmax.f32 %v1762, 0.0
    %v1767 = vld [vmem:[#allocation23] sm:$0xff]
    %v1768 = vld [vmem:[#allocation26] sm:$0x3f]
    %v1769 = vld [vmem:[#allocation25] sm:$0xf]
    %v1770 = vld [vmem:[#allocation25 + $0x4] sm:$0xf]
    %v1771 = vld [vmem:[#allocation25 + $0x8] sm:$0xf]
    %v1772 = vld [vmem:[#allocation25 + $0xc] sm:$0xf]
    %v1773 = vld [vmem:[#allocation25 + $0x10] sm:$0xf]
    %v1774 = vld [vmem:[#allocation25 + $0x14] sm:$0xf]
    %v1775 = vld [vmem:[#allocation25 + $0x18] sm:$0xf]
    %v1776 = vld [vmem:[#allocation25 + $0x1c] sm:$0xf]
    %v1777 = vld [vmem:[#allocation25 + $0x20] sm:$0xf]
    %v1778 = vld [vmem:[#allocation25 + $0x24] sm:$0xf]
    %v1779 = vld [vmem:[#allocation25 + $0x28] sm:$0xf]
    %v1780 = vld [vmem:[#allocation25 + $0x2c] sm:$0xf]
    %v1781 = vld [vmem:[#allocation25 + $0x30] sm:$0xf]
    %v1782 = vld [vmem:[#allocation25 + $0x34] sm:$0xf]
    %v1783 = vld [vmem:[#allocation25 + $0x38] sm:$0xf]
    %v1784 = vld [vmem:[#allocation25 + $0x3c] sm:$0xf]
    %s1785 = scalar_lea.vmem [#allocation25], 64
    %v1786 = vld [vmem:[%s1785] sm:$0xf]
    %v1787 = vld [vmem:[%s1785 + $0x4] sm:$0xf]
    %v1788 = vld [vmem:[%s1785 + $0x8] sm:$0xf]
    %v1789 = vld [vmem:[%s1785 + $0xc] sm:$0xf]
    %v1790 = vld [vmem:[%s1785 + $0x10] sm:$0xf]
    %v1791 = vld [vmem:[%s1785 + $0x14] sm:$0xf]
    %v1792 = vld [vmem:[%s1785 + $0x18] sm:$0xf]
    %v1793 = vld [vmem:[%s1785 + $0x1c] sm:$0xf]
    %v1794 = vld [vmem:[%s1785 + $0x20] sm:$0xf]
    %v1795 = vld [vmem:[%s1785 + $0x24] sm:$0xf]
    %v1796 = vld [vmem:[%s1785 + $0x28] sm:$0xf]
    %v1797 = vld [vmem:[%s1785 + $0x2c] sm:$0xf]
    %v1798 = vld [vmem:[%s1785 + $0x30] sm:$0xf]
    %v1799 = vld [vmem:[%s1785 + $0x34] sm:$0xf]
    %v1800 = vld [vmem:[%s1785 + $0x38] sm:$0xf]
    %v1801 = vld [vmem:[%s1785 + $0x3c] sm:$0xf]
    %s1802 = scalar_lea.vmem [#allocation25], 128
    %v1803 = vld [vmem:[%s1802] sm:$0xf]
    %v1804 = vld [vmem:[%s1802 + $0x4] sm:$0xf]
    %v1805 = vld [vmem:[%s1802 + $0x8] sm:$0xf]
    %v1806 = vld [vmem:[%s1802 + $0xc] sm:$0xf]
    %v1807 = vld [vmem:[%s1802 + $0x10] sm:$0xf]
    %v1808 = vld [vmem:[%s1802 + $0x14] sm:$0xf]
    %v1809 = vld [vmem:[%s1802 + $0x18] sm:$0xf]
    %v1810 = vld [vmem:[%s1802 + $0x1c] sm:$0xf]
    %v1811 = vld [vmem:[%s1802 + $0x20] sm:$0xf]
    %v1812 = vld [vmem:[%s1802 + $0x24] sm:$0xf]
    %v1813 = vld [vmem:[%s1802 + $0x28] sm:$0xf]
    %v1814 = vld [vmem:[%s1802 + $0x2c] sm:$0xf]
    %v1815 = vld [vmem:[%s1802 + $0x30] sm:$0xf]
    %v1816 = vld [vmem:[%s1802 + $0x34] sm:$0xf]
    %v1817 = vld [vmem:[%s1802 + $0x38] sm:$0xf]
    %v1818 = vld [vmem:[%s1802 + $0x3c] sm:$0xf]
    %s1819 = scalar_lea.vmem [#allocation25], 192
    %v1820 = vld [vmem:[%s1819] sm:$0xf]
    %v1821 = vld [vmem:[%s1819 + $0x4] sm:$0xf]
    %v1822 = vld [vmem:[%s1819 + $0x8] sm:$0xf]
    %v1823 = vld [vmem:[%s1819 + $0xc] sm:$0xf]
    %v1824 = vld [vmem:[%s1819 + $0x10] sm:$0xf]
    %v1825 = vld [vmem:[%s1819 + $0x14] sm:$0xf]
    %v1826 = vld [vmem:[%s1819 + $0x18] sm:$0xf]
    %v1827 = vld [vmem:[%s1819 + $0x1c] sm:$0xf]
    %v1828 = vld [vmem:[%s1819 + $0x20] sm:$0xf]
    %v1829 = vld [vmem:[%s1819 + $0x24] sm:$0xf]
    %v1830 = vld [vmem:[%s1819 + $0x28] sm:$0xf]
    %v1831 = vld [vmem:[%s1819 + $0x2c] sm:$0xf]
    %v1832 = vld [vmem:[%s1819 + $0x30] sm:$0xf]
    %v1833 = vld [vmem:[%s1819 + $0x34] sm:$0xf]
    %v1834 = vld [vmem:[%s1819 + $0x38] sm:$0xf]
    %v1835 = vld [vmem:[%s1819 + $0x3c] sm:$0xf]
    %v1836 = vpack.c.bf16 %v752, %v752
    %v1837 = vperm.slane %v1768, 0
    %v1854 = vunpack.c.l.b16 %v1769
    %v1855 = vunpack.c.l.b16 %v1770
    %v1856 = vunpack.c.l.b16 %v1771
    %v1857 = vunpack.c.l.b16 %v1772
    %v1858 = vunpack.c.l.b16 %v1773
    %v1859 = vunpack.c.l.b16 %v1774
    %v1860 = vunpack.c.l.b16 %v1775
    %v1861 = vunpack.c.l.b16 %v1776
    %v1862 = vunpack.c.l.b16 %v1777
    %v1863 = vunpack.c.l.b16 %v1778
    %v1864 = vunpack.c.l.b16 %v1779
    %v1865 = vunpack.c.l.b16 %v1780
    %v1866 = vunpack.c.l.b16 %v1781
    %v1867 = vunpack.c.l.b16 %v1782
    %v1868 = vunpack.c.l.b16 %v1783
    %v1869 = vunpack.c.l.b16 %v1784
    %v1870 = vpack.c.b16 %v1855, %v1854
    %v1871 = vpack.c.b16 %v1857, %v1856
    %v1872 = vpack.c.b16 %v1859, %v1858
    %v1873 = vpack.c.b16 %v1861, %v1860
    %v1874 = vpack.c.b16 %v1863, %v1862
    %v1875 = vpack.c.b16 %v1865, %v1864
    %v1876 = vpack.c.b16 %v1867, %v1866
    %v1877 = vpack.c.b16 %v1869, %v1868
    %1886 = vmatpush.bf16.msra.mxu0 %v1877
    %1887 = vmatpush.bf16.msra.mxu0 %v1876
    %1888 = vmatpush.bf16.msra.mxu0 %v1875
    %1889 = vmatpush.bf16.msra.mxu0 %v1874
    %1890 = vmatpush.bf16.msra.mxu0 %v1873
    %1891 = vmatpush.bf16.msra.mxu0 %v1872
    %1892 = vmatpush.bf16.msra.mxu0 %v1871
    %1893 = vmatpush.bf16.msra.mxu0 %v1870
    %1894 = vmatmul.bf16.gmra.mxu0 %v1836
    %v1895 = vpop.f32.mrf.mxu0
    %v1896 = vadd.f32 %v1837, %v1895
    %v1897 = vpop.f32.mrf.mxu0
    %1898 = vdwg.mxu0
    %v1899 = vpack.c.bf16 %v1268, %v1267
    %v1900 = vpack.c.bf16 %v1270, %v1269
    %v1901 = vperm.slane %v1768, 1
    %v1918 = vunpack.c.l.b16 %v1786
    %v1919 = vunpack.c.l.b16 %v1787
    %v1920 = vunpack.c.l.b16 %v1788
    %v1921 = vunpack.c.l.b16 %v1789
    %v1922 = vunpack.c.l.b16 %v1790
    %v1923 = vunpack.c.l.b16 %v1791
    %v1924 = vunpack.c.l.b16 %v1792
    %v1925 = vunpack.c.l.b16 %v1793
    %v1926 = vunpack.c.l.b16 %v1794
    %v1927 = vunpack.c.l.b16 %v1795
    %v1928 = vunpack.c.l.b16 %v1796
    %v1929 = vunpack.c.l.b16 %v1797
    %v1930 = vunpack.c.l.b16 %v1798
    %v1931 = vunpack.c.l.b16 %v1799
    %v1932 = vunpack.c.l.b16 %v1800
    %v1933 = vunpack.c.l.b16 %v1801
    %v1934 = vpack.c.b16 %v1919, %v1918
    %v1935 = vpack.c.b16 %v1921, %v1920
    %v1936 = vpack.c.b16 %v1923, %v1922
    %v1937 = vpack.c.b16 %v1925, %v1924
    %v1938 = vpack.c.b16 %v1927, %v1926
    %v1939 = vpack.c.b16 %v1929, %v1928
    %v1940 = vpack.c.b16 %v1931, %v1930
    %v1941 = vpack.c.b16 %v1933, %v1932
    %1950 = vmatpush.bf16.msra.mxu0 %v1941
    %1951 = vmatpush.bf16.msra.mxu0 %v1940
    %1952 = vmatpush.bf16.msra.mxu0 %v1939
    %1953 = vmatpush.bf16.msra.mxu0 %v1938
    %1954 = vmatpush.bf16.msra.mxu0 %v1937
    %1955 = vmatpush.bf16.msra.mxu0 %v1936
    %1956 = vmatpush.bf16.msra.mxu0 %v1935
    %1957 = vmatpush.bf16.msra.mxu0 %v1934
    %1958 = vmatmul.bf16.gmra.mxu0 %v1899
    %v1959 = vpop.f32.mrf.mxu0
    %v1960 = vadd.f32 %v1901, %v1959
    %v1961 = vpop.f32.mrf.mxu0
    %v1962 = vadd.f32 %v1901, %v1961
    %1963 = vmatmul.bf16.gmra.mxu0 %v1900
    %v1964 = vpop.f32.mrf.mxu0
    %v1965 = vadd.f32 %v1901, %v1964
    %v1966 = vpop.f32.mrf.mxu0
    %v1967 = vadd.f32 %v1901, %v1966
    %1968 = vdwg.mxu0
    %v1969 = vpack.c.bf16 %v1764, %v1763
    %v1970 = vpack.c.bf16 %v1766, %v1765
    %v1971 = vperm.slane %v1768, 2
    %v1988 = vunpack.c.l.b16 %v1803
    %v1989 = vunpack.c.l.b16 %v1804
    %v1990 = vunpack.c.l.b16 %v1805
    %v1991 = vunpack.c.l.b16 %v1806
    %v1992 = vunpack.c.l.b16 %v1807
    %v1993 = vunpack.c.l.b16 %v1808
    %v1994 = vunpack.c.l.b16 %v1809
    %v1995 = vunpack.c.l.b16 %v1810
    %v1996 = vunpack.c.l.b16 %v1811
    %v1997 = vunpack.c.l.b16 %v1812
    %v1998 = vunpack.c.l.b16 %v1813
    %v1999 = vunpack.c.l.b16 %v1814
    %v2000 = vunpack.c.l.b16 %v1815
    %v2001 = vunpack.c.l.b16 %v1816
    %v2002 = vunpack.c.l.b16 %v1817
    %v2003 = vunpack.c.l.b16 %v1818
    %v2004 = vpack.c.b16 %v1989, %v1988
    %v2005 = vpack.c.b16 %v1991, %v1990
    %v2006 = vpack.c.b16 %v1993, %v1992
    %v2007 = vpack.c.b16 %v1995, %v1994
    %v2008 = vpack.c.b16 %v1997, %v1996
    %v2009 = vpack.c.b16 %v1999, %v1998
    %v2010 = vpack.c.b16 %v2001, %v2000
    %v2011 = vpack.c.b16 %v2003, %v2002
    %2020 = vmatpush.bf16.msra.mxu0 %v2011
    %2021 = vmatpush.bf16.msra.mxu0 %v2010
    %2022 = vmatpush.bf16.msra.mxu0 %v2009
    %2023 = vmatpush.bf16.msra.mxu0 %v2008
    %2024 = vmatpush.bf16.msra.mxu0 %v2007
    %2025 = vmatpush.bf16.msra.mxu0 %v2006
    %2026 = vmatpush.bf16.msra.mxu0 %v2005
    %2027 = vmatpush.bf16.msra.mxu0 %v2004
    %2028 = vmatmul.bf16.gmra.mxu0 %v1969
    %v2029 = vpop.f32.mrf.mxu0
    %v2030 = vadd.f32 %v1971, %v2029
    %v2031 = vpop.f32.mrf.mxu0
    %v2032 = vadd.f32 %v1971, %v2031
    %2033 = vmatmul.bf16.gmra.mxu0 %v1970
    %v2034 = vpop.f32.mrf.mxu0
    %v2035 = vadd.f32 %v1971, %v2034
    %v2036 = vpop.f32.mrf.mxu0
    %v2037 = vadd.f32 %v1971, %v2036
    %2038 = vdwg.mxu0
    %v2040 = vrot.slane %v1896, 1
    %v2041 = vrot.slane %v1896, 2
    %v2042 = vrot.slane %v1896, 3
    %v2043 = vrot.slane %v1896, 4
    %v2044 = vrot.slane %v1896, 5
    %v2045 = vrot.slane %v1896, 6
    %v2046 = vrot.slane %v1896, 7
    %v2047 = vperm.slane %v1896, 0
    %v2048 = vperm.slane %v2040, 0
    %v2049 = vperm.slane %v2041, 0
    %v2050 = vperm.slane %v2042, 0
    %v2051 = vperm.slane %v2043, 0
    %v2052 = vperm.slane %v2044, 0
    %v2053 = vperm.slane %v2045, 0
    %v2054 = vperm.slane %v2046, 0
    %v2063 = vmul.f32 %v2047, %v1767
    %v2064 = vmul.f32 %v2048, %v1767
    %v2065 = vmul.f32 %v2049, %v1767
    %v2066 = vmul.f32 %v2050, %v1767
    %v2067 = vmul.f32 %v2051, %v1767
    %v2068 = vmul.f32 %v2052, %v1767
    %v2069 = vmul.f32 %v2053, %v1767
    %v2070 = vmul.f32 %v2054, %v1767
    %v2071 = vpack.c.bf16 %v2064, %v2063
    %v2072 = vpack.c.bf16 %v2066, %v2065
    %v2073 = vpack.c.bf16 %v2068, %v2067
    %v2074 = vpack.c.bf16 %v2070, %v2069
    %v2075 = vpack.c.bf16 %v1962, %v1960
    %v2076 = vpack.c.bf16 %v1967, %v1965
    %2077 = vmatpush.bf16.xpose.msra.mxu0 0
    %2078 = vmatpush.bf16.xpose.msra.mxu0 0
    %2079 = vmatpush.bf16.xpose.msra.mxu0 0
    %2080 = vmatpush.bf16.xpose.msra.mxu0 0
    %2081 = vmatpush.bf16.xpose.msra.mxu0 0
    %2082 = vmatpush.bf16.xpose.msra.mxu0 0
    %2083 = vmatpush.bf16.xpose.msra.mxu0 %v2076
    %2084 = vmatpush.bf16.xpose.msra.mxu0 %v2075
    %2085 = vmatmul.bf16.gmra.mxu0 %v2071
    %v2086 = vpop.f32.mrf.mxu0
    %v2087 = vadd.f32 0.0, %v2086
    %v2088 = vpop.f32.mrf.mxu0
    %v2089 = vadd.f32 0.0, %v2088
    %2090 = vmatmul.bf16.gmra.mxu0 %v2072
    %v2091 = vpop.f32.mrf.mxu0
    %v2092 = vadd.f32 0.0, %v2091
    %v2093 = vpop.f32.mrf.mxu0
    %v2094 = vadd.f32 0.0, %v2093
    %2095 = vmatmul.bf16.gmra.mxu0 %v2073
    %v2096 = vpop.f32.mrf.mxu0
    %v2097 = vadd.f32 0.0, %v2096
    %v2098 = vpop.f32.mrf.mxu0
    %v2099 = vadd.f32 0.0, %v2098
    %2100 = vmatmul.bf16.gmra.mxu0 %v2074
    %v2101 = vpop.f32.mrf.mxu0
    %v2102 = vadd.f32 0.0, %v2101
    %v2103 = vpop.f32.mrf.mxu0
    %v2104 = vadd.f32 0.0, %v2103
    %2105 = vdwg.mxu0
    %v2106 = vmul.f32 %v2087, 0.25
    %v2107 = vmul.f32 %v2089, 0.25
    %v2108 = vmul.f32 %v2092, 0.25
    %v2109 = vmul.f32 %v2094, 0.25
    %v2110 = vmul.f32 %v2097, 0.25
    %v2111 = vmul.f32 %v2099, 0.25
    %v2112 = vmul.f32 %v2102, 0.25
    %v2113 = vmul.f32 %v2104, 0.25
    %v2114 = vsel %vm598, %v2106, -inf
    %2115 = vmax.xlane.f32.xlu0 %v2114
    %v2116 = vpop.xlane.xlu0 %2115
    %v2117 = vsel %vm598, %v2107, -inf
    %2118 = vmax.xlane.f32.xlu0 %v2117
    %v2119 = vpop.xlane.xlu0 %2118
    %v2120 = vsel %vm598, %v2108, -inf
    %2121 = vmax.xlane.f32.xlu0 %v2120
    %v2122 = vpop.xlane.xlu0 %2121
    %v2123 = vsel %vm598, %v2109, -inf
    %2124 = vmax.xlane.f32.xlu0 %v2123
    %v2125 = vpop.xlane.xlu0 %2124
    %v2126 = vsel %vm598, %v2110, -inf
    %2127 = vmax.xlane.f32.xlu0 %v2126
    %v2128 = vpop.xlane.xlu0 %2127
    %v2129 = vsel %vm598, %v2111, -inf
    %2130 = vmax.xlane.f32.xlu0 %v2129
    %v2131 = vpop.xlane.xlu0 %2130
    %v2132 = vsel %vm598, %v2112, -inf
    %2133 = vmax.xlane.f32.xlu0 %v2132
    %v2134 = vpop.xlane.xlu0 %2133
    %v2135 = vsel %vm598, %v2113, -inf
    %2136 = vmax.xlane.f32.xlu0 %v2135
    %v2137 = vpop.xlane.xlu0 %2136
    %v2138 = vsub.f32 %v2106, %v2116
    %v2139 = vsub.f32 %v2107, %v2119
    %v2140 = vsub.f32 %v2108, %v2122
    %v2141 = vsub.f32 %v2109, %v2125
    %v2142 = vsub.f32 %v2110, %v2128
    %v2143 = vsub.f32 %v2111, %v2131
    %v2144 = vsub.f32 %v2112, %v2134
    %v2145 = vsub.f32 %v2113, %v2137
    %v2146 = vmul.f32 %v2138, 1.442695
    %v2147 = vpow.pop %v2146
    %v2148 = vmul.f32 %v2139, 1.442695
    %v2149 = vpow.pop %v2148
    %v2150 = vmul.f32 %v2140, 1.442695
    %v2151 = vpow.pop %v2150
    %v2152 = vmul.f32 %v2141, 1.442695
    %v2153 = vpow.pop %v2152
    %v2154 = vmul.f32 %v2142, 1.442695
    %v2155 = vpow.pop %v2154
    %v2156 = vmul.f32 %v2143, 1.442695
    %v2157 = vpow.pop %v2156
    %v2158 = vmul.f32 %v2144, 1.442695
    %v2159 = vpow.pop %v2158
    %v2160 = vmul.f32 %v2145, 1.442695
    %v2161 = vpow.pop %v2160
    %v2162 = vsel %vm598, %v2147, 0.0
    %2163 = vadd.xlane.f32.xlu0 %v2162
    %v2164 = vpop.xlane.xlu0 %2163
    %v2165 = vsel %vm598, %v2149, 0.0
    %2166 = vadd.xlane.f32.xlu0 %v2165
    %v2167 = vpop.xlane.xlu0 %2166
    %v2168 = vsel %vm598, %v2151, 0.0
    %2169 = vadd.xlane.f32.xlu0 %v2168
    %v2170 = vpop.xlane.xlu0 %2169
    %v2171 = vsel %vm598, %v2153, 0.0
    %2172 = vadd.xlane.f32.xlu0 %v2171
    %v2173 = vpop.xlane.xlu0 %2172
    %v2174 = vsel %vm598, %v2155, 0.0
    %2175 = vadd.xlane.f32.xlu0 %v2174
    %v2176 = vpop.xlane.xlu0 %2175
    %v2177 = vsel %vm598, %v2157, 0.0
    %2178 = vadd.xlane.f32.xlu0 %v2177
    %v2179 = vpop.xlane.xlu0 %2178
    %v2180 = vsel %vm598, %v2159, 0.0
    %2181 = vadd.xlane.f32.xlu0 %v2180
    %v2182 = vpop.xlane.xlu0 %2181
    %v2183 = vsel %vm598, %v2161, 0.0
    %2184 = vadd.xlane.f32.xlu0 %v2183
    %v2185 = vpop.xlane.xlu0 %2184
    %v2186 = vrcp.pop %v2164
    %v2187 = vrcp.pop %v2167
    %v2188 = vrcp.pop %v2170
    %v2189 = vrcp.pop %v2173
    %v2190 = vrcp.pop %v2176
    %v2191 = vrcp.pop %v2179
    %v2192 = vrcp.pop %v2182
    %v2193 = vrcp.pop %v2185
    %v2194 = vmul.f32 %v2147, %v2186
    %v2195 = vmul.f32 %v2149, %v2187
    %v2196 = vmul.f32 %v2151, %v2188
    %v2197 = vmul.f32 %v2153, %v2189
    %v2198 = vmul.f32 %v2155, %v2190
    %v2199 = vmul.f32 %v2157, %v2191
    %v2200 = vmul.f32 %v2159, %v2192
    %v2201 = vmul.f32 %v2161, %v2193
    %v2202 = vpack.c.bf16 %v2195, %v2194
    %v2203 = vpack.c.bf16 %v2197, %v2196
    %v2204 = vpack.c.bf16 %v2199, %v2198
    %v2205 = vpack.c.bf16 %v2201, %v2200
    %v2206 = vpack.c.bf16 %v2032, %v2030
    %v2207 = vpack.c.bf16 %v2037, %v2035
    %v2209 = vsel %vm598, %v2202, 0
    %v2212 = vsel %vm598, %v2203, 0
    %v2215 = vsel %vm598, %v2204, 0
    %v2218 = vsel %vm598, %v2205, 0
    %2220 = vmatpush.bf16.msra.mxu0 0
    %2221 = vmatpush.bf16.msra.mxu0 0
    %2222 = vmatpush.bf16.msra.mxu0 0
    %2223 = vmatpush.bf16.msra.mxu0 0
    %2224 = vmatpush.bf16.msra.mxu0 0
    %2225 = vmatpush.bf16.msra.mxu0 0
    %2226 = vmatpush.bf16.msra.mxu0 %v2207
    %2227 = vmatpush.bf16.msra.mxu0 %v2206
    %2228 = vmatmul.bf16.gmra.mxu0 %v2209
    %v2229 = vpop.f32.mrf.mxu0
    %v2230 = vadd.f32 0.0, %v2229
    %v2231 = vpop.f32.mrf.mxu0
    %v2232 = vadd.f32 0.0, %v2231
    %2233 = vmatmul.bf16.gmra.mxu0 %v2212
    %v2234 = vpop.f32.mrf.mxu0
    %v2235 = vadd.f32 0.0, %v2234
    %v2236 = vpop.f32.mrf.mxu0
    %v2237 = vadd.f32 0.0, %v2236
    %2238 = vmatmul.bf16.gmra.mxu0 %v2215
    %v2239 = vpop.f32.mrf.mxu0
    %v2240 = vadd.f32 0.0, %v2239
    %v2241 = vpop.f32.mrf.mxu0
    %v2242 = vadd.f32 0.0, %v2241
    %2243 = vmatmul.bf16.gmra.mxu0 %v2218
    %v2244 = vpop.f32.mrf.mxu0
    %v2245 = vadd.f32 0.0, %v2244
    %v2246 = vpop.f32.mrf.mxu0
    %v2247 = vadd.f32 0.0, %v2246
    %2248 = vdwg.mxu0
    %v2249 = vmul.f32 %v2230, %v1767
    %v2250 = vmul.f32 %v2232, %v1767
    %v2251 = vmul.f32 %v2235, %v1767
    %v2252 = vmul.f32 %v2237, %v1767
    %v2253 = vmul.f32 %v2240, %v1767
    %v2254 = vmul.f32 %v2242, %v1767
    %v2255 = vmul.f32 %v2245, %v1767
    %v2256 = vmul.f32 %v2247, %v1767
    %v2257 = vrot.slane %v2249, 4
    %v2258 = vadd.f32 %v2249, %v2257
    %v2259 = vrot.slane %v2258, 2
    %v2260 = vadd.f32 %v2258, %v2259
    %v2261 = vrot.slane %v2260, 1
    %v2262 = vadd.f32 %v2260, %v2261
    %v2263 = vrot.slane %v2250, 4
    %v2264 = vadd.f32 %v2250, %v2263
    %v2265 = vrot.slane %v2264, 2
    %v2266 = vadd.f32 %v2264, %v2265
    %v2267 = vrot.slane %v2266, 1
    %v2268 = vadd.f32 %v2266, %v2267
    %v2269 = vrot.slane %v2251, 4
    %v2270 = vadd.f32 %v2251, %v2269
    %v2271 = vrot.slane %v2270, 2
    %v2272 = vadd.f32 %v2270, %v2271
    %v2273 = vrot.slane %v2272, 1
    %v2274 = vadd.f32 %v2272, %v2273
    %v2275 = vrot.slane %v2252, 4
    %v2276 = vadd.f32 %v2252, %v2275
    %v2277 = vrot.slane %v2276, 2
    %v2278 = vadd.f32 %v2276, %v2277
    %v2279 = vrot.slane %v2278, 1
    %v2280 = vadd.f32 %v2278, %v2279
    %v2281 = vrot.slane %v2253, 4
    %v2282 = vadd.f32 %v2253, %v2281
    %v2283 = vrot.slane %v2282, 2
    %v2284 = vadd.f32 %v2282, %v2283
    %v2285 = vrot.slane %v2284, 1
    %v2286 = vadd.f32 %v2284, %v2285
    %v2287 = vrot.slane %v2254, 4
    %v2288 = vadd.f32 %v2254, %v2287
    %v2289 = vrot.slane %v2288, 2
    %v2290 = vadd.f32 %v2288, %v2289
    %v2291 = vrot.slane %v2290, 1
    %v2292 = vadd.f32 %v2290, %v2291
    %v2293 = vrot.slane %v2255, 4
    %v2294 = vadd.f32 %v2255, %v2293
    %v2295 = vrot.slane %v2294, 2
    %v2296 = vadd.f32 %v2294, %v2295
    %v2297 = vrot.slane %v2296, 1
    %v2298 = vadd.f32 %v2296, %v2297
    %v2299 = vrot.slane %v2256, 4
    %v2300 = vadd.f32 %v2256, %v2299
    %v2301 = vrot.slane %v2300, 2
    %v2302 = vadd.f32 %v2300, %v2301
    %v2303 = vrot.slane %v2302, 1
    %v2304 = vadd.f32 %v2302, %v2303
    %v2305 = vpack.c.bf16 %v2262, %v2262
    %v2306 = vpack.c.bf16 %v2268, %v2268
    %v2307 = vpack.c.bf16 %v2274, %v2274
    %v2308 = vpack.c.bf16 %v2280, %v2280
    %v2309 = vpack.c.bf16 %v2286, %v2286
    %v2310 = vpack.c.bf16 %v2292, %v2292
    %v2311 = vpack.c.bf16 %v2298, %v2298
    %v2312 = vpack.c.bf16 %v2304, %v2304
    %v2313 = vperm.slane %v1768, 3
    %v2322 = vunpack.c.l.b16 %v2305
    %v2323 = vunpack.c.l.b16 %v2306
    %v2324 = vunpack.c.l.b16 %v2307
    %v2325 = vunpack.c.l.b16 %v2308
    %v2326 = vunpack.c.l.b16 %v2309
    %v2327 = vunpack.c.l.b16 %v2310
    %v2328 = vunpack.c.l.b16 %v2311
    %v2329 = vunpack.c.l.b16 %v2312
    %vm2330 = vcmask 1041409
    %v2331 = vsel %vm2330, %v2323, %v2322
    %vm2332 = vcmask 1042434
    %v2333 = vsel %vm2332, %v2324, %v2331
    %vm2334 = vcmask 1043459
    %v2335 = vsel %vm2334, %v2325, %v2333
    %vm2336 = vcmask 1044484
    %v2337 = vsel %vm2336, %v2326, %v2335
    %vm2338 = vcmask 1045509
    %v2339 = vsel %vm2338, %v2327, %v2337
    %vm2340 = vcmask 1046534
    %v2341 = vsel %vm2340, %v2328, %v2339
    %vm2342 = vcmask 1047559
    %v2343 = vsel %vm2342, %v2329, %v2341
    %v2344 = vpack.c.b16 %v2343, %v2343
    %v2362 = vunpack.c.l.b16 %v1820
    %v2363 = vunpack.c.l.b16 %v1821
    %v2364 = vunpack.c.l.b16 %v1822
    %v2365 = vunpack.c.l.b16 %v1823
    %v2366 = vunpack.c.l.b16 %v1824
    %v2367 = vunpack.c.l.b16 %v1825
    %v2368 = vunpack.c.l.b16 %v1826
    %v2369 = vunpack.c.l.b16 %v1827
    %v2370 = vunpack.c.l.b16 %v1828
    %v2371 = vunpack.c.l.b16 %v1829
    %v2372 = vunpack.c.l.b16 %v1830
    %v2373 = vunpack.c.l.b16 %v1831
    %v2374 = vunpack.c.l.b16 %v1832
    %v2375 = vunpack.c.l.b16 %v1833
    %v2376 = vunpack.c.l.b16 %v1834
    %v2377 = vunpack.c.l.b16 %v1835
    %v2378 = vpack.c.b16 %v2363, %v2362
    %v2379 = vpack.c.b16 %v2365, %v2364
    %v2380 = vpack.c.b16 %v2367, %v2366
    %v2381 = vpack.c.b16 %v2369, %v2368
    %v2382 = vpack.c.b16 %v2371, %v2370
    %v2383 = vpack.c.b16 %v2373, %v2372
    %v2384 = vpack.c.b16 %v2375, %v2374
    %v2385 = vpack.c.b16 %v2377, %v2376
    %2394 = vmatpush.bf16.msra.mxu0 %v2385
    %2395 = vmatpush.bf16.msra.mxu0 %v2384
    %2396 = vmatpush.bf16.msra.mxu0 %v2383
    %2397 = vmatpush.bf16.msra.mxu0 %v2382
    %2398 = vmatpush.bf16.msra.mxu0 %v2381
    %2399 = vmatpush.bf16.msra.mxu0 %v2380
    %2400 = vmatpush.bf16.msra.mxu0 %v2379
    %2401 = vmatpush.bf16.msra.mxu0 %v2378
    %2402 = vmatmul.bf16.gmra.mxu0 %v2344
    %v2403 = vpop.f32.mrf.mxu0
    %v2404 = vadd.f32 %v2313, %v2403
    %v2405 = vpop.f32.mrf.mxu0
    %2406 = vdwg.mxu0
    %v2407 = vadd.f32 %v752, %v2404
    %2408 = vadd.xlane.f32.xlu0 %v2407
    %v2409 = vpop.xlane.xlu0 %2408
    %v2410 = vmul.f32 %v2409, %v625
    %v2411 = vsub.f32 %v2407, %v2410
    %v2412 = vmul.f32 %v2411, %v2411
    %2413 = vadd.xlane.f32.xlu0 %v2412
    %v2414 = vpop.xlane.xlu0 %2413
    %v2415 = vmul.f32 %v2414, %v625
    %v2416 = vadd.f32 %v2415, 1e-05
    %v2417 = vrsqrt.pop %v2416
    %v2418 = vmul.f32 %v2417, %v2416
    %v2419 = vmul.f32 %v2418, %v2417
    %v2420 = vmul.f32 0.5, %v2419
    %v2421 = vsub.f32 1.5, %v2420
    %v2422 = vmul.f32 %v2417, %v2421
    %vm2423 = vweird.f32 %v2416
    %vm2424 = vweird.f32 %v2417
    %vm2425 = vmor %vm2423, %vm2424
    %v2426 = vsel %vm2425, %v2417, %v2422
    %v2427 = vmul.f32 %v2411, %v2426
    %v2428 = vperm.slane %v1768, 4
    %v2429 = vmul.f32 %v2427, %v2428
    %v2430 = vperm.slane %v1768, 5
    %v2431 = vadd.f32 %v2429, %v2430
    %v2432 = vld [vmem:[%s20] sm:$0x7]
    %v2433 = vld [vmem:[#allocation28] sm:$0xff]
    %v2434 = vld [vmem:[#allocation28 + $0x8] sm:$0xff]
    %v2435 = vld [vmem:[#allocation28 + $0x10] sm:$0xff]
    %v2436 = vld [vmem:[#allocation28 + $0x18] sm:$0xff]
    %v2437 = vld [vmem:[#allocation28 + $0x20] sm:$0xff]
    %v2438 = vld [vmem:[#allocation28 + $0x28] sm:$0xff]
    %v2439 = vld [vmem:[#allocation28 + $0x30] sm:$0xff]
    %v2440 = vld [vmem:[#allocation28 + $0x38] sm:$0xff]
    %v2441 = vld [vmem:[#allocation28 + $0x40] sm:$0xff]
    %v2442 = vld [vmem:[#allocation28 + $0x48] sm:$0xff]
    %v2443 = vld [vmem:[#allocation28 + $0x50] sm:$0xff]
    %v2444 = vld [vmem:[#allocation28 + $0x58] sm:$0xff]
    %v2445 = vld [vmem:[#allocation28 + $0x60] sm:$0xff]
    %v2446 = vld [vmem:[#allocation28 + $0x68] sm:$0xff]
    %v2447 = vld [vmem:[#allocation28 + $0x70] sm:$0xff]
    %v2448 = vld [vmem:[#allocation28 + $0x78] sm:$0xff]
    %v2449 = vld [vmem:[#allocation28 + $0x80] sm:$0xff]
    %v2450 = vld [vmem:[#allocation28 + $0x88] sm:$0xff]
    %v2451 = vld [vmem:[#allocation28 + $0x90] sm:$0xff]
    %v2452 = vld [vmem:[#allocation28 + $0x98] sm:$0xff]
    %v2453 = vld [vmem:[#allocation28 + $0xa0] sm:$0xff]
    %v2454 = vld [vmem:[#allocation28 + $0xa8] sm:$0xff]
    %v2455 = vld [vmem:[#allocation28 + $0xb0] sm:$0xff]
    %v2456 = vld [vmem:[#allocation28 + $0xb8] sm:$0xff]
    %v2457 = vld [vmem:[#allocation28 + $0xc0] sm:$0xff]
    %v2458 = vld [vmem:[#allocation28 + $0xc8] sm:$0xff]
    %v2459 = vld [vmem:[#allocation28 + $0xd0] sm:$0xff]
    %v2460 = vld [vmem:[#allocation28 + $0xd8] sm:$0xff]
    %v2461 = vld [vmem:[#allocation28 + $0xe0] sm:$0xff]
    %v2462 = vld [vmem:[#allocation28 + $0xe8] sm:$0xff]
    %v2463 = vld [vmem:[#allocation28 + $0xf0] sm:$0xff]
    %v2464 = vld [vmem:[#allocation28 + $0xf8] sm:$0xff]
    %v2465 = vpack.c.bf16 %v2431, %v2431
    %v2466 = vld [vmem:[#allocation29] sm:$0xf]
    %v2468 = vperm.slane %v2466, 0
    %v2469 = vperm.slane %v2466, 1
    %v2470 = vperm.slane %v2466, 2
    %v2471 = vperm.slane %v2466, 3
    %v2508 = vunpack.c.l.b16 %v2433
    %v2509 = vunpack.c.h.b16 %v2433
    %v2510 = vunpack.c.l.b16 %v2434
    %v2511 = vunpack.c.h.b16 %v2434
    %v2512 = vunpack.c.l.b16 %v2435
    %v2513 = vunpack.c.h.b16 %v2435
    %v2514 = vunpack.c.l.b16 %v2436
    %v2515 = vunpack.c.h.b16 %v2436
    %v2516 = vunpack.c.l.b16 %v2437
    %v2517 = vunpack.c.h.b16 %v2437
    %v2518 = vunpack.c.l.b16 %v2438
    %v2519 = vunpack.c.h.b16 %v2438
    %v2520 = vunpack.c.l.b16 %v2439
    %v2521 = vunpack.c.h.b16 %v2439
    %v2522 = vunpack.c.l.b16 %v2440
    %v2523 = vunpack.c.h.b16 %v2440
    %v2524 = vunpack.c.l.b16 %v2441
    %v2525 = vunpack.c.h.b16 %v2441
    %v2526 = vunpack.c.l.b16 %v2442
    %v2527 = vunpack.c.h.b16 %v2442
    %v2528 = vunpack.c.l.b16 %v2443
    %v2529 = vunpack.c.h.b16 %v2443
    %v2530 = vunpack.c.l.b16 %v2444
    %v2531 = vunpack.c.h.b16 %v2444
    %v2532 = vunpack.c.l.b16 %v2445
    %v2533 = vunpack.c.h.b16 %v2445
    %v2534 = vunpack.c.l.b16 %v2446
    %v2535 = vunpack.c.h.b16 %v2446
    %v2536 = vunpack.c.l.b16 %v2447
    %v2537 = vunpack.c.h.b16 %v2447
    %v2538 = vunpack.c.l.b16 %v2448
    %v2539 = vunpack.c.h.b16 %v2448
    %v2540 = vunpack.c.l.b16 %v2449
    %v2541 = vunpack.c.h.b16 %v2449
    %v2542 = vunpack.c.l.b16 %v2450
    %v2543 = vunpack.c.h.b16 %v2450
    %v2544 = vunpack.c.l.b16 %v2451
    %v2545 = vunpack.c.h.b16 %v2451
    %v2546 = vunpack.c.l.b16 %v2452
    %v2547 = vunpack.c.h.b16 %v2452
    %v2548 = vunpack.c.l.b16 %v2453
    %v2549 = vunpack.c.h.b16 %v2453
    %v2550 = vunpack.c.l.b16 %v2454
    %v2551 = vunpack.c.h.b16 %v2454
    %v2552 = vunpack.c.l.b16 %v2455
    %v2553 = vunpack.c.h.b16 %v2455
    %v2554 = vunpack.c.l.b16 %v2456
    %v2555 = vunpack.c.h.b16 %v2456
    %v2556 = vunpack.c.l.b16 %v2457
    %v2557 = vunpack.c.h.b16 %v2457
    %v2558 = vunpack.c.l.b16 %v2458
    %v2559 = vunpack.c.h.b16 %v2458
    %v2560 = vunpack.c.l.b16 %v2459
    %v2561 = vunpack.c.h.b16 %v2459
    %v2562 = vunpack.c.l.b16 %v2460
    %v2563 = vunpack.c.h.b16 %v2460
    %v2564 = vunpack.c.l.b16 %v2461
    %v2565 = vunpack.c.h.b16 %v2461
    %v2566 = vunpack.c.l.b16 %v2462
    %v2567 = vunpack.c.h.b16 %v2462
    %v2568 = vunpack.c.l.b16 %v2463
    %v2569 = vunpack.c.h.b16 %v2463
    %v2570 = vunpack.c.l.b16 %v2464
    %v2571 = vunpack.c.h.b16 %v2464
    %v2572 = vpack.c.b16 %v2512, %v2508
    %v2573 = vpack.c.b16 %v2513, %v2509
    %v2574 = vpack.c.b16 %v2514, %v2510
    %v2575 = vpack.c.b16 %v2515, %v2511
    %v2576 = vpack.c.b16 %v2520, %v2516
    %v2577 = vpack.c.b16 %v2521, %v2517
    %v2578 = vpack.c.b16 %v2522, %v2518
    %v2579 = vpack.c.b16 %v2523, %v2519
    %v2580 = vpack.c.b16 %v2528, %v2524
    %v2581 = vpack.c.b16 %v2529, %v2525
    %v2582 = vpack.c.b16 %v2530, %v2526
    %v2583 = vpack.c.b16 %v2531, %v2527
    %v2584 = vpack.c.b16 %v2536, %v2532
    %v2585 = vpack.c.b16 %v2537, %v2533
    %v2586 = vpack.c.b16 %v2538, %v2534
    %v2587 = vpack.c.b16 %v2539, %v2535
    %v2588 = vpack.c.b16 %v2544, %v2540
    %v2589 = vpack.c.b16 %v2545, %v2541
    %v2590 = vpack.c.b16 %v2546, %v2542
    %v2591 = vpack.c.b16 %v2547, %v2543
    %v2592 = vpack.c.b16 %v2552, %v2548
    %v2593 = vpack.c.b16 %v2553, %v2549
    %v2594 = vpack.c.b16 %v2554, %v2550
    %v2595 = vpack.c.b16 %v2555, %v2551
    %v2596 = vpack.c.b16 %v2560, %v2556
    %v2597 = vpack.c.b16 %v2561, %v2557
    %v2598 = vpack.c.b16 %v2562, %v2558
    %v2599 = vpack.c.b16 %v2563, %v2559
    %v2600 = vpack.c.b16 %v2568, %v2564
    %v2601 = vpack.c.b16 %v2569, %v2565
    %v2602 = vpack.c.b16 %v2570, %v2566
    %v2603 = vpack.c.b16 %v2571, %v2567
    %2636 = vmatpush.bf16.msra.mxu0 %v2600
    %2637 = vmatpush.bf16.msra.mxu0 %v2596
    %2638 = vmatpush.bf16.msra.mxu0 %v2592
    %2639 = vmatpush.bf16.msra.mxu0 %v2588
    %2640 = vmatpush.bf16.msra.mxu0 %v2584
    %2641 = vmatpush.bf16.msra.mxu0 %v2580
    %2642 = vmatpush.bf16.msra.mxu0 %v2576
    %2643 = vmatpush.bf16.msra.mxu0 %v2572
    %2644 = vmatmul.bf16.gmra.mxu0 %v2465
    %v2645 = vpop.f32.mrf.mxu0
    %v2646 = vadd.f32 %v2468, %v2645
    %v2647 = vpop.f32.mrf.mxu0
    %2648 = vdwg.mxu0
    %2649 = vmatpush.bf16.msra.mxu0 %v2601
    %2650 = vmatpush.bf16.msra.mxu0 %v2597
    %2651 = vmatpush.bf16.msra.mxu0 %v2593
    %2652 = vmatpush.bf16.msra.mxu0 %v2589
    %2653 = vmatpush.bf16.msra.mxu0 %v2585
    %2654 = vmatpush.bf16.msra.mxu0 %v2581
    %2655 = vmatpush.bf16.msra.mxu0 %v2577
    %2656 = vmatpush.bf16.msra.mxu0 %v2573
    %2657 = vmatmul.bf16.gmra.mxu0 %v2465
    %v2658 = vpop.f32.mrf.mxu0
    %v2659 = vadd.f32 %v2469, %v2658
    %v2660 = vpop.f32.mrf.mxu0
    %2661 = vdwg.mxu0
    %2662 = vmatpush.bf16.msra.mxu0 %v2602
    %2663 = vmatpush.bf16.msra.mxu0 %v2598
    %2664 = vmatpush.bf16.msra.mxu0 %v2594
    %2665 = vmatpush.bf16.msra.mxu0 %v2590
    %2666 = vmatpush.bf16.msra.mxu0 %v2586
    %2667 = vmatpush.bf16.msra.mxu0 %v2582
    %2668 = vmatpush.bf16.msra.mxu0 %v2578
    %2669 = vmatpush.bf16.msra.mxu0 %v2574
    %2670 = vmatmul.bf16.gmra.mxu0 %v2465
    %v2671 = vpop.f32.mrf.mxu0
    %v2672 = vadd.f32 %v2470, %v2671
    %v2673 = vpop.f32.mrf.mxu0
    %2674 = vdwg.mxu0
    %2675 = vmatpush.bf16.msra.mxu0 %v2603
    %2676 = vmatpush.bf16.msra.mxu0 %v2599
    %2677 = vmatpush.bf16.msra.mxu0 %v2595
    %2678 = vmatpush.bf16.msra.mxu0 %v2591
    %2679 = vmatpush.bf16.msra.mxu0 %v2587
    %2680 = vmatpush.bf16.msra.mxu0 %v2583
    %2681 = vmatpush.bf16.msra.mxu0 %v2579
    %2682 = vmatpush.bf16.msra.mxu0 %v2575
    %2683 = vmatmul.bf16.gmra.mxu0 %v2465
    %v2684 = vpop.f32.mrf.mxu0
    %v2685 = vadd.f32 %v2471, %v2684
    %v2686 = vpop.f32.mrf.mxu0
    %2687 = vdwg.mxu0
    %v2688 = vmax.f32 %v2646, 0.0
    %v2689 = vmax.f32 %v2659, 0.0
    %v2690 = vmax.f32 %v2672, 0.0
    %v2691 = vmax.f32 %v2685, 0.0
    %v2692 = vld [vmem:[#allocation31] sm:$0xf]
    %v2693 = vld [vmem:[#allocation31 + $0x4] sm:$0xf]
    %v2694 = vld [vmem:[#allocation31 + $0x8] sm:$0xf]
    %v2695 = vld [vmem:[#allocation31 + $0xc] sm:$0xf]
    %v2696 = vld [vmem:[#allocation31 + $0x10] sm:$0xf]
    %v2697 = vld [vmem:[#allocation31 + $0x14] sm:$0xf]
    %v2698 = vld [vmem:[#allocation31 + $0x18] sm:$0xf]
    %v2699 = vld [vmem:[#allocation31 + $0x1c] sm:$0xf]
    %v2700 = vld [vmem:[#allocation31 + $0x20] sm:$0xf]
    %v2701 = vld [vmem:[#allocation31 + $0x24] sm:$0xf]
    %v2702 = vld [vmem:[#allocation31 + $0x28] sm:$0xf]
    %v2703 = vld [vmem:[#allocation31 + $0x2c] sm:$0xf]
    %v2704 = vld [vmem:[#allocation31 + $0x30] sm:$0xf]
    %v2705 = vld [vmem:[#allocation31 + $0x34] sm:$0xf]
    %v2706 = vld [vmem:[#allocation31 + $0x38] sm:$0xf]
    %v2707 = vld [vmem:[#allocation31 + $0x3c] sm:$0xf]
    %v2708 = vld [vmem:[#allocation31 + $0x40] sm:$0xf]
    %v2709 = vld [vmem:[#allocation31 + $0x44] sm:$0xf]
    %v2710 = vld [vmem:[#allocation31 + $0x48] sm:$0xf]
    %v2711 = vld [vmem:[#allocation31 + $0x4c] sm:$0xf]
    %v2712 = vld [vmem:[#allocation31 + $0x50] sm:$0xf]
    %v2713 = vld [vmem:[#allocation31 + $0x54] sm:$0xf]
    %v2714 = vld [vmem:[#allocation31 + $0x58] sm:$0xf]
    %v2715 = vld [vmem:[#allocation31 + $0x5c] sm:$0xf]
    %v2716 = vld [vmem:[#allocation31 + $0x60] sm:$0xf]
    %v2717 = vld [vmem:[#allocation31 + $0x64] sm:$0xf]
    %v2718 = vld [vmem:[#allocation31 + $0x68] sm:$0xf]
    %v2719 = vld [vmem:[#allocation31 + $0x6c] sm:$0xf]
    %v2720 = vld [vmem:[#allocation31 + $0x70] sm:$0xf]
    %v2721 = vld [vmem:[#allocation31 + $0x74] sm:$0xf]
    %v2722 = vld [vmem:[#allocation31 + $0x78] sm:$0xf]
    %v2723 = vld [vmem:[#allocation31 + $0x7c] sm:$0xf]
    %v2724 = vld [vmem:[#allocation31 + $0x80] sm:$0xf]
    %v2725 = vld [vmem:[#allocation31 + $0x84] sm:$0xf]
    %v2726 = vld [vmem:[#allocation31 + $0x88] sm:$0xf]
    %v2727 = vld [vmem:[#allocation31 + $0x8c] sm:$0xf]
    %v2728 = vld [vmem:[#allocation31 + $0x90] sm:$0xf]
    %v2729 = vld [vmem:[#allocation31 + $0x94] sm:$0xf]
    %v2730 = vld [vmem:[#allocation31 + $0x98] sm:$0xf]
    %v2731 = vld [vmem:[#allocation31 + $0x9c] sm:$0xf]
    %v2732 = vld [vmem:[#allocation31 + $0xa0] sm:$0xf]
    %v2733 = vld [vmem:[#allocation31 + $0xa4] sm:$0xf]
    %v2734 = vld [vmem:[#allocation31 + $0xa8] sm:$0xf]
    %v2735 = vld [vmem:[#allocation31 + $0xac] sm:$0xf]
    %v2736 = vld [vmem:[#allocation31 + $0xb0] sm:$0xf]
    %v2737 = vld [vmem:[#allocation31 + $0xb4] sm:$0xf]
    %v2738 = vld [vmem:[#allocation31 + $0xb8] sm:$0xf]
    %v2739 = vld [vmem:[#allocation31 + $0xbc] sm:$0xf]
    %v2740 = vld [vmem:[#allocation31 + $0xc0] sm:$0xf]
    %v2741 = vld [vmem:[#allocation31 + $0xc4] sm:$0xf]
    %v2742 = vld [vmem:[#allocation31 + $0xc8] sm:$0xf]
    %v2743 = vld [vmem:[#allocation31 + $0xcc] sm:$0xf]
    %v2744 = vld [vmem:[#allocation31 + $0xd0] sm:$0xf]
    %v2745 = vld [vmem:[#allocation31 + $0xd4] sm:$0xf]
    %v2746 = vld [vmem:[#allocation31 + $0xd8] sm:$0xf]
    %v2747 = vld [vmem:[#allocation31 + $0xdc] sm:$0xf]
    %v2748 = vld [vmem:[#allocation31 + $0xe0] sm:$0xf]
    %v2749 = vld [vmem:[#allocation31 + $0xe4] sm:$0xf]
    %v2750 = vld [vmem:[#allocation31 + $0xe8] sm:$0xf]
    %v2751 = vld [vmem:[#allocation31 + $0xec] sm:$0xf]
    %v2752 = vld [vmem:[#allocation31 + $0xf0] sm:$0xf]
    %v2753 = vld [vmem:[#allocation31 + $0xf4] sm:$0xf]
    %v2754 = vld [vmem:[#allocation31 + $0xf8] sm:$0xf]
    %v2755 = vld [vmem:[#allocation31 + $0xfc] sm:$0xf]
    %v2756 = vpack.c.bf16 %v2688, %v2688
    %v2757 = vpack.c.bf16 %v2689, %v2689
    %v2758 = vpack.c.bf16 %v2690, %v2690
    %v2759 = vpack.c.bf16 %v2691, %v2691
    %v2760 = vperm.slane %v2432, 0
    %v2825 = vunpack.c.l.b16 %v2692
    %v2826 = vunpack.c.l.b16 %v2693
    %v2827 = vunpack.c.l.b16 %v2694
    %v2828 = vunpack.c.l.b16 %v2695
    %v2829 = vunpack.c.l.b16 %v2696
    %v2830 = vunpack.c.l.b16 %v2697
    %v2831 = vunpack.c.l.b16 %v2698
    %v2832 = vunpack.c.l.b16 %v2699
    %v2833 = vunpack.c.l.b16 %v2700
    %v2834 = vunpack.c.l.b16 %v2701
    %v2835 = vunpack.c.l.b16 %v2702
    %v2836 = vunpack.c.l.b16 %v2703
    %v2837 = vunpack.c.l.b16 %v2704
    %v2838 = vunpack.c.l.b16 %v2705
    %v2839 = vunpack.c.l.b16 %v2706
    %v2840 = vunpack.c.l.b16 %v2707
    %v2841 = vunpack.c.l.b16 %v2708
    %v2842 = vunpack.c.l.b16 %v2709
    %v2843 = vunpack.c.l.b16 %v2710
    %v2844 = vunpack.c.l.b16 %v2711
    %v2845 = vunpack.c.l.b16 %v2712
    %v2846 = vunpack.c.l.b16 %v2713
    %v2847 = vunpack.c.l.b16 %v2714
    %v2848 = vunpack.c.l.b16 %v2715
    %v2849 = vunpack.c.l.b16 %v2716
    %v2850 = vunpack.c.l.b16 %v2717
    %v2851 = vunpack.c.l.b16 %v2718
    %v2852 = vunpack.c.l.b16 %v2719
    %v2853 = vunpack.c.l.b16 %v2720
    %v2854 = vunpack.c.l.b16 %v2721
    %v2855 = vunpack.c.l.b16 %v2722
    %v2856 = vunpack.c.l.b16 %v2723
    %v2857 = vunpack.c.l.b16 %v2724
    %v2858 = vunpack.c.l.b16 %v2725
    %v2859 = vunpack.c.l.b16 %v2726
    %v2860 = vunpack.c.l.b16 %v2727
    %v2861 = vunpack.c.l.b16 %v2728
    %v2862 = vunpack.c.l.b16 %v2729
    %v2863 = vunpack.c.l.b16 %v2730
    %v2864 = vunpack.c.l.b16 %v2731
    %v2865 = vunpack.c.l.b16 %v2732
    %v2866 = vunpack.c.l.b16 %v2733
    %v2867 = vunpack.c.l.b16 %v2734
    %v2868 = vunpack.c.l.b16 %v2735
    %v2869 = vunpack.c.l.b16 %v2736
    %v2870 = vunpack.c.l.b16 %v2737
    %v2871 = vunpack.c.l.b16 %v2738
    %v2872 = vunpack.c.l.b16 %v2739
    %v2873 = vunpack.c.l.b16 %v2740
    %v2874 = vunpack.c.l.b16 %v2741
    %v2875 = vunpack.c.l.b16 %v2742
    %v2876 = vunpack.c.l.b16 %v2743
    %v2877 = vunpack.c.l.b16 %v2744
    %v2878 = vunpack.c.l.b16 %v2745
    %v2879 = vunpack.c.l.b16 %v2746
    %v2880 = vunpack.c.l.b16 %v2747
    %v2881 = vunpack.c.l.b16 %v2748
    %v2882 = vunpack.c.l.b16 %v2749
    %v2883 = vunpack.c.l.b16 %v2750
    %v2884 = vunpack.c.l.b16 %v2751
    %v2885 = vunpack.c.l.b16 %v2752
    %v2886 = vunpack.c.l.b16 %v2753
    %v2887 = vunpack.c.l.b16 %v2754
    %v2888 = vunpack.c.l.b16 %v2755
    %v2889 = vpack.c.b16 %v2826, %v2825
    %v2890 = vpack.c.b16 %v2828, %v2827
    %v2891 = vpack.c.b16 %v2830, %v2829
    %v2892 = vpack.c.b16 %v2832, %v2831
    %v2893 = vpack.c.b16 %v2834, %v2833
    %v2894 = vpack.c.b16 %v2836, %v2835
    %v2895 = vpack.c.b16 %v2838, %v2837
    %v2896 = vpack.c.b16 %v2840, %v2839
    %v2897 = vpack.c.b16 %v2842, %v2841
    %v2898 = vpack.c.b16 %v2844, %v2843
    %v2899 = vpack.c.b16 %v2846, %v2845
    %v2900 = vpack.c.b16 %v2848, %v2847
    %v2901 = vpack.c.b16 %v2850, %v2849
    %v2902 = vpack.c.b16 %v2852, %v2851
    %v2903 = vpack.c.b16 %v2854, %v2853
    %v2904 = vpack.c.b16 %v2856, %v2855
    %v2905 = vpack.c.b16 %v2858, %v2857
    %v2906 = vpack.c.b16 %v2860, %v2859
    %v2907 = vpack.c.b16 %v2862, %v2861
    %v2908 = vpack.c.b16 %v2864, %v2863
    %v2909 = vpack.c.b16 %v2866, %v2865
    %v2910 = vpack.c.b16 %v2868, %v2867
    %v2911 = vpack.c.b16 %v2870, %v2869
    %v2912 = vpack.c.b16 %v2872, %v2871
    %v2913 = vpack.c.b16 %v2874, %v2873
    %v2914 = vpack.c.b16 %v2876, %v2875
    %v2915 = vpack.c.b16 %v2878, %v2877
    %v2916 = vpack.c.b16 %v2880, %v2879
    %v2917 = vpack.c.b16 %v2882, %v2881
    %v2918 = vpack.c.b16 %v2884, %v2883
    %v2919 = vpack.c.b16 %v2886, %v2885
    %v2920 = vpack.c.b16 %v2888, %v2887
    %2953 = vmatpush.bf16.msra.mxu0 %v2896
    %2954 = vmatpush.bf16.msra.mxu0 %v2895
    %2955 = vmatpush.bf16.msra.mxu0 %v2894
    %2956 = vmatpush.bf16.msra.mxu0 %v2893
    %2957 = vmatpush.bf16.msra.mxu0 %v2892
    %2958 = vmatpush.bf16.msra.mxu0 %v2891
    %2959 = vmatpush.bf16.msra.mxu0 %v2890
    %2960 = vmatpush.bf16.msra.mxu0 %v2889
    %2961 = vmatmul.bf16.gmra.mxu0 %v2756
    %v2962 = vpop.f32.mrf.mxu0
    %v2963 = vadd.f32 %v2760, %v2962
    %v2964 = vpop.f32.mrf.mxu0
    %2965 = vdwg.mxu0
    %2966 = vmatpush.bf16.msra.mxu0 %v2904
    %2967 = vmatpush.bf16.msra.mxu0 %v2903
    %2968 = vmatpush.bf16.msra.mxu0 %v2902
    %2969 = vmatpush.bf16.msra.mxu0 %v2901
    %2970 = vmatpush.bf16.msra.mxu0 %v2900
    %2971 = vmatpush.bf16.msra.mxu0 %v2899
    %2972 = vmatpush.bf16.msra.mxu0 %v2898
    %2973 = vmatpush.bf16.msra.mxu0 %v2897
    %2974 = vmatmul.bf16.gmra.mxu0 %v2757
    %v2975 = vpop.f32.mrf.mxu0
    %v2976 = vadd.f32 %v2963, %v2975
    %v2977 = vpop.f32.mrf.mxu0
    %2978 = vdwg.mxu0
    %2979 = vmatpush.bf16.msra.mxu0 %v2912
    %2980 = vmatpush.bf16.msra.mxu0 %v2911
    %2981 = vmatpush.bf16.msra.mxu0 %v2910
    %2982 = vmatpush.bf16.msra.mxu0 %v2909
    %2983 = vmatpush.bf16.msra.mxu0 %v2908
    %2984 = vmatpush.bf16.msra.mxu0 %v2907
    %2985 = vmatpush.bf16.msra.mxu0 %v2906
    %2986 = vmatpush.bf16.msra.mxu0 %v2905
    %2987 = vmatmul.bf16.gmra.mxu0 %v2758
    %v2988 = vpop.f32.mrf.mxu0
    %v2989 = vadd.f32 %v2976, %v2988
    %v2990 = vpop.f32.mrf.mxu0
    %2991 = vdwg.mxu0
    %2992 = vmatpush.bf16.msra.mxu0 %v2920
    %2993 = vmatpush.bf16.msra.mxu0 %v2919
    %2994 = vmatpush.bf16.msra.mxu0 %v2918
    %2995 = vmatpush.bf16.msra.mxu0 %v2917
    %2996 = vmatpush.bf16.msra.mxu0 %v2916
    %2997 = vmatpush.bf16.msra.mxu0 %v2915
    %2998 = vmatpush.bf16.msra.mxu0 %v2914
    %2999 = vmatpush.bf16.msra.mxu0 %v2913
    %3000 = vmatmul.bf16.gmra.mxu0 %v2759
    %v3001 = vpop.f32.mrf.mxu0
    %v3002 = vadd.f32 %v2989, %v3001
    %v3003 = vpop.f32.mrf.mxu0
    %3004 = vdwg.mxu0
    %v3005 = vadd.f32 %v2431, %v3002
    %3006 = vadd.xlane.f32.xlu0 %v3005
    %v3007 = vpop.xlane.xlu0 %3006
    %v3008 = vmul.f32 %v3007, %v625
    %v3009 = vsub.f32 %v3005, %v3008
    %v3010 = vmul.f32 %v3009, %v3009
    %3011 = vadd.xlane.f32.xlu0 %v3010
    %v3012 = vpop.xlane.xlu0 %3011
    %v3013 = vmul.f32 %v3012, %v625
    %v3014 = vadd.f32 %v3013, 1e-05
    %v3015 = vrsqrt.pop %v3014
    %v3016 = vmul.f32 %v3015, %v3014
    %v3017 = vmul.f32 %v3016, %v3015
    %v3018 = vmul.f32 0.5, %v3017
    %v3019 = vsub.f32 1.5, %v3018
    %v3020 = vmul.f32 %v3015, %v3019
    %vm3021 = vweird.f32 %v3014
    %vm3022 = vweird.f32 %v3015
    %vm3023 = vmor %vm3021, %vm3022
    %v3024 = vsel %vm3023, %v3015, %v3020
    %v3025 = vmul.f32 %v3009, %v3024
    %v3026 = vperm.slane %v2432, 1
    %v3027 = vmul.f32 %v3025, %v3026
    %v3028 = vperm.slane %v2432, 2
    %v3029 = vadd.f32 %v3027, %v3028
    %s3030 = scalar_lea.vmem [#allocation26], 8
    %v3031 = vld [vmem:[%s3030] sm:$0x3f]
    %s3032 = scalar_lea.vmem [#allocation25], 256
    %v3033 = vld [vmem:[%s3032] sm:$0xf]
    %v3034 = vld [vmem:[%s3032 + $0x4] sm:$0xf]
    %v3035 = vld [vmem:[%s3032 + $0x8] sm:$0xf]
    %v3036 = vld [vmem:[%s3032 + $0xc] sm:$0xf]
    %v3037 = vld [vmem:[%s3032 + $0x10] sm:$0xf]
    %v3038 = vld [vmem:[%s3032 + $0x14] sm:$0xf]
    %v3039 = vld [vmem:[%s3032 + $0x18] sm:$0xf]
    %v3040 = vld [vmem:[%s3032 + $0x1c] sm:$0xf]
    %v3041 = vld [vmem:[%s3032 + $0x20] sm:$0xf]
    %v3042 = vld [vmem:[%s3032 + $0x24] sm:$0xf]
    %v3043 = vld [vmem:[%s3032 + $0x28] sm:$0xf]
    %v3044 = vld [vmem:[%s3032 + $0x2c] sm:$0xf]
    %v3045 = vld [vmem:[%s3032 + $0x30] sm:$0xf]
    %v3046 = vld [vmem:[%s3032 + $0x34] sm:$0xf]
    %v3047 = vld [vmem:[%s3032 + $0x38] sm:$0xf]
    %v3048 = vld [vmem:[%s3032 + $0x3c] sm:$0xf]
    %s3049 = scalar_lea.vmem [#allocation25], 320
    %v3050 = vld [vmem:[%s3049] sm:$0xf]
    %v3051 = vld [vmem:[%s3049 + $0x4] sm:$0xf]
    %v3052 = vld [vmem:[%s3049 + $0x8] sm:$0xf]
    %v3053 = vld [vmem:[%s3049 + $0xc] sm:$0xf]
    %v3054 = vld [vmem:[%s3049 + $0x10] sm:$0xf]
    %v3055 = vld [vmem:[%s3049 + $0x14] sm:$0xf]
    %v3056 = vld [vmem:[%s3049 + $0x18] sm:$0xf]
    %v3057 = vld [vmem:[%s3049 + $0x1c] sm:$0xf]
    %v3058 = vld [vmem:[%s3049 + $0x20] sm:$0xf]
    %v3059 = vld [vmem:[%s3049 + $0x24] sm:$0xf]
    %v3060 = vld [vmem:[%s3049 + $0x28] sm:$0xf]
    %v3061 = vld [vmem:[%s3049 + $0x2c] sm:$0xf]
    %v3062 = vld [vmem:[%s3049 + $0x30] sm:$0xf]
    %v3063 = vld [vmem:[%s3049 + $0x34] sm:$0xf]
    %v3064 = vld [vmem:[%s3049 + $0x38] sm:$0xf]
    %v3065 = vld [vmem:[%s3049 + $0x3c] sm:$0xf]
    %s3066 = scalar_lea.vmem [#allocation25], 384
    %v3067 = vld [vmem:[%s3066] sm:$0xf]
    %v3068 = vld [vmem:[%s3066 + $0x4] sm:$0xf]
    %v3069 = vld [vmem:[%s3066 + $0x8] sm:$0xf]
    %v3070 = vld [vmem:[%s3066 + $0xc] sm:$0xf]
    %v3071 = vld [vmem:[%s3066 + $0x10] sm:$0xf]
    %v3072 = vld [vmem:[%s3066 + $0x14] sm:$0xf]
    %v3073 = vld [vmem:[%s3066 + $0x18] sm:$0xf]
    %v3074 = vld [vmem:[%s3066 + $0x1c] sm:$0xf]
    %v3075 = vld [vmem:[%s3066 + $0x20] sm:$0xf]
    %v3076 = vld [vmem:[%s3066 + $0x24] sm:$0xf]
    %v3077 = vld [vmem:[%s3066 + $0x28] sm:$0xf]
    %v3078 = vld [vmem:[%s3066 + $0x2c] sm:$0xf]
    %v3079 = vld [vmem:[%s3066 + $0x30] sm:$0xf]
    %v3080 = vld [vmem:[%s3066 + $0x34] sm:$0xf]
    %v3081 = vld [vmem:[%s3066 + $0x38] sm:$0xf]
    %v3082 = vld [vmem:[%s3066 + $0x3c] sm:$0xf]
    %s3083 = scalar_lea.vmem [#allocation25], 448
    %v3084 = vld [vmem:[%s3083] sm:$0xf]
    %v3085 = vld [vmem:[%s3083 + $0x4] sm:$0xf]
    %v3086 = vld [vmem:[%s3083 + $0x8] sm:$0xf]
    %v3087 = vld [vmem:[%s3083 + $0xc] sm:$0xf]
    %v3088 = vld [vmem:[%s3083 + $0x10] sm:$0xf]
    %v3089 = vld [vmem:[%s3083 + $0x14] sm:$0xf]
    %v3090 = vld [vmem:[%s3083 + $0x18] sm:$0xf]
    %v3091 = vld [vmem:[%s3083 + $0x1c] sm:$0xf]
    %v3092 = vld [vmem:[%s3083 + $0x20] sm:$0xf]
    %v3093 = vld [vmem:[%s3083 + $0x24] sm:$0xf]
    %v3094 = vld [vmem:[%s3083 + $0x28] sm:$0xf]
    %v3095 = vld [vmem:[%s3083 + $0x2c] sm:$0xf]
    %v3096 = vld [vmem:[%s3083 + $0x30] sm:$0xf]
    %v3097 = vld [vmem:[%s3083 + $0x34] sm:$0xf]
    %v3098 = vld [vmem:[%s3083 + $0x38] sm:$0xf]
    %v3099 = vld [vmem:[%s3083 + $0x3c] sm:$0xf]
    %v3100 = vpack.c.bf16 %v3029, %v3029
    %v3101 = vperm.slane %v3031, 0
    %v3118 = vunpack.c.l.b16 %v3033
    %v3119 = vunpack.c.l.b16 %v3034
    %v3120 = vunpack.c.l.b16 %v3035
    %v3121 = vunpack.c.l.b16 %v3036
    %v3122 = vunpack.c.l.b16 %v3037
    %v3123 = vunpack.c.l.b16 %v3038
    %v3124 = vunpack.c.l.b16 %v3039
    %v3125 = vunpack.c.l.b16 %v3040
    %v3126 = vunpack.c.l.b16 %v3041
    %v3127 = vunpack.c.l.b16 %v3042
    %v3128 = vunpack.c.l.b16 %v3043
    %v3129 = vunpack.c.l.b16 %v3044
    %v3130 = vunpack.c.l.b16 %v3045
    %v3131 = vunpack.c.l.b16 %v3046
    %v3132 = vunpack.c.l.b16 %v3047
    %v3133 = vunpack.c.l.b16 %v3048
    %v3134 = vpack.c.b16 %v3119, %v3118
    %v3135 = vpack.c.b16 %v3121, %v3120
    %v3136 = vpack.c.b16 %v3123, %v3122
    %v3137 = vpack.c.b16 %v3125, %v3124
    %v3138 = vpack.c.b16 %v3127, %v3126
    %v3139 = vpack.c.b16 %v3129, %v3128
    %v3140 = vpack.c.b16 %v3131, %v3130
    %v3141 = vpack.c.b16 %v3133, %v3132
    %3150 = vmatpush.bf16.msra.mxu0 %v3141
    %3151 = vmatpush.bf16.msra.mxu0 %v3140
    %3152 = vmatpush.bf16.msra.mxu0 %v3139
    %3153 = vmatpush.bf16.msra.mxu0 %v3138
    %3154 = vmatpush.bf16.msra.mxu0 %v3137
    %3155 = vmatpush.bf16.msra.mxu0 %v3136
    %3156 = vmatpush.bf16.msra.mxu0 %v3135
    %3157 = vmatpush.bf16.msra.mxu0 %v3134
    %3158 = vmatmul.bf16.gmra.mxu0 %v3100
    %v3159 = vpop.f32.mrf.mxu0
    %v3160 = vadd.f32 %v3101, %v3159
    %v3161 = vpop.f32.mrf.mxu0
    %3162 = vdwg.mxu0
    %v3163 = vperm.slane %v3031, 1
    %v3180 = vunpack.c.l.b16 %v3050
    %v3181 = vunpack.c.l.b16 %v3051
    %v3182 = vunpack.c.l.b16 %v3052
    %v3183 = vunpack.c.l.b16 %v3053
    %v3184 = vunpack.c.l.b16 %v3054
    %v3185 = vunpack.c.l.b16 %v3055
    %v3186 = vunpack.c.l.b16 %v3056
    %v3187 = vunpack.c.l.b16 %v3057
    %v3188 = vunpack.c.l.b16 %v3058
    %v3189 = vunpack.c.l.b16 %v3059
    %v3190 = vunpack.c.l.b16 %v3060
    %v3191 = vunpack.c.l.b16 %v3061
    %v3192 = vunpack.c.l.b16 %v3062
    %v3193 = vunpack.c.l.b16 %v3063
    %v3194 = vunpack.c.l.b16 %v3064
    %v3195 = vunpack.c.l.b16 %v3065
    %v3196 = vpack.c.b16 %v3181, %v3180
    %v3197 = vpack.c.b16 %v3183, %v3182
    %v3198 = vpack.c.b16 %v3185, %v3184
    %v3199 = vpack.c.b16 %v3187, %v3186
    %v3200 = vpack.c.b16 %v3189, %v3188
    %v3201 = vpack.c.b16 %v3191, %v3190
    %v3202 = vpack.c.b16 %v3193, %v3192
    %v3203 = vpack.c.b16 %v3195, %v3194
    %3212 = vmatpush.bf16.msra.mxu0 %v3203
    %3213 = vmatpush.bf16.msra.mxu0 %v3202
    %3214 = vmatpush.bf16.msra.mxu0 %v3201
    %3215 = vmatpush.bf16.msra.mxu0 %v3200
    %3216 = vmatpush.bf16.msra.mxu0 %v3199
    %3217 = vmatpush.bf16.msra.mxu0 %v3198
    %3218 = vmatpush.bf16.msra.mxu0 %v3197
    %3219 = vmatpush.bf16.msra.mxu0 %v3196
    %3220 = vmatmul.bf16.gmra.mxu0 %v1899
    %v3221 = vpop.f32.mrf.mxu0
    %v3222 = vadd.f32 %v3163, %v3221
    %v3223 = vpop.f32.mrf.mxu0
    %v3224 = vadd.f32 %v3163, %v3223
    %3225 = vmatmul.bf16.gmra.mxu0 %v1900
    %v3226 = vpop.f32.mrf.mxu0
    %v3227 = vadd.f32 %v3163, %v3226
    %v3228 = vpop.f32.mrf.mxu0
    %v3229 = vadd.f32 %v3163, %v3228
    %3230 = vdwg.mxu0
    %v3231 = vperm.slane %v3031, 2
    %v3248 = vunpack.c.l.b16 %v3067
    %v3249 = vunpack.c.l.b16 %v3068
    %v3250 = vunpack.c.l.b16 %v3069
    %v3251 = vunpack.c.l.b16 %v3070
    %v3252 = vunpack.c.l.b16 %v3071
    %v3253 = vunpack.c.l.b16 %v3072
    %v3254 = vunpack.c.l.b16 %v3073
    %v3255 = vunpack.c.l.b16 %v3074
    %v3256 = vunpack.c.l.b16 %v3075
    %v3257 = vunpack.c.l.b16 %v3076
    %v3258 = vunpack.c.l.b16 %v3077
    %v3259 = vunpack.c.l.b16 %v3078
    %v3260 = vunpack.c.l.b16 %v3079
    %v3261 = vunpack.c.l.b16 %v3080
    %v3262 = vunpack.c.l.b16 %v3081
    %v3263 = vunpack.c.l.b16 %v3082
    %v3264 = vpack.c.b16 %v3249, %v3248
    %v3265 = vpack.c.b16 %v3251, %v3250
    %v3266 = vpack.c.b16 %v3253, %v3252
    %v3267 = vpack.c.b16 %v3255, %v3254
    %v3268 = vpack.c.b16 %v3257, %v3256
    %v3269 = vpack.c.b16 %v3259, %v3258
    %v3270 = vpack.c.b16 %v3261, %v3260
    %v3271 = vpack.c.b16 %v3263, %v3262
    %3280 = vmatpush.bf16.msra.mxu0 %v3271
    %3281 = vmatpush.bf16.msra.mxu0 %v3270
    %3282 = vmatpush.bf16.msra.mxu0 %v3269
    %3283 = vmatpush.bf16.msra.mxu0 %v3268
    %3284 = vmatpush.bf16.msra.mxu0 %v3267
    %3285 = vmatpush.bf16.msra.mxu0 %v3266
    %3286 = vmatpush.bf16.msra.mxu0 %v3265
    %3287 = vmatpush.bf16.msra.mxu0 %v3264
    %3288 = vmatmul.bf16.gmra.mxu0 %v1969
    %v3289 = vpop.f32.mrf.mxu0
    %v3290 = vadd.f32 %v3231, %v3289
    %v3291 = vpop.f32.mrf.mxu0
    %v3292 = vadd.f32 %v3231, %v3291
    %3293 = vmatmul.bf16.gmra.mxu0 %v1970
    %v3294 = vpop.f32.mrf.mxu0
    %v3295 = vadd.f32 %v3231, %v3294
    %v3296 = vpop.f32.mrf.mxu0
    %v3297 = vadd.f32 %v3231, %v3296
    %3298 = vdwg.mxu0
    %v3300 = vrot.slane %v3160, 1
    %v3301 = vrot.slane %v3160, 2
    %v3302 = vrot.slane %v3160, 3
    %v3303 = vrot.slane %v3160, 4
    %v3304 = vrot.slane %v3160, 5
    %v3305 = vrot.slane %v3160, 6
    %v3306 = vrot.slane %v3160, 7
    %v3307 = vperm.slane %v3160, 0
    %v3308 = vperm.slane %v3300, 0
    %v3309 = vperm.slane %v3301, 0
    %v3310 = vperm.slane %v3302, 0
    %v3311 = vperm.slane %v3303, 0
    %v3312 = vperm.slane %v3304, 0
    %v3313 = vperm.slane %v3305, 0
    %v3314 = vperm.slane %v3306, 0
    %v3323 = vmul.f32 %v3307, %v1767
    %v3324 = vmul.f32 %v3308, %v1767
    %v3325 = vmul.f32 %v3309, %v1767
    %v3326 = vmul.f32 %v3310, %v1767
    %v3327 = vmul.f32 %v3311, %v1767
    %v3328 = vmul.f32 %v3312, %v1767
    %v3329 = vmul.f32 %v3313, %v1767
    %v3330 = vmul.f32 %v3314, %v1767
    %v3331 = vpack.c.bf16 %v3324, %v3323
    %v3332 = vpack.c.bf16 %v3326, %v3325
    %v3333 = vpack.c.bf16 %v3328, %v3327
    %v3334 = vpack.c.bf16 %v3330, %v3329
    %v3335 = vpack.c.bf16 %v3224, %v3222
    %v3336 = vpack.c.bf16 %v3229, %v3227
    %3337 = vmatpush.bf16.xpose.msra.mxu0 0
    %3338 = vmatpush.bf16.xpose.msra.mxu0 0
    %3339 = vmatpush.bf16.xpose.msra.mxu0 0
    %3340 = vmatpush.bf16.xpose.msra.mxu0 0
    %3341 = vmatpush.bf16.xpose.msra.mxu0 0
    %3342 = vmatpush.bf16.xpose.msra.mxu0 0
    %3343 = vmatpush.bf16.xpose.msra.mxu0 %v3336
    %3344 = vmatpush.bf16.xpose.msra.mxu0 %v3335
    %3345 = vmatmul.bf16.gmra.mxu0 %v3331
    %v3346 = vpop.f32.mrf.mxu0
    %v3347 = vadd.f32 0.0, %v3346
    %v3348 = vpop.f32.mrf.mxu0
    %v3349 = vadd.f32 0.0, %v3348
    %3350 = vmatmul.bf16.gmra.mxu0 %v3332
    %v3351 = vpop.f32.mrf.mxu0
    %v3352 = vadd.f32 0.0, %v3351
    %v3353 = vpop.f32.mrf.mxu0
    %v3354 = vadd.f32 0.0, %v3353
    %3355 = vmatmul.bf16.gmra.mxu0 %v3333
    %v3356 = vpop.f32.mrf.mxu0
    %v3357 = vadd.f32 0.0, %v3356
    %v3358 = vpop.f32.mrf.mxu0
    %v3359 = vadd.f32 0.0, %v3358
    %3360 = vmatmul.bf16.gmra.mxu0 %v3334
    %v3361 = vpop.f32.mrf.mxu0
    %v3362 = vadd.f32 0.0, %v3361
    %v3363 = vpop.f32.mrf.mxu0
    %v3364 = vadd.f32 0.0, %v3363
    %3365 = vdwg.mxu0
    %v3366 = vmul.f32 %v3347, 0.25
    %v3367 = vmul.f32 %v3349, 0.25
    %v3368 = vmul.f32 %v3352, 0.25
    %v3369 = vmul.f32 %v3354, 0.25
    %v3370 = vmul.f32 %v3357, 0.25
    %v3371 = vmul.f32 %v3359, 0.25
    %v3372 = vmul.f32 %v3362, 0.25
    %v3373 = vmul.f32 %v3364, 0.25
    %v3374 = vsel %vm598, %v3366, -inf
    %3375 = vmax.xlane.f32.xlu0 %v3374
    %v3376 = vpop.xlane.xlu0 %3375
    %v3377 = vsel %vm598, %v3367, -inf
    %3378 = vmax.xlane.f32.xlu0 %v3377
    %v3379 = vpop.xlane.xlu0 %3378
    %v3380 = vsel %vm598, %v3368, -inf
    %3381 = vmax.xlane.f32.xlu0 %v3380
    %v3382 = vpop.xlane.xlu0 %3381
    %v3383 = vsel %vm598, %v3369, -inf
    %3384 = vmax.xlane.f32.xlu0 %v3383
    %v3385 = vpop.xlane.xlu0 %3384
    %v3386 = vsel %vm598, %v3370, -inf
    %3387 = vmax.xlane.f32.xlu0 %v3386
    %v3388 = vpop.xlane.xlu0 %3387
    %v3389 = vsel %vm598, %v3371, -inf
    %3390 = vmax.xlane.f32.xlu0 %v3389
    %v3391 = vpop.xlane.xlu0 %3390
    %v3392 = vsel %vm598, %v3372, -inf
    %3393 = vmax.xlane.f32.xlu0 %v3392
    %v3394 = vpop.xlane.xlu0 %3393
    %v3395 = vsel %vm598, %v3373, -inf
    %3396 = vmax.xlane.f32.xlu0 %v3395
    %v3397 = vpop.xlane.xlu0 %3396
    %v3398 = vsub.f32 %v3366, %v3376
    %v3399 = vsub.f32 %v3367, %v3379
    %v3400 = vsub.f32 %v3368, %v3382
    %v3401 = vsub.f32 %v3369, %v3385
    %v3402 = vsub.f32 %v3370, %v3388
    %v3403 = vsub.f32 %v3371, %v3391
    %v3404 = vsub.f32 %v3372, %v3394
    %v3405 = vsub.f32 %v3373, %v3397
    %v3406 = vmul.f32 %v3398, 1.442695
    %v3407 = vpow.pop %v3406
    %v3408 = vmul.f32 %v3399, 1.442695
    %v3409 = vpow.pop %v3408
    %v3410 = vmul.f32 %v3400, 1.442695
    %v3411 = vpow.pop %v3410
    %v3412 = vmul.f32 %v3401, 1.442695
    %v3413 = vpow.pop %v3412
    %v3414 = vmul.f32 %v3402, 1.442695
    %v3415 = vpow.pop %v3414
    %v3416 = vmul.f32 %v3403, 1.442695
    %v3417 = vpow.pop %v3416
    %v3418 = vmul.f32 %v3404, 1.442695
    %v3419 = vpow.pop %v3418
    %v3420 = vmul.f32 %v3405, 1.442695
    %v3421 = vpow.pop %v3420
    %v3422 = vsel %vm598, %v3407, 0.0
    %3423 = vadd.xlane.f32.xlu0 %v3422
    %v3424 = vpop.xlane.xlu0 %3423
    %v3425 = vsel %vm598, %v3409, 0.0
    %3426 = vadd.xlane.f32.xlu0 %v3425
    %v3427 = vpop.xlane.xlu0 %3426
    %v3428 = vsel %vm598, %v3411, 0.0
    %3429 = vadd.xlane.f32.xlu0 %v3428
    %v3430 = vpop.xlane.xlu0 %3429
    %v3431 = vsel %vm598, %v3413, 0.0
    %3432 = vadd.xlane.f32.xlu0 %v3431
    %v3433 = vpop.xlane.xlu0 %3432
    %v3434 = vsel %vm598, %v3415, 0.0
    %3435 = vadd.xlane.f32.xlu0 %v3434
    %v3436 = vpop.xlane.xlu0 %3435
    %v3437 = vsel %vm598, %v3417, 0.0
    %3438 = vadd.xlane.f32.xlu0 %v3437
    %v3439 = vpop.xlane.xlu0 %3438
    %v3440 = vsel %vm598, %v3419, 0.0
    %3441 = vadd.xlane.f32.xlu0 %v3440
    %v3442 = vpop.xlane.xlu0 %3441
    %v3443 = vsel %vm598, %v3421, 0.0
    %3444 = vadd.xlane.f32.xlu0 %v3443
    %v3445 = vpop.xlane.xlu0 %3444
    %v3446 = vrcp.pop %v3424
    %v3447 = vrcp.pop %v3427
    %v3448 = vrcp.pop %v3430
    %v3449 = vrcp.pop %v3433
    %v3450 = vrcp.pop %v3436
    %v3451 = vrcp.pop %v3439
    %v3452 = vrcp.pop %v3442
    %v3453 = vrcp.pop %v3445
    %v3454 = vmul.f32 %v3407, %v3446
    %v3455 = vmul.f32 %v3409, %v3447
    %v3456 = vmul.f32 %v3411, %v3448
    %v3457 = vmul.f32 %v3413, %v3449
    %v3458 = vmul.f32 %v3415, %v3450
    %v3459 = vmul.f32 %v3417, %v3451
    %v3460 = vmul.f32 %v3419, %v3452
    %v3461 = vmul.f32 %v3421, %v3453
    %v3462 = vpack.c.bf16 %v3455, %v3454
    %v3463 = vpack.c.bf16 %v3457, %v3456
    %v3464 = vpack.c.bf16 %v3459, %v3458
    %v3465 = vpack.c.bf16 %v3461, %v3460
    %v3466 = vpack.c.bf16 %v3292, %v3290
    %v3467 = vpack.c.bf16 %v3297, %v3295
    %v3469 = vsel %vm598, %v3462, 0
    %v3472 = vsel %vm598, %v3463, 0
    %v3475 = vsel %vm598, %v3464, 0
    %v3478 = vsel %vm598, %v3465, 0
    %3480 = vmatpush.bf16.msra.mxu0 0
    %3481 = vmatpush.bf16.msra.mxu0 0
    %3482 = vmatpush.bf16.msra.mxu0 0
    %3483 = vmatpush.bf16.msra.mxu0 0
    %3484 = vmatpush.bf16.msra.mxu0 0
    %3485 = vmatpush.bf16.msra.mxu0 0
    %3486 = vmatpush.bf16.msra.mxu0 %v3467
    %3487 = vmatpush.bf16.msra.mxu0 %v3466
    %3488 = vmatmul.bf16.gmra.mxu0 %v3469
    %v3489 = vpop.f32.mrf.mxu0
    %v3490 = vadd.f32 0.0, %v3489
    %v3491 = vpop.f32.mrf.mxu0
    %v3492 = vadd.f32 0.0, %v3491
    %3493 = vmatmul.bf16.gmra.mxu0 %v3472
    %v3494 = vpop.f32.mrf.mxu0
    %v3495 = vadd.f32 0.0, %v3494
    %v3496 = vpop.f32.mrf.mxu0
    %v3497 = vadd.f32 0.0, %v3496
    %3498 = vmatmul.bf16.gmra.mxu0 %v3475
    %v3499 = vpop.f32.mrf.mxu0
    %v3500 = vadd.f32 0.0, %v3499
    %v3501 = vpop.f32.mrf.mxu0
    %v3502 = vadd.f32 0.0, %v3501
    %3503 = vmatmul.bf16.gmra.mxu0 %v3478
    %v3504 = vpop.f32.mrf.mxu0
    %v3505 = vadd.f32 0.0, %v3504
    %v3506 = vpop.f32.mrf.mxu0
    %v3507 = vadd.f32 0.0, %v3506
    %3508 = vdwg.mxu0
    %v3509 = vmul.f32 %v3490, %v1767
    %v3510 = vmul.f32 %v3492, %v1767
    %v3511 = vmul.f32 %v3495, %v1767
    %v3512 = vmul.f32 %v3497, %v1767
    %v3513 = vmul.f32 %v3500, %v1767
    %v3514 = vmul.f32 %v3502, %v1767
    %v3515 = vmul.f32 %v3505, %v1767
    %v3516 = vmul.f32 %v3507, %v1767
    %v3517 = vrot.slane %v3509, 4
    %v3518 = vadd.f32 %v3509, %v3517
    %v3519 = vrot.slane %v3518, 2
    %v3520 = vadd.f32 %v3518, %v3519
    %v3521 = vrot.slane %v3520, 1
    %v3522 = vadd.f32 %v3520, %v3521
    %v3523 = vrot.slane %v3510, 4
    %v3524 = vadd.f32 %v3510, %v3523
    %v3525 = vrot.slane %v3524, 2
    %v3526 = vadd.f32 %v3524, %v3525
    %v3527 = vrot.slane %v3526, 1
    %v3528 = vadd.f32 %v3526, %v3527
    %v3529 = vrot.slane %v3511, 4
    %v3530 = vadd.f32 %v3511, %v3529
    %v3531 = vrot.slane %v3530, 2
    %v3532 = vadd.f32 %v3530, %v3531
    %v3533 = vrot.slane %v3532, 1
    %v3534 = vadd.f32 %v3532, %v3533
    %v3535 = vrot.slane %v3512, 4
    %v3536 = vadd.f32 %v3512, %v3535
    %v3537 = vrot.slane %v3536, 2
    %v3538 = vadd.f32 %v3536, %v3537
    %v3539 = vrot.slane %v3538, 1
    %v3540 = vadd.f32 %v3538, %v3539
    %v3541 = vrot.slane %v3513, 4
    %v3542 = vadd.f32 %v3513, %v3541
    %v3543 = vrot.slane %v3542, 2
    %v3544 = vadd.f32 %v3542, %v3543
    %v3545 = vrot.slane %v3544, 1
    %v3546 = vadd.f32 %v3544, %v3545
    %v3547 = vrot.slane %v3514, 4
    %v3548 = vadd.f32 %v3514, %v3547
    %v3549 = vrot.slane %v3548, 2
    %v3550 = vadd.f32 %v3548, %v3549
    %v3551 = vrot.slane %v3550, 1
    %v3552 = vadd.f32 %v3550, %v3551
    %v3553 = vrot.slane %v3515, 4
    %v3554 = vadd.f32 %v3515, %v3553
    %v3555 = vrot.slane %v3554, 2
    %v3556 = vadd.f32 %v3554, %v3555
    %v3557 = vrot.slane %v3556, 1
    %v3558 = vadd.f32 %v3556, %v3557
    %v3559 = vrot.slane %v3516, 4
    %v3560 = vadd.f32 %v3516, %v3559
    %v3561 = vrot.slane %v3560, 2
    %v3562 = vadd.f32 %v3560, %v3561
    %v3563 = vrot.slane %v3562, 1
    %v3564 = vadd.f32 %v3562, %v3563
    %v3565 = vpack.c.bf16 %v3522, %v3522
    %v3566 = vpack.c.bf16 %v3528, %v3528
    %v3567 = vpack.c.bf16 %v3534, %v3534
    %v3568 = vpack.c.bf16 %v3540, %v3540
    %v3569 = vpack.c.bf16 %v3546, %v3546
    %v3570 = vpack.c.bf16 %v3552, %v3552
    %v3571 = vpack.c.bf16 %v3558, %v3558
    %v3572 = vpack.c.bf16 %v3564, %v3564
    %v3573 = vperm.slane %v3031, 3
    %v3582 = vunpack.c.l.b16 %v3565
    %v3583 = vunpack.c.l.b16 %v3566
    %v3584 = vunpack.c.l.b16 %v3567
    %v3585 = vunpack.c.l.b16 %v3568
    %v3586 = vunpack.c.l.b16 %v3569
    %v3587 = vunpack.c.l.b16 %v3570
    %v3588 = vunpack.c.l.b16 %v3571
    %v3589 = vunpack.c.l.b16 %v3572
    %v3590 = vsel %vm2330, %v3583, %v3582
    %v3591 = vsel %vm2332, %v3584, %v3590
    %v3592 = vsel %vm2334, %v3585, %v3591
    %v3593 = vsel %vm2336, %v3586, %v3592
    %v3594 = vsel %vm2338, %v3587, %v3593
    %v3595 = vsel %vm2340, %v3588, %v3594
    %v3596 = vsel %vm2342, %v3589, %v3595
    %v3597 = vpack.c.b16 %v3596, %v3596
    %v3615 = vunpack.c.l.b16 %v3084
    %v3616 = vunpack.c.l.b16 %v3085
    %v3617 = vunpack.c.l.b16 %v3086
    %v3618 = vunpack.c.l.b16 %v3087
    %v3619 = vunpack.c.l.b16 %v3088
    %v3620 = vunpack.c.l.b16 %v3089
    %v3621 = vunpack.c.l.b16 %v3090
    %v3622 = vunpack.c.l.b16 %v3091
    %v3623 = vunpack.c.l.b16 %v3092
    %v3624 = vunpack.c.l.b16 %v3093
    %v3625 = vunpack.c.l.b16 %v3094
    %v3626 = vunpack.c.l.b16 %v3095
    %v3627 = vunpack.c.l.b16 %v3096
    %v3628 = vunpack.c.l.b16 %v3097
    %v3629 = vunpack.c.l.b16 %v3098
    %v3630 = vunpack.c.l.b16 %v3099
    %v3631 = vpack.c.b16 %v3616, %v3615
    %v3632 = vpack.c.b16 %v3618, %v3617
    %v3633 = vpack.c.b16 %v3620, %v3619
    %v3634 = vpack.c.b16 %v3622, %v3621
    %v3635 = vpack.c.b16 %v3624, %v3623
    %v3636 = vpack.c.b16 %v3626, %v3625
    %v3637 = vpack.c.b16 %v3628, %v3627
    %v3638 = vpack.c.b16 %v3630, %v3629
    %3647 = vmatpush.bf16.msra.mxu0 %v3638
    %3648 = vmatpush.bf16.msra.mxu0 %v3637
    %3649 = vmatpush.bf16.msra.mxu0 %v3636
    %3650 = vmatpush.bf16.msra.mxu0 %v3635
    %3651 = vmatpush.bf16.msra.mxu0 %v3634
    %3652 = vmatpush.bf16.msra.mxu0 %v3633
    %3653 = vmatpush.bf16.msra.mxu0 %v3632
    %3654 = vmatpush.bf16.msra.mxu0 %v3631
    %3655 = vmatmul.bf16.gmra.mxu0 %v3597
    %v3656 = vpop.f32.mrf.mxu0
    %v3657 = vadd.f32 %v3573, %v3656
    %v3658 = vpop.f32.mrf.mxu0
    %3659 = vdwg.mxu0
    %v3660 = vadd.f32 %v3029, %v3657
    %3661 = vadd.xlane.f32.xlu0 %v3660
    %v3662 = vpop.xlane.xlu0 %3661
    %v3663 = vmul.f32 %v3662, %v625
    %v3664 = vsub.f32 %v3660, %v3663
    %v3665 = vmul.f32 %v3664, %v3664
    %3666 = vadd.xlane.f32.xlu0 %v3665
    %v3667 = vpop.xlane.xlu0 %3666
    %v3668 = vmul.f32 %v3667, %v625
    %v3669 = vadd.f32 %v3668, 1e-05
    %v3670 = vrsqrt.pop %v3669
    %v3671 = vmul.f32 %v3670, %v3669
    %v3672 = vmul.f32 %v3671, %v3670
    %v3673 = vmul.f32 0.5, %v3672
    %v3674 = vsub.f32 1.5, %v3673
    %v3675 = vmul.f32 %v3670, %v3674
    %vm3676 = vweird.f32 %v3669
    %vm3677 = vweird.f32 %v3670
    %vm3678 = vmor %vm3676, %vm3677
    %v3679 = vsel %vm3678, %v3670, %v3675
    %v3680 = vmul.f32 %v3664, %v3679
    %v3681 = vperm.slane %v3031, 4
    %v3682 = vmul.f32 %v3680, %v3681
    %v3683 = vperm.slane %v3031, 5
    %v3684 = vadd.f32 %v3682, %v3683
    %s3685 = scalar_lea.vmem %s20, 4
    %v3686 = vld [vmem:[%s3685] sm:$0x7]
    %s3687 = scalar_lea.vmem [#allocation28], 256
    %v3688 = vld [vmem:[%s3687] sm:$0xff]
    %v3689 = vld [vmem:[%s3687 + $0x8] sm:$0xff]
    %v3690 = vld [vmem:[%s3687 + $0x10] sm:$0xff]
    %v3691 = vld [vmem:[%s3687 + $0x18] sm:$0xff]
    %v3692 = vld [vmem:[%s3687 + $0x20] sm:$0xff]
    %v3693 = vld [vmem:[%s3687 + $0x28] sm:$0xff]
    %v3694 = vld [vmem:[%s3687 + $0x30] sm:$0xff]
    %v3695 = vld [vmem:[%s3687 + $0x38] sm:$0xff]
    %v3696 = vld [vmem:[%s3687 + $0x40] sm:$0xff]
    %v3697 = vld [vmem:[%s3687 + $0x48] sm:$0xff]
    %v3698 = vld [vmem:[%s3687 + $0x50] sm:$0xff]
    %v3699 = vld [vmem:[%s3687 + $0x58] sm:$0xff]
    %v3700 = vld [vmem:[%s3687 + $0x60] sm:$0xff]
    %v3701 = vld [vmem:[%s3687 + $0x68] sm:$0xff]
    %v3702 = vld [vmem:[%s3687 + $0x70] sm:$0xff]
    %v3703 = vld [vmem:[%s3687 + $0x78] sm:$0xff]
    %v3704 = vld [vmem:[%s3687 + $0x80] sm:$0xff]
    %v3705 = vld [vmem:[%s3687 + $0x88] sm:$0xff]
    %v3706 = vld [vmem:[%s3687 + $0x90] sm:$0xff]
    %v3707 = vld [vmem:[%s3687 + $0x98] sm:$0xff]
    %v3708 = vld [vmem:[%s3687 + $0xa0] sm:$0xff]
    %v3709 = vld [vmem:[%s3687 + $0xa8] sm:$0xff]
    %v3710 = vld [vmem:[%s3687 + $0xb0] sm:$0xff]
    %v3711 = vld [vmem:[%s3687 + $0xb8] sm:$0xff]
    %v3712 = vld [vmem:[%s3687 + $0xc0] sm:$0xff]
    %v3713 = vld [vmem:[%s3687 + $0xc8] sm:$0xff]
    %v3714 = vld [vmem:[%s3687 + $0xd0] sm:$0xff]
    %v3715 = vld [vmem:[%s3687 + $0xd8] sm:$0xff]
    %v3716 = vld [vmem:[%s3687 + $0xe0] sm:$0xff]
    %v3717 = vld [vmem:[%s3687 + $0xe8] sm:$0xff]
    %v3718 = vld [vmem:[%s3687 + $0xf0] sm:$0xff]
    %v3719 = vld [vmem:[%s3687 + $0xf8] sm:$0xff]
    %v3720 = vpack.c.bf16 %v3684, %v3684
    %s3721 = scalar_lea.vmem [#allocation29], 4
    %v3722 = vld [vmem:[%s3721] sm:$0xf]
    %v3724 = vperm.slane %v3722, 0
    %v3725 = vperm.slane %v3722, 1
    %v3726 = vperm.slane %v3722, 2
    %v3727 = vperm.slane %v3722, 3
    %v3764 = vunpack.c.l.b16 %v3688
    %v3765 = vunpack.c.h.b16 %v3688
    %v3766 = vunpack.c.l.b16 %v3689
    %v3767 = vunpack.c.h.b16 %v3689
    %v3768 = vunpack.c.l.b16 %v3690
    %v3769 = vunpack.c.h.b16 %v3690
    %v3770 = vunpack.c.l.b16 %v3691
    %v3771 = vunpack.c.h.b16 %v3691
    %v3772 = vunpack.c.l.b16 %v3692
    %v3773 = vunpack.c.h.b16 %v3692
    %v3774 = vunpack.c.l.b16 %v3693
    %v3775 = vunpack.c.h.b16 %v3693
    %v3776 = vunpack.c.l.b16 %v3694
    %v3777 = vunpack.c.h.b16 %v3694
    %v3778 = vunpack.c.l.b16 %v3695
    %v3779 = vunpack.c.h.b16 %v3695
    %v3780 = vunpack.c.l.b16 %v3696
    %v3781 = vunpack.c.h.b16 %v3696
    %v3782 = vunpack.c.l.b16 %v3697
    %v3783 = vunpack.c.h.b16 %v3697
    %v3784 = vunpack.c.l.b16 %v3698
    %v3785 = vunpack.c.h.b16 %v3698
    %v3786 = vunpack.c.l.b16 %v3699
    %v3787 = vunpack.c.h.b16 %v3699
    %v3788 = vunpack.c.l.b16 %v3700
    %v3789 = vunpack.c.h.b16 %v3700
    %v3790 = vunpack.c.l.b16 %v3701
    %v3791 = vunpack.c.h.b16 %v3701
    %v3792 = vunpack.c.l.b16 %v3702
    %v3793 = vunpack.c.h.b16 %v3702
    %v3794 = vunpack.c.l.b16 %v3703
    %v3795 = vunpack.c.h.b16 %v3703
    %v3796 = vunpack.c.l.b16 %v3704
    %v3797 = vunpack.c.h.b16 %v3704
    %v3798 = vunpack.c.l.b16 %v3705
    %v3799 = vunpack.c.h.b16 %v3705
    %v3800 = vunpack.c.l.b16 %v3706
    %v3801 = vunpack.c.h.b16 %v3706
    %v3802 = vunpack.c.l.b16 %v3707
    %v3803 = vunpack.c.h.b16 %v3707
    %v3804 = vunpack.c.l.b16 %v3708
    %v3805 = vunpack.c.h.b16 %v3708
    %v3806 = vunpack.c.l.b16 %v3709
    %v3807 = vunpack.c.h.b16 %v3709
    %v3808 = vunpack.c.l.b16 %v3710
    %v3809 = vunpack.c.h.b16 %v3710
    %v3810 = vunpack.c.l.b16 %v3711
    %v3811 = vunpack.c.h.b16 %v3711
    %v3812 = vunpack.c.l.b16 %v3712
    %v3813 = vunpack.c.h.b16 %v3712
    %v3814 = vunpack.c.l.b16 %v3713
    %v3815 = vunpack.c.h.b16 %v3713
    %v3816 = vunpack.c.l.b16 %v3714
    %v3817 = vunpack.c.h.b16 %v3714
    %v3818 = vunpack.c.l.b16 %v3715
    %v3819 = vunpack.c.h.b16 %v3715
    %v3820 = vunpack.c.l.b16 %v3716
    %v3821 = vunpack.c.h.b16 %v3716
    %v3822 = vunpack.c.l.b16 %v3717
    %v3823 = vunpack.c.h.b16 %v3717
    %v3824 = vunpack.c.l.b16 %v3718
    %v3825 = vunpack.c.h.b16 %v3718
    %v3826 = vunpack.c.l.b16 %v3719
    %v3827 = vunpack.c.h.b16 %v3719
    %v3828 = vpack.c.b16 %v3768, %v3764
    %v3829 = vpack.c.b16 %v3769, %v3765
    %v3830 = vpack.c.b16 %v3770, %v3766
    %v3831 = vpack.c.b16 %v3771, %v3767
    %v3832 = vpack.c.b16 %v3776, %v3772
    %v3833 = vpack.c.b16 %v3777, %v3773
    %v3834 = vpack.c.b16 %v3778, %v3774
    %v3835 = vpack.c.b16 %v3779, %v3775
    %v3836 = vpack.c.b16 %v3784, %v3780
    %v3837 = vpack.c.b16 %v3785, %v3781
    %v3838 = vpack.c.b16 %v3786, %v3782
    %v3839 = vpack.c.b16 %v3787, %v3783
    %v3840 = vpack.c.b16 %v3792, %v3788
    %v3841 = vpack.c.b16 %v3793, %v3789
    %v3842 = vpack.c.b16 %v3794, %v3790
    %v3843 = vpack.c.b16 %v3795, %v3791
    %v3844 = vpack.c.b16 %v3800, %v3796
    %v3845 = vpack.c.b16 %v3801, %v3797
    %v3846 = vpack.c.b16 %v3802, %v3798
    %v3847 = vpack.c.b16 %v3803, %v3799
    %v3848 = vpack.c.b16 %v3808, %v3804
    %v3849 = vpack.c.b16 %v3809, %v3805
    %v3850 = vpack.c.b16 %v3810, %v3806
    %v3851 = vpack.c.b16 %v3811, %v3807
    %v3852 = vpack.c.b16 %v3816, %v3812
    %v3853 = vpack.c.b16 %v3817, %v3813
    %v3854 = vpack.c.b16 %v3818, %v3814
    %v3855 = vpack.c.b16 %v3819, %v3815
    %v3856 = vpack.c.b16 %v3824, %v3820
    %v3857 = vpack.c.b16 %v3825, %v3821
    %v3858 = vpack.c.b16 %v3826, %v3822
    %v3859 = vpack.c.b16 %v3827, %v3823
    %3892 = vmatpush.bf16.msra.mxu0 %v3856
    %3893 = vmatpush.bf16.msra.mxu0 %v3852
    %3894 = vmatpush.bf16.msra.mxu0 %v3848
    %3895 = vmatpush.bf16.msra.mxu0 %v3844
    %3896 = vmatpush.bf16.msra.mxu0 %v3840
    %3897 = vmatpush.bf16.msra.mxu0 %v3836
    %3898 = vmatpush.bf16.msra.mxu0 %v3832
    %3899 = vmatpush.bf16.msra.mxu0 %v3828
    %3900 = vmatmul.bf16.gmra.mxu0 %v3720
    %v3901 = vpop.f32.mrf.mxu0
    %v3902 = vadd.f32 %v3724, %v3901
    %v3903 = vpop.f32.mrf.mxu0
    %3904 = vdwg.mxu0
    %3905 = vmatpush.bf16.msra.mxu0 %v3857
    %3906 = vmatpush.bf16.msra.mxu0 %v3853
    %3907 = vmatpush.bf16.msra.mxu0 %v3849
    %3908 = vmatpush.bf16.msra.mxu0 %v3845
    %3909 = vmatpush.bf16.msra.mxu0 %v3841
    %3910 = vmatpush.bf16.msra.mxu0 %v3837
    %3911 = vmatpush.bf16.msra.mxu0 %v3833
    %3912 = vmatpush.bf16.msra.mxu0 %v3829
    %3913 = vmatmul.bf16.gmra.mxu0 %v3720
    %v3914 = vpop.f32.mrf.mxu0
    %v3915 = vadd.f32 %v3725, %v3914
    %v3916 = vpop.f32.mrf.mxu0
    %3917 = vdwg.mxu0
    %3918 = vmatpush.bf16.msra.mxu0 %v3858
    %3919 = vmatpush.bf16.msra.mxu0 %v3854
    %3920 = vmatpush.bf16.msra.mxu0 %v3850
    %3921 = vmatpush.bf16.msra.mxu0 %v3846
    %3922 = vmatpush.bf16.msra.mxu0 %v3842
    %3923 = vmatpush.bf16.msra.mxu0 %v3838
    %3924 = vmatpush.bf16.msra.mxu0 %v3834
    %3925 = vmatpush.bf16.msra.mxu0 %v3830
    %3926 = vmatmul.bf16.gmra.mxu0 %v3720
    %v3927 = vpop.f32.mrf.mxu0
    %v3928 = vadd.f32 %v3726, %v3927
    %v3929 = vpop.f32.mrf.mxu0
    %3930 = vdwg.mxu0
    %3931 = vmatpush.bf16.msra.mxu0 %v3859
    %3932 = vmatpush.bf16.msra.mxu0 %v3855
    %3933 = vmatpush.bf16.msra.mxu0 %v3851
    %3934 = vmatpush.bf16.msra.mxu0 %v3847
    %3935 = vmatpush.bf16.msra.mxu0 %v3843
    %3936 = vmatpush.bf16.msra.mxu0 %v3839
    %3937 = vmatpush.bf16.msra.mxu0 %v3835
    %3938 = vmatpush.bf16.msra.mxu0 %v3831
    %3939 = vmatmul.bf16.gmra.mxu0 %v3720
    %v3940 = vpop.f32.mrf.mxu0
    %v3941 = vadd.f32 %v3727, %v3940
    %v3942 = vpop.f32.mrf.mxu0
    %3943 = vdwg.mxu0
    %v3944 = vmax.f32 %v3902, 0.0
    %v3945 = vmax.f32 %v3915, 0.0
    %v3946 = vmax.f32 %v3928, 0.0
    %v3947 = vmax.f32 %v3941, 0.0
    %s3948 = scalar_lea.vmem [#allocation31], 256
    %v3949 = vld [vmem:[%s3948] sm:$0xf]
    %v3950 = vld [vmem:[%s3948 + $0x4] sm:$0xf]
    %v3951 = vld [vmem:[%s3948 + $0x8] sm:$0xf]
    %v3952 = vld [vmem:[%s3948 + $0xc] sm:$0xf]
    %v3953 = vld [vmem:[%s3948 + $0x10] sm:$0xf]
    %v3954 = vld [vmem:[%s3948 + $0x14] sm:$0xf]
    %v3955 = vld [vmem:[%s3948 + $0x18] sm:$0xf]
    %v3956 = vld [vmem:[%s3948 + $0x1c] sm:$0xf]
    %v3957 = vld [vmem:[%s3948 + $0x20] sm:$0xf]
    %v3958 = vld [vmem:[%s3948 + $0x24] sm:$0xf]
    %v3959 = vld [vmem:[%s3948 + $0x28] sm:$0xf]
    %v3960 = vld [vmem:[%s3948 + $0x2c] sm:$0xf]
    %v3961 = vld [vmem:[%s3948 + $0x30] sm:$0xf]
    %v3962 = vld [vmem:[%s3948 + $0x34] sm:$0xf]
    %v3963 = vld [vmem:[%s3948 + $0x38] sm:$0xf]
    %v3964 = vld [vmem:[%s3948 + $0x3c] sm:$0xf]
    %v3965 = vld [vmem:[%s3948 + $0x40] sm:$0xf]
    %v3966 = vld [vmem:[%s3948 + $0x44] sm:$0xf]
    %v3967 = vld [vmem:[%s3948 + $0x48] sm:$0xf]
    %v3968 = vld [vmem:[%s3948 + $0x4c] sm:$0xf]
    %v3969 = vld [vmem:[%s3948 + $0x50] sm:$0xf]
    %v3970 = vld [vmem:[%s3948 + $0x54] sm:$0xf]
    %v3971 = vld [vmem:[%s3948 + $0x58] sm:$0xf]
    %v3972 = vld [vmem:[%s3948 + $0x5c] sm:$0xf]
    %v3973 = vld [vmem:[%s3948 + $0x60] sm:$0xf]
    %v3974 = vld [vmem:[%s3948 + $0x64] sm:$0xf]
    %v3975 = vld [vmem:[%s3948 + $0x68] sm:$0xf]
    %v3976 = vld [vmem:[%s3948 + $0x6c] sm:$0xf]
    %v3977 = vld [vmem:[%s3948 + $0x70] sm:$0xf]
    %v3978 = vld [vmem:[%s3948 + $0x74] sm:$0xf]
    %v3979 = vld [vmem:[%s3948 + $0x78] sm:$0xf]
    %v3980 = vld [vmem:[%s3948 + $0x7c] sm:$0xf]
    %v3981 = vld [vmem:[%s3948 + $0x80] sm:$0xf]
    %v3982 = vld [vmem:[%s3948 + $0x84] sm:$0xf]
    %v3983 = vld [vmem:[%s3948 + $0x88] sm:$0xf]
    %v3984 = vld [vmem:[%s3948 + $0x8c] sm:$0xf]
    %v3985 = vld [vmem:[%s3948 + $0x90] sm:$0xf]
    %v3986 = vld [vmem:[%s3948 + $0x94] sm:$0xf]
    %v3987 = vld [vmem:[%s3948 + $0x98] sm:$0xf]
    %v3988 = vld [vmem:[%s3948 + $0x9c] sm:$0xf]
    %v3989 = vld [vmem:[%s3948 + $0xa0] sm:$0xf]
    %v3990 = vld [vmem:[%s3948 + $0xa4] sm:$0xf]
    %v3991 = vld [vmem:[%s3948 + $0xa8] sm:$0xf]
    %v3992 = vld [vmem:[%s3948 + $0xac] sm:$0xf]
    %v3993 = vld [vmem:[%s3948 + $0xb0] sm:$0xf]
    %v3994 = vld [vmem:[%s3948 + $0xb4] sm:$0xf]
    %v3995 = vld [vmem:[%s3948 + $0xb8] sm:$0xf]
    %v3996 = vld [vmem:[%s3948 + $0xbc] sm:$0xf]
    %v3997 = vld [vmem:[%s3948 + $0xc0] sm:$0xf]
    %v3998 = vld [vmem:[%s3948 + $0xc4] sm:$0xf]
    %v3999 = vld [vmem:[%s3948 + $0xc8] sm:$0xf]
    %v4000 = vld [vmem:[%s3948 + $0xcc] sm:$0xf]
    %v4001 = vld [vmem:[%s3948 + $0xd0] sm:$0xf]
    %v4002 = vld [vmem:[%s3948 + $0xd4] sm:$0xf]
    %v4003 = vld [vmem:[%s3948 + $0xd8] sm:$0xf]
    %v4004 = vld [vmem:[%s3948 + $0xdc] sm:$0xf]
    %v4005 = vld [vmem:[%s3948 + $0xe0] sm:$0xf]
    %v4006 = vld [vmem:[%s3948 + $0xe4] sm:$0xf]
    %v4007 = vld [vmem:[%s3948 + $0xe8] sm:$0xf]
    %v4008 = vld [vmem:[%s3948 + $0xec] sm:$0xf]
    %v4009 = vld [vmem:[%s3948 + $0xf0] sm:$0xf]
    %v4010 = vld [vmem:[%s3948 + $0xf4] sm:$0xf]
    %v4011 = vld [vmem:[%s3948 + $0xf8] sm:$0xf]
    %v4012 = vld [vmem:[%s3948 + $0xfc] sm:$0xf]
    %v4013 = vpack.c.bf16 %v3944, %v3944
    %v4014 = vpack.c.bf16 %v3945, %v3945
    %v4015 = vpack.c.bf16 %v3946, %v3946
    %v4016 = vpack.c.bf16 %v3947, %v3947
    %v4017 = vperm.slane %v3686, 0
    %v4082 = vunpack.c.l.b16 %v3949
    %v4083 = vunpack.c.l.b16 %v3950
    %v4084 = vunpack.c.l.b16 %v3951
    %v4085 = vunpack.c.l.b16 %v3952
    %v4086 = vunpack.c.l.b16 %v3953
    %v4087 = vunpack.c.l.b16 %v3954
    %v4088 = vunpack.c.l.b16 %v3955
    %v4089 = vunpack.c.l.b16 %v3956
    %v4090 = vunpack.c.l.b16 %v3957
    %v4091 = vunpack.c.l.b16 %v3958
    %v4092 = vunpack.c.l.b16 %v3959
    %v4093 = vunpack.c.l.b16 %v3960
    %v4094 = vunpack.c.l.b16 %v3961
    %v4095 = vunpack.c.l.b16 %v3962
    %v4096 = vunpack.c.l.b16 %v3963
    %v4097 = vunpack.c.l.b16 %v3964
    %v4098 = vunpack.c.l.b16 %v3965
    %v4099 = vunpack.c.l.b16 %v3966
    %v4100 = vunpack.c.l.b16 %v3967
    %v4101 = vunpack.c.l.b16 %v3968
    %v4102 = vunpack.c.l.b16 %v3969
    %v4103 = vunpack.c.l.b16 %v3970
    %v4104 = vunpack.c.l.b16 %v3971
    %v4105 = vunpack.c.l.b16 %v3972
    %v4106 = vunpack.c.l.b16 %v3973
    %v4107 = vunpack.c.l.b16 %v3974
    %v4108 = vunpack.c.l.b16 %v3975
    %v4109 = vunpack.c.l.b16 %v3976
    %v4110 = vunpack.c.l.b16 %v3977
    %v4111 = vunpack.c.l.b16 %v3978
    %v4112 = vunpack.c.l.b16 %v3979
    %v4113 = vunpack.c.l.b16 %v3980
    %v4114 = vunpack.c.l.b16 %v3981
    %v4115 = vunpack.c.l.b16 %v3982
    %v4116 = vunpack.c.l.b16 %v3983
    %v4117 = vunpack.c.l.b16 %v3984
    %v4118 = vunpack.c.l.b16 %v3985
    %v4119 = vunpack.c.l.b16 %v3986
    %v4120 = vunpack.c.l.b16 %v3987
    %v4121 = vunpack.c.l.b16 %v3988
    %v4122 = vunpack.c.l.b16 %v3989
    %v4123 = vunpack.c.l.b16 %v3990
    %v4124 = vunpack.c.l.b16 %v3991
    %v4125 = vunpack.c.l.b16 %v3992
    %v4126 = vunpack.c.l.b16 %v3993
    %v4127 = vunpack.c.l.b16 %v3994
    %v4128 = vunpack.c.l.b16 %v3995
    %v4129 = vunpack.c.l.b16 %v3996
    %v4130 = vunpack.c.l.b16 %v3997
    %v4131 = vunpack.c.l.b16 %v3998
    %v4132 = vunpack.c.l.b16 %v3999
    %v4133 = vunpack.c.l.b16 %v4000
    %v4134 = vunpack.c.l.b16 %v4001
    %v4135 = vunpack.c.l.b16 %v4002
    %v4136 = vunpack.c.l.b16 %v4003
    %v4137 = vunpack.c.l.b16 %v4004
    %v4138 = vunpack.c.l.b16 %v4005
    %v4139 = vunpack.c.l.b16 %v4006
    %v4140 = vunpack.c.l.b16 %v4007
    %v4141 = vunpack.c.l.b16 %v4008
    %v4142 = vunpack.c.l.b16 %v4009
    %v4143 = vunpack.c.l.b16 %v4010
    %v4144 = vunpack.c.l.b16 %v4011
    %v4145 = vunpack.c.l.b16 %v4012
    %v4146 = vpack.c.b16 %v4083, %v4082
    %v4147 = vpack.c.b16 %v4085, %v4084
    %v4148 = vpack.c.b16 %v4087, %v4086
    %v4149 = vpack.c.b16 %v4089, %v4088
    %v4150 = vpack.c.b16 %v4091, %v4090
    %v4151 = vpack.c.b16 %v4093, %v4092
    %v4152 = vpack.c.b16 %v4095, %v4094
    %v4153 = vpack.c.b16 %v4097, %v4096
    %v4154 = vpack.c.b16 %v4099, %v4098
    %v4155 = vpack.c.b16 %v4101, %v4100
    %v4156 = vpack.c.b16 %v4103, %v4102
    %v4157 = vpack.c.b16 %v4105, %v4104
    %v4158 = vpack.c.b16 %v4107, %v4106
    %v4159 = vpack.c.b16 %v4109, %v4108
    %v4160 = vpack.c.b16 %v4111, %v4110
    %v4161 = vpack.c.b16 %v4113, %v4112
    %v4162 = vpack.c.b16 %v4115, %v4114
    %v4163 = vpack.c.b16 %v4117, %v4116
    %v4164 = vpack.c.b16 %v4119, %v4118
    %v4165 = vpack.c.b16 %v4121, %v4120
    %v4166 = vpack.c.b16 %v4123, %v4122
    %v4167 = vpack.c.b16 %v4125, %v4124
    %v4168 = vpack.c.b16 %v4127, %v4126
    %v4169 = vpack.c.b16 %v4129, %v4128
    %v4170 = vpack.c.b16 %v4131, %v4130
    %v4171 = vpack.c.b16 %v4133, %v4132
    %v4172 = vpack.c.b16 %v4135, %v4134
    %v4173 = vpack.c.b16 %v4137, %v4136
    %v4174 = vpack.c.b16 %v4139, %v4138
    %v4175 = vpack.c.b16 %v4141, %v4140
    %v4176 = vpack.c.b16 %v4143, %v4142
    %v4177 = vpack.c.b16 %v4145, %v4144
    %4210 = vmatpush.bf16.msra.mxu0 %v4153
    %4211 = vmatpush.bf16.msra.mxu0 %v4152
    %4212 = vmatpush.bf16.msra.mxu0 %v4151
    %4213 = vmatpush.bf16.msra.mxu0 %v4150
    %4214 = vmatpush.bf16.msra.mxu0 %v4149
    %4215 = vmatpush.bf16.msra.mxu0 %v4148
    %4216 = vmatpush.bf16.msra.mxu0 %v4147
    %4217 = vmatpush.bf16.msra.mxu0 %v4146
    %4218 = vmatmul.bf16.gmra.mxu0 %v4013
    %v4219 = vpop.f32.mrf.mxu0
    %v4220 = vadd.f32 %v4017, %v4219
    %v4221 = vpop.f32.mrf.mxu0
    %4222 = vdwg.mxu0
    %4223 = vmatpush.bf16.msra.mxu0 %v4161
    %4224 = vmatpush.bf16.msra.mxu0 %v4160
    %4225 = vmatpush.bf16.msra.mxu0 %v4159
    %4226 = vmatpush.bf16.msra.mxu0 %v4158
    %4227 = vmatpush.bf16.msra.mxu0 %v4157
    %4228 = vmatpush.bf16.msra.mxu0 %v4156
    %4229 = vmatpush.bf16.msra.mxu0 %v4155
    %4230 = vmatpush.bf16.msra.mxu0 %v4154
    %4231 = vmatmul.bf16.gmra.mxu0 %v4014
    %v4232 = vpop.f32.mrf.mxu0
    %v4233 = vadd.f32 %v4220, %v4232
    %v4234 = vpop.f32.mrf.mxu0
    %4235 = vdwg.mxu0
    %4236 = vmatpush.bf16.msra.mxu0 %v4169
    %4237 = vmatpush.bf16.msra.mxu0 %v4168
    %4238 = vmatpush.bf16.msra.mxu0 %v4167
    %4239 = vmatpush.bf16.msra.mxu0 %v4166
    %4240 = vmatpush.bf16.msra.mxu0 %v4165
    %4241 = vmatpush.bf16.msra.mxu0 %v4164
    %4242 = vmatpush.bf16.msra.mxu0 %v4163
    %4243 = vmatpush.bf16.msra.mxu0 %v4162
    %4244 = vmatmul.bf16.gmra.mxu0 %v4015
    %v4245 = vpop.f32.mrf.mxu0
    %v4246 = vadd.f32 %v4233, %v4245
    %v4247 = vpop.f32.mrf.mxu0
    %4248 = vdwg.mxu0
    %4249 = vmatpush.bf16.msra.mxu0 %v4177
    %4250 = vmatpush.bf16.msra.mxu0 %v4176
    %4251 = vmatpush.bf16.msra.mxu0 %v4175
    %4252 = vmatpush.bf16.msra.mxu0 %v4174
    %4253 = vmatpush.bf16.msra.mxu0 %v4173
    %4254 = vmatpush.bf16.msra.mxu0 %v4172
    %4255 = vmatpush.bf16.msra.mxu0 %v4171
    %4256 = vmatpush.bf16.msra.mxu0 %v4170
    %4257 = vmatmul.bf16.gmra.mxu0 %v4016
    %v4258 = vpop.f32.mrf.mxu0
    %v4259 = vadd.f32 %v4246, %v4258
    %v4260 = vpop.f32.mrf.mxu0
    %4261 = vdwg.mxu0
    %v4262 = vadd.f32 %v3684, %v4259
    %4263 = vadd.xlane.f32.xlu0 %v4262
    %v4264 = vpop.xlane.xlu0 %4263
    %v4265 = vmul.f32 %v4264, %v625
    %v4266 = vsub.f32 %v4262, %v4265
    %v4267 = vmul.f32 %v4266, %v4266
    %4268 = vadd.xlane.f32.xlu0 %v4267
    %v4269 = vpop.xlane.xlu0 %4268
    %v4270 = vmul.f32 %v4269, %v625
    %v4271 = vadd.f32 %v4270, 1e-05
    %v4272 = vrsqrt.pop %v4271
    %v4273 = vmul.f32 %v4272, %v4271
    %v4274 = vmul.f32 %v4273, %v4272
    %v4275 = vmul.f32 0.5, %v4274
    %v4276 = vsub.f32 1.5, %v4275
    %v4277 = vmul.f32 %v4272, %v4276
    %vm4278 = vweird.f32 %v4271
    %vm4279 = vweird.f32 %v4272
    %vm4280 = vmor %vm4278, %vm4279
    %v4281 = vsel %vm4280, %v4272, %v4277
    %v4282 = vmul.f32 %v4266, %v4281
    %v4283 = vperm.slane %v3686, 1
    %v4284 = vmul.f32 %v4282, %v4283
    %v4285 = vperm.slane %v3686, 2
    %v4286 = vadd.f32 %v4284, %v4285
    %s4287 = scalar_lea.vmem [#allocation26], 16
    %v4288 = vld [vmem:[%s4287] sm:$0x3f]
    %s4289 = scalar_lea.vmem [#allocation25], 512
    %v4290 = vld [vmem:[%s4289] sm:$0xf]
    %v4291 = vld [vmem:[%s4289 + $0x4] sm:$0xf]
    %v4292 = vld [vmem:[%s4289 + $0x8] sm:$0xf]
    %v4293 = vld [vmem:[%s4289 + $0xc] sm:$0xf]
    %v4294 = vld [vmem:[%s4289 + $0x10] sm:$0xf]
    %v4295 = vld [vmem:[%s4289 + $0x14] sm:$0xf]
    %v4296 = vld [vmem:[%s4289 + $0x18] sm:$0xf]
    %v4297 = vld [vmem:[%s4289 + $0x1c] sm:$0xf]
    %v4298 = vld [vmem:[%s4289 + $0x20] sm:$0xf]
    %v4299 = vld [vmem:[%s4289 + $0x24] sm:$0xf]
    %v4300 = vld [vmem:[%s4289 + $0x28] sm:$0xf]
    %v4301 = vld [vmem:[%s4289 + $0x2c] sm:$0xf]
    %v4302 = vld [vmem:[%s4289 + $0x30] sm:$0xf]
    %v4303 = vld [vmem:[%s4289 + $0x34] sm:$0xf]
    %v4304 = vld [vmem:[%s4289 + $0x38] sm:$0xf]
    %v4305 = vld [vmem:[%s4289 + $0x3c] sm:$0xf]
    %s4306 = scalar_lea.vmem [#allocation25], 576
    %v4307 = vld [vmem:[%s4306] sm:$0xf]
    %v4308 = vld [vmem:[%s4306 + $0x4] sm:$0xf]
    %v4309 = vld [vmem:[%s4306 + $0x8] sm:$0xf]
    %v4310 = vld [vmem:[%s4306 + $0xc] sm:$0xf]
    %v4311 = vld [vmem:[%s4306 + $0x10] sm:$0xf]
    %v4312 = vld [vmem:[%s4306 + $0x14] sm:$0xf]
    %v4313 = vld [vmem:[%s4306 + $0x18] sm:$0xf]
    %v4314 = vld [vmem:[%s4306 + $0x1c] sm:$0xf]
    %v4315 = vld [vmem:[%s4306 + $0x20] sm:$0xf]
    %v4316 = vld [vmem:[%s4306 + $0x24] sm:$0xf]
    %v4317 = vld [vmem:[%s4306 + $0x28] sm:$0xf]
    %v4318 = vld [vmem:[%s4306 + $0x2c] sm:$0xf]
    %v4319 = vld [vmem:[%s4306 + $0x30] sm:$0xf]
    %v4320 = vld [vmem:[%s4306 + $0x34] sm:$0xf]
    %v4321 = vld [vmem:[%s4306 + $0x38] sm:$0xf]
    %v4322 = vld [vmem:[%s4306 + $0x3c] sm:$0xf]
    %s4323 = scalar_lea.vmem [#allocation25], 640
    %v4324 = vld [vmem:[%s4323] sm:$0xf]
    %v4325 = vld [vmem:[%s4323 + $0x4] sm:$0xf]
    %v4326 = vld [vmem:[%s4323 + $0x8] sm:$0xf]
    %v4327 = vld [vmem:[%s4323 + $0xc] sm:$0xf]
    %v4328 = vld [vmem:[%s4323 + $0x10] sm:$0xf]
    %v4329 = vld [vmem:[%s4323 + $0x14] sm:$0xf]
    %v4330 = vld [vmem:[%s4323 + $0x18] sm:$0xf]
    %v4331 = vld [vmem:[%s4323 + $0x1c] sm:$0xf]
    %v4332 = vld [vmem:[%s4323 + $0x20] sm:$0xf]
    %v4333 = vld [vmem:[%s4323 + $0x24] sm:$0xf]
    %v4334 = vld [vmem:[%s4323 + $0x28] sm:$0xf]
    %v4335 = vld [vmem:[%s4323 + $0x2c] sm:$0xf]
    %v4336 = vld [vmem:[%s4323 + $0x30] sm:$0xf]
    %v4337 = vld [vmem:[%s4323 + $0x34] sm:$0xf]
    %v4338 = vld [vmem:[%s4323 + $0x38] sm:$0xf]
    %v4339 = vld [vmem:[%s4323 + $0x3c] sm:$0xf]
    %s4340 = scalar_lea.vmem [#allocation25], 704
    %v4341 = vld [vmem:[%s4340] sm:$0xf]
    %v4342 = vld [vmem:[%s4340 + $0x4] sm:$0xf]
    %v4343 = vld [vmem:[%s4340 + $0x8] sm:$0xf]
    %v4344 = vld [vmem:[%s4340 + $0xc] sm:$0xf]
    %v4345 = vld [vmem:[%s4340 + $0x10] sm:$0xf]
    %v4346 = vld [vmem:[%s4340 + $0x14] sm:$0xf]
    %v4347 = vld [vmem:[%s4340 + $0x18] sm:$0xf]
    %v4348 = vld [vmem:[%s4340 + $0x1c] sm:$0xf]
    %v4349 = vld [vmem:[%s4340 + $0x20] sm:$0xf]
    %v4350 = vld [vmem:[%s4340 + $0x24] sm:$0xf]
    %v4351 = vld [vmem:[%s4340 + $0x28] sm:$0xf]
    %v4352 = vld [vmem:[%s4340 + $0x2c] sm:$0xf]
    %v4353 = vld [vmem:[%s4340 + $0x30] sm:$0xf]
    %v4354 = vld [vmem:[%s4340 + $0x34] sm:$0xf]
    %v4355 = vld [vmem:[%s4340 + $0x38] sm:$0xf]
    %v4356 = vld [vmem:[%s4340 + $0x3c] sm:$0xf]
    %v4357 = vpack.c.bf16 %v4286, %v4286
    %v4358 = vperm.slane %v4288, 0
    %v4375 = vunpack.c.l.b16 %v4290
    %v4376 = vunpack.c.l.b16 %v4291
    %v4377 = vunpack.c.l.b16 %v4292
    %v4378 = vunpack.c.l.b16 %v4293
    %v4379 = vunpack.c.l.b16 %v4294
    %v4380 = vunpack.c.l.b16 %v4295
    %v4381 = vunpack.c.l.b16 %v4296
    %v4382 = vunpack.c.l.b16 %v4297
    %v4383 = vunpack.c.l.b16 %v4298
    %v4384 = vunpack.c.l.b16 %v4299
    %v4385 = vunpack.c.l.b16 %v4300
    %v4386 = vunpack.c.l.b16 %v4301
    %v4387 = vunpack.c.l.b16 %v4302
    %v4388 = vunpack.c.l.b16 %v4303
    %v4389 = vunpack.c.l.b16 %v4304
    %v4390 = vunpack.c.l.b16 %v4305
    %v4391 = vpack.c.b16 %v4376, %v4375
    %v4392 = vpack.c.b16 %v4378, %v4377
    %v4393 = vpack.c.b16 %v4380, %v4379
    %v4394 = vpack.c.b16 %v4382, %v4381
    %v4395 = vpack.c.b16 %v4384, %v4383
    %v4396 = vpack.c.b16 %v4386, %v4385
    %v4397 = vpack.c.b16 %v4388, %v4387
    %v4398 = vpack.c.b16 %v4390, %v4389
    %4407 = vmatpush.bf16.msra.mxu0 %v4398
    %4408 = vmatpush.bf16.msra.mxu0 %v4397
    %4409 = vmatpush.bf16.msra.mxu0 %v4396
    %4410 = vmatpush.bf16.msra.mxu0 %v4395
    %4411 = vmatpush.bf16.msra.mxu0 %v4394
    %4412 = vmatpush.bf16.msra.mxu0 %v4393
    %4413 = vmatpush.bf16.msra.mxu0 %v4392
    %4414 = vmatpush.bf16.msra.mxu0 %v4391
    %4415 = vmatmul.bf16.gmra.mxu0 %v4357
    %v4416 = vpop.f32.mrf.mxu0
    %v4417 = vadd.f32 %v4358, %v4416
    %v4418 = vpop.f32.mrf.mxu0
    %4419 = vdwg.mxu0
    %v4420 = vperm.slane %v4288, 1
    %v4437 = vunpack.c.l.b16 %v4307
    %v4438 = vunpack.c.l.b16 %v4308
    %v4439 = vunpack.c.l.b16 %v4309
    %v4440 = vunpack.c.l.b16 %v4310
    %v4441 = vunpack.c.l.b16 %v4311
    %v4442 = vunpack.c.l.b16 %v4312
    %v4443 = vunpack.c.l.b16 %v4313
    %v4444 = vunpack.c.l.b16 %v4314
    %v4445 = vunpack.c.l.b16 %v4315
    %v4446 = vunpack.c.l.b16 %v4316
    %v4447 = vunpack.c.l.b16 %v4317
    %v4448 = vunpack.c.l.b16 %v4318
    %v4449 = vunpack.c.l.b16 %v4319
    %v4450 = vunpack.c.l.b16 %v4320
    %v4451 = vunpack.c.l.b16 %v4321
    %v4452 = vunpack.c.l.b16 %v4322
    %v4453 = vpack.c.b16 %v4438, %v4437
    %v4454 = vpack.c.b16 %v4440, %v4439
    %v4455 = vpack.c.b16 %v4442, %v4441
    %v4456 = vpack.c.b16 %v4444, %v4443
    %v4457 = vpack.c.b16 %v4446, %v4445
    %v4458 = vpack.c.b16 %v4448, %v4447
    %v4459 = vpack.c.b16 %v4450, %v4449
    %v4460 = vpack.c.b16 %v4452, %v4451
    %4469 = vmatpush.bf16.msra.mxu0 %v4460
    %4470 = vmatpush.bf16.msra.mxu0 %v4459
    %4471 = vmatpush.bf16.msra.mxu0 %v4458
    %4472 = vmatpush.bf16.msra.mxu0 %v4457
    %4473 = vmatpush.bf16.msra.mxu0 %v4456
    %4474 = vmatpush.bf16.msra.mxu0 %v4455
    %4475 = vmatpush.bf16.msra.mxu0 %v4454
    %4476 = vmatpush.bf16.msra.mxu0 %v4453
    %4477 = vmatmul.bf16.gmra.mxu0 %v1899
    %v4478 = vpop.f32.mrf.mxu0
    %v4479 = vadd.f32 %v4420, %v4478
    %v4480 = vpop.f32.mrf.mxu0
    %v4481 = vadd.f32 %v4420, %v4480
    %4482 = vmatmul.bf16.gmra.mxu0 %v1900
    %v4483 = vpop.f32.mrf.mxu0
    %v4484 = vadd.f32 %v4420, %v4483
    %v4485 = vpop.f32.mrf.mxu0
    %v4486 = vadd.f32 %v4420, %v4485
    %4487 = vdwg.mxu0
    %v4488 = vperm.slane %v4288, 2
    %v4505 = vunpack.c.l.b16 %v4324
    %v4506 = vunpack.c.l.b16 %v4325
    %v4507 = vunpack.c.l.b16 %v4326
    %v4508 = vunpack.c.l.b16 %v4327
    %v4509 = vunpack.c.l.b16 %v4328
    %v4510 = vunpack.c.l.b16 %v4329
    %v4511 = vunpack.c.l.b16 %v4330
    %v4512 = vunpack.c.l.b16 %v4331
    %v4513 = vunpack.c.l.b16 %v4332
    %v4514 = vunpack.c.l.b16 %v4333
    %v4515 = vunpack.c.l.b16 %v4334
    %v4516 = vunpack.c.l.b16 %v4335
    %v4517 = vunpack.c.l.b16 %v4336
    %v4518 = vunpack.c.l.b16 %v4337
    %v4519 = vunpack.c.l.b16 %v4338
    %v4520 = vunpack.c.l.b16 %v4339
    %v4521 = vpack.c.b16 %v4506, %v4505
    %v4522 = vpack.c.b16 %v4508, %v4507
    %v4523 = vpack.c.b16 %v4510, %v4509
    %v4524 = vpack.c.b16 %v4512, %v4511
    %v4525 = vpack.c.b16 %v4514, %v4513
    %v4526 = vpack.c.b16 %v4516, %v4515
    %v4527 = vpack.c.b16 %v4518, %v4517
    %v4528 = vpack.c.b16 %v4520, %v4519
    %4537 = vmatpush.bf16.msra.mxu0 %v4528
    %4538 = vmatpush.bf16.msra.mxu0 %v4527
    %4539 = vmatpush.bf16.msra.mxu0 %v4526
    %4540 = vmatpush.bf16.msra.mxu0 %v4525
    %4541 = vmatpush.bf16.msra.mxu0 %v4524
    %4542 = vmatpush.bf16.msra.mxu0 %v4523
    %4543 = vmatpush.bf16.msra.mxu0 %v4522
    %4544 = vmatpush.bf16.msra.mxu0 %v4521
    %4545 = vmatmul.bf16.gmra.mxu0 %v1969
    %v4546 = vpop.f32.mrf.mxu0
    %v4547 = vadd.f32 %v4488, %v4546
    %v4548 = vpop.f32.mrf.mxu0
    %v4549 = vadd.f32 %v4488, %v4548
    %4550 = vmatmul.bf16.gmra.mxu0 %v1970
    %v4551 = vpop.f32.mrf.mxu0
    %v4552 = vadd.f32 %v4488, %v4551
    %v4553 = vpop.f32.mrf.mxu0
    %v4554 = vadd.f32 %v4488, %v4553
    %4555 = vdwg.mxu0
    %v4557 = vrot.slane %v4417, 1
    %v4558 = vrot.slane %v4417, 2
    %v4559 = vrot.slane %v4417, 3
    %v4560 = vrot.slane %v4417, 4
    %v4561 = vrot.slane %v4417, 5
    %v4562 = vrot.slane %v4417, 6
    %v4563 = vrot.slane %v4417, 7
    %v4564 = vperm.slane %v4417, 0
    %v4565 = vperm.slane %v4557, 0
    %v4566 = vperm.slane %v4558, 0
    %v4567 = vperm.slane %v4559, 0
    %v4568 = vperm.slane %v4560, 0
    %v4569 = vperm.slane %v4561, 0
    %v4570 = vperm.slane %v4562, 0
    %v4571 = vperm.slane %v4563, 0
    %v4580 = vmul.f32 %v4564, %v1767
    %v4581 = vmul.f32 %v4565, %v1767
    %v4582 = vmul.f32 %v4566, %v1767
    %v4583 = vmul.f32 %v4567, %v1767
    %v4584 = vmul.f32 %v4568, %v1767
    %v4585 = vmul.f32 %v4569, %v1767
    %v4586 = vmul.f32 %v4570, %v1767
    %v4587 = vmul.f32 %v4571, %v1767
    %v4588 = vpack.c.bf16 %v4581, %v4580
    %v4589 = vpack.c.bf16 %v4583, %v4582
    %v4590 = vpack.c.bf16 %v4585, %v4584
    %v4591 = vpack.c.bf16 %v4587, %v4586
    %v4592 = vpack.c.bf16 %v4481, %v4479
    %v4593 = vpack.c.bf16 %v4486, %v4484
    %4594 = vmatpush.bf16.xpose.msra.mxu0 0
    %4595 = vmatpush.bf16.xpose.msra.mxu0 0
    %4596 = vmatpush.bf16.xpose.msra.mxu0 0
    %4597 = vmatpush.bf16.xpose.msra.mxu0 0
    %4598 = vmatpush.bf16.xpose.msra.mxu0 0
    %4599 = vmatpush.bf16.xpose.msra.mxu0 0
    %4600 = vmatpush.bf16.xpose.msra.mxu0 %v4593
    %4601 = vmatpush.bf16.xpose.msra.mxu0 %v4592
    %4602 = vmatmul.bf16.gmra.mxu0 %v4588
    %v4603 = vpop.f32.mrf.mxu0
    %v4604 = vadd.f32 0.0, %v4603
    %v4605 = vpop.f32.mrf.mxu0
    %v4606 = vadd.f32 0.0, %v4605
    %4607 = vmatmul.bf16.gmra.mxu0 %v4589
    %v4608 = vpop.f32.mrf.mxu0
    %v4609 = vadd.f32 0.0, %v4608
    %v4610 = vpop.f32.mrf.mxu0
    %v4611 = vadd.f32 0.0, %v4610
    %4612 = vmatmul.bf16.gmra.mxu0 %v4590
    %v4613 = vpop.f32.mrf.mxu0
    %v4614 = vadd.f32 0.0, %v4613
    %v4615 = vpop.f32.mrf.mxu0
    %v4616 = vadd.f32 0.0, %v4615
    %4617 = vmatmul.bf16.gmra.mxu0 %v4591
    %v4618 = vpop.f32.mrf.mxu0
    %v4619 = vadd.f32 0.0, %v4618
    %v4620 = vpop.f32.mrf.mxu0
    %v4621 = vadd.f32 0.0, %v4620
    %4622 = vdwg.mxu0
    %v4623 = vmul.f32 %v4604, 0.25
    %v4624 = vmul.f32 %v4606, 0.25
    %v4625 = vmul.f32 %v4609, 0.25
    %v4626 = vmul.f32 %v4611, 0.25
    %v4627 = vmul.f32 %v4614, 0.25
    %v4628 = vmul.f32 %v4616, 0.25
    %v4629 = vmul.f32 %v4619, 0.25
    %v4630 = vmul.f32 %v4621, 0.25
    %v4631 = vsel %vm598, %v4623, -inf
    %4632 = vmax.xlane.f32.xlu0 %v4631
    %v4633 = vpop.xlane.xlu0 %4632
    %v4634 = vsel %vm598, %v4624, -inf
    %4635 = vmax.xlane.f32.xlu0 %v4634
    %v4636 = vpop.xlane.xlu0 %4635
    %v4637 = vsel %vm598, %v4625, -inf
    %4638 = vmax.xlane.f32.xlu0 %v4637
    %v4639 = vpop.xlane.xlu0 %4638
    %v4640 = vsel %vm598, %v4626, -inf
    %4641 = vmax.xlane.f32.xlu0 %v4640
    %v4642 = vpop.xlane.xlu0 %4641
    %v4643 = vsel %vm598, %v4627, -inf
    %4644 = vmax.xlane.f32.xlu0 %v4643
    %v4645 = vpop.xlane.xlu0 %4644
    %v4646 = vsel %vm598, %v4628, -inf
    %4647 = vmax.xlane.f32.xlu0 %v4646
    %v4648 = vpop.xlane.xlu0 %4647
    %v4649 = vsel %vm598, %v4629, -inf
    %4650 = vmax.xlane.f32.xlu0 %v4649
    %v4651 = vpop.xlane.xlu0 %4650
    %v4652 = vsel %vm598, %v4630, -inf
    %4653 = vmax.xlane.f32.xlu0 %v4652
    %v4654 = vpop.xlane.xlu0 %4653
    %v4655 = vsub.f32 %v4623, %v4633
    %v4656 = vsub.f32 %v4624, %v4636
    %v4657 = vsub.f32 %v4625, %v4639
    %v4658 = vsub.f32 %v4626, %v4642
    %v4659 = vsub.f32 %v4627, %v4645
    %v4660 = vsub.f32 %v4628, %v4648
    %v4661 = vsub.f32 %v4629, %v4651
    %v4662 = vsub.f32 %v4630, %v4654
    %v4663 = vmul.f32 %v4655, 1.442695
    %v4664 = vpow.pop %v4663
    %v4665 = vmul.f32 %v4656, 1.442695
    %v4666 = vpow.pop %v4665
    %v4667 = vmul.f32 %v4657, 1.442695
    %v4668 = vpow.pop %v4667
    %v4669 = vmul.f32 %v4658, 1.442695
    %v4670 = vpow.pop %v4669
    %v4671 = vmul.f32 %v4659, 1.442695
    %v4672 = vpow.pop %v4671
    %v4673 = vmul.f32 %v4660, 1.442695
    %v4674 = vpow.pop %v4673
    %v4675 = vmul.f32 %v4661, 1.442695
    %v4676 = vpow.pop %v4675
    %v4677 = vmul.f32 %v4662, 1.442695
    %v4678 = vpow.pop %v4677
    %v4679 = vsel %vm598, %v4664, 0.0
    %4680 = vadd.xlane.f32.xlu0 %v4679
    %v4681 = vpop.xlane.xlu0 %4680
    %v4682 = vsel %vm598, %v4666, 0.0
    %4683 = vadd.xlane.f32.xlu0 %v4682
    %v4684 = vpop.xlane.xlu0 %4683
    %v4685 = vsel %vm598, %v4668, 0.0
    %4686 = vadd.xlane.f32.xlu0 %v4685
    %v4687 = vpop.xlane.xlu0 %4686
    %v4688 = vsel %vm598, %v4670, 0.0
    %4689 = vadd.xlane.f32.xlu0 %v4688
    %v4690 = vpop.xlane.xlu0 %4689
    %v4691 = vsel %vm598, %v4672, 0.0
    %4692 = vadd.xlane.f32.xlu0 %v4691
    %v4693 = vpop.xlane.xlu0 %4692
    %v4694 = vsel %vm598, %v4674, 0.0
    %4695 = vadd.xlane.f32.xlu0 %v4694
    %v4696 = vpop.xlane.xlu0 %4695
    %v4697 = vsel %vm598, %v4676, 0.0
    %4698 = vadd.xlane.f32.xlu0 %v4697
    %v4699 = vpop.xlane.xlu0 %4698
    %v4700 = vsel %vm598, %v4678, 0.0
    %4701 = vadd.xlane.f32.xlu0 %v4700
    %v4702 = vpop.xlane.xlu0 %4701
    %v4703 = vrcp.pop %v4681
    %v4704 = vrcp.pop %v4684
    %v4705 = vrcp.pop %v4687
    %v4706 = vrcp.pop %v4690
    %v4707 = vrcp.pop %v4693
    %v4708 = vrcp.pop %v4696
    %v4709 = vrcp.pop %v4699
    %v4710 = vrcp.pop %v4702
    %v4711 = vmul.f32 %v4664, %v4703
    %v4712 = vmul.f32 %v4666, %v4704
    %v4713 = vmul.f32 %v4668, %v4705
    %v4714 = vmul.f32 %v4670, %v4706
    %v4715 = vmul.f32 %v4672, %v4707
    %v4716 = vmul.f32 %v4674, %v4708
    %v4717 = vmul.f32 %v4676, %v4709
    %v4718 = vmul.f32 %v4678, %v4710
    %v4719 = vpack.c.bf16 %v4712, %v4711
    %v4720 = vpack.c.bf16 %v4714, %v4713
    %v4721 = vpack.c.bf16 %v4716, %v4715
    %v4722 = vpack.c.bf16 %v4718, %v4717
    %v4723 = vpack.c.bf16 %v4549, %v4547
    %v4724 = vpack.c.bf16 %v4554, %v4552
    %v4726 = vsel %vm598, %v4719, 0
    %v4729 = vsel %vm598, %v4720, 0
    %v4732 = vsel %vm598, %v4721, 0
    %v4735 = vsel %vm598, %v4722, 0
    %4737 = vmatpush.bf16.msra.mxu0 0
    %4738 = vmatpush.bf16.msra.mxu0 0
    %4739 = vmatpush.bf16.msra.mxu0 0
    %4740 = vmatpush.bf16.msra.mxu0 0
    %4741 = vmatpush.bf16.msra.mxu0 0
    %4742 = vmatpush.bf16.msra.mxu0 0
    %4743 = vmatpush.bf16.msra.mxu0 %v4724
    %4744 = vmatpush.bf16.msra.mxu0 %v4723
    %4745 = vmatmul.bf16.gmra.mxu0 %v4726
    %v4746 = vpop.f32.mrf.mxu0
    %v4747 = vadd.f32 0.0, %v4746
    %v4748 = vpop.f32.mrf.mxu0
    %v4749 = vadd.f32 0.0, %v4748
    %4750 = vmatmul.bf16.gmra.mxu0 %v4729
    %v4751 = vpop.f32.mrf.mxu0
    %v4752 = vadd.f32 0.0, %v4751
    %v4753 = vpop.f32.mrf.mxu0
    %v4754 = vadd.f32 0.0, %v4753
    %4755 = vmatmul.bf16.gmra.mxu0 %v4732
    %v4756 = vpop.f32.mrf.mxu0
    %v4757 = vadd.f32 0.0, %v4756
    %v4758 = vpop.f32.mrf.mxu0
    %v4759 = vadd.f32 0.0, %v4758
    %4760 = vmatmul.bf16.gmra.mxu0 %v4735
    %v4761 = vpop.f32.mrf.mxu0
    %v4762 = vadd.f32 0.0, %v4761
    %v4763 = vpop.f32.mrf.mxu0
    %v4764 = vadd.f32 0.0, %v4763
    %4765 = vdwg.mxu0
    %v4766 = vmul.f32 %v4747, %v1767
    %v4767 = vmul.f32 %v4749, %v1767
    %v4768 = vmul.f32 %v4752, %v1767
    %v4769 = vmul.f32 %v4754, %v1767
    %v4770 = vmul.f32 %v4757, %v1767
    %v4771 = vmul.f32 %v4759, %v1767
    %v4772 = vmul.f32 %v4762, %v1767
    %v4773 = vmul.f32 %v4764, %v1767
    %v4774 = vrot.slane %v4766, 4
    %v4775 = vadd.f32 %v4766, %v4774
    %v4776 = vrot.slane %v4775, 2
    %v4777 = vadd.f32 %v4775, %v4776
    %v4778 = vrot.slane %v4777, 1
    %v4779 = vadd.f32 %v4777, %v4778
    %v4780 = vrot.slane %v4767, 4
    %v4781 = vadd.f32 %v4767, %v4780
    %v4782 = vrot.slane %v4781, 2
    %v4783 = vadd.f32 %v4781, %v4782
    %v4784 = vrot.slane %v4783, 1
    %v4785 = vadd.f32 %v4783, %v4784
    %v4786 = vrot.slane %v4768, 4
    %v4787 = vadd.f32 %v4768, %v4786
    %v4788 = vrot.slane %v4787, 2
    %v4789 = vadd.f32 %v4787, %v4788
    %v4790 = vrot.slane %v4789, 1
    %v4791 = vadd.f32 %v4789, %v4790
    %v4792 = vrot.slane %v4769, 4
    %v4793 = vadd.f32 %v4769, %v4792
    %v4794 = vrot.slane %v4793, 2
    %v4795 = vadd.f32 %v4793, %v4794
    %v4796 = vrot.slane %v4795, 1
    %v4797 = vadd.f32 %v4795, %v4796
    %v4798 = vrot.slane %v4770, 4
    %v4799 = vadd.f32 %v4770, %v4798
    %v4800 = vrot.slane %v4799, 2
    %v4801 = vadd.f32 %v4799, %v4800
    %v4802 = vrot.slane %v4801, 1
    %v4803 = vadd.f32 %v4801, %v4802
    %v4804 = vrot.slane %v4771, 4
    %v4805 = vadd.f32 %v4771, %v4804
    %v4806 = vrot.slane %v4805, 2
    %v4807 = vadd.f32 %v4805, %v4806
    %v4808 = vrot.slane %v4807, 1
    %v4809 = vadd.f32 %v4807, %v4808
    %v4810 = vrot.slane %v4772, 4
    %v4811 = vadd.f32 %v4772, %v4810
    %v4812 = vrot.slane %v4811, 2
    %v4813 = vadd.f32 %v4811, %v4812
    %v4814 = vrot.slane %v4813, 1
    %v4815 = vadd.f32 %v4813, %v4814
    %v4816 = vrot.slane %v4773, 4
    %v4817 = vadd.f32 %v4773, %v4816
    %v4818 = vrot.slane %v4817, 2
    %v4819 = vadd.f32 %v4817, %v4818
    %v4820 = vrot.slane %v4819, 1
    %v4821 = vadd.f32 %v4819, %v4820
    %v4822 = vpack.c.bf16 %v4779, %v4779
    %v4823 = vpack.c.bf16 %v4785, %v4785
    %v4824 = vpack.c.bf16 %v4791, %v4791
    %v4825 = vpack.c.bf16 %v4797, %v4797
    %v4826 = vpack.c.bf16 %v4803, %v4803
    %v4827 = vpack.c.bf16 %v4809, %v4809
    %v4828 = vpack.c.bf16 %v4815, %v4815
    %v4829 = vpack.c.bf16 %v4821, %v4821
    %v4830 = vperm.slane %v4288, 3
    %v4839 = vunpack.c.l.b16 %v4822
    %v4840 = vunpack.c.l.b16 %v4823
    %v4841 = vunpack.c.l.b16 %v4824
    %v4842 = vunpack.c.l.b16 %v4825
    %v4843 = vunpack.c.l.b16 %v4826
    %v4844 = vunpack.c.l.b16 %v4827
    %v4845 = vunpack.c.l.b16 %v4828
    %v4846 = vunpack.c.l.b16 %v4829
    %v4847 = vsel %vm2330, %v4840, %v4839
    %v4848 = vsel %vm2332, %v4841, %v4847
    %v4849 = vsel %vm2334, %v4842, %v4848
    %v4850 = vsel %vm2336, %v4843, %v4849
    %v4851 = vsel %vm2338, %v4844, %v4850
    %v4852 = vsel %vm2340, %v4845, %v4851
    %v4853 = vsel %vm2342, %v4846, %v4852
    %v4854 = vpack.c.b16 %v4853, %v4853
    %v4872 = vunpack.c.l.b16 %v4341
    %v4873 = vunpack.c.l.b16 %v4342
    %v4874 = vunpack.c.l.b16 %v4343
    %v4875 = vunpack.c.l.b16 %v4344
    %v4876 = vunpack.c.l.b16 %v4345
    %v4877 = vunpack.c.l.b16 %v4346
    %v4878 = vunpack.c.l.b16 %v4347
    %v4879 = vunpack.c.l.b16 %v4348
    %v4880 = vunpack.c.l.b16 %v4349
    %v4881 = vunpack.c.l.b16 %v4350
    %v4882 = vunpack.c.l.b16 %v4351
    %v4883 = vunpack.c.l.b16 %v4352
    %v4884 = vunpack.c.l.b16 %v4353
    %v4885 = vunpack.c.l.b16 %v4354
    %v4886 = vunpack.c.l.b16 %v4355
    %v4887 = vunpack.c.l.b16 %v4356
    %v4888 = vpack.c.b16 %v4873, %v4872
    %v4889 = vpack.c.b16 %v4875, %v4874
    %v4890 = vpack.c.b16 %v4877, %v4876
    %v4891 = vpack.c.b16 %v4879, %v4878
    %v4892 = vpack.c.b16 %v4881, %v4880
    %v4893 = vpack.c.b16 %v4883, %v4882
    %v4894 = vpack.c.b16 %v4885, %v4884
    %v4895 = vpack.c.b16 %v4887, %v4886
    %4904 = vmatpush.bf16.msra.mxu0 %v4895
    %4905 = vmatpush.bf16.msra.mxu0 %v4894
    %4906 = vmatpush.bf16.msra.mxu0 %v4893
    %4907 = vmatpush.bf16.msra.mxu0 %v4892
    %4908 = vmatpush.bf16.msra.mxu0 %v4891
    %4909 = vmatpush.bf16.msra.mxu0 %v4890
    %4910 = vmatpush.bf16.msra.mxu0 %v4889
    %4911 = vmatpush.bf16.msra.mxu0 %v4888
    %4912 = vmatmul.bf16.gmra.mxu0 %v4854
    %v4913 = vpop.f32.mrf.mxu0
    %v4914 = vadd.f32 %v4830, %v4913
    %v4915 = vpop.f32.mrf.mxu0
    %4916 = vdwg.mxu0
    %v4917 = vadd.f32 %v4286, %v4914
    %4918 = vadd.xlane.f32.xlu0 %v4917
    %v4919 = vpop.xlane.xlu0 %4918
    %v4920 = vmul.f32 %v4919, %v625
    %v4921 = vsub.f32 %v4917, %v4920
    %v4922 = vmul.f32 %v4921, %v4921
    %4923 = vadd.xlane.f32.xlu0 %v4922
    %v4924 = vpop.xlane.xlu0 %4923
    %v4925 = vmul.f32 %v4924, %v625
    %v4926 = vadd.f32 %v4925, 1e-05
    %v4927 = vrsqrt.pop %v4926
    %v4928 = vmul.f32 %v4927, %v4926
    %v4929 = vmul.f32 %v4928, %v4927
    %v4930 = vmul.f32 0.5, %v4929
    %v4931 = vsub.f32 1.5, %v4930
    %v4932 = vmul.f32 %v4927, %v4931
    %vm4933 = vweird.f32 %v4926
    %vm4934 = vweird.f32 %v4927
    %vm4935 = vmor %vm4933, %vm4934
    %v4936 = vsel %vm4935, %v4927, %v4932
    %v4937 = vmul.f32 %v4921, %v4936
    %v4938 = vperm.slane %v4288, 4
    %v4939 = vmul.f32 %v4937, %v4938
    %v4940 = vperm.slane %v4288, 5
    %v4941 = vadd.f32 %v4939, %v4940
    %s4942 = scalar_lea.vmem %s20, 8
    %v4943 = vld [vmem:[%s4942] sm:$0x7]
    %s4944 = scalar_lea.vmem [#allocation28], 512
    %v4945 = vld [vmem:[%s4944] sm:$0xff]
    %v4946 = vld [vmem:[%s4944 + $0x8] sm:$0xff]
    %v4947 = vld [vmem:[%s4944 + $0x10] sm:$0xff]
    %v4948 = vld [vmem:[%s4944 + $0x18] sm:$0xff]
    %v4949 = vld [vmem:[%s4944 + $0x20] sm:$0xff]
    %v4950 = vld [vmem:[%s4944 + $0x28] sm:$0xff]
    %v4951 = vld [vmem:[%s4944 + $0x30] sm:$0xff]
    %v4952 = vld [vmem:[%s4944 + $0x38] sm:$0xff]
    %v4953 = vld [vmem:[%s4944 + $0x40] sm:$0xff]
    %v4954 = vld [vmem:[%s4944 + $0x48] sm:$0xff]
    %v4955 = vld [vmem:[%s4944 + $0x50] sm:$0xff]
    %v4956 = vld [vmem:[%s4944 + $0x58] sm:$0xff]
    %v4957 = vld [vmem:[%s4944 + $0x60] sm:$0xff]
    %v4958 = vld [vmem:[%s4944 + $0x68] sm:$0xff]
    %v4959 = vld [vmem:[%s4944 + $0x70] sm:$0xff]
    %v4960 = vld [vmem:[%s4944 + $0x78] sm:$0xff]
    %v4961 = vld [vmem:[%s4944 + $0x80] sm:$0xff]
    %v4962 = vld [vmem:[%s4944 + $0x88] sm:$0xff]
    %v4963 = vld [vmem:[%s4944 + $0x90] sm:$0xff]
    %v4964 = vld [vmem:[%s4944 + $0x98] sm:$0xff]
    %v4965 = vld [vmem:[%s4944 + $0xa0] sm:$0xff]
    %v4966 = vld [vmem:[%s4944 + $0xa8] sm:$0xff]
    %v4967 = vld [vmem:[%s4944 + $0xb0] sm:$0xff]
    %v4968 = vld [vmem:[%s4944 + $0xb8] sm:$0xff]
    %v4969 = vld [vmem:[%s4944 + $0xc0] sm:$0xff]
    %v4970 = vld [vmem:[%s4944 + $0xc8] sm:$0xff]
    %v4971 = vld [vmem:[%s4944 + $0xd0] sm:$0xff]
    %v4972 = vld [vmem:[%s4944 + $0xd8] sm:$0xff]
    %v4973 = vld [vmem:[%s4944 + $0xe0] sm:$0xff]
    %v4974 = vld [vmem:[%s4944 + $0xe8] sm:$0xff]
    %v4975 = vld [vmem:[%s4944 + $0xf0] sm:$0xff]
    %v4976 = vld [vmem:[%s4944 + $0xf8] sm:$0xff]
    %v4977 = vpack.c.bf16 %v4941, %v4941
    %s4978 = scalar_lea.vmem [#allocation29], 8
    %v4979 = vld [vmem:[%s4978] sm:$0xf]
    %v4981 = vperm.slane %v4979, 0
    %v4982 = vperm.slane %v4979, 1
    %v4983 = vperm.slane %v4979, 2
    %v4984 = vperm.slane %v4979, 3
    %v5021 = vunpack.c.l.b16 %v4945
    %v5022 = vunpack.c.h.b16 %v4945
    %v5023 = vunpack.c.l.b16 %v4946
    %v5024 = vunpack.c.h.b16 %v4946
    %v5025 = vunpack.c.l.b16 %v4947
    %v5026 = vunpack.c.h.b16 %v4947
    %v5027 = vunpack.c.l.b16 %v4948
    %v5028 = vunpack.c.h.b16 %v4948
    %v5029 = vunpack.c.l.b16 %v4949
    %v5030 = vunpack.c.h.b16 %v4949
    %v5031 = vunpack.c.l.b16 %v4950
    %v5032 = vunpack.c.h.b16 %v4950
    %v5033 = vunpack.c.l.b16 %v4951
    %v5034 = vunpack.c.h.b16 %v4951
    %v5035 = vunpack.c.l.b16 %v4952
    %v5036 = vunpack.c.h.b16 %v4952
    %v5037 = vunpack.c.l.b16 %v4953
    %v5038 = vunpack.c.h.b16 %v4953
    %v5039 = vunpack.c.l.b16 %v4954
    %v5040 = vunpack.c.h.b16 %v4954
    %v5041 = vunpack.c.l.b16 %v4955
    %v5042 = vunpack.c.h.b16 %v4955
    %v5043 = vunpack.c.l.b16 %v4956
    %v5044 = vunpack.c.h.b16 %v4956
    %v5045 = vunpack.c.l.b16 %v4957
    %v5046 = vunpack.c.h.b16 %v4957
    %v5047 = vunpack.c.l.b16 %v4958
    %v5048 = vunpack.c.h.b16 %v4958
    %v5049 = vunpack.c.l.b16 %v4959
    %v5050 = vunpack.c.h.b16 %v4959
    %v5051 = vunpack.c.l.b16 %v4960
    %v5052 = vunpack.c.h.b16 %v4960
    %v5053 = vunpack.c.l.b16 %v4961
    %v5054 = vunpack.c.h.b16 %v4961
    %v5055 = vunpack.c.l.b16 %v4962
    %v5056 = vunpack.c.h.b16 %v4962
    %v5057 = vunpack.c.l.b16 %v4963
    %v5058 = vunpack.c.h.b16 %v4963
    %v5059 = vunpack.c.l.b16 %v4964
    %v5060 = vunpack.c.h.b16 %v4964
    %v5061 = vunpack.c.l.b16 %v4965
    %v5062 = vunpack.c.h.b16 %v4965
    %v5063 = vunpack.c.l.b16 %v4966
    %v5064 = vunpack.c.h.b16 %v4966
    %v5065 = vunpack.c.l.b16 %v4967
    %v5066 = vunpack.c.h.b16 %v4967
    %v5067 = vunpack.c.l.b16 %v4968
    %v5068 = vunpack.c.h.b16 %v4968
    %v5069 = vunpack.c.l.b16 %v4969
    %v5070 = vunpack.c.h.b16 %v4969
    %v5071 = vunpack.c.l.b16 %v4970
    %v5072 = vunpack.c.h.b16 %v4970
    %v5073 = vunpack.c.l.b16 %v4971
    %v5074 = vunpack.c.h.b16 %v4971
    %v5075 = vunpack.c.l.b16 %v4972
    %v5076 = vunpack.c.h.b16 %v4972
    %v5077 = vunpack.c.l.b16 %v4973
    %v5078 = vunpack.c.h.b16 %v4973
    %v5079 = vunpack.c.l.b16 %v4974
    %v5080 = vunpack.c.h.b16 %v4974
    %v5081 = vunpack.c.l.b16 %v4975
    %v5082 = vunpack.c.h.b16 %v4975
    %v5083 = vunpack.c.l.b16 %v4976
    %v5084 = vunpack.c.h.b16 %v4976
    %v5085 = vpack.c.b16 %v5025, %v5021
    %v5086 = vpack.c.b16 %v5026, %v5022
    %v5087 = vpack.c.b16 %v5027, %v5023
    %v5088 = vpack.c.b16 %v5028, %v5024
    %v5089 = vpack.c.b16 %v5033, %v5029
    %v5090 = vpack.c.b16 %v5034, %v5030
    %v5091 = vpack.c.b16 %v5035, %v5031
    %v5092 = vpack.c.b16 %v5036, %v5032
    %v5093 = vpack.c.b16 %v5041, %v5037
    %v5094 = vpack.c.b16 %v5042, %v5038
    %v5095 = vpack.c.b16 %v5043, %v5039
    %v5096 = vpack.c.b16 %v5044, %v5040
    %v5097 = vpack.c.b16 %v5049, %v5045
    %v5098 = vpack.c.b16 %v5050, %v5046
    %v5099 = vpack.c.b16 %v5051, %v5047
    %v5100 = vpack.c.b16 %v5052, %v5048
    %v5101 = vpack.c.b16 %v5057, %v5053
    %v5102 = vpack.c.b16 %v5058, %v5054
    %v5103 = vpack.c.b16 %v5059, %v5055
    %v5104 = vpack.c.b16 %v5060, %v5056
    %v5105 = vpack.c.b16 %v5065, %v5061
    %v5106 = vpack.c.b16 %v5066, %v5062
    %v5107 = vpack.c.b16 %v5067, %v5063
    %v5108 = vpack.c.b16 %v5068, %v5064
    %v5109 = vpack.c.b16 %v5073, %v5069
    %v5110 = vpack.c.b16 %v5074, %v5070
    %v5111 = vpack.c.b16 %v5075, %v5071
    %v5112 = vpack.c.b16 %v5076, %v5072
    %v5113 = vpack.c.b16 %v5081, %v5077
    %v5114 = vpack.c.b16 %v5082, %v5078
    %v5115 = vpack.c.b16 %v5083, %v5079
    %v5116 = vpack.c.b16 %v5084, %v5080
    %5149 = vmatpush.bf16.msra.mxu0 %v5113
    %5150 = vmatpush.bf16.msra.mxu0 %v5109
    %5151 = vmatpush.bf16.msra.mxu0 %v5105
    %5152 = vmatpush.bf16.msra.mxu0 %v5101
    %5153 = vmatpush.bf16.msra.mxu0 %v5097
    %5154 = vmatpush.bf16.msra.mxu0 %v5093
    %5155 = vmatpush.bf16.msra.mxu0 %v5089
    %5156 = vmatpush.bf16.msra.mxu0 %v5085
    %5157 = vmatmul.bf16.gmra.mxu0 %v4977
    %v5158 = vpop.f32.mrf.mxu0
    %v5159 = vadd.f32 %v4981, %v5158
    %v5160 = vpop.f32.mrf.mxu0
    %5161 = vdwg.mxu0
    %5162 = vmatpush.bf16.msra.mxu0 %v5114
    %5163 = vmatpush.bf16.msra.mxu0 %v5110
    %5164 = vmatpush.bf16.msra.mxu0 %v5106
    %5165 = vmatpush.bf16.msra.mxu0 %v5102
    %5166 = vmatpush.bf16.msra.mxu0 %v5098
    %5167 = vmatpush.bf16.msra.mxu0 %v5094
    %5168 = vmatpush.bf16.msra.mxu0 %v5090
    %5169 = vmatpush.bf16.msra.mxu0 %v5086
    %5170 = vmatmul.bf16.gmra.mxu0 %v4977
    %v5171 = vpop.f32.mrf.mxu0
    %v5172 = vadd.f32 %v4982, %v5171
    %v5173 = vpop.f32.mrf.mxu0
    %5174 = vdwg.mxu0
    %5175 = vmatpush.bf16.msra.mxu0 %v5115
    %5176 = vmatpush.bf16.msra.mxu0 %v5111
    %5177 = vmatpush.bf16.msra.mxu0 %v5107
    %5178 = vmatpush.bf16.msra.mxu0 %v5103
    %5179 = vmatpush.bf16.msra.mxu0 %v5099
    %5180 = vmatpush.bf16.msra.mxu0 %v5095
    %5181 = vmatpush.bf16.msra.mxu0 %v5091
    %5182 = vmatpush.bf16.msra.mxu0 %v5087
    %5183 = vmatmul.bf16.gmra.mxu0 %v4977
    %v5184 = vpop.f32.mrf.mxu0
    %v5185 = vadd.f32 %v4983, %v5184
    %v5186 = vpop.f32.mrf.mxu0
    %5187 = vdwg.mxu0
    %5188 = vmatpush.bf16.msra.mxu0 %v5116
    %5189 = vmatpush.bf16.msra.mxu0 %v5112
    %5190 = vmatpush.bf16.msra.mxu0 %v5108
    %5191 = vmatpush.bf16.msra.mxu0 %v5104
    %5192 = vmatpush.bf16.msra.mxu0 %v5100
    %5193 = vmatpush.bf16.msra.mxu0 %v5096
    %5194 = vmatpush.bf16.msra.mxu0 %v5092
    %5195 = vmatpush.bf16.msra.mxu0 %v5088
    %5196 = vmatmul.bf16.gmra.mxu0 %v4977
    %v5197 = vpop.f32.mrf.mxu0
    %v5198 = vadd.f32 %v4984, %v5197
    %v5199 = vpop.f32.mrf.mxu0
    %5200 = vdwg.mxu0
    %v5201 = vmax.f32 %v5159, 0.0
    %v5202 = vmax.f32 %v5172, 0.0
    %v5203 = vmax.f32 %v5185, 0.0
    %v5204 = vmax.f32 %v5198, 0.0
    %s5205 = scalar_lea.vmem [#allocation31], 512
    %v5206 = vld [vmem:[%s5205] sm:$0xf]
    %v5207 = vld [vmem:[%s5205 + $0x4] sm:$0xf]
    %v5208 = vld [vmem:[%s5205 + $0x8] sm:$0xf]
    %v5209 = vld [vmem:[%s5205 + $0xc] sm:$0xf]
    %v5210 = vld [vmem:[%s5205 + $0x10] sm:$0xf]
    %v5211 = vld [vmem:[%s5205 + $0x14] sm:$0xf]
    %v5212 = vld [vmem:[%s5205 + $0x18] sm:$0xf]
    %v5213 = vld [vmem:[%s5205 + $0x1c] sm:$0xf]
    %v5214 = vld [vmem:[%s5205 + $0x20] sm:$0xf]
    %v5215 = vld [vmem:[%s5205 + $0x24] sm:$0xf]
    %v5216 = vld [vmem:[%s5205 + $0x28] sm:$0xf]
    %v5217 = vld [vmem:[%s5205 + $0x2c] sm:$0xf]
    %v5218 = vld [vmem:[%s5205 + $0x30] sm:$0xf]
    %v5219 = vld [vmem:[%s5205 + $0x34] sm:$0xf]
    %v5220 = vld [vmem:[%s5205 + $0x38] sm:$0xf]
    %v5221 = vld [vmem:[%s5205 + $0x3c] sm:$0xf]
    %v5222 = vld [vmem:[%s5205 + $0x40] sm:$0xf]
    %v5223 = vld [vmem:[%s5205 + $0x44] sm:$0xf]
    %v5224 = vld [vmem:[%s5205 + $0x48] sm:$0xf]
    %v5225 = vld [vmem:[%s5205 + $0x4c] sm:$0xf]
    %v5226 = vld [vmem:[%s5205 + $0x50] sm:$0xf]
    %v5227 = vld [vmem:[%s5205 + $0x54] sm:$0xf]
    %v5228 = vld [vmem:[%s5205 + $0x58] sm:$0xf]
    %v5229 = vld [vmem:[%s5205 + $0x5c] sm:$0xf]
    %v5230 = vld [vmem:[%s5205 + $0x60] sm:$0xf]
    %v5231 = vld [vmem:[%s5205 + $0x64] sm:$0xf]
    %v5232 = vld [vmem:[%s5205 + $0x68] sm:$0xf]
    %v5233 = vld [vmem:[%s5205 + $0x6c] sm:$0xf]
    %v5234 = vld [vmem:[%s5205 + $0x70] sm:$0xf]
    %v5235 = vld [vmem:[%s5205 + $0x74] sm:$0xf]
    %v5236 = vld [vmem:[%s5205 + $0x78] sm:$0xf]
    %v5237 = vld [vmem:[%s5205 + $0x7c] sm:$0xf]
    %v5238 = vld [vmem:[%s5205 + $0x80] sm:$0xf]
    %v5239 = vld [vmem:[%s5205 + $0x84] sm:$0xf]
    %v5240 = vld [vmem:[%s5205 + $0x88] sm:$0xf]
    %v5241 = vld [vmem:[%s5205 + $0x8c] sm:$0xf]
    %v5242 = vld [vmem:[%s5205 + $0x90] sm:$0xf]
    %v5243 = vld [vmem:[%s5205 + $0x94] sm:$0xf]
    %v5244 = vld [vmem:[%s5205 + $0x98] sm:$0xf]
    %v5245 = vld [vmem:[%s5205 + $0x9c] sm:$0xf]
    %v5246 = vld [vmem:[%s5205 + $0xa0] sm:$0xf]
    %v5247 = vld [vmem:[%s5205 + $0xa4] sm:$0xf]
    %v5248 = vld [vmem:[%s5205 + $0xa8] sm:$0xf]
    %v5249 = vld [vmem:[%s5205 + $0xac] sm:$0xf]
    %v5250 = vld [vmem:[%s5205 + $0xb0] sm:$0xf]
    %v5251 = vld [vmem:[%s5205 + $0xb4] sm:$0xf]
    %v5252 = vld [vmem:[%s5205 + $0xb8] sm:$0xf]
    %v5253 = vld [vmem:[%s5205 + $0xbc] sm:$0xf]
    %v5254 = vld [vmem:[%s5205 + $0xc0] sm:$0xf]
    %v5255 = vld [vmem:[%s5205 + $0xc4] sm:$0xf]
    %v5256 = vld [vmem:[%s5205 + $0xc8] sm:$0xf]
    %v5257 = vld [vmem:[%s5205 + $0xcc] sm:$0xf]
    %v5258 = vld [vmem:[%s5205 + $0xd0] sm:$0xf]
    %v5259 = vld [vmem:[%s5205 + $0xd4] sm:$0xf]
    %v5260 = vld [vmem:[%s5205 + $0xd8] sm:$0xf]
    %v5261 = vld [vmem:[%s5205 + $0xdc] sm:$0xf]
    %v5262 = vld [vmem:[%s5205 + $0xe0] sm:$0xf]
    %v5263 = vld [vmem:[%s5205 + $0xe4] sm:$0xf]
    %v5264 = vld [vmem:[%s5205 + $0xe8] sm:$0xf]
    %v5265 = vld [vmem:[%s5205 + $0xec] sm:$0xf]
    %v5266 = vld [vmem:[%s5205 + $0xf0] sm:$0xf]
    %v5267 = vld [vmem:[%s5205 + $0xf4] sm:$0xf]
    %v5268 = vld [vmem:[%s5205 + $0xf8] sm:$0xf]
    %v5269 = vld [vmem:[%s5205 + $0xfc] sm:$0xf]
    %v5270 = vpack.c.bf16 %v5201, %v5201
    %v5271 = vpack.c.bf16 %v5202, %v5202
    %v5272 = vpack.c.bf16 %v5203, %v5203
    %v5273 = vpack.c.bf16 %v5204, %v5204
    %v5274 = vperm.slane %v4943, 0
    %v5339 = vunpack.c.l.b16 %v5206
    %v5340 = vunpack.c.l.b16 %v5207
    %v5341 = vunpack.c.l.b16 %v5208
    %v5342 = vunpack.c.l.b16 %v5209
    %v5343 = vunpack.c.l.b16 %v5210
    %v5344 = vunpack.c.l.b16 %v5211
    %v5345 = vunpack.c.l.b16 %v5212
    %v5346 = vunpack.c.l.b16 %v5213
    %v5347 = vunpack.c.l.b16 %v5214
    %v5348 = vunpack.c.l.b16 %v5215
    %v5349 = vunpack.c.l.b16 %v5216
    %v5350 = vunpack.c.l.b16 %v5217
    %v5351 = vunpack.c.l.b16 %v5218
    %v5352 = vunpack.c.l.b16 %v5219
    %v5353 = vunpack.c.l.b16 %v5220
    %v5354 = vunpack.c.l.b16 %v5221
    %v5355 = vunpack.c.l.b16 %v5222
    %v5356 = vunpack.c.l.b16 %v5223
    %v5357 = vunpack.c.l.b16 %v5224
    %v5358 = vunpack.c.l.b16 %v5225
    %v5359 = vunpack.c.l.b16 %v5226
    %v5360 = vunpack.c.l.b16 %v5227
    %v5361 = vunpack.c.l.b16 %v5228
    %v5362 = vunpack.c.l.b16 %v5229
    %v5363 = vunpack.c.l.b16 %v5230
    %v5364 = vunpack.c.l.b16 %v5231
    %v5365 = vunpack.c.l.b16 %v5232
    %v5366 = vunpack.c.l.b16 %v5233
    %v5367 = vunpack.c.l.b16 %v5234
    %v5368 = vunpack.c.l.b16 %v5235
    %v5369 = vunpack.c.l.b16 %v5236
    %v5370 = vunpack.c.l.b16 %v5237
    %v5371 = vunpack.c.l.b16 %v5238
    %v5372 = vunpack.c.l.b16 %v5239
    %v5373 = vunpack.c.l.b16 %v5240
    %v5374 = vunpack.c.l.b16 %v5241
    %v5375 = vunpack.c.l.b16 %v5242
    %v5376 = vunpack.c.l.b16 %v5243
    %v5377 = vunpack.c.l.b16 %v5244
    %v5378 = vunpack.c.l.b16 %v5245
    %v5379 = vunpack.c.l.b16 %v5246
    %v5380 = vunpack.c.l.b16 %v5247
    %v5381 = vunpack.c.l.b16 %v5248
    %v5382 = vunpack.c.l.b16 %v5249
    %v5383 = vunpack.c.l.b16 %v5250
    %v5384 = vunpack.c.l.b16 %v5251
    %v5385 = vunpack.c.l.b16 %v5252
    %v5386 = vunpack.c.l.b16 %v5253
    %v5387 = vunpack.c.l.b16 %v5254
    %v5388 = vunpack.c.l.b16 %v5255
    %v5389 = vunpack.c.l.b16 %v5256
    %v5390 = vunpack.c.l.b16 %v5257
    %v5391 = vunpack.c.l.b16 %v5258
    %v5392 = vunpack.c.l.b16 %v5259
    %v5393 = vunpack.c.l.b16 %v5260
    %v5394 = vunpack.c.l.b16 %v5261
    %v5395 = vunpack.c.l.b16 %v5262
    %v5396 = vunpack.c.l.b16 %v5263
    %v5397 = vunpack.c.l.b16 %v5264
    %v5398 = vunpack.c.l.b16 %v5265
    %v5399 = vunpack.c.l.b16 %v5266
    %v5400 = vunpack.c.l.b16 %v5267
    %v5401 = vunpack.c.l.b16 %v5268
    %v5402 = vunpack.c.l.b16 %v5269
    %v5403 = vpack.c.b16 %v5340, %v5339
    %v5404 = vpack.c.b16 %v5342, %v5341
    %v5405 = vpack.c.b16 %v5344, %v5343
    %v5406 = vpack.c.b16 %v5346, %v5345
    %v5407 = vpack.c.b16 %v5348, %v5347
    %v5408 = vpack.c.b16 %v5350, %v5349
    %v5409 = vpack.c.b16 %v5352, %v5351
    %v5410 = vpack.c.b16 %v5354, %v5353
    %v5411 = vpack.c.b16 %v5356, %v5355
    %v5412 = vpack.c.b16 %v5358, %v5357
    %v5413 = vpack.c.b16 %v5360, %v5359
    %v5414 = vpack.c.b16 %v5362, %v5361
    %v5415 = vpack.c.b16 %v5364, %v5363
    %v5416 = vpack.c.b16 %v5366, %v5365
    %v5417 = vpack.c.b16 %v5368, %v5367
    %v5418 = vpack.c.b16 %v5370, %v5369
    %v5419 = vpack.c.b16 %v5372, %v5371
    %v5420 = vpack.c.b16 %v5374, %v5373
    %v5421 = vpack.c.b16 %v5376, %v5375
    %v5422 = vpack.c.b16 %v5378, %v5377
    %v5423 = vpack.c.b16 %v5380, %v5379
    %v5424 = vpack.c.b16 %v5382, %v5381
    %v5425 = vpack.c.b16 %v5384, %v5383
    %v5426 = vpack.c.b16 %v5386, %v5385
    %v5427 = vpack.c.b16 %v5388, %v5387
    %v5428 = vpack.c.b16 %v5390, %v5389
    %v5429 = vpack.c.b16 %v5392, %v5391
    %v5430 = vpack.c.b16 %v5394, %v5393
    %v5431 = vpack.c.b16 %v5396, %v5395
    %v5432 = vpack.c.b16 %v5398, %v5397
    %v5433 = vpack.c.b16 %v5400, %v5399
    %v5434 = vpack.c.b16 %v5402, %v5401
    %5467 = vmatpush.bf16.msra.mxu0 %v5410
    %5468 = vmatpush.bf16.msra.mxu0 %v5409
    %5469 = vmatpush.bf16.msra.mxu0 %v5408
    %5470 = vmatpush.bf16.msra.mxu0 %v5407
    %5471 = vmatpush.bf16.msra.mxu0 %v5406
    %5472 = vmatpush.bf16.msra.mxu0 %v5405
    %5473 = vmatpush.bf16.msra.mxu0 %v5404
    %5474 = vmatpush.bf16.msra.mxu0 %v5403
    %5475 = vmatmul.bf16.gmra.mxu0 %v5270
    %v5476 = vpop.f32.mrf.mxu0
    %v5477 = vadd.f32 %v5274, %v5476
    %v5478 = vpop.f32.mrf.mxu0
    %5479 = vdwg.mxu0
    %5480 = vmatpush.bf16.msra.mxu0 %v5418
    %5481 = vmatpush.bf16.msra.mxu0 %v5417
    %5482 = vmatpush.bf16.msra.mxu0 %v5416
    %5483 = vmatpush.bf16.msra.mxu0 %v5415
    %5484 = vmatpush.bf16.msra.mxu0 %v5414
    %5485 = vmatpush.bf16.msra.mxu0 %v5413
    %5486 = vmatpush.bf16.msra.mxu0 %v5412
    %5487 = vmatpush.bf16.msra.mxu0 %v5411
    %5488 = vmatmul.bf16.gmra.mxu0 %v5271
    %v5489 = vpop.f32.mrf.mxu0
    %v5490 = vadd.f32 %v5477, %v5489
    %v5491 = vpop.f32.mrf.mxu0
    %5492 = vdwg.mxu0
    %5493 = vmatpush.bf16.msra.mxu0 %v5426
    %5494 = vmatpush.bf16.msra.mxu0 %v5425
    %5495 = vmatpush.bf16.msra.mxu0 %v5424
    %5496 = vmatpush.bf16.msra.mxu0 %v5423
    %5497 = vmatpush.bf16.msra.mxu0 %v5422
    %5498 = vmatpush.bf16.msra.mxu0 %v5421
    %5499 = vmatpush.bf16.msra.mxu0 %v5420
    %5500 = vmatpush.bf16.msra.mxu0 %v5419
    %5501 = vmatmul.bf16.gmra.mxu0 %v5272
    %v5502 = vpop.f32.mrf.mxu0
    %v5503 = vadd.f32 %v5490, %v5502
    %v5504 = vpop.f32.mrf.mxu0
    %5505 = vdwg.mxu0
    %5506 = vmatpush.bf16.msra.mxu0 %v5434
    %5507 = vmatpush.bf16.msra.mxu0 %v5433
    %5508 = vmatpush.bf16.msra.mxu0 %v5432
    %5509 = vmatpush.bf16.msra.mxu0 %v5431
    %5510 = vmatpush.bf16.msra.mxu0 %v5430
    %5511 = vmatpush.bf16.msra.mxu0 %v5429
    %5512 = vmatpush.bf16.msra.mxu0 %v5428
    %5513 = vmatpush.bf16.msra.mxu0 %v5427
    %5514 = vmatmul.bf16.gmra.mxu0 %v5273
    %v5515 = vpop.f32.mrf.mxu0
    %v5516 = vadd.f32 %v5503, %v5515
    %v5517 = vpop.f32.mrf.mxu0
    %5518 = vdwg.mxu0
    %v5519 = vadd.f32 %v4941, %v5516
    %5520 = vadd.xlane.f32.xlu0 %v5519
    %v5521 = vpop.xlane.xlu0 %5520
    %v5522 = vmul.f32 %v5521, %v625
    %v5523 = vsub.f32 %v5519, %v5522
    %v5524 = vmul.f32 %v5523, %v5523
    %5525 = vadd.xlane.f32.xlu0 %v5524
    %v5526 = vpop.xlane.xlu0 %5525
    %v5527 = vmul.f32 %v5526, %v625
    %v5528 = vadd.f32 %v5527, 1e-05
    %v5529 = vrsqrt.pop %v5528
    %v5530 = vmul.f32 %v5529, %v5528
    %v5531 = vmul.f32 %v5530, %v5529
    %v5532 = vmul.f32 0.5, %v5531
    %v5533 = vsub.f32 1.5, %v5532
    %v5534 = vmul.f32 %v5529, %v5533
    %vm5535 = vweird.f32 %v5528
    %vm5536 = vweird.f32 %v5529
    %vm5537 = vmor %vm5535, %vm5536
    %v5538 = vsel %vm5537, %v5529, %v5534
    %v5539 = vmul.f32 %v5523, %v5538
    %v5540 = vperm.slane %v4943, 1
    %v5541 = vmul.f32 %v5539, %v5540
    %v5542 = vperm.slane %v4943, 2
    %v5543 = vadd.f32 %v5541, %v5542
    %s5544 = scalar_lea.vmem [#allocation26], 24
    %v5545 = vld [vmem:[%s5544] sm:$0x3f]
    %s5546 = scalar_lea.vmem [#allocation25], 768
    %v5547 = vld [vmem:[%s5546] sm:$0xf]
    %v5548 = vld [vmem:[%s5546 + $0x4] sm:$0xf]
    %v5549 = vld [vmem:[%s5546 + $0x8] sm:$0xf]
    %v5550 = vld [vmem:[%s5546 + $0xc] sm:$0xf]
    %v5551 = vld [vmem:[%s5546 + $0x10] sm:$0xf]
    %v5552 = vld [vmem:[%s5546 + $0x14] sm:$0xf]
    %v5553 = vld [vmem:[%s5546 + $0x18] sm:$0xf]
    %v5554 = vld [vmem:[%s5546 + $0x1c] sm:$0xf]
    %v5555 = vld [vmem:[%s5546 + $0x20] sm:$0xf]
    %v5556 = vld [vmem:[%s5546 + $0x24] sm:$0xf]
    %v5557 = vld [vmem:[%s5546 + $0x28] sm:$0xf]
    %v5558 = vld [vmem:[%s5546 + $0x2c] sm:$0xf]
    %v5559 = vld [vmem:[%s5546 + $0x30] sm:$0xf]
    %v5560 = vld [vmem:[%s5546 + $0x34] sm:$0xf]
    %v5561 = vld [vmem:[%s5546 + $0x38] sm:$0xf]
    %v5562 = vld [vmem:[%s5546 + $0x3c] sm:$0xf]
    %s5563 = scalar_lea.vmem [#allocation25], 832
    %v5564 = vld [vmem:[%s5563] sm:$0xf]
    %v5565 = vld [vmem:[%s5563 + $0x4] sm:$0xf]
    %v5566 = vld [vmem:[%s5563 + $0x8] sm:$0xf]
    %v5567 = vld [vmem:[%s5563 + $0xc] sm:$0xf]
    %v5568 = vld [vmem:[%s5563 + $0x10] sm:$0xf]
    %v5569 = vld [vmem:[%s5563 + $0x14] sm:$0xf]
    %v5570 = vld [vmem:[%s5563 + $0x18] sm:$0xf]
    %v5571 = vld [vmem:[%s5563 + $0x1c] sm:$0xf]
    %v5572 = vld [vmem:[%s5563 + $0x20] sm:$0xf]
    %v5573 = vld [vmem:[%s5563 + $0x24] sm:$0xf]
    %v5574 = vld [vmem:[%s5563 + $0x28] sm:$0xf]
    %v5575 = vld [vmem:[%s5563 + $0x2c] sm:$0xf]
    %v5576 = vld [vmem:[%s5563 + $0x30] sm:$0xf]
    %v5577 = vld [vmem:[%s5563 + $0x34] sm:$0xf]
    %v5578 = vld [vmem:[%s5563 + $0x38] sm:$0xf]
    %v5579 = vld [vmem:[%s5563 + $0x3c] sm:$0xf]
    %s5580 = scalar_lea.vmem [#allocation25], 896
    %v5581 = vld [vmem:[%s5580] sm:$0xf]
    %v5582 = vld [vmem:[%s5580 + $0x4] sm:$0xf]
    %v5583 = vld [vmem:[%s5580 + $0x8] sm:$0xf]
    %v5584 = vld [vmem:[%s5580 + $0xc] sm:$0xf]
    %v5585 = vld [vmem:[%s5580 + $0x10] sm:$0xf]
    %v5586 = vld [vmem:[%s5580 + $0x14] sm:$0xf]
    %v5587 = vld [vmem:[%s5580 + $0x18] sm:$0xf]
    %v5588 = vld [vmem:[%s5580 + $0x1c] sm:$0xf]
    %v5589 = vld [vmem:[%s5580 + $0x20] sm:$0xf]
    %v5590 = vld [vmem:[%s5580 + $0x24] sm:$0xf]
    %v5591 = vld [vmem:[%s5580 + $0x28] sm:$0xf]
    %v5592 = vld [vmem:[%s5580 + $0x2c] sm:$0xf]
    %v5593 = vld [vmem:[%s5580 + $0x30] sm:$0xf]
    %v5594 = vld [vmem:[%s5580 + $0x34] sm:$0xf]
    %v5595 = vld [vmem:[%s5580 + $0x38] sm:$0xf]
    %v5596 = vld [vmem:[%s5580 + $0x3c] sm:$0xf]
    %s5597 = scalar_lea.vmem [#allocation25], 960
    %v5598 = vld [vmem:[%s5597] sm:$0xf]
    %v5599 = vld [vmem:[%s5597 + $0x4] sm:$0xf]
    %v5600 = vld [vmem:[%s5597 + $0x8] sm:$0xf]
    %v5601 = vld [vmem:[%s5597 + $0xc] sm:$0xf]
    %v5602 = vld [vmem:[%s5597 + $0x10] sm:$0xf]
    %v5603 = vld [vmem:[%s5597 + $0x14] sm:$0xf]
    %v5604 = vld [vmem:[%s5597 + $0x18] sm:$0xf]
    %v5605 = vld [vmem:[%s5597 + $0x1c] sm:$0xf]
    %v5606 = vld [vmem:[%s5597 + $0x20] sm:$0xf]
    %v5607 = vld [vmem:[%s5597 + $0x24] sm:$0xf]
    %v5608 = vld [vmem:[%s5597 + $0x28] sm:$0xf]
    %v5609 = vld [vmem:[%s5597 + $0x2c] sm:$0xf]
    %v5610 = vld [vmem:[%s5597 + $0x30] sm:$0xf]
    %v5611 = vld [vmem:[%s5597 + $0x34] sm:$0xf]
    %v5612 = vld [vmem:[%s5597 + $0x38] sm:$0xf]
    %v5613 = vld [vmem:[%s5597 + $0x3c] sm:$0xf]
    %v5614 = vpack.c.bf16 %v5543, %v5543
    %v5615 = vperm.slane %v5545, 0
    %v5632 = vunpack.c.l.b16 %v5547
    %v5633 = vunpack.c.l.b16 %v5548
    %v5634 = vunpack.c.l.b16 %v5549
    %v5635 = vunpack.c.l.b16 %v5550
    %v5636 = vunpack.c.l.b16 %v5551
    %v5637 = vunpack.c.l.b16 %v5552
    %v5638 = vunpack.c.l.b16 %v5553
    %v5639 = vunpack.c.l.b16 %v5554
    %v5640 = vunpack.c.l.b16 %v5555
    %v5641 = vunpack.c.l.b16 %v5556
    %v5642 = vunpack.c.l.b16 %v5557
    %v5643 = vunpack.c.l.b16 %v5558
    %v5644 = vunpack.c.l.b16 %v5559
    %v5645 = vunpack.c.l.b16 %v5560
    %v5646 = vunpack.c.l.b16 %v5561
    %v5647 = vunpack.c.l.b16 %v5562
    %v5648 = vpack.c.b16 %v5633, %v5632
    %v5649 = vpack.c.b16 %v5635, %v5634
    %v5650 = vpack.c.b16 %v5637, %v5636
    %v5651 = vpack.c.b16 %v5639, %v5638
    %v5652 = vpack.c.b16 %v5641, %v5640
    %v5653 = vpack.c.b16 %v5643, %v5642
    %v5654 = vpack.c.b16 %v5645, %v5644
    %v5655 = vpack.c.b16 %v5647, %v5646
    %5664 = vmatpush.bf16.msra.mxu0 %v5655
    %5665 = vmatpush.bf16.msra.mxu0 %v5654
    %5666 = vmatpush.bf16.msra.mxu0 %v5653
    %5667 = vmatpush.bf16.msra.mxu0 %v5652
    %5668 = vmatpush.bf16.msra.mxu0 %v5651
    %5669 = vmatpush.bf16.msra.mxu0 %v5650
    %5670 = vmatpush.bf16.msra.mxu0 %v5649
    %5671 = vmatpush.bf16.msra.mxu0 %v5648
    %5672 = vmatmul.bf16.gmra.mxu0 %v5614
    %v5673 = vpop.f32.mrf.mxu0
    %v5674 = vadd.f32 %v5615, %v5673
    %v5675 = vpop.f32.mrf.mxu0
    %5676 = vdwg.mxu0
    %v5677 = vperm.slane %v5545, 1
    %v5694 = vunpack.c.l.b16 %v5564
    %v5695 = vunpack.c.l.b16 %v5565
    %v5696 = vunpack.c.l.b16 %v5566
    %v5697 = vunpack.c.l.b16 %v5567
    %v5698 = vunpack.c.l.b16 %v5568
    %v5699 = vunpack.c.l.b16 %v5569
    %v5700 = vunpack.c.l.b16 %v5570
    %v5701 = vunpack.c.l.b16 %v5571
    %v5702 = vunpack.c.l.b16 %v5572
    %v5703 = vunpack.c.l.b16 %v5573
    %v5704 = vunpack.c.l.b16 %v5574
    %v5705 = vunpack.c.l.b16 %v5575
    %v5706 = vunpack.c.l.b16 %v5576
    %v5707 = vunpack.c.l.b16 %v5577
    %v5708 = vunpack.c.l.b16 %v5578
    %v5709 = vunpack.c.l.b16 %v5579
    %v5710 = vpack.c.b16 %v5695, %v5694
    %v5711 = vpack.c.b16 %v5697, %v5696
    %v5712 = vpack.c.b16 %v5699, %v5698
    %v5713 = vpack.c.b16 %v5701, %v5700
    %v5714 = vpack.c.b16 %v5703, %v5702
    %v5715 = vpack.c.b16 %v5705, %v5704
    %v5716 = vpack.c.b16 %v5707, %v5706
    %v5717 = vpack.c.b16 %v5709, %v5708
    %5726 = vmatpush.bf16.msra.mxu0 %v5717
    %5727 = vmatpush.bf16.msra.mxu0 %v5716
    %5728 = vmatpush.bf16.msra.mxu0 %v5715
    %5729 = vmatpush.bf16.msra.mxu0 %v5714
    %5730 = vmatpush.bf16.msra.mxu0 %v5713
    %5731 = vmatpush.bf16.msra.mxu0 %v5712
    %5732 = vmatpush.bf16.msra.mxu0 %v5711
    %5733 = vmatpush.bf16.msra.mxu0 %v5710
    %5734 = vmatmul.bf16.gmra.mxu0 %v1899
    %v5735 = vpop.f32.mrf.mxu0
    %v5736 = vadd.f32 %v5677, %v5735
    %v5737 = vpop.f32.mrf.mxu0
    %v5738 = vadd.f32 %v5677, %v5737
    %5739 = vmatmul.bf16.gmra.mxu0 %v1900
    %v5740 = vpop.f32.mrf.mxu0
    %v5741 = vadd.f32 %v5677, %v5740
    %v5742 = vpop.f32.mrf.mxu0
    %v5743 = vadd.f32 %v5677, %v5742
    %5744 = vdwg.mxu0
    %v5745 = vperm.slane %v5545, 2
    %v5762 = vunpack.c.l.b16 %v5581
    %v5763 = vunpack.c.l.b16 %v5582
    %v5764 = vunpack.c.l.b16 %v5583
    %v5765 = vunpack.c.l.b16 %v5584
    %v5766 = vunpack.c.l.b16 %v5585
    %v5767 = vunpack.c.l.b16 %v5586
    %v5768 = vunpack.c.l.b16 %v5587
    %v5769 = vunpack.c.l.b16 %v5588
    %v5770 = vunpack.c.l.b16 %v5589
    %v5771 = vunpack.c.l.b16 %v5590
    %v5772 = vunpack.c.l.b16 %v5591
    %v5773 = vunpack.c.l.b16 %v5592
    %v5774 = vunpack.c.l.b16 %v5593
    %v5775 = vunpack.c.l.b16 %v5594
    %v5776 = vunpack.c.l.b16 %v5595
    %v5777 = vunpack.c.l.b16 %v5596
    %v5778 = vpack.c.b16 %v5763, %v5762
    %v5779 = vpack.c.b16 %v5765, %v5764
    %v5780 = vpack.c.b16 %v5767, %v5766
    %v5781 = vpack.c.b16 %v5769, %v5768
    %v5782 = vpack.c.b16 %v5771, %v5770
    %v5783 = vpack.c.b16 %v5773, %v5772
    %v5784 = vpack.c.b16 %v5775, %v5774
    %v5785 = vpack.c.b16 %v5777, %v5776
    %5794 = vmatpush.bf16.msra.mxu0 %v5785
    %5795 = vmatpush.bf16.msra.mxu0 %v5784
    %5796 = vmatpush.bf16.msra.mxu0 %v5783
    %5797 = vmatpush.bf16.msra.mxu0 %v5782
    %5798 = vmatpush.bf16.msra.mxu0 %v5781
    %5799 = vmatpush.bf16.msra.mxu0 %v5780
    %5800 = vmatpush.bf16.msra.mxu0 %v5779
    %5801 = vmatpush.bf16.msra.mxu0 %v5778
    %5802 = vmatmul.bf16.gmra.mxu0 %v1969
    %v5803 = vpop.f32.mrf.mxu0
    %v5804 = vadd.f32 %v5745, %v5803
    %v5805 = vpop.f32.mrf.mxu0
    %v5806 = vadd.f32 %v5745, %v5805
    %5807 = vmatmul.bf16.gmra.mxu0 %v1970
    %v5808 = vpop.f32.mrf.mxu0
    %v5809 = vadd.f32 %v5745, %v5808
    %v5810 = vpop.f32.mrf.mxu0
    %v5811 = vadd.f32 %v5745, %v5810
    %5812 = vdwg.mxu0
    %v5814 = vrot.slane %v5674, 1
    %v5815 = vrot.slane %v5674, 2
    %v5816 = vrot.slane %v5674, 3
    %v5817 = vrot.slane %v5674, 4
    %v5818 = vrot.slane %v5674, 5
    %v5819 = vrot.slane %v5674, 6
    %v5820 = vrot.slane %v5674, 7
    %v5821 = vperm.slane %v5674, 0
    %v5822 = vperm.slane %v5814, 0
    %v5823 = vperm.slane %v5815, 0
    %v5824 = vperm.slane %v5816, 0
    %v5825 = vperm.slane %v5817, 0
    %v5826 = vperm.slane %v5818, 0
    %v5827 = vperm.slane %v5819, 0
    %v5828 = vperm.slane %v5820, 0
    %v5837 = vmul.f32 %v5821, %v1767
    %v5838 = vmul.f32 %v5822, %v1767
    %v5839 = vmul.f32 %v5823, %v1767
    %v5840 = vmul.f32 %v5824, %v1767
    %v5841 = vmul.f32 %v5825, %v1767
    %v5842 = vmul.f32 %v5826, %v1767
    %v5843 = vmul.f32 %v5827, %v1767
    %v5844 = vmul.f32 %v5828, %v1767
    %v5845 = vpack.c.bf16 %v5838, %v5837
    %v5846 = vpack.c.bf16 %v5840, %v5839
    %v5847 = vpack.c.bf16 %v5842, %v5841
    %v5848 = vpack.c.bf16 %v5844, %v5843
    %v5849 = vpack.c.bf16 %v5738, %v5736
    %v5850 = vpack.c.bf16 %v5743, %v5741
    %5851 = vmatpush.bf16.xpose.msra.mxu0 0
    %5852 = vmatpush.bf16.xpose.msra.mxu0 0
    %5853 = vmatpush.bf16.xpose.msra.mxu0 0
    %5854 = vmatpush.bf16.xpose.msra.mxu0 0
    %5855 = vmatpush.bf16.xpose.msra.mxu0 0
    %5856 = vmatpush.bf16.xpose.msra.mxu0 0
    %5857 = vmatpush.bf16.xpose.msra.mxu0 %v5850
    %5858 = vmatpush.bf16.xpose.msra.mxu0 %v5849
    %5859 = vmatmul.bf16.gmra.mxu0 %v5845
    %v5860 = vpop.f32.mrf.mxu0
    %v5861 = vadd.f32 0.0, %v5860
    %v5862 = vpop.f32.mrf.mxu0
    %v5863 = vadd.f32 0.0, %v5862
    %5864 = vmatmul.bf16.gmra.mxu0 %v5846
    %v5865 = vpop.f32.mrf.mxu0
    %v5866 = vadd.f32 0.0, %v5865
    %v5867 = vpop.f32.mrf.mxu0
    %v5868 = vadd.f32 0.0, %v5867
    %5869 = vmatmul.bf16.gmra.mxu0 %v5847
    %v5870 = vpop.f32.mrf.mxu0
    %v5871 = vadd.f32 0.0, %v5870
    %v5872 = vpop.f32.mrf.mxu0
    %v5873 = vadd.f32 0.0, %v5872
    %5874 = vmatmul.bf16.gmra.mxu0 %v5848
    %v5875 = vpop.f32.mrf.mxu0
    %v5876 = vadd.f32 0.0, %v5875
    %v5877 = vpop.f32.mrf.mxu0
    %v5878 = vadd.f32 0.0, %v5877
    %5879 = vdwg.mxu0
    %v5880 = vmul.f32 %v5861, 0.25
    %v5881 = vmul.f32 %v5863, 0.25
    %v5882 = vmul.f32 %v5866, 0.25
    %v5883 = vmul.f32 %v5868, 0.25
    %v5884 = vmul.f32 %v5871, 0.25
    %v5885 = vmul.f32 %v5873, 0.25
    %v5886 = vmul.f32 %v5876, 0.25
    %v5887 = vmul.f32 %v5878, 0.25
    %v5888 = vsel %vm598, %v5880, -inf
    %5889 = vmax.xlane.f32.xlu0 %v5888
    %v5890 = vpop.xlane.xlu0 %5889
    %v5891 = vsel %vm598, %v5881, -inf
    %5892 = vmax.xlane.f32.xlu0 %v5891
    %v5893 = vpop.xlane.xlu0 %5892
    %v5894 = vsel %vm598, %v5882, -inf
    %5895 = vmax.xlane.f32.xlu0 %v5894
    %v5896 = vpop.xlane.xlu0 %5895
    %v5897 = vsel %vm598, %v5883, -inf
    %5898 = vmax.xlane.f32.xlu0 %v5897
    %v5899 = vpop.xlane.xlu0 %5898
    %v5900 = vsel %vm598, %v5884, -inf
    %5901 = vmax.xlane.f32.xlu0 %v5900
    %v5902 = vpop.xlane.xlu0 %5901
    %v5903 = vsel %vm598, %v5885, -inf
    %5904 = vmax.xlane.f32.xlu0 %v5903
    %v5905 = vpop.xlane.xlu0 %5904
    %v5906 = vsel %vm598, %v5886, -inf
    %5907 = vmax.xlane.f32.xlu0 %v5906
    %v5908 = vpop.xlane.xlu0 %5907
    %v5909 = vsel %vm598, %v5887, -inf
    %5910 = vmax.xlane.f32.xlu0 %v5909
    %v5911 = vpop.xlane.xlu0 %5910
    %v5912 = vsub.f32 %v5880, %v5890
    %v5913 = vsub.f32 %v5881, %v5893
    %v5914 = vsub.f32 %v5882, %v5896
    %v5915 = vsub.f32 %v5883, %v5899
    %v5916 = vsub.f32 %v5884, %v5902
    %v5917 = vsub.f32 %v5885, %v5905
    %v5918 = vsub.f32 %v5886, %v5908
    %v5919 = vsub.f32 %v5887, %v5911
    %v5920 = vmul.f32 %v5912, 1.442695
    %v5921 = vpow.pop %v5920
    %v5922 = vmul.f32 %v5913, 1.442695
    %v5923 = vpow.pop %v5922
    %v5924 = vmul.f32 %v5914, 1.442695
    %v5925 = vpow.pop %v5924
    %v5926 = vmul.f32 %v5915, 1.442695
    %v5927 = vpow.pop %v5926
    %v5928 = vmul.f32 %v5916, 1.442695
    %v5929 = vpow.pop %v5928
    %v5930 = vmul.f32 %v5917, 1.442695
    %v5931 = vpow.pop %v5930
    %v5932 = vmul.f32 %v5918, 1.442695
    %v5933 = vpow.pop %v5932
    %v5934 = vmul.f32 %v5919, 1.442695
    %v5935 = vpow.pop %v5934
    %v5936 = vsel %vm598, %v5921, 0.0
    %5937 = vadd.xlane.f32.xlu0 %v5936
    %v5938 = vpop.xlane.xlu0 %5937
    %v5939 = vsel %vm598, %v5923, 0.0
    %5940 = vadd.xlane.f32.xlu0 %v5939
    %v5941 = vpop.xlane.xlu0 %5940
    %v5942 = vsel %vm598, %v5925, 0.0
    %5943 = vadd.xlane.f32.xlu0 %v5942
    %v5944 = vpop.xlane.xlu0 %5943
    %v5945 = vsel %vm598, %v5927, 0.0
    %5946 = vadd.xlane.f32.xlu0 %v5945
    %v5947 = vpop.xlane.xlu0 %5946
    %v5948 = vsel %vm598, %v5929, 0.0
    %5949 = vadd.xlane.f32.xlu0 %v5948
    %v5950 = vpop.xlane.xlu0 %5949
    %v5951 = vsel %vm598, %v5931, 0.0
    %5952 = vadd.xlane.f32.xlu0 %v5951
    %v5953 = vpop.xlane.xlu0 %5952
    %v5954 = vsel %vm598, %v5933, 0.0
    %5955 = vadd.xlane.f32.xlu0 %v5954
    %v5956 = vpop.xlane.xlu0 %5955
    %v5957 = vsel %vm598, %v5935, 0.0
    %5958 = vadd.xlane.f32.xlu0 %v5957
    %v5959 = vpop.xlane.xlu0 %5958
    %v5960 = vrcp.pop %v5938
    %v5961 = vrcp.pop %v5941
    %v5962 = vrcp.pop %v5944
    %v5963 = vrcp.pop %v5947
    %v5964 = vrcp.pop %v5950
    %v5965 = vrcp.pop %v5953
    %v5966 = vrcp.pop %v5956
    %v5967 = vrcp.pop %v5959
    %v5968 = vmul.f32 %v5921, %v5960
    %v5969 = vmul.f32 %v5923, %v5961
    %v5970 = vmul.f32 %v5925, %v5962
    %v5971 = vmul.f32 %v5927, %v5963
    %v5972 = vmul.f32 %v5929, %v5964
    %v5973 = vmul.f32 %v5931, %v5965
    %v5974 = vmul.f32 %v5933, %v5966
    %v5975 = vmul.f32 %v5935, %v5967
    %v5976 = vpack.c.bf16 %v5969, %v5968
    %v5977 = vpack.c.bf16 %v5971, %v5970
    %v5978 = vpack.c.bf16 %v5973, %v5972
    %v5979 = vpack.c.bf16 %v5975, %v5974
    %v5980 = vpack.c.bf16 %v5806, %v5804
    %v5981 = vpack.c.bf16 %v5811, %v5809
    %v5983 = vsel %vm598, %v5976, 0
    %v5986 = vsel %vm598, %v5977, 0
    %v5989 = vsel %vm598, %v5978, 0
    %v5992 = vsel %vm598, %v5979, 0
    %5994 = vmatpush.bf16.msra.mxu0 0
    %5995 = vmatpush.bf16.msra.mxu0 0
    %5996 = vmatpush.bf16.msra.mxu0 0
    %5997 = vmatpush.bf16.msra.mxu0 0
    %5998 = vmatpush.bf16.msra.mxu0 0
    %5999 = vmatpush.bf16.msra.mxu0 0
    %6000 = vmatpush.bf16.msra.mxu0 %v5981
    %6001 = vmatpush.bf16.msra.mxu0 %v5980
    %6002 = vmatmul.bf16.gmra.mxu0 %v5983
    %v6003 = vpop.f32.mrf.mxu0
    %v6004 = vadd.f32 0.0, %v6003
    %v6005 = vpop.f32.mrf.mxu0
    %v6006 = vadd.f32 0.0, %v6005
    %6007 = vmatmul.bf16.gmra.mxu0 %v5986
    %v6008 = vpop.f32.mrf.mxu0
    %v6009 = vadd.f32 0.0, %v6008
    %v6010 = vpop.f32.mrf.mxu0
    %v6011 = vadd.f32 0.0, %v6010
    %6012 = vmatmul.bf16.gmra.mxu0 %v5989
    %v6013 = vpop.f32.mrf.mxu0
    %v6014 = vadd.f32 0.0, %v6013
    %v6015 = vpop.f32.mrf.mxu0
    %v6016 = vadd.f32 0.0, %v6015
    %6017 = vmatmul.bf16.gmra.mxu0 %v5992
    %v6018 = vpop.f32.mrf.mxu0
    %v6019 = vadd.f32 0.0, %v6018
    %v6020 = vpop.f32.mrf.mxu0
    %v6021 = vadd.f32 0.0, %v6020
    %6022 = vdwg.mxu0
    %v6023 = vmul.f32 %v6004, %v1767
    %v6024 = vmul.f32 %v6006, %v1767
    %v6025 = vmul.f32 %v6009, %v1767
    %v6026 = vmul.f32 %v6011, %v1767
    %v6027 = vmul.f32 %v6014, %v1767
    %v6028 = vmul.f32 %v6016, %v1767
    %v6029 = vmul.f32 %v6019, %v1767
    %v6030 = vmul.f32 %v6021, %v1767
    %v6031 = vrot.slane %v6023, 4
    %v6032 = vadd.f32 %v6023, %v6031
    %v6033 = vrot.slane %v6032, 2
    %v6034 = vadd.f32 %v6032, %v6033
    %v6035 = vrot.slane %v6034, 1
    %v6036 = vadd.f32 %v6034, %v6035
    %v6037 = vrot.slane %v6024, 4
    %v6038 = vadd.f32 %v6024, %v6037
    %v6039 = vrot.slane %v6038, 2
    %v6040 = vadd.f32 %v6038, %v6039
    %v6041 = vrot.slane %v6040, 1
    %v6042 = vadd.f32 %v6040, %v6041
    %v6043 = vrot.slane %v6025, 4
    %v6044 = vadd.f32 %v6025, %v6043
    %v6045 = vrot.slane %v6044, 2
    %v6046 = vadd.f32 %v6044, %v6045
    %v6047 = vrot.slane %v6046, 1
    %v6048 = vadd.f32 %v6046, %v6047
    %v6049 = vrot.slane %v6026, 4
    %v6050 = vadd.f32 %v6026, %v6049
    %v6051 = vrot.slane %v6050, 2
    %v6052 = vadd.f32 %v6050, %v6051
    %v6053 = vrot.slane %v6052, 1
    %v6054 = vadd.f32 %v6052, %v6053
    %v6055 = vrot.slane %v6027, 4
    %v6056 = vadd.f32 %v6027, %v6055
    %v6057 = vrot.slane %v6056, 2
    %v6058 = vadd.f32 %v6056, %v6057
    %v6059 = vrot.slane %v6058, 1
    %v6060 = vadd.f32 %v6058, %v6059
    %v6061 = vrot.slane %v6028, 4
    %v6062 = vadd.f32 %v6028, %v6061
    %v6063 = vrot.slane %v6062, 2
    %v6064 = vadd.f32 %v6062, %v6063
    %v6065 = vrot.slane %v6064, 1
    %v6066 = vadd.f32 %v6064, %v6065
    %v6067 = vrot.slane %v6029, 4
    %v6068 = vadd.f32 %v6029, %v6067
    %v6069 = vrot.slane %v6068, 2
    %v6070 = vadd.f32 %v6068, %v6069
    %v6071 = vrot.slane %v6070, 1
    %v6072 = vadd.f32 %v6070, %v6071
    %v6073 = vrot.slane %v6030, 4
    %v6074 = vadd.f32 %v6030, %v6073
    %v6075 = vrot.slane %v6074, 2
    %v6076 = vadd.f32 %v6074, %v6075
    %v6077 = vrot.slane %v6076, 1
    %v6078 = vadd.f32 %v6076, %v6077
    %v6079 = vpack.c.bf16 %v6036, %v6036
    %v6080 = vpack.c.bf16 %v6042, %v6042
    %v6081 = vpack.c.bf16 %v6048, %v6048
    %v6082 = vpack.c.bf16 %v6054, %v6054
    %v6083 = vpack.c.bf16 %v6060, %v6060
    %v6084 = vpack.c.bf16 %v6066, %v6066
    %v6085 = vpack.c.bf16 %v6072, %v6072
    %v6086 = vpack.c.bf16 %v6078, %v6078
    %v6087 = vperm.slane %v5545, 3
    %v6096 = vunpack.c.l.b16 %v6079
    %v6097 = vunpack.c.l.b16 %v6080
    %v6098 = vunpack.c.l.b16 %v6081
    %v6099 = vunpack.c.l.b16 %v6082
    %v6100 = vunpack.c.l.b16 %v6083
    %v6101 = vunpack.c.l.b16 %v6084
    %v6102 = vunpack.c.l.b16 %v6085
    %v6103 = vunpack.c.l.b16 %v6086
    %v6104 = vsel %vm2330, %v6097, %v6096
    %v6105 = vsel %vm2332, %v6098, %v6104
    %v6106 = vsel %vm2334, %v6099, %v6105
    %v6107 = vsel %vm2336, %v6100, %v6106
    %v6108 = vsel %vm2338, %v6101, %v6107
    %v6109 = vsel %vm2340, %v6102, %v6108
    %v6110 = vsel %vm2342, %v6103, %v6109
    %v6111 = vpack.c.b16 %v6110, %v6110
    %v6129 = vunpack.c.l.b16 %v5598
    %v6130 = vunpack.c.l.b16 %v5599
    %v6131 = vunpack.c.l.b16 %v5600
    %v6132 = vunpack.c.l.b16 %v5601
    %v6133 = vunpack.c.l.b16 %v5602
    %v6134 = vunpack.c.l.b16 %v5603
    %v6135 = vunpack.c.l.b16 %v5604
    %v6136 = vunpack.c.l.b16 %v5605
    %v6137 = vunpack.c.l.b16 %v5606
    %v6138 = vunpack.c.l.b16 %v5607
    %v6139 = vunpack.c.l.b16 %v5608
    %v6140 = vunpack.c.l.b16 %v5609
    %v6141 = vunpack.c.l.b16 %v5610
    %v6142 = vunpack.c.l.b16 %v5611
    %v6143 = vunpack.c.l.b16 %v5612
    %v6144 = vunpack.c.l.b16 %v5613
    %v6145 = vpack.c.b16 %v6130, %v6129
    %v6146 = vpack.c.b16 %v6132, %v6131
    %v6147 = vpack.c.b16 %v6134, %v6133
    %v6148 = vpack.c.b16 %v6136, %v6135
    %v6149 = vpack.c.b16 %v6138, %v6137
    %v6150 = vpack.c.b16 %v6140, %v6139
    %v6151 = vpack.c.b16 %v6142, %v6141
    %v6152 = vpack.c.b16 %v6144, %v6143
    %6161 = vmatpush.bf16.msra.mxu0 %v6152
    %6162 = vmatpush.bf16.msra.mxu0 %v6151
    %6163 = vmatpush.bf16.msra.mxu0 %v6150
    %6164 = vmatpush.bf16.msra.mxu0 %v6149
    %6165 = vmatpush.bf16.msra.mxu0 %v6148
    %6166 = vmatpush.bf16.msra.mxu0 %v6147
    %6167 = vmatpush.bf16.msra.mxu0 %v6146
    %6168 = vmatpush.bf16.msra.mxu0 %v6145
    %6169 = vmatmul.bf16.gmra.mxu0 %v6111
    %v6170 = vpop.f32.mrf.mxu0
    %v6171 = vadd.f32 %v6087, %v6170
    %v6172 = vpop.f32.mrf.mxu0
    %6173 = vdwg.mxu0
    %v6174 = vadd.f32 %v5543, %v6171
    %6175 = vadd.xlane.f32.xlu0 %v6174
    %v6176 = vpop.xlane.xlu0 %6175
    %v6177 = vmul.f32 %v6176, %v625
    %v6178 = vsub.f32 %v6174, %v6177
    %v6179 = vmul.f32 %v6178, %v6178
    %6180 = vadd.xlane.f32.xlu0 %v6179
    %v6181 = vpop.xlane.xlu0 %6180
    %v6182 = vmul.f32 %v6181, %v625
    %v6183 = vadd.f32 %v6182, 1e-05
    %v6184 = vrsqrt.pop %v6183
    %v6185 = vmul.f32 %v6184, %v6183
    %v6186 = vmul.f32 %v6185, %v6184
    %v6187 = vmul.f32 0.5, %v6186
    %v6188 = vsub.f32 1.5, %v6187
    %v6189 = vmul.f32 %v6184, %v6188
    %vm6190 = vweird.f32 %v6183
    %vm6191 = vweird.f32 %v6184
    %vm6192 = vmor %vm6190, %vm6191
    %v6193 = vsel %vm6192, %v6184, %v6189
    %v6194 = vmul.f32 %v6178, %v6193
    %v6195 = vperm.slane %v5545, 4
    %v6196 = vmul.f32 %v6194, %v6195
    %v6197 = vperm.slane %v5545, 5
    %v6198 = vadd.f32 %v6196, %v6197
    %s6199 = scalar_lea.vmem %s20, 12
    %v6200 = vld [vmem:[%s6199] sm:$0x7]
    %s6201 = scalar_lea.vmem [#allocation28], 768
    %v6202 = vld [vmem:[%s6201] sm:$0xff]
    %v6203 = vld [vmem:[%s6201 + $0x8] sm:$0xff]
    %v6204 = vld [vmem:[%s6201 + $0x10] sm:$0xff]
    %v6205 = vld [vmem:[%s6201 + $0x18] sm:$0xff]
    %v6206 = vld [vmem:[%s6201 + $0x20] sm:$0xff]
    %v6207 = vld [vmem:[%s6201 + $0x28] sm:$0xff]
    %v6208 = vld [vmem:[%s6201 + $0x30] sm:$0xff]
    %v6209 = vld [vmem:[%s6201 + $0x38] sm:$0xff]
    %v6210 = vld [vmem:[%s6201 + $0x40] sm:$0xff]
    %v6211 = vld [vmem:[%s6201 + $0x48] sm:$0xff]
    %v6212 = vld [vmem:[%s6201 + $0x50] sm:$0xff]
    %v6213 = vld [vmem:[%s6201 + $0x58] sm:$0xff]
    %v6214 = vld [vmem:[%s6201 + $0x60] sm:$0xff]
    %v6215 = vld [vmem:[%s6201 + $0x68] sm:$0xff]
    %v6216 = vld [vmem:[%s6201 + $0x70] sm:$0xff]
    %v6217 = vld [vmem:[%s6201 + $0x78] sm:$0xff]
    %v6218 = vld [vmem:[%s6201 + $0x80] sm:$0xff]
    %v6219 = vld [vmem:[%s6201 + $0x88] sm:$0xff]
    %v6220 = vld [vmem:[%s6201 + $0x90] sm:$0xff]
    %v6221 = vld [vmem:[%s6201 + $0x98] sm:$0xff]
    %v6222 = vld [vmem:[%s6201 + $0xa0] sm:$0xff]
    %v6223 = vld [vmem:[%s6201 + $0xa8] sm:$0xff]
    %v6224 = vld [vmem:[%s6201 + $0xb0] sm:$0xff]
    %v6225 = vld [vmem:[%s6201 + $0xb8] sm:$0xff]
    %v6226 = vld [vmem:[%s6201 + $0xc0] sm:$0xff]
    %v6227 = vld [vmem:[%s6201 + $0xc8] sm:$0xff]
    %v6228 = vld [vmem:[%s6201 + $0xd0] sm:$0xff]
    %v6229 = vld [vmem:[%s6201 + $0xd8] sm:$0xff]
    %v6230 = vld [vmem:[%s6201 + $0xe0] sm:$0xff]
    %v6231 = vld [vmem:[%s6201 + $0xe8] sm:$0xff]
    %v6232 = vld [vmem:[%s6201 + $0xf0] sm:$0xff]
    %v6233 = vld [vmem:[%s6201 + $0xf8] sm:$0xff]
    %v6234 = vpack.c.bf16 %v6198, %v6198
    %s6235 = scalar_lea.vmem [#allocation29], 12
    %v6236 = vld [vmem:[%s6235] sm:$0xf]
    %v6238 = vperm.slane %v6236, 0
    %v6239 = vperm.slane %v6236, 1
    %v6240 = vperm.slane %v6236, 2
    %v6241 = vperm.slane %v6236, 3
    %v6278 = vunpack.c.l.b16 %v6202
    %v6279 = vunpack.c.h.b16 %v6202
    %v6280 = vunpack.c.l.b16 %v6203
    %v6281 = vunpack.c.h.b16 %v6203
    %v6282 = vunpack.c.l.b16 %v6204
    %v6283 = vunpack.c.h.b16 %v6204
    %v6284 = vunpack.c.l.b16 %v6205
    %v6285 = vunpack.c.h.b16 %v6205
    %v6286 = vunpack.c.l.b16 %v6206
    %v6287 = vunpack.c.h.b16 %v6206
    %v6288 = vunpack.c.l.b16 %v6207
    %v6289 = vunpack.c.h.b16 %v6207
    %v6290 = vunpack.c.l.b16 %v6208
    %v6291 = vunpack.c.h.b16 %v6208
    %v6292 = vunpack.c.l.b16 %v6209
    %v6293 = vunpack.c.h.b16 %v6209
    %v6294 = vunpack.c.l.b16 %v6210
    %v6295 = vunpack.c.h.b16 %v6210
    %v6296 = vunpack.c.l.b16 %v6211
    %v6297 = vunpack.c.h.b16 %v6211
    %v6298 = vunpack.c.l.b16 %v6212
    %v6299 = vunpack.c.h.b16 %v6212
    %v6300 = vunpack.c.l.b16 %v6213
    %v6301 = vunpack.c.h.b16 %v6213
    %v6302 = vunpack.c.l.b16 %v6214
    %v6303 = vunpack.c.h.b16 %v6214
    %v6304 = vunpack.c.l.b16 %v6215
    %v6305 = vunpack.c.h.b16 %v6215
    %v6306 = vunpack.c.l.b16 %v6216
    %v6307 = vunpack.c.h.b16 %v6216
    %v6308 = vunpack.c.l.b16 %v6217
    %v6309 = vunpack.c.h.b16 %v6217
    %v6310 = vunpack.c.l.b16 %v6218
    %v6311 = vunpack.c.h.b16 %v6218
    %v6312 = vunpack.c.l.b16 %v6219
    %v6313 = vunpack.c.h.b16 %v6219
    %v6314 = vunpack.c.l.b16 %v6220
    %v6315 = vunpack.c.h.b16 %v6220
    %v6316 = vunpack.c.l.b16 %v6221
    %v6317 = vunpack.c.h.b16 %v6221
    %v6318 = vunpack.c.l.b16 %v6222
    %v6319 = vunpack.c.h.b16 %v6222
    %v6320 = vunpack.c.l.b16 %v6223
    %v6321 = vunpack.c.h.b16 %v6223
    %v6322 = vunpack.c.l.b16 %v6224
    %v6323 = vunpack.c.h.b16 %v6224
    %v6324 = vunpack.c.l.b16 %v6225
    %v6325 = vunpack.c.h.b16 %v6225
    %v6326 = vunpack.c.l.b16 %v6226
    %v6327 = vunpack.c.h.b16 %v6226
    %v6328 = vunpack.c.l.b16 %v6227
    %v6329 = vunpack.c.h.b16 %v6227
    %v6330 = vunpack.c.l.b16 %v6228
    %v6331 = vunpack.c.h.b16 %v6228
    %v6332 = vunpack.c.l.b16 %v6229
    %v6333 = vunpack.c.h.b16 %v6229
    %v6334 = vunpack.c.l.b16 %v6230
    %v6335 = vunpack.c.h.b16 %v6230
    %v6336 = vunpack.c.l.b16 %v6231
    %v6337 = vunpack.c.h.b16 %v6231
    %v6338 = vunpack.c.l.b16 %v6232
    %v6339 = vunpack.c.h.b16 %v6232
    %v6340 = vunpack.c.l.b16 %v6233
    %v6341 = vunpack.c.h.b16 %v6233
    %v6342 = vpack.c.b16 %v6282, %v6278
    %v6343 = vpack.c.b16 %v6283, %v6279
    %v6344 = vpack.c.b16 %v6284, %v6280
    %v6345 = vpack.c.b16 %v6285, %v6281
    %v6346 = vpack.c.b16 %v6290, %v6286
    %v6347 = vpack.c.b16 %v6291, %v6287
    %v6348 = vpack.c.b16 %v6292, %v6288
    %v6349 = vpack.c.b16 %v6293, %v6289
    %v6350 = vpack.c.b16 %v6298, %v6294
    %v6351 = vpack.c.b16 %v6299, %v6295
    %v6352 = vpack.c.b16 %v6300, %v6296
    %v6353 = vpack.c.b16 %v6301, %v6297
    %v6354 = vpack.c.b16 %v6306, %v6302
    %v6355 = vpack.c.b16 %v6307, %v6303
    %v6356 = vpack.c.b16 %v6308, %v6304
    %v6357 = vpack.c.b16 %v6309, %v6305
    %v6358 = vpack.c.b16 %v6314, %v6310
    %v6359 = vpack.c.b16 %v6315, %v6311
    %v6360 = vpack.c.b16 %v6316, %v6312
    %v6361 = vpack.c.b16 %v6317, %v6313
    %v6362 = vpack.c.b16 %v6322, %v6318
    %v6363 = vpack.c.b16 %v6323, %v6319
    %v6364 = vpack.c.b16 %v6324, %v6320
    %v6365 = vpack.c.b16 %v6325, %v6321
    %v6366 = vpack.c.b16 %v6330, %v6326
    %v6367 = vpack.c.b16 %v6331, %v6327
    %v6368 = vpack.c.b16 %v6332, %v6328
    %v6369 = vpack.c.b16 %v6333, %v6329
    %v6370 = vpack.c.b16 %v6338, %v6334
    %v6371 = vpack.c.b16 %v6339, %v6335
    %v6372 = vpack.c.b16 %v6340, %v6336
    %v6373 = vpack.c.b16 %v6341, %v6337
    %6406 = vmatpush.bf16.msra.mxu0 %v6370
    %6407 = vmatpush.bf16.msra.mxu0 %v6366
    %6408 = vmatpush.bf16.msra.mxu0 %v6362
    %6409 = vmatpush.bf16.msra.mxu0 %v6358
    %6410 = vmatpush.bf16.msra.mxu0 %v6354
    %6411 = vmatpush.bf16.msra.mxu0 %v6350
    %6412 = vmatpush.bf16.msra.mxu0 %v6346
    %6413 = vmatpush.bf16.msra.mxu0 %v6342
    %6414 = vmatmul.bf16.gmra.mxu0 %v6234
    %v6415 = vpop.f32.mrf.mxu0
    %v6416 = vadd.f32 %v6238, %v6415
    %v6417 = vpop.f32.mrf.mxu0
    %6418 = vdwg.mxu0
    %6419 = vmatpush.bf16.msra.mxu0 %v6371
    %6420 = vmatpush.bf16.msra.mxu0 %v6367
    %6421 = vmatpush.bf16.msra.mxu0 %v6363
    %6422 = vmatpush.bf16.msra.mxu0 %v6359
    %6423 = vmatpush.bf16.msra.mxu0 %v6355
    %6424 = vmatpush.bf16.msra.mxu0 %v6351
    %6425 = vmatpush.bf16.msra.mxu0 %v6347
    %6426 = vmatpush.bf16.msra.mxu0 %v6343
    %6427 = vmatmul.bf16.gmra.mxu0 %v6234
    %v6428 = vpop.f32.mrf.mxu0
    %v6429 = vadd.f32 %v6239, %v6428
    %v6430 = vpop.f32.mrf.mxu0
    %6431 = vdwg.mxu0
    %6432 = vmatpush.bf16.msra.mxu0 %v6372
    %6433 = vmatpush.bf16.msra.mxu0 %v6368
    %6434 = vmatpush.bf16.msra.mxu0 %v6364
    %6435 = vmatpush.bf16.msra.mxu0 %v6360
    %6436 = vmatpush.bf16.msra.mxu0 %v6356
    %6437 = vmatpush.bf16.msra.mxu0 %v6352
    %6438 = vmatpush.bf16.msra.mxu0 %v6348
    %6439 = vmatpush.bf16.msra.mxu0 %v6344
    %6440 = vmatmul.bf16.gmra.mxu0 %v6234
    %v6441 = vpop.f32.mrf.mxu0
    %v6442 = vadd.f32 %v6240, %v6441
    %v6443 = vpop.f32.mrf.mxu0
    %6444 = vdwg.mxu0
    %6445 = vmatpush.bf16.msra.mxu0 %v6373
    %6446 = vmatpush.bf16.msra.mxu0 %v6369
    %6447 = vmatpush.bf16.msra.mxu0 %v6365
    %6448 = vmatpush.bf16.msra.mxu0 %v6361
    %6449 = vmatpush.bf16.msra.mxu0 %v6357
    %6450 = vmatpush.bf16.msra.mxu0 %v6353
    %6451 = vmatpush.bf16.msra.mxu0 %v6349
    %6452 = vmatpush.bf16.msra.mxu0 %v6345
    %6453 = vmatmul.bf16.gmra.mxu0 %v6234
    %v6454 = vpop.f32.mrf.mxu0
    %v6455 = vadd.f32 %v6241, %v6454
    %v6456 = vpop.f32.mrf.mxu0
    %6457 = vdwg.mxu0
    %v6458 = vmax.f32 %v6416, 0.0
    %v6459 = vmax.f32 %v6429, 0.0
    %v6460 = vmax.f32 %v6442, 0.0
    %v6461 = vmax.f32 %v6455, 0.0
    %s6462 = scalar_lea.vmem [#allocation31], 768
    %v6463 = vld [vmem:[%s6462] sm:$0xf]
    %v6464 = vld [vmem:[%s6462 + $0x4] sm:$0xf]
    %v6465 = vld [vmem:[%s6462 + $0x8] sm:$0xf]
    %v6466 = vld [vmem:[%s6462 + $0xc] sm:$0xf]
    %v6467 = vld [vmem:[%s6462 + $0x10] sm:$0xf]
    %v6468 = vld [vmem:[%s6462 + $0x14] sm:$0xf]
    %v6469 = vld [vmem:[%s6462 + $0x18] sm:$0xf]
    %v6470 = vld [vmem:[%s6462 + $0x1c] sm:$0xf]
    %v6471 = vld [vmem:[%s6462 + $0x20] sm:$0xf]
    %v6472 = vld [vmem:[%s6462 + $0x24] sm:$0xf]
    %v6473 = vld [vmem:[%s6462 + $0x28] sm:$0xf]
    %v6474 = vld [vmem:[%s6462 + $0x2c] sm:$0xf]
    %v6475 = vld [vmem:[%s6462 + $0x30] sm:$0xf]
    %v6476 = vld [vmem:[%s6462 + $0x34] sm:$0xf]
    %v6477 = vld [vmem:[%s6462 + $0x38] sm:$0xf]
    %v6478 = vld [vmem:[%s6462 + $0x3c] sm:$0xf]
    %v6479 = vld [vmem:[%s6462 + $0x40] sm:$0xf]
    %v6480 = vld [vmem:[%s6462 + $0x44] sm:$0xf]
    %v6481 = vld [vmem:[%s6462 + $0x48] sm:$0xf]
    %v6482 = vld [vmem:[%s6462 + $0x4c] sm:$0xf]
    %v6483 = vld [vmem:[%s6462 + $0x50] sm:$0xf]
    %v6484 = vld [vmem:[%s6462 + $0x54] sm:$0xf]
    %v6485 = vld [vmem:[%s6462 + $0x58] sm:$0xf]
    %v6486 = vld [vmem:[%s6462 + $0x5c] sm:$0xf]
    %v6487 = vld [vmem:[%s6462 + $0x60] sm:$0xf]
    %v6488 = vld [vmem:[%s6462 + $0x64] sm:$0xf]
    %v6489 = vld [vmem:[%s6462 + $0x68] sm:$0xf]
    %v6490 = vld [vmem:[%s6462 + $0x6c] sm:$0xf]
    %v6491 = vld [vmem:[%s6462 + $0x70] sm:$0xf]
    %v6492 = vld [vmem:[%s6462 + $0x74] sm:$0xf]
    %v6493 = vld [vmem:[%s6462 + $0x78] sm:$0xf]
    %v6494 = vld [vmem:[%s6462 + $0x7c] sm:$0xf]
    %v6495 = vld [vmem:[%s6462 + $0x80] sm:$0xf]
    %v6496 = vld [vmem:[%s6462 + $0x84] sm:$0xf]
    %v6497 = vld [vmem:[%s6462 + $0x88] sm:$0xf]
    %v6498 = vld [vmem:[%s6462 + $0x8c] sm:$0xf]
    %v6499 = vld [vmem:[%s6462 + $0x90] sm:$0xf]
    %v6500 = vld [vmem:[%s6462 + $0x94] sm:$0xf]
    %v6501 = vld [vmem:[%s6462 + $0x98] sm:$0xf]
    %v6502 = vld [vmem:[%s6462 + $0x9c] sm:$0xf]
    %v6503 = vld [vmem:[%s6462 + $0xa0] sm:$0xf]
    %v6504 = vld [vmem:[%s6462 + $0xa4] sm:$0xf]
    %v6505 = vld [vmem:[%s6462 + $0xa8] sm:$0xf]
    %v6506 = vld [vmem:[%s6462 + $0xac] sm:$0xf]
    %v6507 = vld [vmem:[%s6462 + $0xb0] sm:$0xf]
    %v6508 = vld [vmem:[%s6462 + $0xb4] sm:$0xf]
    %v6509 = vld [vmem:[%s6462 + $0xb8] sm:$0xf]
    %v6510 = vld [vmem:[%s6462 + $0xbc] sm:$0xf]
    %v6511 = vld [vmem:[%s6462 + $0xc0] sm:$0xf]
    %v6512 = vld [vmem:[%s6462 + $0xc4] sm:$0xf]
    %v6513 = vld [vmem:[%s6462 + $0xc8] sm:$0xf]
    %v6514 = vld [vmem:[%s6462 + $0xcc] sm:$0xf]
    %v6515 = vld [vmem:[%s6462 + $0xd0] sm:$0xf]
    %v6516 = vld [vmem:[%s6462 + $0xd4] sm:$0xf]
    %v6517 = vld [vmem:[%s6462 + $0xd8] sm:$0xf]
    %v6518 = vld [vmem:[%s6462 + $0xdc] sm:$0xf]
    %v6519 = vld [vmem:[%s6462 + $0xe0] sm:$0xf]
    %v6520 = vld [vmem:[%s6462 + $0xe4] sm:$0xf]
    %v6521 = vld [vmem:[%s6462 + $0xe8] sm:$0xf]
    %v6522 = vld [vmem:[%s6462 + $0xec] sm:$0xf]
    %v6523 = vld [vmem:[%s6462 + $0xf0] sm:$0xf]
    %v6524 = vld [vmem:[%s6462 + $0xf4] sm:$0xf]
    %v6525 = vld [vmem:[%s6462 + $0xf8] sm:$0xf]
    %v6526 = vld [vmem:[%s6462 + $0xfc] sm:$0xf]
    %v6527 = vpack.c.bf16 %v6458, %v6458
    %v6528 = vpack.c.bf16 %v6459, %v6459
    %v6529 = vpack.c.bf16 %v6460, %v6460
    %v6530 = vpack.c.bf16 %v6461, %v6461
    %v6531 = vperm.slane %v6200, 0
    %v6596 = vunpack.c.l.b16 %v6463
    %v6597 = vunpack.c.l.b16 %v6464
    %v6598 = vunpack.c.l.b16 %v6465
    %v6599 = vunpack.c.l.b16 %v6466
    %v6600 = vunpack.c.l.b16 %v6467
    %v6601 = vunpack.c.l.b16 %v6468
    %v6602 = vunpack.c.l.b16 %v6469
    %v6603 = vunpack.c.l.b16 %v6470
    %v6604 = vunpack.c.l.b16 %v6471
    %v6605 = vunpack.c.l.b16 %v6472
    %v6606 = vunpack.c.l.b16 %v6473
    %v6607 = vunpack.c.l.b16 %v6474
    %v6608 = vunpack.c.l.b16 %v6475
    %v6609 = vunpack.c.l.b16 %v6476
    %v6610 = vunpack.c.l.b16 %v6477
    %v6611 = vunpack.c.l.b16 %v6478
    %v6612 = vunpack.c.l.b16 %v6479
    %v6613 = vunpack.c.l.b16 %v6480
    %v6614 = vunpack.c.l.b16 %v6481
    %v6615 = vunpack.c.l.b16 %v6482
    %v6616 = vunpack.c.l.b16 %v6483
    %v6617 = vunpack.c.l.b16 %v6484
    %v6618 = vunpack.c.l.b16 %v6485
    %v6619 = vunpack.c.l.b16 %v6486
    %v6620 = vunpack.c.l.b16 %v6487
    %v6621 = vunpack.c.l.b16 %v6488
    %v6622 = vunpack.c.l.b16 %v6489
    %v6623 = vunpack.c.l.b16 %v6490
    %v6624 = vunpack.c.l.b16 %v6491
    %v6625 = vunpack.c.l.b16 %v6492
    %v6626 = vunpack.c.l.b16 %v6493
    %v6627 = vunpack.c.l.b16 %v6494
    %v6628 = vunpack.c.l.b16 %v6495
    %v6629 = vunpack.c.l.b16 %v6496
    %v6630 = vunpack.c.l.b16 %v6497
    %v6631 = vunpack.c.l.b16 %v6498
    %v6632 = vunpack.c.l.b16 %v6499
    %v6633 = vunpack.c.l.b16 %v6500
    %v6634 = vunpack.c.l.b16 %v6501
    %v6635 = vunpack.c.l.b16 %v6502
    %v6636 = vunpack.c.l.b16 %v6503
    %v6637 = vunpack.c.l.b16 %v6504
    %v6638 = vunpack.c.l.b16 %v6505
    %v6639 = vunpack.c.l.b16 %v6506
    %v6640 = vunpack.c.l.b16 %v6507
    %v6641 = vunpack.c.l.b16 %v6508
    %v6642 = vunpack.c.l.b16 %v6509
    %v6643 = vunpack.c.l.b16 %v6510
    %v6644 = vunpack.c.l.b16 %v6511
    %v6645 = vunpack.c.l.b16 %v6512
    %v6646 = vunpack.c.l.b16 %v6513
    %v6647 = vunpack.c.l.b16 %v6514
    %v6648 = vunpack.c.l.b16 %v6515
    %v6649 = vunpack.c.l.b16 %v6516
    %v6650 = vunpack.c.l.b16 %v6517
    %v6651 = vunpack.c.l.b16 %v6518
    %v6652 = vunpack.c.l.b16 %v6519
    %v6653 = vunpack.c.l.b16 %v6520
    %v6654 = vunpack.c.l.b16 %v6521
    %v6655 = vunpack.c.l.b16 %v6522
    %v6656 = vunpack.c.l.b16 %v6523
    %v6657 = vunpack.c.l.b16 %v6524
    %v6658 = vunpack.c.l.b16 %v6525
    %v6659 = vunpack.c.l.b16 %v6526
    %v6660 = vpack.c.b16 %v6597, %v6596
    %v6661 = vpack.c.b16 %v6599, %v6598
    %v6662 = vpack.c.b16 %v6601, %v6600
    %v6663 = vpack.c.b16 %v6603, %v6602
    %v6664 = vpack.c.b16 %v6605, %v6604
    %v6665 = vpack.c.b16 %v6607, %v6606
    %v6666 = vpack.c.b16 %v6609, %v6608
    %v6667 = vpack.c.b16 %v6611, %v6610
    %v6668 = vpack.c.b16 %v6613, %v6612
    %v6669 = vpack.c.b16 %v6615, %v6614
    %v6670 = vpack.c.b16 %v6617, %v6616
    %v6671 = vpack.c.b16 %v6619, %v6618
    %v6672 = vpack.c.b16 %v6621, %v6620
    %v6673 = vpack.c.b16 %v6623, %v6622
    %v6674 = vpack.c.b16 %v6625, %v6624
    %v6675 = vpack.c.b16 %v6627, %v6626
    %v6676 = vpack.c.b16 %v6629, %v6628
    %v6677 = vpack.c.b16 %v6631, %v6630
    %v6678 = vpack.c.b16 %v6633, %v6632
    %v6679 = vpack.c.b16 %v6635, %v6634
    %v6680 = vpack.c.b16 %v6637, %v6636
    %v6681 = vpack.c.b16 %v6639, %v6638
    %v6682 = vpack.c.b16 %v6641, %v6640
    %v6683 = vpack.c.b16 %v6643, %v6642
    %v6684 = vpack.c.b16 %v6645, %v6644
    %v6685 = vpack.c.b16 %v6647, %v6646
    %v6686 = vpack.c.b16 %v6649, %v6648
    %v6687 = vpack.c.b16 %v6651, %v6650
    %v6688 = vpack.c.b16 %v6653, %v6652
    %v6689 = vpack.c.b16 %v6655, %v6654
    %v6690 = vpack.c.b16 %v6657, %v6656
    %v6691 = vpack.c.b16 %v6659, %v6658
    %6724 = vmatpush.bf16.msra.mxu0 %v6667
    %6725 = vmatpush.bf16.msra.mxu0 %v6666
    %6726 = vmatpush.bf16.msra.mxu0 %v6665
    %6727 = vmatpush.bf16.msra.mxu0 %v6664
    %6728 = vmatpush.bf16.msra.mxu0 %v6663
    %6729 = vmatpush.bf16.msra.mxu0 %v6662
    %6730 = vmatpush.bf16.msra.mxu0 %v6661
    %6731 = vmatpush.bf16.msra.mxu0 %v6660
    %6732 = vmatmul.bf16.gmra.mxu0 %v6527
    %v6733 = vpop.f32.mrf.mxu0
    %v6734 = vadd.f32 %v6531, %v6733
    %v6735 = vpop.f32.mrf.mxu0
    %6736 = vdwg.mxu0
    %6737 = vmatpush.bf16.msra.mxu0 %v6675
    %6738 = vmatpush.bf16.msra.mxu0 %v6674
    %6739 = vmatpush.bf16.msra.mxu0 %v6673
    %6740 = vmatpush.bf16.msra.mxu0 %v6672
    %6741 = vmatpush.bf16.msra.mxu0 %v6671
    %6742 = vmatpush.bf16.msra.mxu0 %v6670
    %6743 = vmatpush.bf16.msra.mxu0 %v6669
    %6744 = vmatpush.bf16.msra.mxu0 %v6668
    %6745 = vmatmul.bf16.gmra.mxu0 %v6528
    %v6746 = vpop.f32.mrf.mxu0
    %v6747 = vadd.f32 %v6734, %v6746
    %v6748 = vpop.f32.mrf.mxu0
    %6749 = vdwg.mxu0
    %6750 = vmatpush.bf16.msra.mxu0 %v6683
    %6751 = vmatpush.bf16.msra.mxu0 %v6682
    %6752 = vmatpush.bf16.msra.mxu0 %v6681
    %6753 = vmatpush.bf16.msra.mxu0 %v6680
    %6754 = vmatpush.bf16.msra.mxu0 %v6679
    %6755 = vmatpush.bf16.msra.mxu0 %v6678
    %6756 = vmatpush.bf16.msra.mxu0 %v6677
    %6757 = vmatpush.bf16.msra.mxu0 %v6676
    %6758 = vmatmul.bf16.gmra.mxu0 %v6529
    %v6759 = vpop.f32.mrf.mxu0
    %v6760 = vadd.f32 %v6747, %v6759
    %v6761 = vpop.f32.mrf.mxu0
    %6762 = vdwg.mxu0
    %6763 = vmatpush.bf16.msra.mxu0 %v6691
    %6764 = vmatpush.bf16.msra.mxu0 %v6690
    %6765 = vmatpush.bf16.msra.mxu0 %v6689
    %6766 = vmatpush.bf16.msra.mxu0 %v6688
    %6767 = vmatpush.bf16.msra.mxu0 %v6687
    %6768 = vmatpush.bf16.msra.mxu0 %v6686
    %6769 = vmatpush.bf16.msra.mxu0 %v6685
    %6770 = vmatpush.bf16.msra.mxu0 %v6684
    %6771 = vmatmul.bf16.gmra.mxu0 %v6530
    %v6772 = vpop.f32.mrf.mxu0
    %v6773 = vadd.f32 %v6760, %v6772
    %v6774 = vpop.f32.mrf.mxu0
    %6775 = vdwg.mxu0
    %v6776 = vadd.f32 %v6198, %v6773
    %6777 = vadd.xlane.f32.xlu0 %v6776
    %v6778 = vpop.xlane.xlu0 %6777
    %v6779 = vmul.f32 %v6778, %v625
    %v6780 = vsub.f32 %v6776, %v6779
    %v6781 = vmul.f32 %v6780, %v6780
    %6782 = vadd.xlane.f32.xlu0 %v6781
    %v6783 = vpop.xlane.xlu0 %6782
    %v6784 = vmul.f32 %v6783, %v625
    %v6785 = vadd.f32 %v6784, 1e-05
    %v6786 = vrsqrt.pop %v6785
    %v6787 = vmul.f32 %v6786, %v6785
    %v6788 = vmul.f32 %v6787, %v6786
    %v6789 = vmul.f32 0.5, %v6788
    %v6790 = vsub.f32 1.5, %v6789
    %v6791 = vmul.f32 %v6786, %v6790
    %vm6792 = vweird.f32 %v6785
    %vm6793 = vweird.f32 %v6786
    %vm6794 = vmor %vm6792, %vm6793
    %v6795 = vsel %vm6794, %v6786, %v6791
    %v6796 = vmul.f32 %v6780, %v6795
    %v6797 = vperm.slane %v6200, 1
    %v6798 = vmul.f32 %v6796, %v6797
    %v6799 = vperm.slane %v6200, 2
    %v6800 = vadd.f32 %v6798, %v6799
    %s6801 = scalar_lea.vmem [#allocation26], 32
    %v6802 = vld [vmem:[%s6801] sm:$0x3f]
    %s6803 = scalar_lea.vmem [#allocation25], 1024
    %v6804 = vld [vmem:[%s6803] sm:$0xf]
    %v6805 = vld [vmem:[%s6803 + $0x4] sm:$0xf]
    %v6806 = vld [vmem:[%s6803 + $0x8] sm:$0xf]
    %v6807 = vld [vmem:[%s6803 + $0xc] sm:$0xf]
    %v6808 = vld [vmem:[%s6803 + $0x10] sm:$0xf]
    %v6809 = vld [vmem:[%s6803 + $0x14] sm:$0xf]
    %v6810 = vld [vmem:[%s6803 + $0x18] sm:$0xf]
    %v6811 = vld [vmem:[%s6803 + $0x1c] sm:$0xf]
    %v6812 = vld [vmem:[%s6803 + $0x20] sm:$0xf]
    %v6813 = vld [vmem:[%s6803 + $0x24] sm:$0xf]
    %v6814 = vld [vmem:[%s6803 + $0x28] sm:$0xf]
    %v6815 = vld [vmem:[%s6803 + $0x2c] sm:$0xf]
    %v6816 = vld [vmem:[%s6803 + $0x30] sm:$0xf]
    %v6817 = vld [vmem:[%s6803 + $0x34] sm:$0xf]
    %v6818 = vld [vmem:[%s6803 + $0x38] sm:$0xf]
    %v6819 = vld [vmem:[%s6803 + $0x3c] sm:$0xf]
    %s6820 = scalar_lea.vmem [#allocation25], 1088
    %v6821 = vld [vmem:[%s6820] sm:$0xf]
    %v6822 = vld [vmem:[%s6820 + $0x4] sm:$0xf]
    %v6823 = vld [vmem:[%s6820 + $0x8] sm:$0xf]
    %v6824 = vld [vmem:[%s6820 + $0xc] sm:$0xf]
    %v6825 = vld [vmem:[%s6820 + $0x10] sm:$0xf]
    %v6826 = vld [vmem:[%s6820 + $0x14] sm:$0xf]
    %v6827 = vld [vmem:[%s6820 + $0x18] sm:$0xf]
    %v6828 = vld [vmem:[%s6820 + $0x1c] sm:$0xf]
    %v6829 = vld [vmem:[%s6820 + $0x20] sm:$0xf]
    %v6830 = vld [vmem:[%s6820 + $0x24] sm:$0xf]
    %v6831 = vld [vmem:[%s6820 + $0x28] sm:$0xf]
    %v6832 = vld [vmem:[%s6820 + $0x2c] sm:$0xf]
    %v6833 = vld [vmem:[%s6820 + $0x30] sm:$0xf]
    %v6834 = vld [vmem:[%s6820 + $0x34] sm:$0xf]
    %v6835 = vld [vmem:[%s6820 + $0x38] sm:$0xf]
    %v6836 = vld [vmem:[%s6820 + $0x3c] sm:$0xf]
    %s6837 = scalar_lea.vmem [#allocation25], 1152
    %v6838 = vld [vmem:[%s6837] sm:$0xf]
    %v6839 = vld [vmem:[%s6837 + $0x4] sm:$0xf]
    %v6840 = vld [vmem:[%s6837 + $0x8] sm:$0xf]
    %v6841 = vld [vmem:[%s6837 + $0xc] sm:$0xf]
    %v6842 = vld [vmem:[%s6837 + $0x10] sm:$0xf]
    %v6843 = vld [vmem:[%s6837 + $0x14] sm:$0xf]
    %v6844 = vld [vmem:[%s6837 + $0x18] sm:$0xf]
    %v6845 = vld [vmem:[%s6837 + $0x1c] sm:$0xf]
    %v6846 = vld [vmem:[%s6837 + $0x20] sm:$0xf]
    %v6847 = vld [vmem:[%s6837 + $0x24] sm:$0xf]
    %v6848 = vld [vmem:[%s6837 + $0x28] sm:$0xf]
    %v6849 = vld [vmem:[%s6837 + $0x2c] sm:$0xf]
    %v6850 = vld [vmem:[%s6837 + $0x30] sm:$0xf]
    %v6851 = vld [vmem:[%s6837 + $0x34] sm:$0xf]
    %v6852 = vld [vmem:[%s6837 + $0x38] sm:$0xf]
    %v6853 = vld [vmem:[%s6837 + $0x3c] sm:$0xf]
    %s6854 = scalar_lea.vmem [#allocation25], 1216
    %v6855 = vld [vmem:[%s6854] sm:$0xf]
    %v6856 = vld [vmem:[%s6854 + $0x4] sm:$0xf]
    %v6857 = vld [vmem:[%s6854 + $0x8] sm:$0xf]
    %v6858 = vld [vmem:[%s6854 + $0xc] sm:$0xf]
    %v6859 = vld [vmem:[%s6854 + $0x10] sm:$0xf]
    %v6860 = vld [vmem:[%s6854 + $0x14] sm:$0xf]
    %v6861 = vld [vmem:[%s6854 + $0x18] sm:$0xf]
    %v6862 = vld [vmem:[%s6854 + $0x1c] sm:$0xf]
    %v6863 = vld [vmem:[%s6854 + $0x20] sm:$0xf]
    %v6864 = vld [vmem:[%s6854 + $0x24] sm:$0xf]
    %v6865 = vld [vmem:[%s6854 + $0x28] sm:$0xf]
    %v6866 = vld [vmem:[%s6854 + $0x2c] sm:$0xf]
    %v6867 = vld [vmem:[%s6854 + $0x30] sm:$0xf]
    %v6868 = vld [vmem:[%s6854 + $0x34] sm:$0xf]
    %v6869 = vld [vmem:[%s6854 + $0x38] sm:$0xf]
    %v6870 = vld [vmem:[%s6854 + $0x3c] sm:$0xf]
    %v6871 = vpack.c.bf16 %v6800, %v6800
    %v6872 = vperm.slane %v6802, 0
    %v6889 = vunpack.c.l.b16 %v6804
    %v6890 = vunpack.c.l.b16 %v6805
    %v6891 = vunpack.c.l.b16 %v6806
    %v6892 = vunpack.c.l.b16 %v6807
    %v6893 = vunpack.c.l.b16 %v6808
    %v6894 = vunpack.c.l.b16 %v6809
    %v6895 = vunpack.c.l.b16 %v6810
    %v6896 = vunpack.c.l.b16 %v6811
    %v6897 = vunpack.c.l.b16 %v6812
    %v6898 = vunpack.c.l.b16 %v6813
    %v6899 = vunpack.c.l.b16 %v6814
    %v6900 = vunpack.c.l.b16 %v6815
    %v6901 = vunpack.c.l.b16 %v6816
    %v6902 = vunpack.c.l.b16 %v6817
    %v6903 = vunpack.c.l.b16 %v6818
    %v6904 = vunpack.c.l.b16 %v6819
    %v6905 = vpack.c.b16 %v6890, %v6889
    %v6906 = vpack.c.b16 %v6892, %v6891
    %v6907 = vpack.c.b16 %v6894, %v6893
    %v6908 = vpack.c.b16 %v6896, %v6895
    %v6909 = vpack.c.b16 %v6898, %v6897
    %v6910 = vpack.c.b16 %v6900, %v6899
    %v6911 = vpack.c.b16 %v6902, %v6901
    %v6912 = vpack.c.b16 %v6904, %v6903
    %6921 = vmatpush.bf16.msra.mxu0 %v6912
    %6922 = vmatpush.bf16.msra.mxu0 %v6911
    %6923 = vmatpush.bf16.msra.mxu0 %v6910
    %6924 = vmatpush.bf16.msra.mxu0 %v6909
    %6925 = vmatpush.bf16.msra.mxu0 %v6908
    %6926 = vmatpush.bf16.msra.mxu0 %v6907
    %6927 = vmatpush.bf16.msra.mxu0 %v6906
    %6928 = vmatpush.bf16.msra.mxu0 %v6905
    %6929 = vmatmul.bf16.gmra.mxu0 %v6871
    %v6930 = vpop.f32.mrf.mxu0
    %v6931 = vadd.f32 %v6872, %v6930
    %v6932 = vpop.f32.mrf.mxu0
    %6933 = vdwg.mxu0
    %v6934 = vperm.slane %v6802, 1
    %v6951 = vunpack.c.l.b16 %v6821
    %v6952 = vunpack.c.l.b16 %v6822
    %v6953 = vunpack.c.l.b16 %v6823
    %v6954 = vunpack.c.l.b16 %v6824
    %v6955 = vunpack.c.l.b16 %v6825
    %v6956 = vunpack.c.l.b16 %v6826
    %v6957 = vunpack.c.l.b16 %v6827
    %v6958 = vunpack.c.l.b16 %v6828
    %v6959 = vunpack.c.l.b16 %v6829
    %v6960 = vunpack.c.l.b16 %v6830
    %v6961 = vunpack.c.l.b16 %v6831
    %v6962 = vunpack.c.l.b16 %v6832
    %v6963 = vunpack.c.l.b16 %v6833
    %v6964 = vunpack.c.l.b16 %v6834
    %v6965 = vunpack.c.l.b16 %v6835
    %v6966 = vunpack.c.l.b16 %v6836
    %v6967 = vpack.c.b16 %v6952, %v6951
    %v6968 = vpack.c.b16 %v6954, %v6953
    %v6969 = vpack.c.b16 %v6956, %v6955
    %v6970 = vpack.c.b16 %v6958, %v6957
    %v6971 = vpack.c.b16 %v6960, %v6959
    %v6972 = vpack.c.b16 %v6962, %v6961
    %v6973 = vpack.c.b16 %v6964, %v6963
    %v6974 = vpack.c.b16 %v6966, %v6965
    %6983 = vmatpush.bf16.msra.mxu0 %v6974
    %6984 = vmatpush.bf16.msra.mxu0 %v6973
    %6985 = vmatpush.bf16.msra.mxu0 %v6972
    %6986 = vmatpush.bf16.msra.mxu0 %v6971
    %6987 = vmatpush.bf16.msra.mxu0 %v6970
    %6988 = vmatpush.bf16.msra.mxu0 %v6969
    %6989 = vmatpush.bf16.msra.mxu0 %v6968
    %6990 = vmatpush.bf16.msra.mxu0 %v6967
    %6991 = vmatmul.bf16.gmra.mxu0 %v1899
    %v6992 = vpop.f32.mrf.mxu0
    %v6993 = vadd.f32 %v6934, %v6992
    %v6994 = vpop.f32.mrf.mxu0
    %v6995 = vadd.f32 %v6934, %v6994
    %6996 = vmatmul.bf16.gmra.mxu0 %v1900
    %v6997 = vpop.f32.mrf.mxu0
    %v6998 = vadd.f32 %v6934, %v6997
    %v6999 = vpop.f32.mrf.mxu0
    %v7000 = vadd.f32 %v6934, %v6999
    %7001 = vdwg.mxu0
    %v7002 = vperm.slane %v6802, 2
    %v7019 = vunpack.c.l.b16 %v6838
    %v7020 = vunpack.c.l.b16 %v6839
    %v7021 = vunpack.c.l.b16 %v6840
    %v7022 = vunpack.c.l.b16 %v6841
    %v7023 = vunpack.c.l.b16 %v6842
    %v7024 = vunpack.c.l.b16 %v6843
    %v7025 = vunpack.c.l.b16 %v6844
    %v7026 = vunpack.c.l.b16 %v6845
    %v7027 = vunpack.c.l.b16 %v6846
    %v7028 = vunpack.c.l.b16 %v6847
    %v7029 = vunpack.c.l.b16 %v6848
    %v7030 = vunpack.c.l.b16 %v6849
    %v7031 = vunpack.c.l.b16 %v6850
    %v7032 = vunpack.c.l.b16 %v6851
    %v7033 = vunpack.c.l.b16 %v6852
    %v7034 = vunpack.c.l.b16 %v6853
    %v7035 = vpack.c.b16 %v7020, %v7019
    %v7036 = vpack.c.b16 %v7022, %v7021
    %v7037 = vpack.c.b16 %v7024, %v7023
    %v7038 = vpack.c.b16 %v7026, %v7025
    %v7039 = vpack.c.b16 %v7028, %v7027
    %v7040 = vpack.c.b16 %v7030, %v7029
    %v7041 = vpack.c.b16 %v7032, %v7031
    %v7042 = vpack.c.b16 %v7034, %v7033
    %7051 = vmatpush.bf16.msra.mxu0 %v7042
    %7052 = vmatpush.bf16.msra.mxu0 %v7041
    %7053 = vmatpush.bf16.msra.mxu0 %v7040
    %7054 = vmatpush.bf16.msra.mxu0 %v7039
    %7055 = vmatpush.bf16.msra.mxu0 %v7038
    %7056 = vmatpush.bf16.msra.mxu0 %v7037
    %7057 = vmatpush.bf16.msra.mxu0 %v7036
    %7058 = vmatpush.bf16.msra.mxu0 %v7035
    %7059 = vmatmul.bf16.gmra.mxu0 %v1969
    %v7060 = vpop.f32.mrf.mxu0
    %v7061 = vadd.f32 %v7002, %v7060
    %v7062 = vpop.f32.mrf.mxu0
    %v7063 = vadd.f32 %v7002, %v7062
    %7064 = vmatmul.bf16.gmra.mxu0 %v1970
    %v7065 = vpop.f32.mrf.mxu0
    %v7066 = vadd.f32 %v7002, %v7065
    %v7067 = vpop.f32.mrf.mxu0
    %v7068 = vadd.f32 %v7002, %v7067
    %7069 = vdwg.mxu0
    %v7071 = vrot.slane %v6931, 1
    %v7072 = vrot.slane %v6931, 2
    %v7073 = vrot.slane %v6931, 3
    %v7074 = vrot.slane %v6931, 4
    %v7075 = vrot.slane %v6931, 5
    %v7076 = vrot.slane %v6931, 6
    %v7077 = vrot.slane %v6931, 7
    %v7078 = vperm.slane %v6931, 0
    %v7079 = vperm.slane %v7071, 0
    %v7080 = vperm.slane %v7072, 0
    %v7081 = vperm.slane %v7073, 0
    %v7082 = vperm.slane %v7074, 0
    %v7083 = vperm.slane %v7075, 0
    %v7084 = vperm.slane %v7076, 0
    %v7085 = vperm.slane %v7077, 0
    %v7094 = vmul.f32 %v7078, %v1767
    %v7095 = vmul.f32 %v7079, %v1767
    %v7096 = vmul.f32 %v7080, %v1767
    %v7097 = vmul.f32 %v7081, %v1767
    %v7098 = vmul.f32 %v7082, %v1767
    %v7099 = vmul.f32 %v7083, %v1767
    %v7100 = vmul.f32 %v7084, %v1767
    %v7101 = vmul.f32 %v7085, %v1767
    %v7102 = vpack.c.bf16 %v7095, %v7094
    %v7103 = vpack.c.bf16 %v7097, %v7096
    %v7104 = vpack.c.bf16 %v7099, %v7098
    %v7105 = vpack.c.bf16 %v7101, %v7100
    %v7106 = vpack.c.bf16 %v6995, %v6993
    %v7107 = vpack.c.bf16 %v7000, %v6998
    %7108 = vmatpush.bf16.xpose.msra.mxu0 0
    %7109 = vmatpush.bf16.xpose.msra.mxu0 0
    %7110 = vmatpush.bf16.xpose.msra.mxu0 0
    %7111 = vmatpush.bf16.xpose.msra.mxu0 0
    %7112 = vmatpush.bf16.xpose.msra.mxu0 0
    %7113 = vmatpush.bf16.xpose.msra.mxu0 0
    %7114 = vmatpush.bf16.xpose.msra.mxu0 %v7107
    %7115 = vmatpush.bf16.xpose.msra.mxu0 %v7106
    %7116 = vmatmul.bf16.gmra.mxu0 %v7102
    %v7117 = vpop.f32.mrf.mxu0
    %v7118 = vadd.f32 0.0, %v7117
    %v7119 = vpop.f32.mrf.mxu0
    %v7120 = vadd.f32 0.0, %v7119
    %7121 = vmatmul.bf16.gmra.mxu0 %v7103
    %v7122 = vpop.f32.mrf.mxu0
    %v7123 = vadd.f32 0.0, %v7122
    %v7124 = vpop.f32.mrf.mxu0
    %v7125 = vadd.f32 0.0, %v7124
    %7126 = vmatmul.bf16.gmra.mxu0 %v7104
    %v7127 = vpop.f32.mrf.mxu0
    %v7128 = vadd.f32 0.0, %v7127
    %v7129 = vpop.f32.mrf.mxu0
    %v7130 = vadd.f32 0.0, %v7129
    %7131 = vmatmul.bf16.gmra.mxu0 %v7105
    %v7132 = vpop.f32.mrf.mxu0
    %v7133 = vadd.f32 0.0, %v7132
    %v7134 = vpop.f32.mrf.mxu0
    %v7135 = vadd.f32 0.0, %v7134
    %7136 = vdwg.mxu0
    %v7137 = vmul.f32 %v7118, 0.25
    %v7138 = vmul.f32 %v7120, 0.25
    %v7139 = vmul.f32 %v7123, 0.25
    %v7140 = vmul.f32 %v7125, 0.25
    %v7141 = vmul.f32 %v7128, 0.25
    %v7142 = vmul.f32 %v7130, 0.25
    %v7143 = vmul.f32 %v7133, 0.25
    %v7144 = vmul.f32 %v7135, 0.25
    %v7145 = vsel %vm598, %v7137, -inf
    %7146 = vmax.xlane.f32.xlu0 %v7145
    %v7147 = vpop.xlane.xlu0 %7146
    %v7148 = vsel %vm598, %v7138, -inf
    %7149 = vmax.xlane.f32.xlu0 %v7148
    %v7150 = vpop.xlane.xlu0 %7149
    %v7151 = vsel %vm598, %v7139, -inf
    %7152 = vmax.xlane.f32.xlu0 %v7151
    %v7153 = vpop.xlane.xlu0 %7152
    %v7154 = vsel %vm598, %v7140, -inf
    %7155 = vmax.xlane.f32.xlu0 %v7154
    %v7156 = vpop.xlane.xlu0 %7155
    %v7157 = vsel %vm598, %v7141, -inf
    %7158 = vmax.xlane.f32.xlu0 %v7157
    %v7159 = vpop.xlane.xlu0 %7158
    %v7160 = vsel %vm598, %v7142, -inf
    %7161 = vmax.xlane.f32.xlu0 %v7160
    %v7162 = vpop.xlane.xlu0 %7161
    %v7163 = vsel %vm598, %v7143, -inf
    %7164 = vmax.xlane.f32.xlu0 %v7163
    %v7165 = vpop.xlane.xlu0 %7164
    %v7166 = vsel %vm598, %v7144, -inf
    %7167 = vmax.xlane.f32.xlu0 %v7166
    %v7168 = vpop.xlane.xlu0 %7167
    %v7169 = vsub.f32 %v7137, %v7147
    %v7170 = vsub.f32 %v7138, %v7150
    %v7171 = vsub.f32 %v7139, %v7153
    %v7172 = vsub.f32 %v7140, %v7156
    %v7173 = vsub.f32 %v7141, %v7159
    %v7174 = vsub.f32 %v7142, %v7162
    %v7175 = vsub.f32 %v7143, %v7165
    %v7176 = vsub.f32 %v7144, %v7168
    %v7177 = vmul.f32 %v7169, 1.442695
    %v7178 = vpow.pop %v7177
    %v7179 = vmul.f32 %v7170, 1.442695
    %v7180 = vpow.pop %v7179
    %v7181 = vmul.f32 %v7171, 1.442695
    %v7182 = vpow.pop %v7181
    %v7183 = vmul.f32 %v7172, 1.442695
    %v7184 = vpow.pop %v7183
    %v7185 = vmul.f32 %v7173, 1.442695
    %v7186 = vpow.pop %v7185
    %v7187 = vmul.f32 %v7174, 1.442695
    %v7188 = vpow.pop %v7187
    %v7189 = vmul.f32 %v7175, 1.442695
    %v7190 = vpow.pop %v7189
    %v7191 = vmul.f32 %v7176, 1.442695
    %v7192 = vpow.pop %v7191
    %v7193 = vsel %vm598, %v7178, 0.0
    %7194 = vadd.xlane.f32.xlu0 %v7193
    %v7195 = vpop.xlane.xlu0 %7194
    %v7196 = vsel %vm598, %v7180, 0.0
    %7197 = vadd.xlane.f32.xlu0 %v7196
    %v7198 = vpop.xlane.xlu0 %7197
    %v7199 = vsel %vm598, %v7182, 0.0
    %7200 = vadd.xlane.f32.xlu0 %v7199
    %v7201 = vpop.xlane.xlu0 %7200
    %v7202 = vsel %vm598, %v7184, 0.0
    %7203 = vadd.xlane.f32.xlu0 %v7202
    %v7204 = vpop.xlane.xlu0 %7203
    %v7205 = vsel %vm598, %v7186, 0.0
    %7206 = vadd.xlane.f32.xlu0 %v7205
    %v7207 = vpop.xlane.xlu0 %7206
    %v7208 = vsel %vm598, %v7188, 0.0
    %7209 = vadd.xlane.f32.xlu0 %v7208
    %v7210 = vpop.xlane.xlu0 %7209
    %v7211 = vsel %vm598, %v7190, 0.0
    %7212 = vadd.xlane.f32.xlu0 %v7211
    %v7213 = vpop.xlane.xlu0 %7212
    %v7214 = vsel %vm598, %v7192, 0.0
    %7215 = vadd.xlane.f32.xlu0 %v7214
    %v7216 = vpop.xlane.xlu0 %7215
    %v7217 = vrcp.pop %v7195
    %v7218 = vrcp.pop %v7198
    %v7219 = vrcp.pop %v7201
    %v7220 = vrcp.pop %v7204
    %v7221 = vrcp.pop %v7207
    %v7222 = vrcp.pop %v7210
    %v7223 = vrcp.pop %v7213
    %v7224 = vrcp.pop %v7216
    %v7225 = vmul.f32 %v7178, %v7217
    %v7226 = vmul.f32 %v7180, %v7218
    %v7227 = vmul.f32 %v7182, %v7219
    %v7228 = vmul.f32 %v7184, %v7220
    %v7229 = vmul.f32 %v7186, %v7221
    %v7230 = vmul.f32 %v7188, %v7222
    %v7231 = vmul.f32 %v7190, %v7223
    %v7232 = vmul.f32 %v7192, %v7224
    %v7233 = vpack.c.bf16 %v7226, %v7225
    %v7234 = vpack.c.bf16 %v7228, %v7227
    %v7235 = vpack.c.bf16 %v7230, %v7229
    %v7236 = vpack.c.bf16 %v7232, %v7231
    %v7237 = vpack.c.bf16 %v7063, %v7061
    %v7238 = vpack.c.bf16 %v7068, %v7066
    %v7240 = vsel %vm598, %v7233, 0
    %v7243 = vsel %vm598, %v7234, 0
    %v7246 = vsel %vm598, %v7235, 0
    %v7249 = vsel %vm598, %v7236, 0
    %7251 = vmatpush.bf16.msra.mxu0 0
    %7252 = vmatpush.bf16.msra.mxu0 0
    %7253 = vmatpush.bf16.msra.mxu0 0
    %7254 = vmatpush.bf16.msra.mxu0 0
    %7255 = vmatpush.bf16.msra.mxu0 0
    %7256 = vmatpush.bf16.msra.mxu0 0
    %7257 = vmatpush.bf16.msra.mxu0 %v7238
    %7258 = vmatpush.bf16.msra.mxu0 %v7237
    %7259 = vmatmul.bf16.gmra.mxu0 %v7240
    %v7260 = vpop.f32.mrf.mxu0
    %v7261 = vadd.f32 0.0, %v7260
    %v7262 = vpop.f32.mrf.mxu0
    %v7263 = vadd.f32 0.0, %v7262
    %7264 = vmatmul.bf16.gmra.mxu0 %v7243
    %v7265 = vpop.f32.mrf.mxu0
    %v7266 = vadd.f32 0.0, %v7265
    %v7267 = vpop.f32.mrf.mxu0
    %v7268 = vadd.f32 0.0, %v7267
    %7269 = vmatmul.bf16.gmra.mxu0 %v7246
    %v7270 = vpop.f32.mrf.mxu0
    %v7271 = vadd.f32 0.0, %v7270
    %v7272 = vpop.f32.mrf.mxu0
    %v7273 = vadd.f32 0.0, %v7272
    %7274 = vmatmul.bf16.gmra.mxu0 %v7249
    %v7275 = vpop.f32.mrf.mxu0
    %v7276 = vadd.f32 0.0, %v7275
    %v7277 = vpop.f32.mrf.mxu0
    %v7278 = vadd.f32 0.0, %v7277
    %7279 = vdwg.mxu0
    %v7280 = vmul.f32 %v7261, %v1767
    %v7281 = vmul.f32 %v7263, %v1767
    %v7282 = vmul.f32 %v7266, %v1767
    %v7283 = vmul.f32 %v7268, %v1767
    %v7284 = vmul.f32 %v7271, %v1767
    %v7285 = vmul.f32 %v7273, %v1767
    %v7286 = vmul.f32 %v7276, %v1767
    %v7287 = vmul.f32 %v7278, %v1767
    %v7288 = vrot.slane %v7280, 4
    %v7289 = vadd.f32 %v7280, %v7288
    %v7290 = vrot.slane %v7289, 2
    %v7291 = vadd.f32 %v7289, %v7290
    %v7292 = vrot.slane %v7291, 1
    %v7293 = vadd.f32 %v7291, %v7292
    %v7294 = vrot.slane %v7281, 4
    %v7295 = vadd.f32 %v7281, %v7294
    %v7296 = vrot.slane %v7295, 2
    %v7297 = vadd.f32 %v7295, %v7296
    %v7298 = vrot.slane %v7297, 1
    %v7299 = vadd.f32 %v7297, %v7298
    %v7300 = vrot.slane %v7282, 4
    %v7301 = vadd.f32 %v7282, %v7300
    %v7302 = vrot.slane %v7301, 2
    %v7303 = vadd.f32 %v7301, %v7302
    %v7304 = vrot.slane %v7303, 1
    %v7305 = vadd.f32 %v7303, %v7304
    %v7306 = vrot.slane %v7283, 4
    %v7307 = vadd.f32 %v7283, %v7306
    %v7308 = vrot.slane %v7307, 2
    %v7309 = vadd.f32 %v7307, %v7308
    %v7310 = vrot.slane %v7309, 1
    %v7311 = vadd.f32 %v7309, %v7310
    %v7312 = vrot.slane %v7284, 4
    %v7313 = vadd.f32 %v7284, %v7312
    %v7314 = vrot.slane %v7313, 2
    %v7315 = vadd.f32 %v7313, %v7314
    %v7316 = vrot.slane %v7315, 1
    %v7317 = vadd.f32 %v7315, %v7316
    %v7318 = vrot.slane %v7285, 4
    %v7319 = vadd.f32 %v7285, %v7318
    %v7320 = vrot.slane %v7319, 2
    %v7321 = vadd.f32 %v7319, %v7320
    %v7322 = vrot.slane %v7321, 1
    %v7323 = vadd.f32 %v7321, %v7322
    %v7324 = vrot.slane %v7286, 4
    %v7325 = vadd.f32 %v7286, %v7324
    %v7326 = vrot.slane %v7325, 2
    %v7327 = vadd.f32 %v7325, %v7326
    %v7328 = vrot.slane %v7327, 1
    %v7329 = vadd.f32 %v7327, %v7328
    %v7330 = vrot.slane %v7287, 4
    %v7331 = vadd.f32 %v7287, %v7330
    %v7332 = vrot.slane %v7331, 2
    %v7333 = vadd.f32 %v7331, %v7332
    %v7334 = vrot.slane %v7333, 1
    %v7335 = vadd.f32 %v7333, %v7334
    %v7336 = vpack.c.bf16 %v7293, %v7293
    %v7337 = vpack.c.bf16 %v7299, %v7299
    %v7338 = vpack.c.bf16 %v7305, %v7305
    %v7339 = vpack.c.bf16 %v7311, %v7311
    %v7340 = vpack.c.bf16 %v7317, %v7317
    %v7341 = vpack.c.bf16 %v7323, %v7323
    %v7342 = vpack.c.bf16 %v7329, %v7329
    %v7343 = vpack.c.bf16 %v7335, %v7335
    %v7344 = vperm.slane %v6802, 3
    %v7353 = vunpack.c.l.b16 %v7336
    %v7354 = vunpack.c.l.b16 %v7337
    %v7355 = vunpack.c.l.b16 %v7338
    %v7356 = vunpack.c.l.b16 %v7339
    %v7357 = vunpack.c.l.b16 %v7340
    %v7358 = vunpack.c.l.b16 %v7341
    %v7359 = vunpack.c.l.b16 %v7342
    %v7360 = vunpack.c.l.b16 %v7343
    %v7361 = vsel %vm2330, %v7354, %v7353
    %v7362 = vsel %vm2332, %v7355, %v7361
    %v7363 = vsel %vm2334, %v7356, %v7362
    %v7364 = vsel %vm2336, %v7357, %v7363
    %v7365 = vsel %vm2338, %v7358, %v7364
    %v7366 = vsel %vm2340, %v7359, %v7365
    %v7367 = vsel %vm2342, %v7360, %v7366
    %v7368 = vpack.c.b16 %v7367, %v7367
    %v7386 = vunpack.c.l.b16 %v6855
    %v7387 = vunpack.c.l.b16 %v6856
    %v7388 = vunpack.c.l.b16 %v6857
    %v7389 = vunpack.c.l.b16 %v6858
    %v7390 = vunpack.c.l.b16 %v6859
    %v7391 = vunpack.c.l.b16 %v6860
    %v7392 = vunpack.c.l.b16 %v6861
    %v7393 = vunpack.c.l.b16 %v6862
    %v7394 = vunpack.c.l.b16 %v6863
    %v7395 = vunpack.c.l.b16 %v6864
    %v7396 = vunpack.c.l.b16 %v6865
    %v7397 = vunpack.c.l.b16 %v6866
    %v7398 = vunpack.c.l.b16 %v6867
    %v7399 = vunpack.c.l.b16 %v6868
    %v7400 = vunpack.c.l.b16 %v6869
    %v7401 = vunpack.c.l.b16 %v6870
    %v7402 = vpack.c.b16 %v7387, %v7386
    %v7403 = vpack.c.b16 %v7389, %v7388
    %v7404 = vpack.c.b16 %v7391, %v7390
    %v7405 = vpack.c.b16 %v7393, %v7392
    %v7406 = vpack.c.b16 %v7395, %v7394
    %v7407 = vpack.c.b16 %v7397, %v7396
    %v7408 = vpack.c.b16 %v7399, %v7398
    %v7409 = vpack.c.b16 %v7401, %v7400
    %7418 = vmatpush.bf16.msra.mxu0 %v7409
    %7419 = vmatpush.bf16.msra.mxu0 %v7408
    %7420 = vmatpush.bf16.msra.mxu0 %v7407
    %7421 = vmatpush.bf16.msra.mxu0 %v7406
    %7422 = vmatpush.bf16.msra.mxu0 %v7405
    %7423 = vmatpush.bf16.msra.mxu0 %v7404
    %7424 = vmatpush.bf16.msra.mxu0 %v7403
    %7425 = vmatpush.bf16.msra.mxu0 %v7402
    %7426 = vmatmul.bf16.gmra.mxu0 %v7368
    %v7427 = vpop.f32.mrf.mxu0
    %v7428 = vadd.f32 %v7344, %v7427
    %v7429 = vpop.f32.mrf.mxu0
    %7430 = vdwg.mxu0
    %v7431 = vadd.f32 %v6800, %v7428
    %7432 = vadd.xlane.f32.xlu0 %v7431
    %v7433 = vpop.xlane.xlu0 %7432
    %v7434 = vmul.f32 %v7433, %v625
    %v7435 = vsub.f32 %v7431, %v7434
    %v7436 = vmul.f32 %v7435, %v7435
    %7437 = vadd.xlane.f32.xlu0 %v7436
    %v7438 = vpop.xlane.xlu0 %7437
    %v7439 = vmul.f32 %v7438, %v625
    %v7440 = vadd.f32 %v7439, 1e-05
    %v7441 = vrsqrt.pop %v7440
    %v7442 = vmul.f32 %v7441, %v7440
    %v7443 = vmul.f32 %v7442, %v7441
    %v7444 = vmul.f32 0.5, %v7443
    %v7445 = vsub.f32 1.5, %v7444
    %v7446 = vmul.f32 %v7441, %v7445
    %vm7447 = vweird.f32 %v7440
    %vm7448 = vweird.f32 %v7441
    %vm7449 = vmor %vm7447, %vm7448
    %v7450 = vsel %vm7449, %v7441, %v7446
    %v7451 = vmul.f32 %v7435, %v7450
    %v7452 = vperm.slane %v6802, 4
    %v7453 = vmul.f32 %v7451, %v7452
    %v7454 = vperm.slane %v6802, 5
    %v7455 = vadd.f32 %v7453, %v7454
    %s7456 = scalar_lea.vmem %s20, 16
    %v7457 = vld [vmem:[%s7456] sm:$0x7]
    %s7458 = scalar_lea.vmem [#allocation28], 1024
    %v7459 = vld [vmem:[%s7458] sm:$0xff]
    %v7460 = vld [vmem:[%s7458 + $0x8] sm:$0xff]
    %v7461 = vld [vmem:[%s7458 + $0x10] sm:$0xff]
    %v7462 = vld [vmem:[%s7458 + $0x18] sm:$0xff]
    %v7463 = vld [vmem:[%s7458 + $0x20] sm:$0xff]
    %v7464 = vld [vmem:[%s7458 + $0x28] sm:$0xff]
    %v7465 = vld [vmem:[%s7458 + $0x30] sm:$0xff]
    %v7466 = vld [vmem:[%s7458 + $0x38] sm:$0xff]
    %v7467 = vld [vmem:[%s7458 + $0x40] sm:$0xff]
    %v7468 = vld [vmem:[%s7458 + $0x48] sm:$0xff]
    %v7469 = vld [vmem:[%s7458 + $0x50] sm:$0xff]
    %v7470 = vld [vmem:[%s7458 + $0x58] sm:$0xff]
    %v7471 = vld [vmem:[%s7458 + $0x60] sm:$0xff]
    %v7472 = vld [vmem:[%s7458 + $0x68] sm:$0xff]
    %v7473 = vld [vmem:[%s7458 + $0x70] sm:$0xff]
    %v7474 = vld [vmem:[%s7458 + $0x78] sm:$0xff]
    %v7475 = vld [vmem:[%s7458 + $0x80] sm:$0xff]
    %v7476 = vld [vmem:[%s7458 + $0x88] sm:$0xff]
    %v7477 = vld [vmem:[%s7458 + $0x90] sm:$0xff]
    %v7478 = vld [vmem:[%s7458 + $0x98] sm:$0xff]
    %v7479 = vld [vmem:[%s7458 + $0xa0] sm:$0xff]
    %v7480 = vld [vmem:[%s7458 + $0xa8] sm:$0xff]
    %v7481 = vld [vmem:[%s7458 + $0xb0] sm:$0xff]
    %v7482 = vld [vmem:[%s7458 + $0xb8] sm:$0xff]
    %v7483 = vld [vmem:[%s7458 + $0xc0] sm:$0xff]
    %v7484 = vld [vmem:[%s7458 + $0xc8] sm:$0xff]
    %v7485 = vld [vmem:[%s7458 + $0xd0] sm:$0xff]
    %v7486 = vld [vmem:[%s7458 + $0xd8] sm:$0xff]
    %v7487 = vld [vmem:[%s7458 + $0xe0] sm:$0xff]
    %v7488 = vld [vmem:[%s7458 + $0xe8] sm:$0xff]
    %v7489 = vld [vmem:[%s7458 + $0xf0] sm:$0xff]
    %v7490 = vld [vmem:[%s7458 + $0xf8] sm:$0xff]
    %v7491 = vpack.c.bf16 %v7455, %v7455
    %s7492 = scalar_lea.vmem [#allocation29], 16
    %v7493 = vld [vmem:[%s7492] sm:$0xf]
    %v7495 = vperm.slane %v7493, 0
    %v7496 = vperm.slane %v7493, 1
    %v7497 = vperm.slane %v7493, 2
    %v7498 = vperm.slane %v7493, 3
    %v7535 = vunpack.c.l.b16 %v7459
    %v7536 = vunpack.c.h.b16 %v7459
    %v7537 = vunpack.c.l.b16 %v7460
    %v7538 = vunpack.c.h.b16 %v7460
    %v7539 = vunpack.c.l.b16 %v7461
    %v7540 = vunpack.c.h.b16 %v7461
    %v7541 = vunpack.c.l.b16 %v7462
    %v7542 = vunpack.c.h.b16 %v7462
    %v7543 = vunpack.c.l.b16 %v7463
    %v7544 = vunpack.c.h.b16 %v7463
    %v7545 = vunpack.c.l.b16 %v7464
    %v7546 = vunpack.c.h.b16 %v7464
    %v7547 = vunpack.c.l.b16 %v7465
    %v7548 = vunpack.c.h.b16 %v7465
    %v7549 = vunpack.c.l.b16 %v7466
    %v7550 = vunpack.c.h.b16 %v7466
    %v7551 = vunpack.c.l.b16 %v7467
    %v7552 = vunpack.c.h.b16 %v7467
    %v7553 = vunpack.c.l.b16 %v7468
    %v7554 = vunpack.c.h.b16 %v7468
    %v7555 = vunpack.c.l.b16 %v7469
    %v7556 = vunpack.c.h.b16 %v7469
    %v7557 = vunpack.c.l.b16 %v7470
    %v7558 = vunpack.c.h.b16 %v7470
    %v7559 = vunpack.c.l.b16 %v7471
    %v7560 = vunpack.c.h.b16 %v7471
    %v7561 = vunpack.c.l.b16 %v7472
    %v7562 = vunpack.c.h.b16 %v7472
    %v7563 = vunpack.c.l.b16 %v7473
    %v7564 = vunpack.c.h.b16 %v7473
    %v7565 = vunpack.c.l.b16 %v7474
    %v7566 = vunpack.c.h.b16 %v7474
    %v7567 = vunpack.c.l.b16 %v7475
    %v7568 = vunpack.c.h.b16 %v7475
    %v7569 = vunpack.c.l.b16 %v7476
    %v7570 = vunpack.c.h.b16 %v7476
    %v7571 = vunpack.c.l.b16 %v7477
    %v7572 = vunpack.c.h.b16 %v7477
    %v7573 = vunpack.c.l.b16 %v7478
    %v7574 = vunpack.c.h.b16 %v7478
    %v7575 = vunpack.c.l.b16 %v7479
    %v7576 = vunpack.c.h.b16 %v7479
    %v7577 = vunpack.c.l.b16 %v7480
    %v7578 = vunpack.c.h.b16 %v7480
    %v7579 = vunpack.c.l.b16 %v7481
    %v7580 = vunpack.c.h.b16 %v7481
    %v7581 = vunpack.c.l.b16 %v7482
    %v7582 = vunpack.c.h.b16 %v7482
    %v7583 = vunpack.c.l.b16 %v7483
    %v7584 = vunpack.c.h.b16 %v7483
    %v7585 = vunpack.c.l.b16 %v7484
    %v7586 = vunpack.c.h.b16 %v7484
    %v7587 = vunpack.c.l.b16 %v7485
    %v7588 = vunpack.c.h.b16 %v7485
    %v7589 = vunpack.c.l.b16 %v7486
    %v7590 = vunpack.c.h.b16 %v7486
    %v7591 = vunpack.c.l.b16 %v7487
    %v7592 = vunpack.c.h.b16 %v7487
    %v7593 = vunpack.c.l.b16 %v7488
    %v7594 = vunpack.c.h.b16 %v7488
    %v7595 = vunpack.c.l.b16 %v7489
    %v7596 = vunpack.c.h.b16 %v7489
    %v7597 = vunpack.c.l.b16 %v7490
    %v7598 = vunpack.c.h.b16 %v7490
    %v7599 = vpack.c.b16 %v7539, %v7535
    %v7600 = vpack.c.b16 %v7540, %v7536
    %v7601 = vpack.c.b16 %v7541, %v7537
    %v7602 = vpack.c.b16 %v7542, %v7538
    %v7603 = vpack.c.b16 %v7547, %v7543
    %v7604 = vpack.c.b16 %v7548, %v7544
    %v7605 = vpack.c.b16 %v7549, %v7545
    %v7606 = vpack.c.b16 %v7550, %v7546
    %v7607 = vpack.c.b16 %v7555, %v7551
    %v7608 = vpack.c.b16 %v7556, %v7552
    %v7609 = vpack.c.b16 %v7557, %v7553
    %v7610 = vpack.c.b16 %v7558, %v7554
    %v7611 = vpack.c.b16 %v7563, %v7559
    %v7612 = vpack.c.b16 %v7564, %v7560
    %v7613 = vpack.c.b16 %v7565, %v7561
    %v7614 = vpack.c.b16 %v7566, %v7562
    %v7615 = vpack.c.b16 %v7571, %v7567
    %v7616 = vpack.c.b16 %v7572, %v7568
    %v7617 = vpack.c.b16 %v7573, %v7569
    %v7618 = vpack.c.b16 %v7574, %v7570
    %v7619 = vpack.c.b16 %v7579, %v7575
    %v7620 = vpack.c.b16 %v7580, %v7576
    %v7621 = vpack.c.b16 %v7581, %v7577
    %v7622 = vpack.c.b16 %v7582, %v7578
    %v7623 = vpack.c.b16 %v7587, %v7583
    %v7624 = vpack.c.b16 %v7588, %v7584
    %v7625 = vpack.c.b16 %v7589, %v7585
    %v7626 = vpack.c.b16 %v7590, %v7586
    %v7627 = vpack.c.b16 %v7595, %v7591
    %v7628 = vpack.c.b16 %v7596, %v7592
    %v7629 = vpack.c.b16 %v7597, %v7593
    %v7630 = vpack.c.b16 %v7598, %v7594
    %7663 = vmatpush.bf16.msra.mxu0 %v7627
    %7664 = vmatpush.bf16.msra.mxu0 %v7623
    %7665 = vmatpush.bf16.msra.mxu0 %v7619
    %7666 = vmatpush.bf16.msra.mxu0 %v7615
    %7667 = vmatpush.bf16.msra.mxu0 %v7611
    %7668 = vmatpush.bf16.msra.mxu0 %v7607
    %7669 = vmatpush.bf16.msra.mxu0 %v7603
    %7670 = vmatpush.bf16.msra.mxu0 %v7599
    %7671 = vmatmul.bf16.gmra.mxu0 %v7491
    %v7672 = vpop.f32.mrf.mxu0
    %v7673 = vadd.f32 %v7495, %v7672
    %v7674 = vpop.f32.mrf.mxu0
    %7675 = vdwg.mxu0
    %7676 = vmatpush.bf16.msra.mxu0 %v7628
    %7677 = vmatpush.bf16.msra.mxu0 %v7624
    %7678 = vmatpush.bf16.msra.mxu0 %v7620
    %7679 = vmatpush.bf16.msra.mxu0 %v7616
    %7680 = vmatpush.bf16.msra.mxu0 %v7612
    %7681 = vmatpush.bf16.msra.mxu0 %v7608
    %7682 = vmatpush.bf16.msra.mxu0 %v7604
    %7683 = vmatpush.bf16.msra.mxu0 %v7600
    %7684 = vmatmul.bf16.gmra.mxu0 %v7491
    %v7685 = vpop.f32.mrf.mxu0
    %v7686 = vadd.f32 %v7496, %v7685
    %v7687 = vpop.f32.mrf.mxu0
    %7688 = vdwg.mxu0
    %7689 = vmatpush.bf16.msra.mxu0 %v7629
    %7690 = vmatpush.bf16.msra.mxu0 %v7625
    %7691 = vmatpush.bf16.msra.mxu0 %v7621
    %7692 = vmatpush.bf16.msra.mxu0 %v7617
    %7693 = vmatpush.bf16.msra.mxu0 %v7613
    %7694 = vmatpush.bf16.msra.mxu0 %v7609
    %7695 = vmatpush.bf16.msra.mxu0 %v7605
    %7696 = vmatpush.bf16.msra.mxu0 %v7601
    %7697 = vmatmul.bf16.gmra.mxu0 %v7491
    %v7698 = vpop.f32.mrf.mxu0
    %v7699 = vadd.f32 %v7497, %v7698
    %v7700 = vpop.f32.mrf.mxu0
    %7701 = vdwg.mxu0
    %7702 = vmatpush.bf16.msra.mxu0 %v7630
    %7703 = vmatpush.bf16.msra.mxu0 %v7626
    %7704 = vmatpush.bf16.msra.mxu0 %v7622
    %7705 = vmatpush.bf16.msra.mxu0 %v7618
    %7706 = vmatpush.bf16.msra.mxu0 %v7614
    %7707 = vmatpush.bf16.msra.mxu0 %v7610
    %7708 = vmatpush.bf16.msra.mxu0 %v7606
    %7709 = vmatpush.bf16.msra.mxu0 %v7602
    %7710 = vmatmul.bf16.gmra.mxu0 %v7491
    %v7711 = vpop.f32.mrf.mxu0
    %v7712 = vadd.f32 %v7498, %v7711
    %v7713 = vpop.f32.mrf.mxu0
    %7714 = vdwg.mxu0
    %v7715 = vmax.f32 %v7673, 0.0
    %v7716 = vmax.f32 %v7686, 0.0
    %v7717 = vmax.f32 %v7699, 0.0
    %v7718 = vmax.f32 %v7712, 0.0
    %s7719 = scalar_lea.vmem [#allocation31], 1024
    %v7720 = vld [vmem:[%s7719] sm:$0xf]
    %v7721 = vld [vmem:[%s7719 + $0x4] sm:$0xf]
    %v7722 = vld [vmem:[%s7719 + $0x8] sm:$0xf]
    %v7723 = vld [vmem:[%s7719 + $0xc] sm:$0xf]
    %v7724 = vld [vmem:[%s7719 + $0x10] sm:$0xf]
    %v7725 = vld [vmem:[%s7719 + $0x14] sm:$0xf]
    %v7726 = vld [vmem:[%s7719 + $0x18] sm:$0xf]
    %v7727 = vld [vmem:[%s7719 + $0x1c] sm:$0xf]
    %v7728 = vld [vmem:[%s7719 + $0x20] sm:$0xf]
    %v7729 = vld [vmem:[%s7719 + $0x24] sm:$0xf]
    %v7730 = vld [vmem:[%s7719 + $0x28] sm:$0xf]
    %v7731 = vld [vmem:[%s7719 + $0x2c] sm:$0xf]
    %v7732 = vld [vmem:[%s7719 + $0x30] sm:$0xf]
    %v7733 = vld [vmem:[%s7719 + $0x34] sm:$0xf]
    %v7734 = vld [vmem:[%s7719 + $0x38] sm:$0xf]
    %v7735 = vld [vmem:[%s7719 + $0x3c] sm:$0xf]
    %v7736 = vld [vmem:[%s7719 + $0x40] sm:$0xf]
    %v7737 = vld [vmem:[%s7719 + $0x44] sm:$0xf]
    %v7738 = vld [vmem:[%s7719 + $0x48] sm:$0xf]
    %v7739 = vld [vmem:[%s7719 + $0x4c] sm:$0xf]
    %v7740 = vld [vmem:[%s7719 + $0x50] sm:$0xf]
    %v7741 = vld [vmem:[%s7719 + $0x54] sm:$0xf]
    %v7742 = vld [vmem:[%s7719 + $0x58] sm:$0xf]
    %v7743 = vld [vmem:[%s7719 + $0x5c] sm:$0xf]
    %v7744 = vld [vmem:[%s7719 + $0x60] sm:$0xf]
    %v7745 = vld [vmem:[%s7719 + $0x64] sm:$0xf]
    %v7746 = vld [vmem:[%s7719 + $0x68] sm:$0xf]
    %v7747 = vld [vmem:[%s7719 + $0x6c] sm:$0xf]
    %v7748 = vld [vmem:[%s7719 + $0x70] sm:$0xf]
    %v7749 = vld [vmem:[%s7719 + $0x74] sm:$0xf]
    %v7750 = vld [vmem:[%s7719 + $0x78] sm:$0xf]
    %v7751 = vld [vmem:[%s7719 + $0x7c] sm:$0xf]
    %v7752 = vld [vmem:[%s7719 + $0x80] sm:$0xf]
    %v7753 = vld [vmem:[%s7719 + $0x84] sm:$0xf]
    %v7754 = vld [vmem:[%s7719 + $0x88] sm:$0xf]
    %v7755 = vld [vmem:[%s7719 + $0x8c] sm:$0xf]
    %v7756 = vld [vmem:[%s7719 + $0x90] sm:$0xf]
    %v7757 = vld [vmem:[%s7719 + $0x94] sm:$0xf]
    %v7758 = vld [vmem:[%s7719 + $0x98] sm:$0xf]
    %v7759 = vld [vmem:[%s7719 + $0x9c] sm:$0xf]
    %v7760 = vld [vmem:[%s7719 + $0xa0] sm:$0xf]
    %v7761 = vld [vmem:[%s7719 + $0xa4] sm:$0xf]
    %v7762 = vld [vmem:[%s7719 + $0xa8] sm:$0xf]
    %v7763 = vld [vmem:[%s7719 + $0xac] sm:$0xf]
    %v7764 = vld [vmem:[%s7719 + $0xb0] sm:$0xf]
    %v7765 = vld [vmem:[%s7719 + $0xb4] sm:$0xf]
    %v7766 = vld [vmem:[%s7719 + $0xb8] sm:$0xf]
    %v7767 = vld [vmem:[%s7719 + $0xbc] sm:$0xf]
    %v7768 = vld [vmem:[%s7719 + $0xc0] sm:$0xf]
    %v7769 = vld [vmem:[%s7719 + $0xc4] sm:$0xf]
    %v7770 = vld [vmem:[%s7719 + $0xc8] sm:$0xf]
    %v7771 = vld [vmem:[%s7719 + $0xcc] sm:$0xf]
    %v7772 = vld [vmem:[%s7719 + $0xd0] sm:$0xf]
    %v7773 = vld [vmem:[%s7719 + $0xd4] sm:$0xf]
    %v7774 = vld [vmem:[%s7719 + $0xd8] sm:$0xf]
    %v7775 = vld [vmem:[%s7719 + $0xdc] sm:$0xf]
    %v7776 = vld [vmem:[%s7719 + $0xe0] sm:$0xf]
    %v7777 = vld [vmem:[%s7719 + $0xe4] sm:$0xf]
    %v7778 = vld [vmem:[%s7719 + $0xe8] sm:$0xf]
    %v7779 = vld [vmem:[%s7719 + $0xec] sm:$0xf]
    %v7780 = vld [vmem:[%s7719 + $0xf0] sm:$0xf]
    %v7781 = vld [vmem:[%s7719 + $0xf4] sm:$0xf]
    %v7782 = vld [vmem:[%s7719 + $0xf8] sm:$0xf]
    %v7783 = vld [vmem:[%s7719 + $0xfc] sm:$0xf]
    %v7784 = vpack.c.bf16 %v7715, %v7715
    %v7785 = vpack.c.bf16 %v7716, %v7716
    %v7786 = vpack.c.bf16 %v7717, %v7717
    %v7787 = vpack.c.bf16 %v7718, %v7718
    %v7788 = vperm.slane %v7457, 0
    %v7853 = vunpack.c.l.b16 %v7720
    %v7854 = vunpack.c.l.b16 %v7721
    %v7855 = vunpack.c.l.b16 %v7722
    %v7856 = vunpack.c.l.b16 %v7723
    %v7857 = vunpack.c.l.b16 %v7724
    %v7858 = vunpack.c.l.b16 %v7725
    %v7859 = vunpack.c.l.b16 %v7726
    %v7860 = vunpack.c.l.b16 %v7727
    %v7861 = vunpack.c.l.b16 %v7728
    %v7862 = vunpack.c.l.b16 %v7729
    %v7863 = vunpack.c.l.b16 %v7730
    %v7864 = vunpack.c.l.b16 %v7731
    %v7865 = vunpack.c.l.b16 %v7732
    %v7866 = vunpack.c.l.b16 %v7733
    %v7867 = vunpack.c.l.b16 %v7734
    %v7868 = vunpack.c.l.b16 %v7735
    %v7869 = vunpack.c.l.b16 %v7736
    %v7870 = vunpack.c.l.b16 %v7737
    %v7871 = vunpack.c.l.b16 %v7738
    %v7872 = vunpack.c.l.b16 %v7739
    %v7873 = vunpack.c.l.b16 %v7740
    %v7874 = vunpack.c.l.b16 %v7741
    %v7875 = vunpack.c.l.b16 %v7742
    %v7876 = vunpack.c.l.b16 %v7743
    %v7877 = vunpack.c.l.b16 %v7744
    %v7878 = vunpack.c.l.b16 %v7745
    %v7879 = vunpack.c.l.b16 %v7746
    %v7880 = vunpack.c.l.b16 %v7747
    %v7881 = vunpack.c.l.b16 %v7748
    %v7882 = vunpack.c.l.b16 %v7749
    %v7883 = vunpack.c.l.b16 %v7750
    %v7884 = vunpack.c.l.b16 %v7751
    %v7885 = vunpack.c.l.b16 %v7752
    %v7886 = vunpack.c.l.b16 %v7753
    %v7887 = vunpack.c.l.b16 %v7754
    %v7888 = vunpack.c.l.b16 %v7755
    %v7889 = vunpack.c.l.b16 %v7756
    %v7890 = vunpack.c.l.b16 %v7757
    %v7891 = vunpack.c.l.b16 %v7758
    %v7892 = vunpack.c.l.b16 %v7759
    %v7893 = vunpack.c.l.b16 %v7760
    %v7894 = vunpack.c.l.b16 %v7761
    %v7895 = vunpack.c.l.b16 %v7762
    %v7896 = vunpack.c.l.b16 %v7763
    %v7897 = vunpack.c.l.b16 %v7764
    %v7898 = vunpack.c.l.b16 %v7765
    %v7899 = vunpack.c.l.b16 %v7766
    %v7900 = vunpack.c.l.b16 %v7767
    %v7901 = vunpack.c.l.b16 %v7768
    %v7902 = vunpack.c.l.b16 %v7769
    %v7903 = vunpack.c.l.b16 %v7770
    %v7904 = vunpack.c.l.b16 %v7771
    %v7905 = vunpack.c.l.b16 %v7772
    %v7906 = vunpack.c.l.b16 %v7773
    %v7907 = vunpack.c.l.b16 %v7774
    %v7908 = vunpack.c.l.b16 %v7775
    %v7909 = vunpack.c.l.b16 %v7776
    %v7910 = vunpack.c.l.b16 %v7777
    %v7911 = vunpack.c.l.b16 %v7778
    %v7912 = vunpack.c.l.b16 %v7779
    %v7913 = vunpack.c.l.b16 %v7780
    %v7914 = vunpack.c.l.b16 %v7781
    %v7915 = vunpack.c.l.b16 %v7782
    %v7916 = vunpack.c.l.b16 %v7783
    %v7917 = vpack.c.b16 %v7854, %v7853
    %v7918 = vpack.c.b16 %v7856, %v7855
    %v7919 = vpack.c.b16 %v7858, %v7857
    %v7920 = vpack.c.b16 %v7860, %v7859
    %v7921 = vpack.c.b16 %v7862, %v7861
    %v7922 = vpack.c.b16 %v7864, %v7863
    %v7923 = vpack.c.b16 %v7866, %v7865
    %v7924 = vpack.c.b16 %v7868, %v7867
    %v7925 = vpack.c.b16 %v7870, %v7869
    %v7926 = vpack.c.b16 %v7872, %v7871
    %v7927 = vpack.c.b16 %v7874, %v7873
    %v7928 = vpack.c.b16 %v7876, %v7875
    %v7929 = vpack.c.b16 %v7878, %v7877
    %v7930 = vpack.c.b16 %v7880, %v7879
    %v7931 = vpack.c.b16 %v7882, %v7881
    %v7932 = vpack.c.b16 %v7884, %v7883
    %v7933 = vpack.c.b16 %v7886, %v7885
    %v7934 = vpack.c.b16 %v7888, %v7887
    %v7935 = vpack.c.b16 %v7890, %v7889
    %v7936 = vpack.c.b16 %v7892, %v7891
    %v7937 = vpack.c.b16 %v7894, %v7893
    %v7938 = vpack.c.b16 %v7896, %v7895
    %v7939 = vpack.c.b16 %v7898, %v7897
    %v7940 = vpack.c.b16 %v7900, %v7899
    %v7941 = vpack.c.b16 %v7902, %v7901
    %v7942 = vpack.c.b16 %v7904, %v7903
    %v7943 = vpack.c.b16 %v7906, %v7905
    %v7944 = vpack.c.b16 %v7908, %v7907
    %v7945 = vpack.c.b16 %v7910, %v7909
    %v7946 = vpack.c.b16 %v7912, %v7911
    %v7947 = vpack.c.b16 %v7914, %v7913
    %v7948 = vpack.c.b16 %v7916, %v7915
    %7981 = vmatpush.bf16.msra.mxu0 %v7924
    %7982 = vmatpush.bf16.msra.mxu0 %v7923
    %7983 = vmatpush.bf16.msra.mxu0 %v7922
    %7984 = vmatpush.bf16.msra.mxu0 %v7921
    %7985 = vmatpush.bf16.msra.mxu0 %v7920
    %7986 = vmatpush.bf16.msra.mxu0 %v7919
    %7987 = vmatpush.bf16.msra.mxu0 %v7918
    %7988 = vmatpush.bf16.msra.mxu0 %v7917
    %7989 = vmatmul.bf16.gmra.mxu0 %v7784
    %v7990 = vpop.f32.mrf.mxu0
    %v7991 = vadd.f32 %v7788, %v7990
    %v7992 = vpop.f32.mrf.mxu0
    %7993 = vdwg.mxu0
    %7994 = vmatpush.bf16.msra.mxu0 %v7932
    %7995 = vmatpush.bf16.msra.mxu0 %v7931
    %7996 = vmatpush.bf16.msra.mxu0 %v7930
    %7997 = vmatpush.bf16.msra.mxu0 %v7929
    %7998 = vmatpush.bf16.msra.mxu0 %v7928
    %7999 = vmatpush.bf16.msra.mxu0 %v7927
    %8000 = vmatpush.bf16.msra.mxu0 %v7926
    %8001 = vmatpush.bf16.msra.mxu0 %v7925
    %8002 = vmatmul.bf16.gmra.mxu0 %v7785
    %v8003 = vpop.f32.mrf.mxu0
    %v8004 = vadd.f32 %v7991, %v8003
    %v8005 = vpop.f32.mrf.mxu0
    %8006 = vdwg.mxu0
    %8007 = vmatpush.bf16.msra.mxu0 %v7940
    %8008 = vmatpush.bf16.msra.mxu0 %v7939
    %8009 = vmatpush.bf16.msra.mxu0 %v7938
    %8010 = vmatpush.bf16.msra.mxu0 %v7937
    %8011 = vmatpush.bf16.msra.mxu0 %v7936
    %8012 = vmatpush.bf16.msra.mxu0 %v7935
    %8013 = vmatpush.bf16.msra.mxu0 %v7934
    %8014 = vmatpush.bf16.msra.mxu0 %v7933
    %8015 = vmatmul.bf16.gmra.mxu0 %v7786
    %v8016 = vpop.f32.mrf.mxu0
    %v8017 = vadd.f32 %v8004, %v8016
    %v8018 = vpop.f32.mrf.mxu0
    %8019 = vdwg.mxu0
    %8020 = vmatpush.bf16.msra.mxu0 %v7948
    %8021 = vmatpush.bf16.msra.mxu0 %v7947
    %8022 = vmatpush.bf16.msra.mxu0 %v7946
    %8023 = vmatpush.bf16.msra.mxu0 %v7945
    %8024 = vmatpush.bf16.msra.mxu0 %v7944
    %8025 = vmatpush.bf16.msra.mxu0 %v7943
    %8026 = vmatpush.bf16.msra.mxu0 %v7942
    %8027 = vmatpush.bf16.msra.mxu0 %v7941
    %8028 = vmatmul.bf16.gmra.mxu0 %v7787
    %v8029 = vpop.f32.mrf.mxu0
    %v8030 = vadd.f32 %v8017, %v8029
    %v8031 = vpop.f32.mrf.mxu0
    %8032 = vdwg.mxu0
    %v8033 = vadd.f32 %v7455, %v8030
    %8034 = vadd.xlane.f32.xlu0 %v8033
    %v8035 = vpop.xlane.xlu0 %8034
    %v8036 = vmul.f32 %v8035, %v625
    %v8037 = vsub.f32 %v8033, %v8036
    %v8038 = vmul.f32 %v8037, %v8037
    %8039 = vadd.xlane.f32.xlu0 %v8038
    %v8040 = vpop.xlane.xlu0 %8039
    %v8041 = vmul.f32 %v8040, %v625
    %v8042 = vadd.f32 %v8041, 1e-05
    %v8043 = vrsqrt.pop %v8042
    %v8044 = vmul.f32 %v8043, %v8042
    %v8045 = vmul.f32 %v8044, %v8043
    %v8046 = vmul.f32 0.5, %v8045
    %v8047 = vsub.f32 1.5, %v8046
    %v8048 = vmul.f32 %v8043, %v8047
    %vm8049 = vweird.f32 %v8042
    %vm8050 = vweird.f32 %v8043
    %vm8051 = vmor %vm8049, %vm8050
    %v8052 = vsel %vm8051, %v8043, %v8048
    %v8053 = vmul.f32 %v8037, %v8052
    %v8054 = vperm.slane %v7457, 1
    %v8055 = vmul.f32 %v8053, %v8054
    %v8056 = vperm.slane %v7457, 2
    %v8057 = vadd.f32 %v8055, %v8056
    %s8058 = scalar_lea.vmem [#allocation26], 40
    %v8059 = vld [vmem:[%s8058] sm:$0x3f]
    %s8060 = scalar_lea.vmem [#allocation25], 1280
    %v8061 = vld [vmem:[%s8060] sm:$0xf]
    %v8062 = vld [vmem:[%s8060 + $0x4] sm:$0xf]
    %v8063 = vld [vmem:[%s8060 + $0x8] sm:$0xf]
    %v8064 = vld [vmem:[%s8060 + $0xc] sm:$0xf]
    %v8065 = vld [vmem:[%s8060 + $0x10] sm:$0xf]
    %v8066 = vld [vmem:[%s8060 + $0x14] sm:$0xf]
    %v8067 = vld [vmem:[%s8060 + $0x18] sm:$0xf]
    %v8068 = vld [vmem:[%s8060 + $0x1c] sm:$0xf]
    %v8069 = vld [vmem:[%s8060 + $0x20] sm:$0xf]
    %v8070 = vld [vmem:[%s8060 + $0x24] sm:$0xf]
    %v8071 = vld [vmem:[%s8060 + $0x28] sm:$0xf]
    %v8072 = vld [vmem:[%s8060 + $0x2c] sm:$0xf]
    %v8073 = vld [vmem:[%s8060 + $0x30] sm:$0xf]
    %v8074 = vld [vmem:[%s8060 + $0x34] sm:$0xf]
    %v8075 = vld [vmem:[%s8060 + $0x38] sm:$0xf]
    %v8076 = vld [vmem:[%s8060 + $0x3c] sm:$0xf]
    %s8077 = scalar_lea.vmem [#allocation25], 1344
    %v8078 = vld [vmem:[%s8077] sm:$0xf]
    %v8079 = vld [vmem:[%s8077 + $0x4] sm:$0xf]
    %v8080 = vld [vmem:[%s8077 + $0x8] sm:$0xf]
    %v8081 = vld [vmem:[%s8077 + $0xc] sm:$0xf]
    %v8082 = vld [vmem:[%s8077 + $0x10] sm:$0xf]
    %v8083 = vld [vmem:[%s8077 + $0x14] sm:$0xf]
    %v8084 = vld [vmem:[%s8077 + $0x18] sm:$0xf]
    %v8085 = vld [vmem:[%s8077 + $0x1c] sm:$0xf]
    %v8086 = vld [vmem:[%s8077 + $0x20] sm:$0xf]
    %v8087 = vld [vmem:[%s8077 + $0x24] sm:$0xf]
    %v8088 = vld [vmem:[%s8077 + $0x28] sm:$0xf]
    %v8089 = vld [vmem:[%s8077 + $0x2c] sm:$0xf]
    %v8090 = vld [vmem:[%s8077 + $0x30] sm:$0xf]
    %v8091 = vld [vmem:[%s8077 + $0x34] sm:$0xf]
    %v8092 = vld [vmem:[%s8077 + $0x38] sm:$0xf]
    %v8093 = vld [vmem:[%s8077 + $0x3c] sm:$0xf]
    %s8094 = scalar_lea.vmem [#allocation25], 1408
    %v8095 = vld [vmem:[%s8094] sm:$0xf]
    %v8096 = vld [vmem:[%s8094 + $0x4] sm:$0xf]
    %v8097 = vld [vmem:[%s8094 + $0x8] sm:$0xf]
    %v8098 = vld [vmem:[%s8094 + $0xc] sm:$0xf]
    %v8099 = vld [vmem:[%s8094 + $0x10] sm:$0xf]
    %v8100 = vld [vmem:[%s8094 + $0x14] sm:$0xf]
    %v8101 = vld [vmem:[%s8094 + $0x18] sm:$0xf]
    %v8102 = vld [vmem:[%s8094 + $0x1c] sm:$0xf]
    %v8103 = vld [vmem:[%s8094 + $0x20] sm:$0xf]
    %v8104 = vld [vmem:[%s8094 + $0x24] sm:$0xf]
    %v8105 = vld [vmem:[%s8094 + $0x28] sm:$0xf]
    %v8106 = vld [vmem:[%s8094 + $0x2c] sm:$0xf]
    %v8107 = vld [vmem:[%s8094 + $0x30] sm:$0xf]
    %v8108 = vld [vmem:[%s8094 + $0x34] sm:$0xf]
    %v8109 = vld [vmem:[%s8094 + $0x38] sm:$0xf]
    %v8110 = vld [vmem:[%s8094 + $0x3c] sm:$0xf]
    %s8111 = scalar_lea.vmem [#allocation25], 1472
    %v8112 = vld [vmem:[%s8111] sm:$0xf]
    %v8113 = vld [vmem:[%s8111 + $0x4] sm:$0xf]
    %v8114 = vld [vmem:[%s8111 + $0x8] sm:$0xf]
    %v8115 = vld [vmem:[%s8111 + $0xc] sm:$0xf]
    %v8116 = vld [vmem:[%s8111 + $0x10] sm:$0xf]
    %v8117 = vld [vmem:[%s8111 + $0x14] sm:$0xf]
    %v8118 = vld [vmem:[%s8111 + $0x18] sm:$0xf]
    %v8119 = vld [vmem:[%s8111 + $0x1c] sm:$0xf]
    %v8120 = vld [vmem:[%s8111 + $0x20] sm:$0xf]
    %v8121 = vld [vmem:[%s8111 + $0x24] sm:$0xf]
    %v8122 = vld [vmem:[%s8111 + $0x28] sm:$0xf]
    %v8123 = vld [vmem:[%s8111 + $0x2c] sm:$0xf]
    %v8124 = vld [vmem:[%s8111 + $0x30] sm:$0xf]
    %v8125 = vld [vmem:[%s8111 + $0x34] sm:$0xf]
    %v8126 = vld [vmem:[%s8111 + $0x38] sm:$0xf]
    %v8127 = vld [vmem:[%s8111 + $0x3c] sm:$0xf]
    %v8128 = vpack.c.bf16 %v8057, %v8057
    %v8129 = vperm.slane %v8059, 0
    %v8146 = vunpack.c.l.b16 %v8061
    %v8147 = vunpack.c.l.b16 %v8062
    %v8148 = vunpack.c.l.b16 %v8063
    %v8149 = vunpack.c.l.b16 %v8064
    %v8150 = vunpack.c.l.b16 %v8065
    %v8151 = vunpack.c.l.b16 %v8066
    %v8152 = vunpack.c.l.b16 %v8067
    %v8153 = vunpack.c.l.b16 %v8068
    %v8154 = vunpack.c.l.b16 %v8069
    %v8155 = vunpack.c.l.b16 %v8070
    %v8156 = vunpack.c.l.b16 %v8071
    %v8157 = vunpack.c.l.b16 %v8072
    %v8158 = vunpack.c.l.b16 %v8073
    %v8159 = vunpack.c.l.b16 %v8074
    %v8160 = vunpack.c.l.b16 %v8075
    %v8161 = vunpack.c.l.b16 %v8076
    %v8162 = vpack.c.b16 %v8147, %v8146
    %v8163 = vpack.c.b16 %v8149, %v8148
    %v8164 = vpack.c.b16 %v8151, %v8150
    %v8165 = vpack.c.b16 %v8153, %v8152
    %v8166 = vpack.c.b16 %v8155, %v8154
    %v8167 = vpack.c.b16 %v8157, %v8156
    %v8168 = vpack.c.b16 %v8159, %v8158
    %v8169 = vpack.c.b16 %v8161, %v8160
    %8178 = vmatpush.bf16.msra.mxu0 %v8169
    %8179 = vmatpush.bf16.msra.mxu0 %v8168
    %8180 = vmatpush.bf16.msra.mxu0 %v8167
    %8181 = vmatpush.bf16.msra.mxu0 %v8166
    %8182 = vmatpush.bf16.msra.mxu0 %v8165
    %8183 = vmatpush.bf16.msra.mxu0 %v8164
    %8184 = vmatpush.bf16.msra.mxu0 %v8163
    %8185 = vmatpush.bf16.msra.mxu0 %v8162
    %8186 = vmatmul.bf16.gmra.mxu0 %v8128
    %v8187 = vpop.f32.mrf.mxu0
    %v8188 = vadd.f32 %v8129, %v8187
    %v8189 = vpop.f32.mrf.mxu0
    %8190 = vdwg.mxu0
    %v8191 = vperm.slane %v8059, 1
    %v8208 = vunpack.c.l.b16 %v8078
    %v8209 = vunpack.c.l.b16 %v8079
    %v8210 = vunpack.c.l.b16 %v8080
    %v8211 = vunpack.c.l.b16 %v8081
    %v8212 = vunpack.c.l.b16 %v8082
    %v8213 = vunpack.c.l.b16 %v8083
    %v8214 = vunpack.c.l.b16 %v8084
    %v8215 = vunpack.c.l.b16 %v8085
    %v8216 = vunpack.c.l.b16 %v8086
    %v8217 = vunpack.c.l.b16 %v8087
    %v8218 = vunpack.c.l.b16 %v8088
    %v8219 = vunpack.c.l.b16 %v8089
    %v8220 = vunpack.c.l.b16 %v8090
    %v8221 = vunpack.c.l.b16 %v8091
    %v8222 = vunpack.c.l.b16 %v8092
    %v8223 = vunpack.c.l.b16 %v8093
    %v8224 = vpack.c.b16 %v8209, %v8208
    %v8225 = vpack.c.b16 %v8211, %v8210
    %v8226 = vpack.c.b16 %v8213, %v8212
    %v8227 = vpack.c.b16 %v8215, %v8214
    %v8228 = vpack.c.b16 %v8217, %v8216
    %v8229 = vpack.c.b16 %v8219, %v8218
    %v8230 = vpack.c.b16 %v8221, %v8220
    %v8231 = vpack.c.b16 %v8223, %v8222
    %8240 = vmatpush.bf16.msra.mxu0 %v8231
    %8241 = vmatpush.bf16.msra.mxu0 %v8230
    %8242 = vmatpush.bf16.msra.mxu0 %v8229
    %8243 = vmatpush.bf16.msra.mxu0 %v8228
    %8244 = vmatpush.bf16.msra.mxu0 %v8227
    %8245 = vmatpush.bf16.msra.mxu0 %v8226
    %8246 = vmatpush.bf16.msra.mxu0 %v8225
    %8247 = vmatpush.bf16.msra.mxu0 %v8224
    %8248 = vmatmul.bf16.gmra.mxu0 %v1899
    %v8249 = vpop.f32.mrf.mxu0
    %v8250 = vadd.f32 %v8191, %v8249
    %v8251 = vpop.f32.mrf.mxu0
    %v8252 = vadd.f32 %v8191, %v8251
    %8253 = vmatmul.bf16.gmra.mxu0 %v1900
    %v8254 = vpop.f32.mrf.mxu0
    %v8255 = vadd.f32 %v8191, %v8254
    %v8256 = vpop.f32.mrf.mxu0
    %v8257 = vadd.f32 %v8191, %v8256
    %8258 = vdwg.mxu0
    %v8259 = vperm.slane %v8059, 2
    %v8276 = vunpack.c.l.b16 %v8095
    %v8277 = vunpack.c.l.b16 %v8096
    %v8278 = vunpack.c.l.b16 %v8097
    %v8279 = vunpack.c.l.b16 %v8098
    %v8280 = vunpack.c.l.b16 %v8099
    %v8281 = vunpack.c.l.b16 %v8100
    %v8282 = vunpack.c.l.b16 %v8101
    %v8283 = vunpack.c.l.b16 %v8102
    %v8284 = vunpack.c.l.b16 %v8103
    %v8285 = vunpack.c.l.b16 %v8104
    %v8286 = vunpack.c.l.b16 %v8105
    %v8287 = vunpack.c.l.b16 %v8106
    %v8288 = vunpack.c.l.b16 %v8107
    %v8289 = vunpack.c.l.b16 %v8108
    %v8290 = vunpack.c.l.b16 %v8109
    %v8291 = vunpack.c.l.b16 %v8110
    %v8292 = vpack.c.b16 %v8277, %v8276
    %v8293 = vpack.c.b16 %v8279, %v8278
    %v8294 = vpack.c.b16 %v8281, %v8280
    %v8295 = vpack.c.b16 %v8283, %v8282
    %v8296 = vpack.c.b16 %v8285, %v8284
    %v8297 = vpack.c.b16 %v8287, %v8286
    %v8298 = vpack.c.b16 %v8289, %v8288
    %v8299 = vpack.c.b16 %v8291, %v8290
    %8308 = vmatpush.bf16.msra.mxu0 %v8299
    %8309 = vmatpush.bf16.msra.mxu0 %v8298
    %8310 = vmatpush.bf16.msra.mxu0 %v8297
    %8311 = vmatpush.bf16.msra.mxu0 %v8296
    %8312 = vmatpush.bf16.msra.mxu0 %v8295
    %8313 = vmatpush.bf16.msra.mxu0 %v8294
    %8314 = vmatpush.bf16.msra.mxu0 %v8293
    %8315 = vmatpush.bf16.msra.mxu0 %v8292
    %8316 = vmatmul.bf16.gmra.mxu0 %v1969
    %v8317 = vpop.f32.mrf.mxu0
    %v8318 = vadd.f32 %v8259, %v8317
    %v8319 = vpop.f32.mrf.mxu0
    %v8320 = vadd.f32 %v8259, %v8319
    %8321 = vmatmul.bf16.gmra.mxu0 %v1970
    %v8322 = vpop.f32.mrf.mxu0
    %v8323 = vadd.f32 %v8259, %v8322
    %v8324 = vpop.f32.mrf.mxu0
    %v8325 = vadd.f32 %v8259, %v8324
    %8326 = vdwg.mxu0
    %v8328 = vrot.slane %v8188, 1
    %v8329 = vrot.slane %v8188, 2
    %v8330 = vrot.slane %v8188, 3
    %v8331 = vrot.slane %v8188, 4
    %v8332 = vrot.slane %v8188, 5
    %v8333 = vrot.slane %v8188, 6
    %v8334 = vrot.slane %v8188, 7
    %v8335 = vperm.slane %v8188, 0
    %v8336 = vperm.slane %v8328, 0
    %v8337 = vperm.slane %v8329, 0
    %v8338 = vperm.slane %v8330, 0
    %v8339 = vperm.slane %v8331, 0
    %v8340 = vperm.slane %v8332, 0
    %v8341 = vperm.slane %v8333, 0
    %v8342 = vperm.slane %v8334, 0
    %v8351 = vmul.f32 %v8335, %v1767
    %v8352 = vmul.f32 %v8336, %v1767
    %v8353 = vmul.f32 %v8337, %v1767
    %v8354 = vmul.f32 %v8338, %v1767
    %v8355 = vmul.f32 %v8339, %v1767
    %v8356 = vmul.f32 %v8340, %v1767
    %v8357 = vmul.f32 %v8341, %v1767
    %v8358 = vmul.f32 %v8342, %v1767
    %v8359 = vpack.c.bf16 %v8352, %v8351
    %v8360 = vpack.c.bf16 %v8354, %v8353
    %v8361 = vpack.c.bf16 %v8356, %v8355
    %v8362 = vpack.c.bf16 %v8358, %v8357
    %v8363 = vpack.c.bf16 %v8252, %v8250
    %v8364 = vpack.c.bf16 %v8257, %v8255
    %8365 = vmatpush.bf16.xpose.msra.mxu0 0
    %8366 = vmatpush.bf16.xpose.msra.mxu0 0
    %8367 = vmatpush.bf16.xpose.msra.mxu0 0
    %8368 = vmatpush.bf16.xpose.msra.mxu0 0
    %8369 = vmatpush.bf16.xpose.msra.mxu0 0
    %8370 = vmatpush.bf16.xpose.msra.mxu0 0
    %8371 = vmatpush.bf16.xpose.msra.mxu0 %v8364
    %8372 = vmatpush.bf16.xpose.msra.mxu0 %v8363
    %8373 = vmatmul.bf16.gmra.mxu0 %v8359
    %v8374 = vpop.f32.mrf.mxu0
    %v8375 = vadd.f32 0.0, %v8374
    %v8376 = vpop.f32.mrf.mxu0
    %v8377 = vadd.f32 0.0, %v8376
    %8378 = vmatmul.bf16.gmra.mxu0 %v8360
    %v8379 = vpop.f32.mrf.mxu0
    %v8380 = vadd.f32 0.0, %v8379
    %v8381 = vpop.f32.mrf.mxu0
    %v8382 = vadd.f32 0.0, %v8381
    %8383 = vmatmul.bf16.gmra.mxu0 %v8361
    %v8384 = vpop.f32.mrf.mxu0
    %v8385 = vadd.f32 0.0, %v8384
    %v8386 = vpop.f32.mrf.mxu0
    %v8387 = vadd.f32 0.0, %v8386
    %8388 = vmatmul.bf16.gmra.mxu0 %v8362
    %v8389 = vpop.f32.mrf.mxu0
    %v8390 = vadd.f32 0.0, %v8389
    %v8391 = vpop.f32.mrf.mxu0
    %v8392 = vadd.f32 0.0, %v8391
    %8393 = vdwg.mxu0
    %v8394 = vmul.f32 %v8375, 0.25
    %v8395 = vmul.f32 %v8377, 0.25
    %v8396 = vmul.f32 %v8380, 0.25
    %v8397 = vmul.f32 %v8382, 0.25
    %v8398 = vmul.f32 %v8385, 0.25
    %v8399 = vmul.f32 %v8387, 0.25
    %v8400 = vmul.f32 %v8390, 0.25
    %v8401 = vmul.f32 %v8392, 0.25
    %v8402 = vsel %vm598, %v8394, -inf
    %8403 = vmax.xlane.f32.xlu0 %v8402
    %v8404 = vpop.xlane.xlu0 %8403
    %v8405 = vsel %vm598, %v8395, -inf
    %8406 = vmax.xlane.f32.xlu0 %v8405
    %v8407 = vpop.xlane.xlu0 %8406
    %v8408 = vsel %vm598, %v8396, -inf
    %8409 = vmax.xlane.f32.xlu0 %v8408
    %v8410 = vpop.xlane.xlu0 %8409
    %v8411 = vsel %vm598, %v8397, -inf
    %8412 = vmax.xlane.f32.xlu0 %v8411
    %v8413 = vpop.xlane.xlu0 %8412
    %v8414 = vsel %vm598, %v8398, -inf
    %8415 = vmax.xlane.f32.xlu0 %v8414
    %v8416 = vpop.xlane.xlu0 %8415
    %v8417 = vsel %vm598, %v8399, -inf
    %8418 = vmax.xlane.f32.xlu0 %v8417
    %v8419 = vpop.xlane.xlu0 %8418
    %v8420 = vsel %vm598, %v8400, -inf
    %8421 = vmax.xlane.f32.xlu0 %v8420
    %v8422 = vpop.xlane.xlu0 %8421
    %v8423 = vsel %vm598, %v8401, -inf
    %8424 = vmax.xlane.f32.xlu0 %v8423
    %v8425 = vpop.xlane.xlu0 %8424
    %v8426 = vsub.f32 %v8394, %v8404
    %v8427 = vsub.f32 %v8395, %v8407
    %v8428 = vsub.f32 %v8396, %v8410
    %v8429 = vsub.f32 %v8397, %v8413
    %v8430 = vsub.f32 %v8398, %v8416
    %v8431 = vsub.f32 %v8399, %v8419
    %v8432 = vsub.f32 %v8400, %v8422
    %v8433 = vsub.f32 %v8401, %v8425
    %v8434 = vmul.f32 %v8426, 1.442695
    %v8435 = vpow.pop %v8434
    %v8436 = vmul.f32 %v8427, 1.442695
    %v8437 = vpow.pop %v8436
    %v8438 = vmul.f32 %v8428, 1.442695
    %v8439 = vpow.pop %v8438
    %v8440 = vmul.f32 %v8429, 1.442695
    %v8441 = vpow.pop %v8440
    %v8442 = vmul.f32 %v8430, 1.442695
    %v8443 = vpow.pop %v8442
    %v8444 = vmul.f32 %v8431, 1.442695
    %v8445 = vpow.pop %v8444
    %v8446 = vmul.f32 %v8432, 1.442695
    %v8447 = vpow.pop %v8446
    %v8448 = vmul.f32 %v8433, 1.442695
    %v8449 = vpow.pop %v8448
    %v8450 = vsel %vm598, %v8435, 0.0
    %8451 = vadd.xlane.f32.xlu0 %v8450
    %v8452 = vpop.xlane.xlu0 %8451
    %v8453 = vsel %vm598, %v8437, 0.0
    %8454 = vadd.xlane.f32.xlu0 %v8453
    %v8455 = vpop.xlane.xlu0 %8454
    %v8456 = vsel %vm598, %v8439, 0.0
    %8457 = vadd.xlane.f32.xlu0 %v8456
    %v8458 = vpop.xlane.xlu0 %8457
    %v8459 = vsel %vm598, %v8441, 0.0
    %8460 = vadd.xlane.f32.xlu0 %v8459
    %v8461 = vpop.xlane.xlu0 %8460
    %v8462 = vsel %vm598, %v8443, 0.0
    %8463 = vadd.xlane.f32.xlu0 %v8462
    %v8464 = vpop.xlane.xlu0 %8463
    %v8465 = vsel %vm598, %v8445, 0.0
    %8466 = vadd.xlane.f32.xlu0 %v8465
    %v8467 = vpop.xlane.xlu0 %8466
    %v8468 = vsel %vm598, %v8447, 0.0
    %8469 = vadd.xlane.f32.xlu0 %v8468
    %v8470 = vpop.xlane.xlu0 %8469
    %v8471 = vsel %vm598, %v8449, 0.0
    %8472 = vadd.xlane.f32.xlu0 %v8471
    %v8473 = vpop.xlane.xlu0 %8472
    %v8474 = vrcp.pop %v8452
    %v8475 = vmul.f32 %v8452, %v8474
    %v8476 = vsub.f32 1.0, %v8475
    %v8477 = vmul.f32 %v8474, %v8476
    %v8478 = vadd.f32 %v8474, %v8477
    %vm8479 = vweird.f32 %v8452
    %vm8480 = vweird.f32 %v8474
    %vm8481 = vmor %vm8479, %vm8480
    %v8482 = vsel %vm8481, %v8474, %v8478
    %v8483 = vand.u32 2147483647, %v8452
    %vm8484 = vcmp.eq.f32.partialorder %v8483, 8.507059e+37
    %v8485 = vand.u32 %v8452, 2147483648
    %v8486 = vor.u32 1.1754944e-38, %v8485
    %v8487 = vsel %vm8484, %v8486, %v8482
    %v8488 = vmul.f32 %v8435, %v8487
    %v8489 = vrcp.pop %v8455
    %v8490 = vmul.f32 %v8455, %v8489
    %v8491 = vsub.f32 1.0, %v8490
    %v8492 = vmul.f32 %v8489, %v8491
    %v8493 = vadd.f32 %v8489, %v8492
    %vm8494 = vweird.f32 %v8455
    %vm8495 = vweird.f32 %v8489
    %vm8496 = vmor %vm8494, %vm8495
    %v8497 = vsel %vm8496, %v8489, %v8493
    %v8498 = vand.u32 2147483647, %v8455
    %vm8499 = vcmp.eq.f32.partialorder %v8498, 8.507059e+37
    %v8500 = vand.u32 %v8455, 2147483648
    %v8501 = vor.u32 1.1754944e-38, %v8500
    %v8502 = vsel %vm8499, %v8501, %v8497
    %v8503 = vmul.f32 %v8437, %v8502
    %v8504 = vrcp.pop %v8458
    %v8505 = vmul.f32 %v8458, %v8504
    %v8506 = vsub.f32 1.0, %v8505
    %v8507 = vmul.f32 %v8504, %v8506
    %v8508 = vadd.f32 %v8504, %v8507
    %vm8509 = vweird.f32 %v8458
    %vm8510 = vweird.f32 %v8504
    %vm8511 = vmor %vm8509, %vm8510
    %v8512 = vsel %vm8511, %v8504, %v8508
    %v8513 = vand.u32 2147483647, %v8458
    %vm8514 = vcmp.eq.f32.partialorder %v8513, 8.507059e+37
    %v8515 = vand.u32 %v8458, 2147483648
    %v8516 = vor.u32 1.1754944e-38, %v8515
    %v8517 = vsel %vm8514, %v8516, %v8512
    %v8518 = vmul.f32 %v8439, %v8517
    %v8519 = vrcp.pop %v8461
    %v8520 = vmul.f32 %v8461, %v8519
    %v8521 = vsub.f32 1.0, %v8520
    %v8522 = vmul.f32 %v8519, %v8521
    %v8523 = vadd.f32 %v8519, %v8522
    %vm8524 = vweird.f32 %v8461
    %vm8525 = vweird.f32 %v8519
    %vm8526 = vmor %vm8524, %vm8525
    %v8527 = vsel %vm8526, %v8519, %v8523
    %v8528 = vand.u32 2147483647, %v8461
    %vm8529 = vcmp.eq.f32.partialorder %v8528, 8.507059e+37
    %v8530 = vand.u32 %v8461, 2147483648
    %v8531 = vor.u32 1.1754944e-38, %v8530
    %v8532 = vsel %vm8529, %v8531, %v8527
    %v8533 = vmul.f32 %v8441, %v8532
    %v8534 = vrcp.pop %v8464
    %v8535 = vmul.f32 %v8464, %v8534
    %v8536 = vsub.f32 1.0, %v8535
    %v8537 = vmul.f32 %v8534, %v8536
    %v8538 = vadd.f32 %v8534, %v8537
    %vm8539 = vweird.f32 %v8464
    %vm8540 = vweird.f32 %v8534
    %vm8541 = vmor %vm8539, %vm8540
    %v8542 = vsel %vm8541, %v8534, %v8538
    %v8543 = vand.u32 2147483647, %v8464
    %vm8544 = vcmp.eq.f32.partialorder %v8543, 8.507059e+37
    %v8545 = vand.u32 %v8464, 2147483648
    %v8546 = vor.u32 1.1754944e-38, %v8545
    %v8547 = vsel %vm8544, %v8546, %v8542
    %v8548 = vmul.f32 %v8443, %v8547
    %v8549 = vrcp.pop %v8467
    %v8550 = vmul.f32 %v8467, %v8549
    %v8551 = vsub.f32 1.0, %v8550
    %v8552 = vmul.f32 %v8549, %v8551
    %v8553 = vadd.f32 %v8549, %v8552
    %vm8554 = vweird.f32 %v8467
    %vm8555 = vweird.f32 %v8549
    %vm8556 = vmor %vm8554, %vm8555
    %v8557 = vsel %vm8556, %v8549, %v8553
    %v8558 = vand.u32 2147483647, %v8467
    %vm8559 = vcmp.eq.f32.partialorder %v8558, 8.507059e+37
    %v8560 = vand.u32 %v8467, 2147483648
    %v8561 = vor.u32 1.1754944e-38, %v8560
    %v8562 = vsel %vm8559, %v8561, %v8557
    %v8563 = vmul.f32 %v8445, %v8562
    %v8564 = vrcp.pop %v8470
    %v8565 = vmul.f32 %v8470, %v8564
    %v8566 = vsub.f32 1.0, %v8565
    %v8567 = vmul.f32 %v8564, %v8566
    %v8568 = vadd.f32 %v8564, %v8567
    %vm8569 = vweird.f32 %v8470
    %vm8570 = vweird.f32 %v8564
    %vm8571 = vmor %vm8569, %vm8570
    %v8572 = vsel %vm8571, %v8564, %v8568
    %v8573 = vand.u32 2147483647, %v8470
    %vm8574 = vcmp.eq.f32.partialorder %v8573, 8.507059e+37
    %v8575 = vand.u32 %v8470, 2147483648
    %v8576 = vor.u32 1.1754944e-38, %v8575
    %v8577 = vsel %vm8574, %v8576, %v8572
    %v8578 = vmul.f32 %v8447, %v8577
    %v8579 = vrcp.pop %v8473
    %v8580 = vmul.f32 %v8473, %v8579
    %v8581 = vsub.f32 1.0, %v8580
    %v8582 = vmul.f32 %v8579, %v8581
    %v8583 = vadd.f32 %v8579, %v8582
    %vm8584 = vweird.f32 %v8473
    %vm8585 = vweird.f32 %v8579
    %vm8586 = vmor %vm8584, %vm8585
    %v8587 = vsel %vm8586, %v8579, %v8583
    %v8588 = vand.u32 2147483647, %v8473
    %vm8589 = vcmp.eq.f32.partialorder %v8588, 8.507059e+37
    %v8590 = vand.u32 %v8473, 2147483648
    %v8591 = vor.u32 1.1754944e-38, %v8590
    %v8592 = vsel %vm8589, %v8591, %v8587
    %v8593 = vmul.f32 %v8449, %v8592
    %v8594 = vpack.c.bf16 %v8503, %v8488
    %v8595 = vpack.c.bf16 %v8533, %v8518
    %v8596 = vpack.c.bf16 %v8563, %v8548
    %v8597 = vpack.c.bf16 %v8593, %v8578
    %v8598 = vpack.c.bf16 %v8320, %v8318
    %v8599 = vpack.c.bf16 %v8325, %v8323
    %v8601 = vsel %vm598, %v8594, 0
    %v8604 = vsel %vm598, %v8595, 0
    %v8607 = vsel %vm598, %v8596, 0
    %v8610 = vsel %vm598, %v8597, 0
    %8612 = vmatpush.bf16.msra.mxu0 0
    %8613 = vmatpush.bf16.msra.mxu0 0
    %8614 = vmatpush.bf16.msra.mxu0 0
    %8615 = vmatpush.bf16.msra.mxu0 0
    %8616 = vmatpush.bf16.msra.mxu0 0
    %8617 = vmatpush.bf16.msra.mxu0 0
    %8618 = vmatpush.bf16.msra.mxu0 %v8599
    %8619 = vmatpush.bf16.msra.mxu0 %v8598
    %8620 = vmatmul.bf16.gmra.mxu0 %v8601
    %v8621 = vpop.f32.mrf.mxu0
    %v8622 = vadd.f32 0.0, %v8621
    %v8623 = vpop.f32.mrf.mxu0
    %v8624 = vadd.f32 0.0, %v8623
    %8625 = vmatmul.bf16.gmra.mxu0 %v8604
    %v8626 = vpop.f32.mrf.mxu0
    %v8627 = vadd.f32 0.0, %v8626
    %v8628 = vpop.f32.mrf.mxu0
    %v8629 = vadd.f32 0.0, %v8628
    %8630 = vmatmul.bf16.gmra.mxu0 %v8607
    %v8631 = vpop.f32.mrf.mxu0
    %v8632 = vadd.f32 0.0, %v8631
    %v8633 = vpop.f32.mrf.mxu0
    %v8634 = vadd.f32 0.0, %v8633
    %8635 = vmatmul.bf16.gmra.mxu0 %v8610
    %v8636 = vpop.f32.mrf.mxu0
    %v8637 = vadd.f32 0.0, %v8636
    %v8638 = vpop.f32.mrf.mxu0
    %v8639 = vadd.f32 0.0, %v8638
    %8640 = vdwg.mxu0
    %v8641 = vmul.f32 %v8622, %v1767
    %v8642 = vmul.f32 %v8624, %v1767
    %v8643 = vmul.f32 %v8627, %v1767
    %v8644 = vmul.f32 %v8629, %v1767
    %v8645 = vmul.f32 %v8632, %v1767
    %v8646 = vmul.f32 %v8634, %v1767
    %v8647 = vmul.f32 %v8637, %v1767
    %v8648 = vmul.f32 %v8639, %v1767
    %v8649 = vrot.slane %v8641, 4
    %v8650 = vadd.f32 %v8641, %v8649
    %v8651 = vrot.slane %v8650, 2
    %v8652 = vadd.f32 %v8650, %v8651
    %v8653 = vrot.slane %v8652, 1
    %v8654 = vadd.f32 %v8652, %v8653
    %v8655 = vrot.slane %v8642, 4
    %v8656 = vadd.f32 %v8642, %v8655
    %v8657 = vrot.slane %v8656, 2
    %v8658 = vadd.f32 %v8656, %v8657
    %v8659 = vrot.slane %v8658, 1
    %v8660 = vadd.f32 %v8658, %v8659
    %v8661 = vrot.slane %v8643, 4
    %v8662 = vadd.f32 %v8643, %v8661
    %v8663 = vrot.slane %v8662, 2
    %v8664 = vadd.f32 %v8662, %v8663
    %v8665 = vrot.slane %v8664, 1
    %v8666 = vadd.f32 %v8664, %v8665
    %v8667 = vrot.slane %v8644, 4
    %v8668 = vadd.f32 %v8644, %v8667
    %v8669 = vrot.slane %v8668, 2
    %v8670 = vadd.f32 %v8668, %v8669
    %v8671 = vrot.slane %v8670, 1
    %v8672 = vadd.f32 %v8670, %v8671
    %v8673 = vrot.slane %v8645, 4
    %v8674 = vadd.f32 %v8645, %v8673
    %v8675 = vrot.slane %v8674, 2
    %v8676 = vadd.f32 %v8674, %v8675
    %v8677 = vrot.slane %v8676, 1
    %v8678 = vadd.f32 %v8676, %v8677
    %v8679 = vrot.slane %v8646, 4
    %v8680 = vadd.f32 %v8646, %v8679
    %v8681 = vrot.slane %v8680, 2
    %v8682 = vadd.f32 %v8680, %v8681
    %v8683 = vrot.slane %v8682, 1
    %v8684 = vadd.f32 %v8682, %v8683
    %v8685 = vrot.slane %v8647, 4
    %v8686 = vadd.f32 %v8647, %v8685
    %v8687 = vrot.slane %v8686, 2
    %v8688 = vadd.f32 %v8686, %v8687
    %v8689 = vrot.slane %v8688, 1
    %v8690 = vadd.f32 %v8688, %v8689
    %v8691 = vrot.slane %v8648, 4
    %v8692 = vadd.f32 %v8648, %v8691
    %v8693 = vrot.slane %v8692, 2
    %v8694 = vadd.f32 %v8692, %v8693
    %v8695 = vrot.slane %v8694, 1
    %v8696 = vadd.f32 %v8694, %v8695
    %v8697 = vpack.c.bf16 %v8654, %v8654
    %v8698 = vpack.c.bf16 %v8660, %v8660
    %v8699 = vpack.c.bf16 %v8666, %v8666
    %v8700 = vpack.c.bf16 %v8672, %v8672
    %v8701 = vpack.c.bf16 %v8678, %v8678
    %v8702 = vpack.c.bf16 %v8684, %v8684
    %v8703 = vpack.c.bf16 %v8690, %v8690
    %v8704 = vpack.c.bf16 %v8696, %v8696
    %v8705 = vperm.slane %v8059, 3
    %v8714 = vunpack.c.l.b16 %v8697
    %v8715 = vunpack.c.l.b16 %v8698
    %v8716 = vunpack.c.l.b16 %v8699
    %v8717 = vunpack.c.l.b16 %v8700
    %v8718 = vunpack.c.l.b16 %v8701
    %v8719 = vunpack.c.l.b16 %v8702
    %v8720 = vunpack.c.l.b16 %v8703
    %v8721 = vunpack.c.l.b16 %v8704
    %v8722 = vsel %vm2330, %v8715, %v8714
    %v8723 = vsel %vm2332, %v8716, %v8722
    %v8724 = vsel %vm2334, %v8717, %v8723
    %v8725 = vsel %vm2336, %v8718, %v8724
    %v8726 = vsel %vm2338, %v8719, %v8725
    %v8727 = vsel %vm2340, %v8720, %v8726
    %v8728 = vsel %vm2342, %v8721, %v8727
    %v8729 = vpack.c.b16 %v8728, %v8728
    %v8747 = vunpack.c.l.b16 %v8112
    %v8748 = vunpack.c.l.b16 %v8113
    %v8749 = vunpack.c.l.b16 %v8114
    %v8750 = vunpack.c.l.b16 %v8115
    %v8751 = vunpack.c.l.b16 %v8116
    %v8752 = vunpack.c.l.b16 %v8117
    %v8753 = vunpack.c.l.b16 %v8118
    %v8754 = vunpack.c.l.b16 %v8119
    %v8755 = vunpack.c.l.b16 %v8120
    %v8756 = vunpack.c.l.b16 %v8121
    %v8757 = vunpack.c.l.b16 %v8122
    %v8758 = vunpack.c.l.b16 %v8123
    %v8759 = vunpack.c.l.b16 %v8124
    %v8760 = vunpack.c.l.b16 %v8125
    %v8761 = vunpack.c.l.b16 %v8126
    %v8762 = vunpack.c.l.b16 %v8127
    %v8763 = vpack.c.b16 %v8748, %v8747
    %v8764 = vpack.c.b16 %v8750, %v8749
    %v8765 = vpack.c.b16 %v8752, %v8751
    %v8766 = vpack.c.b16 %v8754, %v8753
    %v8767 = vpack.c.b16 %v8756, %v8755
    %v8768 = vpack.c.b16 %v8758, %v8757
    %v8769 = vpack.c.b16 %v8760, %v8759
    %v8770 = vpack.c.b16 %v8762, %v8761
    %8779 = vmatpush.bf16.msra.mxu0 %v8770
    %8780 = vmatpush.bf16.msra.mxu0 %v8769
    %8781 = vmatpush.bf16.msra.mxu0 %v8768
    %8782 = vmatpush.bf16.msra.mxu0 %v8767
    %8783 = vmatpush.bf16.msra.mxu0 %v8766
    %8784 = vmatpush.bf16.msra.mxu0 %v8765
    %8785 = vmatpush.bf16.msra.mxu0 %v8764
    %8786 = vmatpush.bf16.msra.mxu0 %v8763
    %8787 = vmatmul.bf16.gmra.mxu0 %v8729
    %v8788 = vpop.f32.mrf.mxu0
    %v8789 = vadd.f32 %v8705, %v8788
    %v8790 = vpop.f32.mrf.mxu0
    %8791 = vdwg.mxu0
    %v8792 = vadd.f32 %v8057, %v8789
    %8793 = vadd.xlane.f32.xlu0 %v8792
    %v8794 = vpop.xlane.xlu0 %8793
    %v8795 = vmul.f32 %v8794, %v625
    %v8796 = vsub.f32 %v8792, %v8795
    %v8797 = vmul.f32 %v8796, %v8796
    %8798 = vadd.xlane.f32.xlu0 %v8797
    %v8799 = vpop.xlane.xlu0 %8798
    %v8800 = vmul.f32 %v8799, %v625
    %v8801 = vadd.f32 %v8800, 1e-05
    %v8802 = vrsqrt.pop %v8801
    %v8803 = vmul.f32 %v8802, %v8801
    %v8804 = vmul.f32 %v8803, %v8802
    %v8805 = vmul.f32 0.5, %v8804
    %v8806 = vsub.f32 1.5, %v8805
    %v8807 = vmul.f32 %v8802, %v8806
    %vm8808 = vweird.f32 %v8801
    %vm8809 = vweird.f32 %v8802
    %vm8810 = vmor %vm8808, %vm8809
    %v8811 = vsel %vm8810, %v8802, %v8807
    %v8812 = vmul.f32 %v8796, %v8811
    %v8813 = vperm.slane %v8059, 4
    %v8814 = vmul.f32 %v8812, %v8813
    %v8815 = vperm.slane %v8059, 5
    %v8816 = vadd.f32 %v8814, %v8815
    %s8817 = scalar_lea.vmem %s20, 20
    %v8818 = vld [vmem:[%s8817] sm:$0x7]
    %s8819 = scalar_lea.vmem [#allocation28], 1280
    %v8820 = vld [vmem:[%s8819] sm:$0xff]
    %v8821 = vld [vmem:[%s8819 + $0x8] sm:$0xff]
    %v8822 = vld [vmem:[%s8819 + $0x10] sm:$0xff]
    %v8823 = vld [vmem:[%s8819 + $0x18] sm:$0xff]
    %v8824 = vld [vmem:[%s8819 + $0x20] sm:$0xff]
    %v8825 = vld [vmem:[%s8819 + $0x28] sm:$0xff]
    %v8826 = vld [vmem:[%s8819 + $0x30] sm:$0xff]
    %v8827 = vld [vmem:[%s8819 + $0x38] sm:$0xff]
    %v8828 = vld [vmem:[%s8819 + $0x40] sm:$0xff]
    %v8829 = vld [vmem:[%s8819 + $0x48] sm:$0xff]
    %v8830 = vld [vmem:[%s8819 + $0x50] sm:$0xff]
    %v8831 = vld [vmem:[%s8819 + $0x58] sm:$0xff]
    %v8832 = vld [vmem:[%s8819 + $0x60] sm:$0xff]
    %v8833 = vld [vmem:[%s8819 + $0x68] sm:$0xff]
    %v8834 = vld [vmem:[%s8819 + $0x70] sm:$0xff]
    %v8835 = vld [vmem:[%s8819 + $0x78] sm:$0xff]
    %v8836 = vld [vmem:[%s8819 + $0x80] sm:$0xff]
    %v8837 = vld [vmem:[%s8819 + $0x88] sm:$0xff]
    %v8838 = vld [vmem:[%s8819 + $0x90] sm:$0xff]
    %v8839 = vld [vmem:[%s8819 + $0x98] sm:$0xff]
    %v8840 = vld [vmem:[%s8819 + $0xa0] sm:$0xff]
    %v8841 = vld [vmem:[%s8819 + $0xa8] sm:$0xff]
    %v8842 = vld [vmem:[%s8819 + $0xb0] sm:$0xff]
    %v8843 = vld [vmem:[%s8819 + $0xb8] sm:$0xff]
    %v8844 = vld [vmem:[%s8819 + $0xc0] sm:$0xff]
    %v8845 = vld [vmem:[%s8819 + $0xc8] sm:$0xff]
    %v8846 = vld [vmem:[%s8819 + $0xd0] sm:$0xff]
    %v8847 = vld [vmem:[%s8819 + $0xd8] sm:$0xff]
    %v8848 = vld [vmem:[%s8819 + $0xe0] sm:$0xff]
    %v8849 = vld [vmem:[%s8819 + $0xe8] sm:$0xff]
    %v8850 = vld [vmem:[%s8819 + $0xf0] sm:$0xff]
    %v8851 = vld [vmem:[%s8819 + $0xf8] sm:$0xff]
    %v8852 = vpack.c.bf16 %v8816, %v8816
    %s8853 = scalar_lea.vmem [#allocation29], 20
    %v8854 = vld [vmem:[%s8853] sm:$0xf]
    %v8856 = vperm.slane %v8854, 0
    %v8857 = vperm.slane %v8854, 1
    %v8858 = vperm.slane %v8854, 2
    %v8859 = vperm.slane %v8854, 3
    %v8896 = vunpack.c.l.b16 %v8820
    %v8897 = vunpack.c.h.b16 %v8820
    %v8898 = vunpack.c.l.b16 %v8821
    %v8899 = vunpack.c.h.b16 %v8821
    %v8900 = vunpack.c.l.b16 %v8822
    %v8901 = vunpack.c.h.b16 %v8822
    %v8902 = vunpack.c.l.b16 %v8823
    %v8903 = vunpack.c.h.b16 %v8823
    %v8904 = vunpack.c.l.b16 %v8824
    %v8905 = vunpack.c.h.b16 %v8824
    %v8906 = vunpack.c.l.b16 %v8825
    %v8907 = vunpack.c.h.b16 %v8825
    %v8908 = vunpack.c.l.b16 %v8826
    %v8909 = vunpack.c.h.b16 %v8826
    %v8910 = vunpack.c.l.b16 %v8827
    %v8911 = vunpack.c.h.b16 %v8827
    %v8912 = vunpack.c.l.b16 %v8828
    %v8913 = vunpack.c.h.b16 %v8828
    %v8914 = vunpack.c.l.b16 %v8829
    %v8915 = vunpack.c.h.b16 %v8829
    %v8916 = vunpack.c.l.b16 %v8830
    %v8917 = vunpack.c.h.b16 %v8830
    %v8918 = vunpack.c.l.b16 %v8831
    %v8919 = vunpack.c.h.b16 %v8831
    %v8920 = vunpack.c.l.b16 %v8832
    %v8921 = vunpack.c.h.b16 %v8832
    %v8922 = vunpack.c.l.b16 %v8833
    %v8923 = vunpack.c.h.b16 %v8833
    %v8924 = vunpack.c.l.b16 %v8834
    %v8925 = vunpack.c.h.b16 %v8834
    %v8926 = vunpack.c.l.b16 %v8835
    %v8927 = vunpack.c.h.b16 %v8835
    %v8928 = vunpack.c.l.b16 %v8836
    %v8929 = vunpack.c.h.b16 %v8836
    %v8930 = vunpack.c.l.b16 %v8837
    %v8931 = vunpack.c.h.b16 %v8837
    %v8932 = vunpack.c.l.b16 %v8838
    %v8933 = vunpack.c.h.b16 %v8838
    %v8934 = vunpack.c.l.b16 %v8839
    %v8935 = vunpack.c.h.b16 %v8839
    %v8936 = vunpack.c.l.b16 %v8840
    %v8937 = vunpack.c.h.b16 %v8840
    %v8938 = vunpack.c.l.b16 %v8841
    %v8939 = vunpack.c.h.b16 %v8841
    %v8940 = vunpack.c.l.b16 %v8842
    %v8941 = vunpack.c.h.b16 %v8842
    %v8942 = vunpack.c.l.b16 %v8843
    %v8943 = vunpack.c.h.b16 %v8843
    %v8944 = vunpack.c.l.b16 %v8844
    %v8945 = vunpack.c.h.b16 %v8844
    %v8946 = vunpack.c.l.b16 %v8845
    %v8947 = vunpack.c.h.b16 %v8845
    %v8948 = vunpack.c.l.b16 %v8846
    %v8949 = vunpack.c.h.b16 %v8846
    %v8950 = vunpack.c.l.b16 %v8847
    %v8951 = vunpack.c.h.b16 %v8847
    %v8952 = vunpack.c.l.b16 %v8848
    %v8953 = vunpack.c.h.b16 %v8848
    %v8954 = vunpack.c.l.b16 %v8849
    %v8955 = vunpack.c.h.b16 %v8849
    %v8956 = vunpack.c.l.b16 %v8850
    %v8957 = vunpack.c.h.b16 %v8850
    %v8958 = vunpack.c.l.b16 %v8851
    %v8959 = vunpack.c.h.b16 %v8851
    %v8960 = vpack.c.b16 %v8900, %v8896
    %v8961 = vpack.c.b16 %v8901, %v8897
    %v8962 = vpack.c.b16 %v8902, %v8898
    %v8963 = vpack.c.b16 %v8903, %v8899
    %v8964 = vpack.c.b16 %v8908, %v8904
    %v8965 = vpack.c.b16 %v8909, %v8905
    %v8966 = vpack.c.b16 %v8910, %v8906
    %v8967 = vpack.c.b16 %v8911, %v8907
    %v8968 = vpack.c.b16 %v8916, %v8912
    %v8969 = vpack.c.b16 %v8917, %v8913
    %v8970 = vpack.c.b16 %v8918, %v8914
    %v8971 = vpack.c.b16 %v8919, %v8915
    %v8972 = vpack.c.b16 %v8924, %v8920
    %v8973 = vpack.c.b16 %v8925, %v8921
    %v8974 = vpack.c.b16 %v8926, %v8922
    %v8975 = vpack.c.b16 %v8927, %v8923
    %v8976 = vpack.c.b16 %v8932, %v8928
    %v8977 = vpack.c.b16 %v8933, %v8929
    %v8978 = vpack.c.b16 %v8934, %v8930
    %v8979 = vpack.c.b16 %v8935, %v8931
    %v8980 = vpack.c.b16 %v8940, %v8936
    %v8981 = vpack.c.b16 %v8941, %v8937
    %v8982 = vpack.c.b16 %v8942, %v8938
    %v8983 = vpack.c.b16 %v8943, %v8939
    %v8984 = vpack.c.b16 %v8948, %v8944
    %v8985 = vpack.c.b16 %v8949, %v8945
    %v8986 = vpack.c.b16 %v8950, %v8946
    %v8987 = vpack.c.b16 %v8951, %v8947
    %v8988 = vpack.c.b16 %v8956, %v8952
    %v8989 = vpack.c.b16 %v8957, %v8953
    %v8990 = vpack.c.b16 %v8958, %v8954
    %v8991 = vpack.c.b16 %v8959, %v8955
    %9024 = vmatpush.bf16.msra.mxu0 %v8988
    %9025 = vmatpush.bf16.msra.mxu0 %v8984
    %9026 = vmatpush.bf16.msra.mxu0 %v8980
    %9027 = vmatpush.bf16.msra.mxu0 %v8976
    %9028 = vmatpush.bf16.msra.mxu0 %v8972
    %9029 = vmatpush.bf16.msra.mxu0 %v8968
    %9030 = vmatpush.bf16.msra.mxu0 %v8964
    %9031 = vmatpush.bf16.msra.mxu0 %v8960
    %9032 = vmatmul.bf16.gmra.mxu0 %v8852
    %v9033 = vpop.f32.mrf.mxu0
    %v9034 = vadd.f32 %v8856, %v9033
    %v9035 = vpop.f32.mrf.mxu0
    %9036 = vdwg.mxu0
    %9037 = vmatpush.bf16.msra.mxu0 %v8989
    %9038 = vmatpush.bf16.msra.mxu0 %v8985
    %9039 = vmatpush.bf16.msra.mxu0 %v8981
    %9040 = vmatpush.bf16.msra.mxu0 %v8977
    %9041 = vmatpush.bf16.msra.mxu0 %v8973
    %9042 = vmatpush.bf16.msra.mxu0 %v8969
    %9043 = vmatpush.bf16.msra.mxu0 %v8965
    %9044 = vmatpush.bf16.msra.mxu0 %v8961
    %9045 = vmatmul.bf16.gmra.mxu0 %v8852
    %v9046 = vpop.f32.mrf.mxu0
    %v9047 = vadd.f32 %v8857, %v9046
    %v9048 = vpop.f32.mrf.mxu0
    %9049 = vdwg.mxu0
    %9050 = vmatpush.bf16.msra.mxu0 %v8990
    %9051 = vmatpush.bf16.msra.mxu0 %v8986
    %9052 = vmatpush.bf16.msra.mxu0 %v8982
    %9053 = vmatpush.bf16.msra.mxu0 %v8978
    %9054 = vmatpush.bf16.msra.mxu0 %v8974
    %9055 = vmatpush.bf16.msra.mxu0 %v8970
    %9056 = vmatpush.bf16.msra.mxu0 %v8966
    %9057 = vmatpush.bf16.msra.mxu0 %v8962
    %9058 = vmatmul.bf16.gmra.mxu0 %v8852
    %v9059 = vpop.f32.mrf.mxu0
    %v9060 = vadd.f32 %v8858, %v9059
    %v9061 = vpop.f32.mrf.mxu0
    %9062 = vdwg.mxu0
    %9063 = vmatpush.bf16.msra.mxu0 %v8991
    %9064 = vmatpush.bf16.msra.mxu0 %v8987
    %9065 = vmatpush.bf16.msra.mxu0 %v8983
    %9066 = vmatpush.bf16.msra.mxu0 %v8979
    %9067 = vmatpush.bf16.msra.mxu0 %v8975
    %9068 = vmatpush.bf16.msra.mxu0 %v8971
    %9069 = vmatpush.bf16.msra.mxu0 %v8967
    %9070 = vmatpush.bf16.msra.mxu0 %v8963
    %9071 = vmatmul.bf16.gmra.mxu0 %v8852
    %v9072 = vpop.f32.mrf.mxu0
    %v9073 = vadd.f32 %v8859, %v9072
    %v9074 = vpop.f32.mrf.mxu0
    %9075 = vdwg.mxu0
    %v9076 = vmax.f32 %v9034, 0.0
    %v9077 = vmax.f32 %v9047, 0.0
    %v9078 = vmax.f32 %v9060, 0.0
    %v9079 = vmax.f32 %v9073, 0.0
    %s9080 = scalar_lea.vmem [#allocation31], 1280
    %v9081 = vld [vmem:[%s9080] sm:$0xf]
    %v9082 = vld [vmem:[%s9080 + $0x4] sm:$0xf]
    %v9083 = vld [vmem:[%s9080 + $0x8] sm:$0xf]
    %v9084 = vld [vmem:[%s9080 + $0xc] sm:$0xf]
    %v9085 = vld [vmem:[%s9080 + $0x10] sm:$0xf]
    %v9086 = vld [vmem:[%s9080 + $0x14] sm:$0xf]
    %v9087 = vld [vmem:[%s9080 + $0x18] sm:$0xf]
    %v9088 = vld [vmem:[%s9080 + $0x1c] sm:$0xf]
    %v9089 = vld [vmem:[%s9080 + $0x20] sm:$0xf]
    %v9090 = vld [vmem:[%s9080 + $0x24] sm:$0xf]
    %v9091 = vld [vmem:[%s9080 + $0x28] sm:$0xf]
    %v9092 = vld [vmem:[%s9080 + $0x2c] sm:$0xf]
    %v9093 = vld [vmem:[%s9080 + $0x30] sm:$0xf]
    %v9094 = vld [vmem:[%s9080 + $0x34] sm:$0xf]
    %v9095 = vld [vmem:[%s9080 + $0x38] sm:$0xf]
    %v9096 = vld [vmem:[%s9080 + $0x3c] sm:$0xf]
    %v9097 = vld [vmem:[%s9080 + $0x40] sm:$0xf]
    %v9098 = vld [vmem:[%s9080 + $0x44] sm:$0xf]
    %v9099 = vld [vmem:[%s9080 + $0x48] sm:$0xf]
    %v9100 = vld [vmem:[%s9080 + $0x4c] sm:$0xf]
    %v9101 = vld [vmem:[%s9080 + $0x50] sm:$0xf]
    %v9102 = vld [vmem:[%s9080 + $0x54] sm:$0xf]
    %v9103 = vld [vmem:[%s9080 + $0x58] sm:$0xf]
    %v9104 = vld [vmem:[%s9080 + $0x5c] sm:$0xf]
    %v9105 = vld [vmem:[%s9080 + $0x60] sm:$0xf]
    %v9106 = vld [vmem:[%s9080 + $0x64] sm:$0xf]
    %v9107 = vld [vmem:[%s9080 + $0x68] sm:$0xf]
    %v9108 = vld [vmem:[%s9080 + $0x6c] sm:$0xf]
    %v9109 = vld [vmem:[%s9080 + $0x70] sm:$0xf]
    %v9110 = vld [vmem:[%s9080 + $0x74] sm:$0xf]
    %v9111 = vld [vmem:[%s9080 + $0x78] sm:$0xf]
    %v9112 = vld [vmem:[%s9080 + $0x7c] sm:$0xf]
    %v9113 = vld [vmem:[%s9080 + $0x80] sm:$0xf]
    %v9114 = vld [vmem:[%s9080 + $0x84] sm:$0xf]
    %v9115 = vld [vmem:[%s9080 + $0x88] sm:$0xf]
    %v9116 = vld [vmem:[%s9080 + $0x8c] sm:$0xf]
    %v9117 = vld [vmem:[%s9080 + $0x90] sm:$0xf]
    %v9118 = vld [vmem:[%s9080 + $0x94] sm:$0xf]
    %v9119 = vld [vmem:[%s9080 + $0x98] sm:$0xf]
    %v9120 = vld [vmem:[%s9080 + $0x9c] sm:$0xf]
    %v9121 = vld [vmem:[%s9080 + $0xa0] sm:$0xf]
    %v9122 = vld [vmem:[%s9080 + $0xa4] sm:$0xf]
    %v9123 = vld [vmem:[%s9080 + $0xa8] sm:$0xf]
    %v9124 = vld [vmem:[%s9080 + $0xac] sm:$0xf]
    %v9125 = vld [vmem:[%s9080 + $0xb0] sm:$0xf]
    %v9126 = vld [vmem:[%s9080 + $0xb4] sm:$0xf]
    %v9127 = vld [vmem:[%s9080 + $0xb8] sm:$0xf]
    %v9128 = vld [vmem:[%s9080 + $0xbc] sm:$0xf]
    %v9129 = vld [vmem:[%s9080 + $0xc0] sm:$0xf]
    %v9130 = vld [vmem:[%s9080 + $0xc4] sm:$0xf]
    %v9131 = vld [vmem:[%s9080 + $0xc8] sm:$0xf]
    %v9132 = vld [vmem:[%s9080 + $0xcc] sm:$0xf]
    %v9133 = vld [vmem:[%s9080 + $0xd0] sm:$0xf]
    %v9134 = vld [vmem:[%s9080 + $0xd4] sm:$0xf]
    %v9135 = vld [vmem:[%s9080 + $0xd8] sm:$0xf]
    %v9136 = vld [vmem:[%s9080 + $0xdc] sm:$0xf]
    %v9137 = vld [vmem:[%s9080 + $0xe0] sm:$0xf]
    %v9138 = vld [vmem:[%s9080 + $0xe4] sm:$0xf]
    %v9139 = vld [vmem:[%s9080 + $0xe8] sm:$0xf]
    %v9140 = vld [vmem:[%s9080 + $0xec] sm:$0xf]
    %v9141 = vld [vmem:[%s9080 + $0xf0] sm:$0xf]
    %v9142 = vld [vmem:[%s9080 + $0xf4] sm:$0xf]
    %v9143 = vld [vmem:[%s9080 + $0xf8] sm:$0xf]
    %v9144 = vld [vmem:[%s9080 + $0xfc] sm:$0xf]
    %v9145 = vpack.c.bf16 %v9076, %v9076
    %v9146 = vpack.c.bf16 %v9077, %v9077
    %v9147 = vpack.c.bf16 %v9078, %v9078
    %v9148 = vpack.c.bf16 %v9079, %v9079
    %v9149 = vperm.slane %v8818, 0
    %v9214 = vunpack.c.l.b16 %v9081
    %v9215 = vunpack.c.l.b16 %v9082
    %v9216 = vunpack.c.l.b16 %v9083
    %v9217 = vunpack.c.l.b16 %v9084
    %v9218 = vunpack.c.l.b16 %v9085
    %v9219 = vunpack.c.l.b16 %v9086
    %v9220 = vunpack.c.l.b16 %v9087
    %v9221 = vunpack.c.l.b16 %v9088
    %v9222 = vunpack.c.l.b16 %v9089
    %v9223 = vunpack.c.l.b16 %v9090
    %v9224 = vunpack.c.l.b16 %v9091
    %v9225 = vunpack.c.l.b16 %v9092
    %v9226 = vunpack.c.l.b16 %v9093
    %v9227 = vunpack.c.l.b16 %v9094
    %v9228 = vunpack.c.l.b16 %v9095
    %v9229 = vunpack.c.l.b16 %v9096
    %v9230 = vunpack.c.l.b16 %v9097
    %v9231 = vunpack.c.l.b16 %v9098
    %v9232 = vunpack.c.l.b16 %v9099
    %v9233 = vunpack.c.l.b16 %v9100
    %v9234 = vunpack.c.l.b16 %v9101
    %v9235 = vunpack.c.l.b16 %v9102
    %v9236 = vunpack.c.l.b16 %v9103
    %v9237 = vunpack.c.l.b16 %v9104
    %v9238 = vunpack.c.l.b16 %v9105
    %v9239 = vunpack.c.l.b16 %v9106
    %v9240 = vunpack.c.l.b16 %v9107
    %v9241 = vunpack.c.l.b16 %v9108
    %v9242 = vunpack.c.l.b16 %v9109
    %v9243 = vunpack.c.l.b16 %v9110
    %v9244 = vunpack.c.l.b16 %v9111
    %v9245 = vunpack.c.l.b16 %v9112
    %v9246 = vunpack.c.l.b16 %v9113
    %v9247 = vunpack.c.l.b16 %v9114
    %v9248 = vunpack.c.l.b16 %v9115
    %v9249 = vunpack.c.l.b16 %v9116
    %v9250 = vunpack.c.l.b16 %v9117
    %v9251 = vunpack.c.l.b16 %v9118
    %v9252 = vunpack.c.l.b16 %v9119
    %v9253 = vunpack.c.l.b16 %v9120
    %v9254 = vunpack.c.l.b16 %v9121
    %v9255 = vunpack.c.l.b16 %v9122
    %v9256 = vunpack.c.l.b16 %v9123
    %v9257 = vunpack.c.l.b16 %v9124
    %v9258 = vunpack.c.l.b16 %v9125
    %v9259 = vunpack.c.l.b16 %v9126
    %v9260 = vunpack.c.l.b16 %v9127
    %v9261 = vunpack.c.l.b16 %v9128
    %v9262 = vunpack.c.l.b16 %v9129
    %v9263 = vunpack.c.l.b16 %v9130
    %v9264 = vunpack.c.l.b16 %v9131
    %v9265 = vunpack.c.l.b16 %v9132
    %v9266 = vunpack.c.l.b16 %v9133
    %v9267 = vunpack.c.l.b16 %v9134
    %v9268 = vunpack.c.l.b16 %v9135
    %v9269 = vunpack.c.l.b16 %v9136
    %v9270 = vunpack.c.l.b16 %v9137
    %v9271 = vunpack.c.l.b16 %v9138
    %v9272 = vunpack.c.l.b16 %v9139
    %v9273 = vunpack.c.l.b16 %v9140
    %v9274 = vunpack.c.l.b16 %v9141
    %v9275 = vunpack.c.l.b16 %v9142
    %v9276 = vunpack.c.l.b16 %v9143
    %v9277 = vunpack.c.l.b16 %v9144
    %v9278 = vpack.c.b16 %v9215, %v9214
    %v9279 = vpack.c.b16 %v9217, %v9216
    %v9280 = vpack.c.b16 %v9219, %v9218
    %v9281 = vpack.c.b16 %v9221, %v9220
    %v9282 = vpack.c.b16 %v9223, %v9222
    %v9283 = vpack.c.b16 %v9225, %v9224
    %v9284 = vpack.c.b16 %v9227, %v9226
    %v9285 = vpack.c.b16 %v9229, %v9228
    %v9286 = vpack.c.b16 %v9231, %v9230
    %v9287 = vpack.c.b16 %v9233, %v9232
    %v9288 = vpack.c.b16 %v9235, %v9234
    %v9289 = vpack.c.b16 %v9237, %v9236
    %v9290 = vpack.c.b16 %v9239, %v9238
    %v9291 = vpack.c.b16 %v9241, %v9240
    %v9292 = vpack.c.b16 %v9243, %v9242
    %v9293 = vpack.c.b16 %v9245, %v9244
    %v9294 = vpack.c.b16 %v9247, %v9246
    %v9295 = vpack.c.b16 %v9249, %v9248
    %v9296 = vpack.c.b16 %v9251, %v9250
    %v9297 = vpack.c.b16 %v9253, %v9252
    %v9298 = vpack.c.b16 %v9255, %v9254
    %v9299 = vpack.c.b16 %v9257, %v9256
    %v9300 = vpack.c.b16 %v9259, %v9258
    %v9301 = vpack.c.b16 %v9261, %v9260
    %v9302 = vpack.c.b16 %v9263, %v9262
    %v9303 = vpack.c.b16 %v9265, %v9264
    %v9304 = vpack.c.b16 %v9267, %v9266
    %v9305 = vpack.c.b16 %v9269, %v9268
    %v9306 = vpack.c.b16 %v9271, %v9270
    %v9307 = vpack.c.b16 %v9273, %v9272
    %v9308 = vpack.c.b16 %v9275, %v9274
    %v9309 = vpack.c.b16 %v9277, %v9276
    %9342 = vmatpush.bf16.msra.mxu0 %v9285
    %9343 = vmatpush.bf16.msra.mxu0 %v9284
    %9344 = vmatpush.bf16.msra.mxu0 %v9283
    %9345 = vmatpush.bf16.msra.mxu0 %v9282
    %9346 = vmatpush.bf16.msra.mxu0 %v9281
    %9347 = vmatpush.bf16.msra.mxu0 %v9280
    %9348 = vmatpush.bf16.msra.mxu0 %v9279
    %9349 = vmatpush.bf16.msra.mxu0 %v9278
    %9350 = vmatmul.bf16.gmra.mxu0 %v9145
    %v9351 = vpop.f32.mrf.mxu0
    %v9352 = vadd.f32 %v9149, %v9351
    %v9353 = vpop.f32.mrf.mxu0
    %9354 = vdwg.mxu0
    %9355 = vmatpush.bf16.msra.mxu0 %v9293
    %9356 = vmatpush.bf16.msra.mxu0 %v9292
    %9357 = vmatpush.bf16.msra.mxu0 %v9291
    %9358 = vmatpush.bf16.msra.mxu0 %v9290
    %9359 = vmatpush.bf16.msra.mxu0 %v9289
    %9360 = vmatpush.bf16.msra.mxu0 %v9288
    %9361 = vmatpush.bf16.msra.mxu0 %v9287
    %9362 = vmatpush.bf16.msra.mxu0 %v9286
    %9363 = vmatmul.bf16.gmra.mxu0 %v9146
    %v9364 = vpop.f32.mrf.mxu0
    %v9365 = vadd.f32 %v9352, %v9364
    %v9366 = vpop.f32.mrf.mxu0
    %9367 = vdwg.mxu0
    %9368 = vmatpush.bf16.msra.mxu0 %v9301
    %9369 = vmatpush.bf16.msra.mxu0 %v9300
    %9370 = vmatpush.bf16.msra.mxu0 %v9299
    %9371 = vmatpush.bf16.msra.mxu0 %v9298
    %9372 = vmatpush.bf16.msra.mxu0 %v9297
    %9373 = vmatpush.bf16.msra.mxu0 %v9296
    %9374 = vmatpush.bf16.msra.mxu0 %v9295
    %9375 = vmatpush.bf16.msra.mxu0 %v9294
    %9376 = vmatmul.bf16.gmra.mxu0 %v9147
    %v9377 = vpop.f32.mrf.mxu0
    %v9378 = vadd.f32 %v9365, %v9377
    %v9379 = vpop.f32.mrf.mxu0
    %9380 = vdwg.mxu0
    %9381 = vmatpush.bf16.msra.mxu0 %v9309
    %9382 = vmatpush.bf16.msra.mxu0 %v9308
    %9383 = vmatpush.bf16.msra.mxu0 %v9307
    %9384 = vmatpush.bf16.msra.mxu0 %v9306
    %9385 = vmatpush.bf16.msra.mxu0 %v9305
    %9386 = vmatpush.bf16.msra.mxu0 %v9304
    %9387 = vmatpush.bf16.msra.mxu0 %v9303
    %9388 = vmatpush.bf16.msra.mxu0 %v9302
    %9389 = vmatmul.bf16.gmra.mxu0 %v9148
    %v9390 = vpop.f32.mrf.mxu0
    %v9391 = vadd.f32 %v9378, %v9390
    %v9392 = vpop.f32.mrf.mxu0
    %9393 = vdwg.mxu0
    %v9394 = vadd.f32 %v8816, %v9391
    %9395 = vadd.xlane.f32.xlu0 %v9394
    %v9396 = vpop.xlane.xlu0 %9395
    %v9397 = vmul.f32 %v9396, %v625
    %v9398 = vsub.f32 %v9394, %v9397
    %v9399 = vmul.f32 %v9398, %v9398
    %9400 = vadd.xlane.f32.xlu0 %v9399
    %v9401 = vpop.xlane.xlu0 %9400
    %v9402 = vmul.f32 %v9401, %v625
    %v9403 = vadd.f32 %v9402, 1e-05
    %v9404 = vrsqrt.pop %v9403
    %v9405 = vmul.f32 %v9404, %v9403
    %v9406 = vmul.f32 %v9405, %v9404
    %v9407 = vmul.f32 0.5, %v9406
    %v9408 = vsub.f32 1.5, %v9407
    %v9409 = vmul.f32 %v9404, %v9408
    %vm9410 = vweird.f32 %v9403
    %vm9411 = vweird.f32 %v9404
    %vm9412 = vmor %vm9410, %vm9411
    %v9413 = vsel %vm9412, %v9404, %v9409
    %v9414 = vmul.f32 %v9398, %v9413
    %v9415 = vperm.slane %v8818, 1
    %v9416 = vmul.f32 %v9414, %v9415
    %v9417 = vperm.slane %v8818, 2
    %v9418 = vadd.f32 %v9416, %v9417
    %v9419 = vsel %vm598, %v8488, 0.0
    %v9420 = vrot.slane %v9419, 4
    %v9421 = vadd.f32 %v9419, %v9420
    %v9422 = vrot.slane %v9421, 2
    %v9423 = vadd.f32 %v9421, %v9422
    %v9424 = vrot.slane %v9423, 1
    %v9425 = vadd.f32 %v9423, %v9424
    %v9426 = vsel %vm598, %v8503, 0.0
    %v9427 = vrot.slane %v9426, 4
    %v9428 = vadd.f32 %v9426, %v9427
    %v9429 = vrot.slane %v9428, 2
    %v9430 = vadd.f32 %v9428, %v9429
    %v9431 = vrot.slane %v9430, 1
    %v9432 = vadd.f32 %v9430, %v9431
    %v9433 = vsel %vm598, %v8518, 0.0
    %v9434 = vrot.slane %v9433, 4
    %v9435 = vadd.f32 %v9433, %v9434
    %v9436 = vrot.slane %v9435, 2
    %v9437 = vadd.f32 %v9435, %v9436
    %v9438 = vrot.slane %v9437, 1
    %v9439 = vadd.f32 %v9437, %v9438
    %v9440 = vsel %vm598, %v8533, 0.0
    %v9441 = vrot.slane %v9440, 4
    %v9442 = vadd.f32 %v9440, %v9441
    %v9443 = vrot.slane %v9442, 2
    %v9444 = vadd.f32 %v9442, %v9443
    %v9445 = vrot.slane %v9444, 1
    %v9446 = vadd.f32 %v9444, %v9445
    %v9447 = vsel %vm598, %v8548, 0.0
    %v9448 = vrot.slane %v9447, 4
    %v9449 = vadd.f32 %v9447, %v9448
    %v9450 = vrot.slane %v9449, 2
    %v9451 = vadd.f32 %v9449, %v9450
    %v9452 = vrot.slane %v9451, 1
    %v9453 = vadd.f32 %v9451, %v9452
    %v9454 = vsel %vm598, %v8563, 0.0
    %v9455 = vrot.slane %v9454, 4
    %v9456 = vadd.f32 %v9454, %v9455
    %v9457 = vrot.slane %v9456, 2
    %v9458 = vadd.f32 %v9456, %v9457
    %v9459 = vrot.slane %v9458, 1
    %v9460 = vadd.f32 %v9458, %v9459
    %v9461 = vsel %vm598, %v8578, 0.0
    %v9462 = vrot.slane %v9461, 4
    %v9463 = vadd.f32 %v9461, %v9462
    %v9464 = vrot.slane %v9463, 2
    %v9465 = vadd.f32 %v9463, %v9464
    %v9466 = vrot.slane %v9465, 1
    %v9467 = vadd.f32 %v9465, %v9466
    %v9468 = vsel %vm598, %v8593, 0.0
    %v9469 = vrot.slane %v9468, 4
    %v9470 = vadd.f32 %v9468, %v9469
    %v9471 = vrot.slane %v9470, 2
    %v9472 = vadd.f32 %v9470, %v9471
    %v9473 = vrot.slane %v9472, 1
    %v9474 = vadd.f32 %v9472, %v9473
    %v9475 = vrcp.pop 8.0
    %v9476 = vmul.f32 8.0, %v9475
    %v9477 = vsub.f32 1.0, %v9476
    %v9478 = vmul.f32 %v9475, %v9477
    %v9479 = vadd.f32 %v9475, %v9478
    %vm9480 = vweird.f32 %v9475
    %v9481 = vsel %vm9480, %v9475, %v9479
    %v9482 = vmul.f32 %v9425, %v9481
    %v9483 = vmul.f32 %v9432, %v9481
    %v9484 = vmul.f32 %v9439, %v9481
    %v9485 = vmul.f32 %v9446, %v9481
    %v9486 = vmul.f32 %v9453, %v9481
    %v9487 = vmul.f32 %v9460, %v9481
    %v9488 = vmul.f32 %v9467, %v9481
    %v9489 = vmul.f32 %v9474, %v9481
    %v9498 = vsel %vm2330, %v9483, %v9482
    %v9499 = vsel %vm2332, %v9484, %v9498
    %v9500 = vsel %vm2334, %v9485, %v9499
    %v9501 = vsel %vm2336, %v9486, %v9500
    %v9502 = vsel %vm2338, %v9487, %v9501
    %v9503 = vsel %vm2340, %v9488, %v9502
    %v9504 = vsel %vm2342, %v9489, %v9503
    %9506 = vst.msk [vmem:[#allocation36] sm:$0xff] %vm598, %v9504
    %v9507 = vld [vmem:[%s21] sm:$0x7]
    %9508 = vadd.xlane.f32.xlu0 %v9418
    %v9509 = vpop.xlane.xlu0 %9508
    %v9510 = vmul.f32 %v9509, %v625
    %v9511 = vsub.f32 %v9418, %v9510
    %v9512 = vmul.f32 %v9511, %v9511
    %9513 = vadd.xlane.f32.xlu0 %v9512
    %v9514 = vpop.xlane.xlu0 %9513
    %v9515 = vmul.f32 %v9514, %v625
    %v9516 = vadd.f32 %v9515, 1e-05
    %v9517 = vrsqrt.pop %v9516
    %v9518 = vmul.f32 %v9517, %v9516
    %v9519 = vmul.f32 %v9518, %v9517
    %v9520 = vmul.f32 0.5, %v9519
    %v9521 = vsub.f32 1.5, %v9520
    %v9522 = vmul.f32 %v9517, %v9521
    %vm9523 = vweird.f32 %v9516
    %vm9524 = vweird.f32 %v9517
    %vm9525 = vmor %vm9523, %vm9524
    %v9526 = vsel %vm9525, %v9517, %v9522
    %v9527 = vmul.f32 %v9511, %v9526
    %v9528 = vperm.slane %v9507, 0
    %v9529 = vmul.f32 %v9527, %v9528
    %v9530 = vperm.slane %v9507, 1
    %v9531 = vadd.f32 %v9529, %v9530
    %v9532 = vld [vmem:[#allocation32] sm:$0xf]
    %v9533 = vld [vmem:[#allocation32 + $0x4] sm:$0xf]
    %v9534 = vld [vmem:[#allocation32 + $0x8] sm:$0xf]
    %v9535 = vld [vmem:[#allocation32 + $0xc] sm:$0xf]
    %v9536 = vld [vmem:[#allocation32 + $0x10] sm:$0xf]
    %v9537 = vld [vmem:[#allocation32 + $0x14] sm:$0xf]
    %v9538 = vld [vmem:[#allocation32 + $0x18] sm:$0xf]
    %v9539 = vld [vmem:[#allocation32 + $0x1c] sm:$0xf]
    %v9540 = vld [vmem:[#allocation32 + $0x20] sm:$0xf]
    %v9541 = vld [vmem:[#allocation32 + $0x24] sm:$0xf]
    %v9542 = vld [vmem:[#allocation32 + $0x28] sm:$0xf]
    %v9543 = vld [vmem:[#allocation32 + $0x2c] sm:$0xf]
    %v9544 = vld [vmem:[#allocation32 + $0x30] sm:$0xf]
    %v9545 = vld [vmem:[#allocation32 + $0x34] sm:$0xf]
    %v9546 = vld [vmem:[#allocation32 + $0x38] sm:$0xf]
    %v9547 = vld [vmem:[#allocation32 + $0x3c] sm:$0xf]
    %v9548 = vpack.c.bf16 %v9531, %v9531
    %v9549 = vperm.slane %v9507, 2
    %v9566 = vunpack.c.l.b16 %v9532
    %v9567 = vunpack.c.l.b16 %v9533
    %v9568 = vunpack.c.l.b16 %v9534
    %v9569 = vunpack.c.l.b16 %v9535
    %v9570 = vunpack.c.l.b16 %v9536
    %v9571 = vunpack.c.l.b16 %v9537
    %v9572 = vunpack.c.l.b16 %v9538
    %v9573 = vunpack.c.l.b16 %v9539
    %v9574 = vunpack.c.l.b16 %v9540
    %v9575 = vunpack.c.l.b16 %v9541
    %v9576 = vunpack.c.l.b16 %v9542
    %v9577 = vunpack.c.l.b16 %v9543
    %v9578 = vunpack.c.l.b16 %v9544
    %v9579 = vunpack.c.l.b16 %v9545
    %v9580 = vunpack.c.l.b16 %v9546
    %v9581 = vunpack.c.l.b16 %v9547
    %v9582 = vpack.c.b16 %v9567, %v9566
    %v9583 = vpack.c.b16 %v9569, %v9568
    %v9584 = vpack.c.b16 %v9571, %v9570
    %v9585 = vpack.c.b16 %v9573, %v9572
    %v9586 = vpack.c.b16 %v9575, %v9574
    %v9587 = vpack.c.b16 %v9577, %v9576
    %v9588 = vpack.c.b16 %v9579, %v9578
    %v9589 = vpack.c.b16 %v9581, %v9580
    %9598 = vmatpush.bf16.msra.mxu0 %v9589
    %9599 = vmatpush.bf16.msra.mxu0 %v9588
    %9600 = vmatpush.bf16.msra.mxu0 %v9587
    %9601 = vmatpush.bf16.msra.mxu0 %v9586
    %9602 = vmatpush.bf16.msra.mxu0 %v9585
    %9603 = vmatpush.bf16.msra.mxu0 %v9584
    %9604 = vmatpush.bf16.msra.mxu0 %v9583
    %9605 = vmatpush.bf16.msra.mxu0 %v9582
    %9606 = vmatmul.bf16.gmra.mxu0 %v9548
    %v9607 = vpop.f32.mrf.mxu0
    %v9608 = vadd.f32 %v9549, %v9607
    %v9609 = vpop.f32.mrf.mxu0
    %9610 = vdwg.mxu0
    %v9611 = vmax.f32 %v9608, 0.0
    %v9612 = vld [vmem:[#allocation34] sm:$0xf]
    %v9613 = vld [vmem:[#allocation34 + $0x4] sm:$0xf]
    %v9614 = vld [vmem:[#allocation34 + $0x8] sm:$0xf]
    %v9615 = vld [vmem:[#allocation34 + $0xc] sm:$0xf]
    %v9616 = vld [vmem:[#allocation34 + $0x10] sm:$0xf]
    %v9617 = vld [vmem:[#allocation34 + $0x14] sm:$0xf]
    %v9618 = vld [vmem:[#allocation34 + $0x18] sm:$0xf]
    %v9619 = vld [vmem:[#allocation34 + $0x1c] sm:$0xf]
    %v9620 = vld [vmem:[#allocation34 + $0x20] sm:$0xf]
    %v9621 = vld [vmem:[#allocation34 + $0x24] sm:$0xf]
    %v9622 = vld [vmem:[#allocation34 + $0x28] sm:$0xf]
    %v9623 = vld [vmem:[#allocation34 + $0x2c] sm:$0xf]
    %v9624 = vld [vmem:[#allocation34 + $0x30] sm:$0xf]
    %v9625 = vld [vmem:[#allocation34 + $0x34] sm:$0xf]
    %v9626 = vld [vmem:[#allocation34 + $0x38] sm:$0xf]
    %v9627 = vld [vmem:[#allocation34 + $0x3c] sm:$0xf]
    %v9628 = vpack.c.bf16 %v9611, %v9611
    %v9629 = vld [vmem:[%s24] sm:$0x1]
    %v9631 = vperm.slane %v9629, 0
    %v9649 = vunpack.c.l.b16 %v9612
    %v9650 = vunpack.c.l.b16 %v9613
    %v9651 = vunpack.c.l.b16 %v9614
    %v9652 = vunpack.c.l.b16 %v9615
    %v9653 = vunpack.c.l.b16 %v9616
    %v9654 = vunpack.c.l.b16 %v9617
    %v9655 = vunpack.c.l.b16 %v9618
    %v9656 = vunpack.c.l.b16 %v9619
    %v9657 = vunpack.c.l.b16 %v9620
    %v9658 = vunpack.c.l.b16 %v9621
    %v9659 = vunpack.c.l.b16 %v9622
    %v9660 = vunpack.c.l.b16 %v9623
    %v9661 = vunpack.c.l.b16 %v9624
    %v9662 = vunpack.c.l.b16 %v9625
    %v9663 = vunpack.c.l.b16 %v9626
    %v9664 = vunpack.c.l.b16 %v9627
    %v9665 = vpack.c.b16 %v9650, %v9649
    %v9666 = vpack.c.b16 %v9652, %v9651
    %v9667 = vpack.c.b16 %v9654, %v9653
    %v9668 = vpack.c.b16 %v9656, %v9655
    %v9669 = vpack.c.b16 %v9658, %v9657
    %v9670 = vpack.c.b16 %v9660, %v9659
    %v9671 = vpack.c.b16 %v9662, %v9661
    %v9672 = vpack.c.b16 %v9664, %v9663
    %9681 = vmatpush.bf16.msra.mxu0 %v9672
    %9682 = vmatpush.bf16.msra.mxu0 %v9671
    %9683 = vmatpush.bf16.msra.mxu0 %v9670
    %9684 = vmatpush.bf16.msra.mxu0 %v9669
    %9685 = vmatpush.bf16.msra.mxu0 %v9668
    %9686 = vmatpush.bf16.msra.mxu0 %v9667
    %9687 = vmatpush.bf16.msra.mxu0 %v9666
    %9688 = vmatpush.bf16.msra.mxu0 %v9665
    %9689 = vmatmul.bf16.gmra.mxu0 %v9628
    %v9690 = vpop.f32.mrf.mxu0
    %v9691 = vadd.f32 %v9631, %v9690
    %v9692 = vpop.f32.mrf.mxu0
    %9693 = vdwg.mxu0
    %vm9694 = vcmask 146432
    %9695 = vst.msk [vmem:[#allocation35] sm:$0xff] %vm9694, %v9691
    // Predicated region
    $region186: #{_lambda_.1} parent=1 // pred_check
      _
    $region187: #{_lambda_.1} parent=1 // pred_check_branch
      %9697 = sbr.rel (0) target = $region189
    $region188: #{_lambda_.1} parent=1 // pred_region
      %9699 = vsyncadd [#allocation4], 0
      %s9701 = sshll.u32 [#allocation35], 4
      %s9702 = int_to_ptr.vmem [resolvable:$true] %s9701
      %s9703 = sshll.u32 %s25, 4
      %s9704 = int_to_ptr.hbm [resolvable:$true] %s9703
      %9706 = dma.vmem_to_hbm [thread:$0]  %s9702, 128, %s9704, [#allocation4]
    $region189: #{_lambda_.1} parent=1 // pred_fallthru
      _
    // Predicated region
    $region190: #{_lambda_.1} parent=1 // pred_check
      _
    $region191: #{_lambda_.1} parent=1 // pred_check_branch
      %9708 = sbr.rel (0) target = $region193
    $region192: #{_lambda_.1} parent=1 // pred_region
      %9710 = vsyncadd [#allocation37], 0
      %s9712 = sshll.u32 [#allocation36], 4
      %s9713 = int_to_ptr.vmem [resolvable:$true] %s9712
      %s9714 = sshll.u32 %s26, 4
      %s9715 = int_to_ptr.hbm [resolvable:$true] %s9714
      %9717 = dma.vmem_to_hbm [thread:$0]  %s9713, 128, %s9715, [#allocation37]
    $region193: #{_lambda_.1} parent=1 // pred_fallthru
      _
    // Predicated region
    $region194: #{_lambda_.1} parent=1 // pred_check
      _
    $region195: #{_lambda_.1} parent=1 // pred_check_branch
      %9719 = sbr.rel (0) target = $region197
    $region196: #{_lambda_.1} parent=1 // pred_region
      %9721 = dma.done [#allocation4], 128
    $region197: #{_lambda_.1} parent=1 // pred_fallthru
      _
    // Predicated region
    $region198: #{_lambda_.1} parent=1 // pred_check
      _
    $region199: #{_lambda_.1} parent=1 // pred_check_branch
      %9723 = sbr.rel (0) target = $region201
    $region200: #{_lambda_.1} parent=1 // pred_region
      %9725 = dma.done [#allocation37], 128
    $region201: #{_lambda_.1} parent=1 // pred_fallthru
      _
    %9726 = vsyncpa [#allocation3], 1
    %9727 = vsyncpa [#allocation6], 1
    %9728 = vsyncpa [#allocation9], 1
    %9729 = vsyncpa [#allocation12], 1
    %9730 = vsyncpa [#allocation15], 1
    %9731 = vsyncpa [#allocation18], 1
    %9732 = vsyncpa [#allocation21], 1
    %9733 = vsyncpa [#allocation24], 1
    %9734 = vsyncpa [#allocation27], 1
    %9735 = vsyncpa [#allocation30], 1
    %9736 = vsyncpa [#allocation33], 1
    %9737 = vsyncpa [#allocation4], 1
    %9738 = vsyncpa [#allocation37], 1

</llo_original>
